<compile_context>
chip_gen: v5e
topology: v5e:2x2
jax: 0.10.0
libtpu: 0.0.40
codegen_flags: <defaults>
</compile_context>

<pallas_src>
import jax
import jax.numpy as jnp
from jax.experimental import pallas as pl
from jax.experimental.pallas import tpu as pltpu


# ---------------------------------------------------------------------------
# 3x3 'same' convolution in channel-major layout via 9 per-tap dots.
# ---------------------------------------------------------------------------
def _conv3x3(x, w_ref, h, w):
    """x: (Cin, h*w) f32 (spatial row-major on lanes); w_ref: (9, Cout, Cin) bf16.
    Returns (Cout, h*w) f32 (no bias / activation)."""
    cin, s = x.shape
    # (w+1) zero lanes on each side: every tap offset becomes a static in-bounds
    # lane window; only the column wrap at row edges still needs a mask.
    zpad = jnp.zeros((cin, w + 1), jnp.float32)
    xp = jnp.concatenate([zpad, x, zpad], axis=1)               # (cin, s + 2w + 2)
    col = jax.lax.broadcasted_iota(jnp.int32, (1, s), 1) % w
    not_left = jnp.where(col > 0, 1.0, 0.0).astype(jnp.float32)       # dx = -1 wrap
    not_right = jnp.where(col < (w - 1), 1.0, 0.0).astype(jnp.float32)  # dx = +1 wrap

    acc = None
    for ky in range(3):
        for kx in range(3):
            dy, dx = ky - 1, kx - 1
            start = (w + 1) + dy * w + dx
            win = xp[:, start:start + s]                         # (cin, s) shifted
            if dx == -1:
                win = win * not_left
            elif dx == 1:
                win = win * not_right
            tap = jnp.dot(w_ref[ky * 3 + kx], win.astype(jnp.bfloat16),
                          preferred_element_type=jnp.float32)    # (cout, s)
            acc = tap if acc is None else acc + tap
    return acc


# ---------------------------------------------------------------------------
# Fused UNet + linear (A^T z) kernel.
# ---------------------------------------------------------------------------
def _make_kernel(H, W, TN):
    HW = H * W
    Hh, Wh = H // 2, W // 2

    def kernel(x_ref, w1_ref, b1_ref, w2_ref, b2_ref, w3u_ref, w3s_ref, b3_ref,
               w4_ref, b4_ref, pool_ref, up_ref, a_ref, o_ref, z_ref):
        B, C, _ = x_ref.shape

        # -- step 0: run the UNet for every sample into the z scratch (NCHW flat) --
        @pl.when(pl.program_id(0) == 0)
        def _():
            for b in range(B):
                x = x_ref[b]                                            # (C, HW)
                e1 = jnp.maximum(_conv3x3(x, w1_ref, H, W) + b1_ref[...], 0.0)
                p1 = jnp.dot(e1.astype(jnp.bfloat16), pool_ref[...],
                             preferred_element_type=jnp.float32)        # (F, HW/4)
                e2 = jnp.maximum(_conv3x3(p1, w2_ref, Hh, Wh) + b2_ref[...], 0.0)
                up = jnp.dot(e2.astype(jnp.bfloat16), up_ref[...],
                             preferred_element_type=jnp.float32)        # (2F, HW)
                # conv3(cat([up, e1], dim=1)) without materializing the concat.
                d1 = jnp.maximum(_conv3x3(up, w3u_ref, H, W)
                                 + _conv3x3(e1, w3s_ref, H, W)
                                 + b3_ref[...], 0.0)                    # (F, HW)
                u = jnp.dot(w4_ref[...], d1.astype(jnp.bfloat16),
                            preferred_element_type=jnp.float32) + b4_ref[...]
                z_ref[b] = u                                            # (C, HW)

        # -- every step: one A column tile:  out[:, tile] = Z @ A[:, tile] --------
        acc = None
        for c in range(C):
            zc = z_ref[:, c, :].astype(jnp.bfloat16)                    # (B, HW)
            ac = a_ref[c * HW:(c + 1) * HW, :]                          # (HW, TN) bf16
            d = jnp.dot(zc, ac, preferred_element_type=jnp.float32)
            acc = d if acc is None else acc + d
        o_ref[...] = acc

    return kernel


def ls_unet_forward(params, x_nchw):
    """linear_model.forward_t(unet(x));  x is NCHW (like PyTorch), returns NCHW."""
    B, C, H, W = x_nchw.shape
    HW, HW4 = H * W, (H // 2) * (W // 2)
    F = params["b1"].shape[0]
    N = C * HW
    TN = 512 if N % 512 == 0 else N
    NT = N // TN

    def _const(shape):
        nd = len(shape)
        return pl.BlockSpec(shape, lambda j, _n=nd: (0,) * _n)

    x = x_nchw.reshape(B, C, HW).astype(jnp.float32)   # NCHW flatten, no transpose

    out = pl.pallas_call(
        _make_kernel(H, W, TN),
        out_shape=jax.ShapeDtypeStruct((B, N), jnp.float32),
        grid=(NT,),
        in_specs=[
            _const((B, C, HW)),                                   # x
            _const((9, F, C)), _const((F, 1)),                    # conv1
            _const((9, 2 * F, F)), _const((2 * F, 1)),            # conv2
            _const((9, F, 2 * F)), _const((9, F, F)), _const((F, 1)),  # conv3 split
            _const((C, F)), _const((C, 1)),                       # 1x1 head
            _const((HW, HW4)), _const((HW4, HW)),                 # pool / up
            pl.BlockSpec((N, TN), lambda j: (0, j)),              # A column tile
        ],
        out_specs=pl.BlockSpec((B, TN), lambda j: (0, j)),
        scratch_shapes=[pltpu.VMEM((B, C, HW), jnp.float32)],     # z = unet(x), NCHW
        compiler_params=pltpu.CompilerParams(
            dimension_semantics=("arbitrary",)),
    )(x,
      params["w1t"], params["b1"],
      params["w2t"], params["b2"],
      params["w3ut"], params["w3st"], params["b3"],
      params["w4"], params["b4"],
      params["poolT"], params["upT"],
      params["A"])
    return out.reshape(B, C, H, W)


# ---------------------------------------------------------------------------
# Parameter porting: PyTorch layouts -> kernel layouts.
# ---------------------------------------------------------------------------
def _conv_taps(w_oihw):
    # PyTorch (Cout, Cin, 3, 3) -> (9, Cout, Cin) bf16, tap-major t = ky*3 + kx.
    o, i, kh, kw = w_oihw.shape
    return jnp.transpose(w_oihw, (2, 3, 0, 1)).reshape(kh * kw, o, i).astype(jnp.bfloat16)


def _pool_up_mats(H, W):
    Hh, Wh = H // 2, W // 2
    p = jnp.arange(H * W)
    parent = (p // W // 2) * Wh + (p % W) // 2
    onehot = (parent[:, None] == jnp.arange(Hh * Wh)[None, :]).astype(jnp.float32)
    poolT = (0.25 * onehot).astype(jnp.bfloat16)    # (HW, HW/4):  p1 = e1 @ poolT
    upT = onehot.T.astype(jnp.bfloat16)             # (HW/4, HW):  up = e2 @ upT
    return poolT, upT


def prepare_params(tp, H, W):
    feat = tp["b1"].shape[0]
    poolT, upT = _pool_up_mats(H, W)
    w3 = tp["w3"]   # (F, 3F, 3, 3); decoder input is cat([up(2F), e1(F)], dim=1)
    return {
        "w1t": _conv_taps(tp["w1"]), "b1": tp["b1"].reshape(-1, 1),
        "w2t": _conv_taps(tp["w2"]), "b2": tp["b2"].reshape(-1, 1),
        "w3ut": _conv_taps(w3[:, :2 * feat]),
        "w3st": _conv_taps(w3[:, 2 * feat:]),
        "b3": tp["b3"].reshape(-1, 1),
        "w4": tp["w4"][:, :, 0, 0].astype(jnp.bfloat16),   # (Cout=C, Cin=F)
        "b4": tp["b4"].reshape(-1, 1),
        # A acts on NCHW-flattened vectors.  bf16 halves the dominant HBM traffic;
        # keep it f32 here if exact-reference numerics are required.
        "A": tp["A"].astype(jnp.bfloat16),
        "poolT": poolT, "upT": upT,
    }


def init_torch_layout_params(key, cin=4, feat=8, H=16, W=16):
    ks = jax.random.split(key, 5)

    def w_init(k, shape, fan_in):
        return jax.random.normal(k, shape, jnp.float32) / jnp.sqrt(fan_in)

    N = cin * H * W
    return {
        "w1": w_init(ks[0], (feat, cin, 3, 3), 9 * cin),           # OIHW (PyTorch)
        "b1": jnp.zeros((feat,), jnp.float32),
        "w2": w_init(ks[1], (2 * feat, feat, 3, 3), 9 * feat),
        "b2": jnp.zeros((2 * feat,), jnp.float32),
        "w3": w_init(ks[2], (feat, 3 * feat, 3, 3), 27 * feat),
        "b3": jnp.zeros((feat,), jnp.float32),
        "w4": w_init(ks[3], (cin, feat, 1, 1), feat),
        "b4": jnp.zeros((cin,), jnp.float32),
        "A": w_init(ks[4], (N, N), N),                             # square operator
    }


# ---------------------------------------------------------------------------
if __name__ == "__main__":
    key = jax.random.PRNGKey(0)
    kx, kp = jax.random.split(key)
    B, C, H, W = 2, 4, 16, 16
    x = jax.random.normal(kx, (B, C, H, W), jnp.float32)

    torch_params = init_torch_layout_params(kp, cin=C, feat=8, H=H, W=W)
    params = prepare_params(torch_params, H, W)

    out = jax.jit(ls_unet_forward)(params, x)
    out = jax.block_until_ready(out)
    assert out.shape == (B, C, H, W), out.shape
    assert bool(jnp.all(jnp.isfinite(out)))
    print("KERNEL_OK")
</pallas_src>

<mosaic_0001>
module attributes {stable_mosaic.version = 11 : i64} {
  func.func @kernel(%arg0: i32, %arg1: memref<2x4x256xf32, #tpu.memory_space<vmem>>, %arg2: memref<9x8x4xbf16, #tpu.memory_space<vmem>>, %arg3: memref<8x1xf32, #tpu.memory_space<vmem>>, %arg4: memref<9x16x8xbf16, #tpu.memory_space<vmem>>, %arg5: memref<16x1xf32, #tpu.memory_space<vmem>>, %arg6: memref<9x8x16xbf16, #tpu.memory_space<vmem>>, %arg7: memref<9x8x8xbf16, #tpu.memory_space<vmem>>, %arg8: memref<8x1xf32, #tpu.memory_space<vmem>>, %arg9: memref<4x8xbf16, #tpu.memory_space<vmem>>, %arg10: memref<4x1xf32, #tpu.memory_space<vmem>>, %arg11: memref<256x64xbf16, #tpu.memory_space<vmem>>, %arg12: memref<64x256xbf16, #tpu.memory_space<vmem>>, %arg13: memref<1024x512xbf16, #tpu.memory_space<vmem>>, %arg14: memref<2x512xf32, #tpu.memory_space<vmem>>, %arg15: memref<2x4x256xf32, #tpu.memory_space<vmem>>) attributes {dimension_semantics = [#tpu.dimension_semantics<arbitrary>], iteration_bounds = array<i64: 2>, scalar_prefetch = 0 : i64, scratch_operands = 1 : i64, tpu.core_type = #tpu.core_type<tc>, window_params = [{pipeline_mode = #tpu.pipeline_mode<synchronous>, transform_indices = @transform_0, window_bounds = array<i64: 2, 4, 256>}, {pipeline_mode = #tpu.pipeline_mode<synchronous>, transform_indices = @transform_1, window_bounds = array<i64: 9, 8, 4>}, {pipeline_mode = #tpu.pipeline_mode<synchronous>, transform_indices = @transform_2, window_bounds = array<i64: 8, 1>}, {pipeline_mode = #tpu.pipeline_mode<synchronous>, transform_indices = @transform_3, window_bounds = array<i64: 9, 16, 8>}, {pipeline_mode = #tpu.pipeline_mode<synchronous>, transform_indices = @transform_4, window_bounds = array<i64: 16, 1>}, {pipeline_mode = #tpu.pipeline_mode<synchronous>, transform_indices = @transform_5, window_bounds = array<i64: 9, 8, 16>}, {pipeline_mode = #tpu.pipeline_mode<synchronous>, transform_indices = @transform_6, window_bounds = array<i64: 9, 8, 8>}, {pipeline_mode = #tpu.pipeline_mode<synchronous>, transform_indices = @transform_7, window_bounds = array<i64: 8, 1>}, {pipeline_mode = #tpu.pipeline_mode<synchronous>, transform_indices = @transform_8, window_bounds = array<i64: 4, 8>}, {pipeline_mode = #tpu.pipeline_mode<synchronous>, transform_indices = @transform_9, window_bounds = array<i64: 4, 1>}, {pipeline_mode = #tpu.pipeline_mode<synchronous>, transform_indices = @transform_10, window_bounds = array<i64: 256, 64>}, {pipeline_mode = #tpu.pipeline_mode<synchronous>, transform_indices = @transform_11, window_bounds = array<i64: 64, 256>}, {transform_indices = @transform_12, window_bounds = array<i64: 1024, 512>}, {transform_indices = @transform_13, window_bounds = array<i64: 2, 512>}]} {
    %c0_i32 = arith.constant 0 : i32
    %0 = arith.cmpi eq, %arg0, %c0_i32 : i32
    %1 = arith.extui %0 : i1 to i32
    %c0_i32_0 = arith.constant 0 : i32
    %2 = arith.cmpi ne, %1, %c0_i32_0 : i32
    scf.if %2 {
      %c0_19 = arith.constant 0 : index
      %c0_20 = arith.constant 0 : index
      %c0_21 = arith.constant 0 : index
      %27 = vector.load %arg1[%c0_19, %c0_20, %c0_21] : memref<2x4x256xf32, #tpu.memory_space<vmem>>, vector<1x4x256xf32>
      %28 = vector.shape_cast %27 : vector<1x4x256xf32> to vector<4x256xf32>
      %cst_22 = arith.constant 0.000000e+00 : f32
      %29 = vector.broadcast %cst_22 : f32 to vector<4x17xf32>
      %30 = tpu.concatenate %29, %28, %29 in 1 : vector<4x17xf32>, vector<4x256xf32>, vector<4x17xf32> -> vector<4x290xf32>
      %31 = tpu.iota {dimensions = array<i32: 1>} : vector<1x256xi32>
      %c16_i32 = arith.constant 16 : i32
      %c0_i32_23 = arith.constant 0 : i32
      %32 = arith.cmpi eq, %c16_i32, %c0_i32_23 : i32
      %c1_i32 = arith.constant 1 : i32
      %33 = arith.select %32, %c1_i32, %c16_i32 : i32
      %34 = vector.broadcast %33 : i32 to vector<1x256xi32>
      %35 = arith.remsi %31, %34 : vector<1x256xi32>
      %c0_i32_24 = arith.constant 0 : i32
      %36 = vector.broadcast %c0_i32_24 : i32 to vector<1x256xi32>
      %37 = arith.cmpi ne, %35, %36 : vector<1x256xi32>
      %c0_i32_25 = arith.constant 0 : i32
      %38 = vector.broadcast %c0_i32_25 : i32 to vector<1x256xi32>
      %39 = arith.cmpi slt, %35, %38 : vector<1x256xi32>
      %c0_i32_26 = arith.constant 0 : i32
      %40 = arith.cmpi slt, %33, %c0_i32_26 : i32
      %41 = vector.broadcast %40 : i1 to vector<1x256xi1>
      %42 = vector.broadcast %41 : vector<1x256xi1> to vector<1x256xi1>
      %43 = arith.xori %39, %42 : vector<1x256xi1>
      %44 = arith.andi %43, %37 : vector<1x256xi1>
      %45 = vector.broadcast %33 : i32 to vector<1x256xi32>
      %46 = arith.addi %35, %45 : vector<1x256xi32>
      %47 = arith.select %44, %46, %35 : vector<1x256xi1>, vector<1x256xi32>
      %c0_i32_27 = arith.constant 0 : i32
      %48 = vector.broadcast %c0_i32_27 : i32 to vector<1x256xi32>
      %49 = arith.cmpi sgt, %47, %48 : vector<1x256xi32>
      %cst_28 = arith.constant 1.000000e+00 : f32
      %cst_29 = arith.constant 0.000000e+00 : f32
      %50 = vector.broadcast %cst_28 : f32 to vector<1x256xf32>
      %51 = vector.broadcast %cst_29 : f32 to vector<1x256xf32>
      %52 = arith.select %49, %50, %51 : vector<1x256xi1>, vector<1x256xf32>
      %c15_i32 = arith.constant 15 : i32
      %53 = vector.broadcast %c15_i32 : i32 to vector<1x256xi32>
      %54 = arith.cmpi slt, %47, %53 : vector<1x256xi32>
      %cst_30 = arith.constant 1.000000e+00 : f32
      %cst_31 = arith.constant 0.000000e+00 : f32
      %55 = vector.broadcast %cst_30 : f32 to vector<1x256xf32>
      %56 = vector.broadcast %cst_31 : f32 to vector<1x256xf32>
      %57 = arith.select %54, %55, %56 : vector<1x256xi1>, vector<1x256xf32>
      %58 = vector.extract_strided_slice %30 {offsets = [0, 0], sizes = [4, 256], strides = [1, 1]} : vector<4x290xf32> to vector<4x256xf32>
      %59 = vector.broadcast %52 : vector<1x256xf32> to vector<4x256xf32>
      %60 = arith.mulf %58, %59 : vector<4x256xf32>
      %c0_32 = arith.constant 0 : index
      %c0_33 = arith.constant 0 : index
      %c0_34 = arith.constant 0 : index
      %61 = vector.load %arg2[%c0_32, %c0_33, %c0_34] : memref<9x8x4xbf16, #tpu.memory_space<vmem>>, vector<1x8x4xbf16>
      %62 = vector.shape_cast %61 : vector<1x8x4xbf16> to vector<8x4xbf16>
      %63 = arith.truncf %60 : vector<4x256xf32> to vector<4x256xbf16>
      %cst_35 = arith.constant dense<0.000000e+00> : vector<8x256xf32>
      %64 = tpu.matmul %62, %63, %cst_35 {dimension_numbers = #tpu.dot_dimension_numbers<[1], [0], [0], [1], [0, 0, 1, 1], [], []>} : vector<8x4xbf16>, vector<4x256xbf16>, vector<8x256xf32> -> vector<8x256xf32>
      %65 = vector.extract_strided_slice %30 {offsets = [0, 1], sizes = [4, 256], strides = [1, 1]} : vector<4x290xf32> to vector<4x256xf32>
      %c1_36 = arith.constant 1 : index
      %c0_37 = arith.constant 0 : index
      %c0_38 = arith.constant 0 : index
      %66 = vector.load %arg2[%c1_36, %c0_37, %c0_38] : memref<9x8x4xbf16, #tpu.memory_space<vmem>>, vector<1x8x4xbf16>
      %67 = vector.shape_cast %66 : vector<1x8x4xbf16> to vector<8x4xbf16>
      %68 = arith.truncf %65 : vector<4x256xf32> to vector<4x256xbf16>
      %cst_39 = arith.constant dense<0.000000e+00> : vector<8x256xf32>
      %69 = tpu.matmul %67, %68, %cst_39 {dimension_numbers = #tpu.dot_dimension_numbers<[1], [0], [0], [1], [0, 0, 1, 1], [], []>} : vector<8x4xbf16>, vector<4x256xbf16>, vector<8x256xf32> -> vector<8x256xf32>
      %70 = arith.addf %64, %69 : vector<8x256xf32>
      %71 = vector.extract_strided_slice %30 {offsets = [0, 2], sizes = [4, 256], strides = [1, 1]} : vector<4x290xf32> to vector<4x256xf32>
      %72 = vector.broadcast %57 : vector<1x256xf32> to vector<4x256xf32>
      %73 = arith.mulf %71, %72 : vector<4x256xf32>
      %c2_40 = arith.constant 2 : index
      %c0_41 = arith.constant 0 : index
      %c0_42 = arith.constant 0 : index
      %74 = vector.load %arg2[%c2_40, %c0_41, %c0_42] : memref<9x8x4xbf16, #tpu.memory_space<vmem>>, vector<1x8x4xbf16>
      %75 = vector.shape_cast %74 : vector<1x8x4xbf16> to vector<8x4xbf16>
      %76 = arith.truncf %73 : vector<4x256xf32> to vector<4x256xbf16>
      %cst_43 = arith.constant dense<0.000000e+00> : vector<8x256xf32>
      %77 = tpu.matmul %75, %76, %cst_43 {dimension_numbers = #tpu.dot_dimension_numbers<[1], [0], [0], [1], [0, 0, 1, 1], [], []>} : vector<8x4xbf16>, vector<4x256xbf16>, vector<8x256xf32> -> vector<8x256xf32>
      %78 = arith.addf %70, %77 : vector<8x256xf32>
      %79 = vector.extract_strided_slice %30 {offsets = [0, 16], sizes = [4, 256], strides = [1, 1]} : vector<4x290xf32> to vector<4x256xf32>
      %80 = vector.broadcast %52 : vector<1x256xf32> to vector<4x256xf32>
      %81 = arith.mulf %79, %80 : vector<4x256xf32>
      %c3_44 = arith.constant 3 : index
      %c0_45 = arith.constant 0 : index
      %c0_46 = arith.constant 0 : index
      %82 = vector.load %arg2[%c3_44, %c0_45, %c0_46] : memref<9x8x4xbf16, #tpu.memory_space<vmem>>, vector<1x8x4xbf16>
      %83 = vector.shape_cast %82 : vector<1x8x4xbf16> to vector<8x4xbf16>
      %84 = arith.truncf %81 : vector<4x256xf32> to vector<4x256xbf16>
      %cst_47 = arith.constant dense<0.000000e+00> : vector<8x256xf32>
      %85 = tpu.matmul %83, %84, %cst_47 {dimension_numbers = #tpu.dot_dimension_numbers<[1], [0], [0], [1], [0, 0, 1, 1], [], []>} : vector<8x4xbf16>, vector<4x256xbf16>, vector<8x256xf32> -> vector<8x256xf32>
      %86 = arith.addf %78, %85 : vector<8x256xf32>
      %87 = vector.extract_strided_slice %30 {offsets = [0, 17], sizes = [4, 256], strides = [1, 1]} : vector<4x290xf32> to vector<4x256xf32>
      %c4 = arith.constant 4 : index
      %c0_48 = arith.constant 0 : index
      %c0_49 = arith.constant 0 : index
      %88 = vector.load %arg2[%c4, %c0_48, %c0_49] : memref<9x8x4xbf16, #tpu.memory_space<vmem>>, vector<1x8x4xbf16>
      %89 = vector.shape_cast %88 : vector<1x8x4xbf16> to vector<8x4xbf16>
      %90 = arith.truncf %87 : vector<4x256xf32> to vector<4x256xbf16>
      %cst_50 = arith.constant dense<0.000000e+00> : vector<8x256xf32>
      %91 = tpu.matmul %89, %90, %cst_50 {dimension_numbers = #tpu.dot_dimension_numbers<[1], [0], [0], [1], [0, 0, 1, 1], [], []>} : vector<8x4xbf16>, vector<4x256xbf16>, vector<8x256xf32> -> vector<8x256xf32>
      %92 = arith.addf %86, %91 : vector<8x256xf32>
      %93 = vector.extract_strided_slice %30 {offsets = [0, 18], sizes = [4, 256], strides = [1, 1]} : vector<4x290xf32> to vector<4x256xf32>
      %94 = vector.broadcast %57 : vector<1x256xf32> to vector<4x256xf32>
      %95 = arith.mulf %93, %94 : vector<4x256xf32>
      %c5 = arith.constant 5 : index
      %c0_51 = arith.constant 0 : index
      %c0_52 = arith.constant 0 : index
      %96 = vector.load %arg2[%c5, %c0_51, %c0_52] : memref<9x8x4xbf16, #tpu.memory_space<vmem>>, vector<1x8x4xbf16>
      %97 = vector.shape_cast %96 : vector<1x8x4xbf16> to vector<8x4xbf16>
      %98 = arith.truncf %95 : vector<4x256xf32> to vector<4x256xbf16>
      %cst_53 = arith.constant dense<0.000000e+00> : vector<8x256xf32>
      %99 = tpu.matmul %97, %98, %cst_53 {dimension_numbers = #tpu.dot_dimension_numbers<[1], [0], [0], [1], [0, 0, 1, 1], [], []>} : vector<8x4xbf16>, vector<4x256xbf16>, vector<8x256xf32> -> vector<8x256xf32>
      %100 = arith.addf %92, %99 : vector<8x256xf32>
      %101 = vector.extract_strided_slice %30 {offsets = [0, 32], sizes = [4, 256], strides = [1, 1]} : vector<4x290xf32> to vector<4x256xf32>
      %102 = vector.broadcast %52 : vector<1x256xf32> to vector<4x256xf32>
      %103 = arith.mulf %101, %102 : vector<4x256xf32>
      %c6 = arith.constant 6 : index
      %c0_54 = arith.constant 0 : index
      %c0_55 = arith.constant 0 : index
      %104 = vector.load %arg2[%c6, %c0_54, %c0_55] : memref<9x8x4xbf16, #tpu.memory_space<vmem>>, vector<1x8x4xbf16>
      %105 = vector.shape_cast %104 : vector<1x8x4xbf16> to vector<8x4xbf16>
      %106 = arith.truncf %103 : vector<4x256xf32> to vector<4x256xbf16>
      %cst_56 = arith.constant dense<0.000000e+00> : vector<8x256xf32>
      %107 = tpu.matmul %105, %106, %cst_56 {dimension_numbers = #tpu.dot_dimension_numbers<[1], [0], [0], [1], [0, 0, 1, 1], [], []>} : vector<8x4xbf16>, vector<4x256xbf16>, vector<8x256xf32> -> vector<8x256xf32>
      %108 = arith.addf %100, %107 : vector<8x256xf32>
      %109 = vector.extract_strided_slice %30 {offsets = [0, 33], sizes = [4, 256], strides = [1, 1]} : vector<4x290xf32> to vector<4x256xf32>
      %c7 = arith.constant 7 : index
      %c0_57 = arith.constant 0 : index
      %c0_58 = arith.constant 0 : index
      %110 = vector.load %arg2[%c7, %c0_57, %c0_58] : memref<9x8x4xbf16, #tpu.memory_space<vmem>>, vector<1x8x4xbf16>
      %111 = vector.shape_cast %110 : vector<1x8x4xbf16> to vector<8x4xbf16>
      %112 = arith.truncf %109 : vector<4x256xf32> to vector<4x256xbf16>
      %cst_59 = arith.constant dense<0.000000e+00> : vector<8x256xf32>
      %113 = tpu.matmul %111, %112, %cst_59 {dimension_numbers = #tpu.dot_dimension_numbers<[1], [0], [0], [1], [0, 0, 1, 1], [], []>} : vector<8x4xbf16>, vector<4x256xbf16>, vector<8x256xf32> -> vector<8x256xf32>
      %114 = arith.addf %108, %113 : vector<8x256xf32>
      %115 = vector.extract_strided_slice %30 {offsets = [0, 34], sizes = [4, 256], strides = [1, 1]} : vector<4x290xf32> to vector<4x256xf32>
      %116 = vector.broadcast %57 : vector<1x256xf32> to vector<4x256xf32>
      %117 = arith.mulf %115, %116 : vector<4x256xf32>
      %c8 = arith.constant 8 : index
      %c0_60 = arith.constant 0 : index
      %c0_61 = arith.constant 0 : index
      %118 = vector.load %arg2[%c8, %c0_60, %c0_61] : memref<9x8x4xbf16, #tpu.memory_space<vmem>>, vector<1x8x4xbf16>
      %119 = vector.shape_cast %118 : vector<1x8x4xbf16> to vector<8x4xbf16>
      %120 = arith.truncf %117 : vector<4x256xf32> to vector<4x256xbf16>
      %cst_62 = arith.constant dense<0.000000e+00> : vector<8x256xf32>
      %121 = tpu.matmul %119, %120, %cst_62 {dimension_numbers = #tpu.dot_dimension_numbers<[1], [0], [0], [1], [0, 0, 1, 1], [], []>} : vector<8x4xbf16>, vector<4x256xbf16>, vector<8x256xf32> -> vector<8x256xf32>
      %122 = arith.addf %114, %121 : vector<8x256xf32>
      %c0_63 = arith.constant 0 : index
      %c0_64 = arith.constant 0 : index
      %123 = vector.load %arg3[%c0_63, %c0_64] : memref<8x1xf32, #tpu.memory_space<vmem>>, vector<8x1xf32>
      %124 = vector.broadcast %123 : vector<8x1xf32> to vector<8x256xf32>
      %125 = arith.addf %122, %124 : vector<8x256xf32>
      %cst_65 = arith.constant 0.000000e+00 : f32
      %126 = vector.broadcast %cst_65 : f32 to vector<8x256xf32>
      %127 = arith.maximumf %125, %126 : vector<8x256xf32>
      %128 = arith.truncf %127 : vector<8x256xf32> to vector<8x256xbf16>
      %c0_66 = arith.constant 0 : index
      %c0_67 = arith.constant 0 : index
      %129 = vector.load %arg11[%c0_66, %c0_67] : memref<256x64xbf16, #tpu.memory_space<vmem>>, vector<256x64xbf16>
      %cst_68 = arith.constant dense<0.000000e+00> : vector<8x64xf32>
      %130 = tpu.matmul %128, %129, %cst_68 {dimension_numbers = #tpu.dot_dimension_numbers<[1], [0], [0], [1], [0, 0, 1, 1], [], []>} : vector<8x256xbf16>, vector<256x64xbf16>, vector<8x64xf32> -> vector<8x64xf32>
      %cst_69 = arith.constant 0.000000e+00 : f32
      %131 = vector.broadcast %cst_69 : f32 to vector<8x9xf32>
      %132 = tpu.concatenate %131, %130, %131 in 1 : vector<8x9xf32>, vector<8x64xf32>, vector<8x9xf32> -> vector<8x82xf32>
      %133 = tpu.iota {dimensions = array<i32: 1>} : vector<1x64xi32>
      %c8_i32 = arith.constant 8 : i32
      %c0_i32_70 = arith.constant 0 : i32
      %134 = arith.cmpi eq, %c8_i32, %c0_i32_70 : i32
      %c1_i32_71 = arith.constant 1 : i32
      %135 = arith.select %134, %c1_i32_71, %c8_i32 : i32
      %136 = vector.broadcast %135 : i32 to vector<1x64xi32>
      %137 = arith.remsi %133, %136 : vector<1x64xi32>
      %c0_i32_72 = arith.constant 0 : i32
      %138 = vector.broadcast %c0_i32_72 : i32 to vector<1x64xi32>
      %139 = arith.cmpi ne, %137, %138 : vector<1x64xi32>
      %c0_i32_73 = arith.constant 0 : i32
      %140 = vector.broadcast %c0_i32_73 : i32 to vector<1x64xi32>
      %141 = arith.cmpi slt, %137, %140 : vector<1x64xi32>
      %c0_i32_74 = arith.constant 0 : i32
      %142 = arith.cmpi slt, %135, %c0_i32_74 : i32
      %143 = vector.broadcast %142 : i1 to vector<1x64xi1>
      %144 = vector.broadcast %143 : vector<1x64xi1> to vector<1x64xi1>
      %145 = arith.xori %141, %144 : vector<1x64xi1>
      %146 = arith.andi %145, %139 : vector<1x64xi1>
      %147 = vector.broadcast %135 : i32 to vector<1x64xi32>
      %148 = arith.addi %137, %147 : vector<1x64xi32>
      %149 = arith.select %146, %148, %137 : vector<1x64xi1>, vector<1x64xi32>
      %c0_i32_75 = arith.constant 0 : i32
      %150 = vector.broadcast %c0_i32_75 : i32 to vector<1x64xi32>
      %151 = arith.cmpi sgt, %149, %150 : vector<1x64xi32>
      %cst_76 = arith.constant 1.000000e+00 : f32
      %cst_77 = arith.constant 0.000000e+00 : f32
      %152 = vector.broadcast %cst_76 : f32 to vector<1x64xf32>
      %153 = vector.broadcast %cst_77 : f32 to vector<1x64xf32>
      %154 = arith.select %151, %152, %153 : vector<1x64xi1>, vector<1x64xf32>
      %c7_i32 = arith.constant 7 : i32
      %155 = vector.broadcast %c7_i32 : i32 to vector<1x64xi32>
      %156 = arith.cmpi slt, %149, %155 : vector<1x64xi32>
      %cst_78 = arith.constant 1.000000e+00 : f32
      %cst_79 = arith.constant 0.000000e+00 : f32
      %157 = vector.broadcast %cst_78 : f32 to vector<1x64xf32>
      %158 = vector.broadcast %cst_79 : f32 to vector<1x64xf32>
      %159 = arith.select %156, %157, %158 : vector<1x64xi1>, vector<1x64xf32>
      %160 = vector.extract_strided_slice %132 {offsets = [0, 0], sizes = [8, 64], strides = [1, 1]} : vector<8x82xf32> to vector<8x64xf32>
      %161 = vector.broadcast %154 : vector<1x64xf32> to vector<8x64xf32>
      %162 = arith.mulf %160, %161 : vector<8x64xf32>
      %c0_80 = arith.constant 0 : index
      %c0_81 = arith.constant 0 : index
      %c0_82 = arith.constant 0 : index
      %163 = vector.load %arg4[%c0_80, %c0_81, %c0_82] : memref<9x16x8xbf16, #tpu.memory_space<vmem>>, vector<1x16x8xbf16>
      %164 = vector.shape_cast %163 : vector<1x16x8xbf16> to vector<16x8xbf16>
      %165 = arith.truncf %162 : vector<8x64xf32> to vector<8x64xbf16>
      %cst_83 = arith.constant dense<0.000000e+00> : vector<16x64xf32>
      %166 = tpu.matmul %164, %165, %cst_83 {dimension_numbers = #tpu.dot_dimension_numbers<[1], [0], [0], [1], [0, 0, 1, 1], [], []>} : vector<16x8xbf16>, vector<8x64xbf16>, vector<16x64xf32> -> vector<16x64xf32>
      %167 = vector.extract_strided_slice %132 {offsets = [0, 1], sizes = [8, 64], strides = [1, 1]} : vector<8x82xf32> to vector<8x64xf32>
      %c1_84 = arith.constant 1 : index
      %c0_85 = arith.constant 0 : index
      %c0_86 = arith.constant 0 : index
      %168 = vector.load %arg4[%c1_84, %c0_85, %c0_86] : memref<9x16x8xbf16, #tpu.memory_space<vmem>>, vector<1x16x8xbf16>
      %169 = vector.shape_cast %168 : vector<1x16x8xbf16> to vector<16x8xbf16>
      %170 = arith.truncf %167 : vector<8x64xf32> to vector<8x64xbf16>
      %cst_87 = arith.constant dense<0.000000e+00> : vector<16x64xf32>
      %171 = tpu.matmul %169, %170, %cst_87 {dimension_numbers = #tpu.dot_dimension_numbers<[1], [0], [0], [1], [0, 0, 1, 1], [], []>} : vector<16x8xbf16>, vector<8x64xbf16>, vector<16x64xf32> -> vector<16x64xf32>
      %172 = arith.addf %166, %171 : vector<16x64xf32>
      %173 = vector.extract_strided_slice %132 {offsets = [0, 2], sizes = [8, 64], strides = [1, 1]} : vector<8x82xf32> to vector<8x64xf32>
      %174 = vector.broadcast %159 : vector<1x64xf32> to vector<8x64xf32>
      %175 = arith.mulf %173, %174 : vector<8x64xf32>
      %c2_88 = arith.constant 2 : index
      %c0_89 = arith.constant 0 : index
      %c0_90 = arith.constant 0 : index
      %176 = vector.load %arg4[%c2_88, %c0_89, %c0_90] : memref<9x16x8xbf16, #tpu.memory_space<vmem>>, vector<1x16x8xbf16>
      %177 = vector.shape_cast %176 : vector<1x16x8xbf16> to vector<16x8xbf16>
      %178 = arith.truncf %175 : vector<8x64xf32> to vector<8x64xbf16>
      %cst_91 = arith.constant dense<0.000000e+00> : vector<16x64xf32>
      %179 = tpu.matmul %177, %178, %cst_91 {dimension_numbers = #tpu.dot_dimension_numbers<[1], [0], [0], [1], [0, 0, 1, 1], [], []>} : vector<16x8xbf16>, vector<8x64xbf16>, vector<16x64xf32> -> vector<16x64xf32>
      %180 = arith.addf %172, %179 : vector<16x64xf32>
      %181 = vector.extract_strided_slice %132 {offsets = [0, 8], sizes = [8, 64], strides = [1, 1]} : vector<8x82xf32> to vector<8x64xf32>
      %182 = vector.broadcast %154 : vector<1x64xf32> to vector<8x64xf32>
      %183 = arith.mulf %181, %182 : vector<8x64xf32>
      %c3_92 = arith.constant 3 : index
      %c0_93 = arith.constant 0 : index
      %c0_94 = arith.constant 0 : index
      %184 = vector.load %arg4[%c3_92, %c0_93, %c0_94] : memref<9x16x8xbf16, #tpu.memory_space<vmem>>, vector<1x16x8xbf16>
      %185 = vector.shape_cast %184 : vector<1x16x8xbf16> to vector<16x8xbf16>
      %186 = arith.truncf %183 : vector<8x64xf32> to vector<8x64xbf16>
      %cst_95 = arith.constant dense<0.000000e+00> : vector<16x64xf32>
      %187 = tpu.matmul %185, %186, %cst_95 {dimension_numbers = #tpu.dot_dimension_numbers<[1], [0], [0], [1], [0, 0, 1, 1], [], []>} : vector<16x8xbf16>, vector<8x64xbf16>, vector<16x64xf32> -> vector<16x64xf32>
      %188 = arith.addf %180, %187 : vector<16x64xf32>
      %189 = vector.extract_strided_slice %132 {offsets = [0, 9], sizes = [8, 64], strides = [1, 1]} : vector<8x82xf32> to vector<8x64xf32>
      %c4_96 = arith.constant 4 : index
      %c0_97 = arith.constant 0 : index
      %c0_98 = arith.constant 0 : index
      %190 = vector.load %arg4[%c4_96, %c0_97, %c0_98] : memref<9x16x8xbf16, #tpu.memory_space<vmem>>, vector<1x16x8xbf16>
      %191 = vector.shape_cast %190 : vector<1x16x8xbf16> to vector<16x8xbf16>
      %192 = arith.truncf %189 : vector<8x64xf32> to vector<8x64xbf16>
      %cst_99 = arith.constant dense<0.000000e+00> : vector<16x64xf32>
      %193 = tpu.matmul %191, %192, %cst_99 {dimension_numbers = #tpu.dot_dimension_numbers<[1], [0], [0], [1], [0, 0, 1, 1], [], []>} : vector<16x8xbf16>, vector<8x64xbf16>, vector<16x64xf32> -> vector<16x64xf32>
      %194 = arith.addf %188, %193 : vector<16x64xf32>
      %195 = vector.extract_strided_slice %132 {offsets = [0, 10], sizes = [8, 64], strides = [1, 1]} : vector<8x82xf32> to vector<8x64xf32>
      %196 = vector.broadcast %159 : vector<1x64xf32> to vector<8x64xf32>
      %197 = arith.mulf %195, %196 : vector<8x64xf32>
      %c5_100 = arith.constant 5 : index
      %c0_101 = arith.constant 0 : index
      %c0_102 = arith.constant 0 : index
      %198 = vector.load %arg4[%c5_100, %c0_101, %c0_102] : memref<9x16x8xbf16, #tpu.memory_space<vmem>>, vector<1x16x8xbf16>
      %199 = vector.shape_cast %198 : vector<1x16x8xbf16> to vector<16x8xbf16>
      %200 = arith.truncf %197 : vector<8x64xf32> to vector<8x64xbf16>
      %cst_103 = arith.constant dense<0.000000e+00> : vector<16x64xf32>
      %201 = tpu.matmul %199, %200, %cst_103 {dimension_numbers = #tpu.dot_dimension_numbers<[1], [0], [0], [1], [0, 0, 1, 1], [], []>} : vector<16x8xbf16>, vector<8x64xbf16>, vector<16x64xf32> -> vector<16x64xf32>
      %202 = arith.addf %194, %201 : vector<16x64xf32>
      %203 = vector.extract_strided_slice %132 {offsets = [0, 16], sizes = [8, 64], strides = [1, 1]} : vector<8x82xf32> to vector<8x64xf32>
      %204 = vector.broadcast %154 : vector<1x64xf32> to vector<8x64xf32>
      %205 = arith.mulf %203, %204 : vector<8x64xf32>
      %c6_104 = arith.constant 6 : index
      %c0_105 = arith.constant 0 : index
      %c0_106 = arith.constant 0 : index
      %206 = vector.load %arg4[%c6_104, %c0_105, %c0_106] : memref<9x16x8xbf16, #tpu.memory_space<vmem>>, vector<1x16x8xbf16>
      %207 = vector.shape_cast %206 : vector<1x16x8xbf16> to vector<16x8xbf16>
      %208 = arith.truncf %205 : vector<8x64xf32> to vector<8x64xbf16>
      %cst_107 = arith.constant dense<0.000000e+00> : vector<16x64xf32>
      %209 = tpu.matmul %207, %208, %cst_107 {dimension_numbers = #tpu.dot_dimension_numbers<[1], [0], [0], [1], [0, 0, 1, 1], [], []>} : vector<16x8xbf16>, vector<8x64xbf16>, vector<16x64xf32> -> vector<16x64xf32>
      %210 = arith.addf %202, %209 : vector<16x64xf32>
      %211 = vector.extract_strided_slice %132 {offsets = [0, 17], sizes = [8, 64], strides = [1, 1]} : vector<8x82xf32> to vector<8x64xf32>
      %c7_108 = arith.constant 7 : index
      %c0_109 = arith.constant 0 : index
      %c0_110 = arith.constant 0 : index
      %212 = vector.load %arg4[%c7_108, %c0_109, %c0_110] : memref<9x16x8xbf16, #tpu.memory_space<vmem>>, vector<1x16x8xbf16>
      %213 = vector.shape_cast %212 : vector<1x16x8xbf16> to vector<16x8xbf16>
      %214 = arith.truncf %211 : vector<8x64xf32> to vector<8x64xbf16>
      %cst_111 = arith.constant dense<0.000000e+00> : vector<16x64xf32>
      %215 = tpu.matmul %213, %214, %cst_111 {dimension_numbers = #tpu.dot_dimension_numbers<[1], [0], [0], [1], [0, 0, 1, 1], [], []>} : vector<16x8xbf16>, vector<8x64xbf16>, vector<16x64xf32> -> vector<16x64xf32>
      %216 = arith.addf %210, %215 : vector<16x64xf32>
      %217 = vector.extract_strided_slice %132 {offsets = [0, 18], sizes = [8, 64], strides = [1, 1]} : vector<8x82xf32> to vector<8x64xf32>
      %218 = vector.broadcast %159 : vector<1x64xf32> to vector<8x64xf32>
      %219 = arith.mulf %217, %218 : vector<8x64xf32>
      %c8_112 = arith.constant 8 : index
      %c0_113 = arith.constant 0 : index
      %c0_114 = arith.constant 0 : index
      %220 = vector.load %arg4[%c8_112, %c0_113, %c0_114] : memref<9x16x8xbf16, #tpu.memory_space<vmem>>, vector<1x16x8xbf16>
      %221 = vector.shape_cast %220 : vector<1x16x8xbf16> to vector<16x8xbf16>
      %222 = arith.truncf %219 : vector<8x64xf32> to vector<8x64xbf16>
      %cst_115 = arith.constant dense<0.000000e+00> : vector<16x64xf32>
      %223 = tpu.matmul %221, %222, %cst_115 {dimension_numbers = #tpu.dot_dimension_numbers<[1], [0], [0], [1], [0, 0, 1, 1], [], []>} : vector<16x8xbf16>, vector<8x64xbf16>, vector<16x64xf32> -> vector<16x64xf32>
      %224 = arith.addf %216, %223 : vector<16x64xf32>
      %c0_116 = arith.constant 0 : index
      %c0_117 = arith.constant 0 : index
      %225 = vector.load %arg5[%c0_116, %c0_117] : memref<16x1xf32, #tpu.memory_space<vmem>>, vector<16x1xf32>
      %226 = vector.broadcast %225 : vector<16x1xf32> to vector<16x64xf32>
      %227 = arith.addf %224, %226 : vector<16x64xf32>
      %cst_118 = arith.constant 0.000000e+00 : f32
      %228 = vector.broadcast %cst_118 : f32 to vector<16x64xf32>
      %229 = arith.maximumf %227, %228 : vector<16x64xf32>
      %230 = arith.truncf %229 : vector<16x64xf32> to vector<16x64xbf16>
      %c0_119 = arith.constant 0 : index
      %c0_120 = arith.constant 0 : index
      %231 = vector.load %arg12[%c0_119, %c0_120] : memref<64x256xbf16, #tpu.memory_space<vmem>>, vector<64x256xbf16>
      %cst_121 = arith.constant dense<0.000000e+00> : vector<16x256xf32>
      %232 = tpu.matmul %230, %231, %cst_121 {dimension_numbers = #tpu.dot_dimension_numbers<[1], [0], [0], [1], [0, 0, 1, 1], [], []>} : vector<16x64xbf16>, vector<64x256xbf16>, vector<16x256xf32> -> vector<16x256xf32>
      %cst_122 = arith.constant 0.000000e+00 : f32
      %233 = vector.broadcast %cst_122 : f32 to vector<16x17xf32>
      %234 = tpu.concatenate %233, %232, %233 in 1 : vector<16x17xf32>, vector<16x256xf32>, vector<16x17xf32> -> vector<16x290xf32>
      %235 = tpu.iota {dimensions = array<i32: 1>} : vector<1x256xi32>
      %c16_i32_123 = arith.constant 16 : i32
      %c0_i32_124 = arith.constant 0 : i32
      %236 = arith.cmpi eq, %c16_i32_123, %c0_i32_124 : i32
      %c1_i32_125 = arith.constant 1 : i32
      %237 = arith.select %236, %c1_i32_125, %c16_i32_123 : i32
      %238 = vector.broadcast %237 : i32 to vector<1x256xi32>
      %239 = arith.remsi %235, %238 : vector<1x256xi32>
      %c0_i32_126 = arith.constant 0 : i32
      %240 = vector.broadcast %c0_i32_126 : i32 to vector<1x256xi32>
      %241 = arith.cmpi ne, %239, %240 : vector<1x256xi32>
      %c0_i32_127 = arith.constant 0 : i32
      %242 = vector.broadcast %c0_i32_127 : i32 to vector<1x256xi32>
      %243 = arith.cmpi slt, %239, %242 : vector<1x256xi32>
      %c0_i32_128 = arith.constant 0 : i32
      %244 = arith.cmpi slt, %237, %c0_i32_128 : i32
      %245 = vector.broadcast %244 : i1 to vector<1x256xi1>
      %246 = vector.broadcast %245 : vector<1x256xi1> to vector<1x256xi1>
      %247 = arith.xori %243, %246 : vector<1x256xi1>
      %248 = arith.andi %247, %241 : vector<1x256xi1>
      %249 = vector.broadcast %237 : i32 to vector<1x256xi32>
      %250 = arith.addi %239, %249 : vector<1x256xi32>
      %251 = arith.select %248, %250, %239 : vector<1x256xi1>, vector<1x256xi32>
      %c0_i32_129 = arith.constant 0 : i32
      %252 = vector.broadcast %c0_i32_129 : i32 to vector<1x256xi32>
      %253 = arith.cmpi sgt, %251, %252 : vector<1x256xi32>
      %cst_130 = arith.constant 1.000000e+00 : f32
      %cst_131 = arith.constant 0.000000e+00 : f32
      %254 = vector.broadcast %cst_130 : f32 to vector<1x256xf32>
      %255 = vector.broadcast %cst_131 : f32 to vector<1x256xf32>
      %256 = arith.select %253, %254, %255 : vector<1x256xi1>, vector<1x256xf32>
      %c15_i32_132 = arith.constant 15 : i32
      %257 = vector.broadcast %c15_i32_132 : i32 to vector<1x256xi32>
      %258 = arith.cmpi slt, %251, %257 : vector<1x256xi32>
      %cst_133 = arith.constant 1.000000e+00 : f32
      %cst_134 = arith.constant 0.000000e+00 : f32
      %259 = vector.broadcast %cst_133 : f32 to vector<1x256xf32>
      %260 = vector.broadcast %cst_134 : f32 to vector<1x256xf32>
      %261 = arith.select %258, %259, %260 : vector<1x256xi1>, vector<1x256xf32>
      %262 = vector.extract_strided_slice %234 {offsets = [0, 0], sizes = [16, 256], strides = [1, 1]} : vector<16x290xf32> to vector<16x256xf32>
      %263 = vector.broadcast %256 : vector<1x256xf32> to vector<16x256xf32>
      %264 = arith.mulf %262, %263 : vector<16x256xf32>
      %c0_135 = arith.constant 0 : index
      %c0_136 = arith.constant 0 : index
      %c0_137 = arith.constant 0 : index
      %265 = vector.load %arg6[%c0_135, %c0_136, %c0_137] : memref<9x8x16xbf16, #tpu.memory_space<vmem>>, vector<1x8x16xbf16>
      %266 = vector.shape_cast %265 : vector<1x8x16xbf16> to vector<8x16xbf16>
      %267 = arith.truncf %264 : vector<16x256xf32> to vector<16x256xbf16>
      %cst_138 = arith.constant dense<0.000000e+00> : vector<8x256xf32>
      %268 = tpu.matmul %266, %267, %cst_138 {dimension_numbers = #tpu.dot_dimension_numbers<[1], [0], [0], [1], [0, 0, 1, 1], [], []>} : vector<8x16xbf16>, vector<16x256xbf16>, vector<8x256xf32> -> vector<8x256xf32>
      %269 = vector.extract_strided_slice %234 {offsets = [0, 1], sizes = [16, 256], strides = [1, 1]} : vector<16x290xf32> to vector<16x256xf32>
      %c1_139 = arith.constant 1 : index
      %c0_140 = arith.constant 0 : index
      %c0_141 = arith.constant 0 : index
      %270 = vector.load %arg6[%c1_139, %c0_140, %c0_141] : memref<9x8x16xbf16, #tpu.memory_space<vmem>>, vector<1x8x16xbf16>
      %271 = vector.shape_cast %270 : vector<1x8x16xbf16> to vector<8x16xbf16>
      %272 = arith.truncf %269 : vector<16x256xf32> to vector<16x256xbf16>
      %cst_142 = arith.constant dense<0.000000e+00> : vector<8x256xf32>
      %273 = tpu.matmul %271, %272, %cst_142 {dimension_numbers = #tpu.dot_dimension_numbers<[1], [0], [0], [1], [0, 0, 1, 1], [], []>} : vector<8x16xbf16>, vector<16x256xbf16>, vector<8x256xf32> -> vector<8x256xf32>
      %274 = arith.addf %268, %273 : vector<8x256xf32>
      %275 = vector.extract_strided_slice %234 {offsets = [0, 2], sizes = [16, 256], strides = [1, 1]} : vector<16x290xf32> to vector<16x256xf32>
      %276 = vector.broadcast %261 : vector<1x256xf32> to vector<16x256xf32>
      %277 = arith.mulf %275, %276 : vector<16x256xf32>
      %c2_143 = arith.constant 2 : index
      %c0_144 = arith.constant 0 : index
      %c0_145 = arith.constant 0 : index
      %278 = vector.load %arg6[%c2_143, %c0_144, %c0_145] : memref<9x8x16xbf16, #tpu.memory_space<vmem>>, vector<1x8x16xbf16>
      %279 = vector.shape_cast %278 : vector<1x8x16xbf16> to vector<8x16xbf16>
      %280 = arith.truncf %277 : vector<16x256xf32> to vector<16x256xbf16>
      %cst_146 = arith.constant dense<0.000000e+00> : vector<8x256xf32>
      %281 = tpu.matmul %279, %280, %cst_146 {dimension_numbers = #tpu.dot_dimension_numbers<[1], [0], [0], [1], [0, 0, 1, 1], [], []>} : vector<8x16xbf16>, vector<16x256xbf16>, vector<8x256xf32> -> vector<8x256xf32>
      %282 = arith.addf %274, %281 : vector<8x256xf32>
      %283 = vector.extract_strided_slice %234 {offsets = [0, 16], sizes = [16, 256], strides = [1, 1]} : vector<16x290xf32> to vector<16x256xf32>
      %284 = vector.broadcast %256 : vector<1x256xf32> to vector<16x256xf32>
      %285 = arith.mulf %283, %284 : vector<16x256xf32>
      %c3_147 = arith.constant 3 : index
      %c0_148 = arith.constant 0 : index
      %c0_149 = arith.constant 0 : index
      %286 = vector.load %arg6[%c3_147, %c0_148, %c0_149] : memref<9x8x16xbf16, #tpu.memory_space<vmem>>, vector<1x8x16xbf16>
      %287 = vector.shape_cast %286 : vector<1x8x16xbf16> to vector<8x16xbf16>
      %288 = arith.truncf %285 : vector<16x256xf32> to vector<16x256xbf16>
      %cst_150 = arith.constant dense<0.000000e+00> : vector<8x256xf32>
      %289 = tpu.matmul %287, %288, %cst_150 {dimension_numbers = #tpu.dot_dimension_numbers<[1], [0], [0], [1], [0, 0, 1, 1], [], []>} : vector<8x16xbf16>, vector<16x256xbf16>, vector<8x256xf32> -> vector<8x256xf32>
      %290 = arith.addf %282, %289 : vector<8x256xf32>
      %291 = vector.extract_strided_slice %234 {offsets = [0, 17], sizes = [16, 256], strides = [1, 1]} : vector<16x290xf32> to vector<16x256xf32>
      %c4_151 = arith.constant 4 : index
      %c0_152 = arith.constant 0 : index
      %c0_153 = arith.constant 0 : index
      %292 = vector.load %arg6[%c4_151, %c0_152, %c0_153] : memref<9x8x16xbf16, #tpu.memory_space<vmem>>, vector<1x8x16xbf16>
      %293 = vector.shape_cast %292 : vector<1x8x16xbf16> to vector<8x16xbf16>
      %294 = arith.truncf %291 : vector<16x256xf32> to vector<16x256xbf16>
      %cst_154 = arith.constant dense<0.000000e+00> : vector<8x256xf32>
      %295 = tpu.matmul %293, %294, %cst_154 {dimension_numbers = #tpu.dot_dimension_numbers<[1], [0], [0], [1], [0, 0, 1, 1], [], []>} : vector<8x16xbf16>, vector<16x256xbf16>, vector<8x256xf32> -> vector<8x256xf32>
      %296 = arith.addf %290, %295 : vector<8x256xf32>
      %297 = vector.extract_strided_slice %234 {offsets = [0, 18], sizes = [16, 256], strides = [1, 1]} : vector<16x290xf32> to vector<16x256xf32>
      %298 = vector.broadcast %261 : vector<1x256xf32> to vector<16x256xf32>
      %299 = arith.mulf %297, %298 : vector<16x256xf32>
      %c5_155 = arith.constant 5 : index
      %c0_156 = arith.constant 0 : index
      %c0_157 = arith.constant 0 : index
      %300 = vector.load %arg6[%c5_155, %c0_156, %c0_157] : memref<9x8x16xbf16, #tpu.memory_space<vmem>>, vector<1x8x16xbf16>
      %301 = vector.shape_cast %300 : vector<1x8x16xbf16> to vector<8x16xbf16>
      %302 = arith.truncf %299 : vector<16x256xf32> to vector<16x256xbf16>
      %cst_158 = arith.constant dense<0.000000e+00> : vector<8x256xf32>
      %303 = tpu.matmul %301, %302, %cst_158 {dimension_numbers = #tpu.dot_dimension_numbers<[1], [0], [0], [1], [0, 0, 1, 1], [], []>} : vector<8x16xbf16>, vector<16x256xbf16>, vector<8x256xf32> -> vector<8x256xf32>
      %304 = arith.addf %296, %303 : vector<8x256xf32>
      %305 = vector.extract_strided_slice %234 {offsets = [0, 32], sizes = [16, 256], strides = [1, 1]} : vector<16x290xf32> to vector<16x256xf32>
      %306 = vector.broadcast %256 : vector<1x256xf32> to vector<16x256xf32>
      %307 = arith.mulf %305, %306 : vector<16x256xf32>
      %c6_159 = arith.constant 6 : index
      %c0_160 = arith.constant 0 : index
      %c0_161 = arith.constant 0 : index
      %308 = vector.load %arg6[%c6_159, %c0_160, %c0_161] : memref<9x8x16xbf16, #tpu.memory_space<vmem>>, vector<1x8x16xbf16>
      %309 = vector.shape_cast %308 : vector<1x8x16xbf16> to vector<8x16xbf16>
      %310 = arith.truncf %307 : vector<16x256xf32> to vector<16x256xbf16>
      %cst_162 = arith.constant dense<0.000000e+00> : vector<8x256xf32>
      %311 = tpu.matmul %309, %310, %cst_162 {dimension_numbers = #tpu.dot_dimension_numbers<[1], [0], [0], [1], [0, 0, 1, 1], [], []>} : vector<8x16xbf16>, vector<16x256xbf16>, vector<8x256xf32> -> vector<8x256xf32>
      %312 = arith.addf %304, %311 : vector<8x256xf32>
      %313 = vector.extract_strided_slice %234 {offsets = [0, 33], sizes = [16, 256], strides = [1, 1]} : vector<16x290xf32> to vector<16x256xf32>
      %c7_163 = arith.constant 7 : index
      %c0_164 = arith.constant 0 : index
      %c0_165 = arith.constant 0 : index
      %314 = vector.load %arg6[%c7_163, %c0_164, %c0_165] : memref<9x8x16xbf16, #tpu.memory_space<vmem>>, vector<1x8x16xbf16>
      %315 = vector.shape_cast %314 : vector<1x8x16xbf16> to vector<8x16xbf16>
      %316 = arith.truncf %313 : vector<16x256xf32> to vector<16x256xbf16>
      %cst_166 = arith.constant dense<0.000000e+00> : vector<8x256xf32>
      %317 = tpu.matmul %315, %316, %cst_166 {dimension_numbers = #tpu.dot_dimension_numbers<[1], [0], [0], [1], [0, 0, 1, 1], [], []>} : vector<8x16xbf16>, vector<16x256xbf16>, vector<8x256xf32> -> vector<8x256xf32>
      %318 = arith.addf %312, %317 : vector<8x256xf32>
      %319 = vector.extract_strided_slice %234 {offsets = [0, 34], sizes = [16, 256], strides = [1, 1]} : vector<16x290xf32> to vector<16x256xf32>
      %320 = vector.broadcast %261 : vector<1x256xf32> to vector<16x256xf32>
      %321 = arith.mulf %319, %320 : vector<16x256xf32>
      %c8_167 = arith.constant 8 : index
      %c0_168 = arith.constant 0 : index
      %c0_169 = arith.constant 0 : index
      %322 = vector.load %arg6[%c8_167, %c0_168, %c0_169] : memref<9x8x16xbf16, #tpu.memory_space<vmem>>, vector<1x8x16xbf16>
      %323 = vector.shape_cast %322 : vector<1x8x16xbf16> to vector<8x16xbf16>
      %324 = arith.truncf %321 : vector<16x256xf32> to vector<16x256xbf16>
      %cst_170 = arith.constant dense<0.000000e+00> : vector<8x256xf32>
      %325 = tpu.matmul %323, %324, %cst_170 {dimension_numbers = #tpu.dot_dimension_numbers<[1], [0], [0], [1], [0, 0, 1, 1], [], []>} : vector<8x16xbf16>, vector<16x256xbf16>, vector<8x256xf32> -> vector<8x256xf32>
      %326 = arith.addf %318, %325 : vector<8x256xf32>
      %cst_171 = arith.constant 0.000000e+00 : f32
      %327 = vector.broadcast %cst_171 : f32 to vector<8x17xf32>
      %328 = tpu.concatenate %327, %127, %327 in 1 : vector<8x17xf32>, vector<8x256xf32>, vector<8x17xf32> -> vector<8x290xf32>
      %329 = tpu.iota {dimensions = array<i32: 1>} : vector<1x256xi32>
      %c16_i32_172 = arith.constant 16 : i32
      %c0_i32_173 = arith.constant 0 : i32
      %330 = arith.cmpi eq, %c16_i32_172, %c0_i32_173 : i32
      %c1_i32_174 = arith.constant 1 : i32
      %331 = arith.select %330, %c1_i32_174, %c16_i32_172 : i32
      %332 = vector.broadcast %331 : i32 to vector<1x256xi32>
      %333 = arith.remsi %329, %332 : vector<1x256xi32>
      %c0_i32_175 = arith.constant 0 : i32
      %334 = vector.broadcast %c0_i32_175 : i32 to vector<1x256xi32>
      %335 = arith.cmpi ne, %333, %334 : vector<1x256xi32>
      %c0_i32_176 = arith.constant 0 : i32
      %336 = vector.broadcast %c0_i32_176 : i32 to vector<1x256xi32>
      %337 = arith.cmpi slt, %333, %336 : vector<1x256xi32>
      %c0_i32_177 = arith.constant 0 : i32
      %338 = arith.cmpi slt, %331, %c0_i32_177 : i32
      %339 = vector.broadcast %338 : i1 to vector<1x256xi1>
      %340 = vector.broadcast %339 : vector<1x256xi1> to vector<1x256xi1>
      %341 = arith.xori %337, %340 : vector<1x256xi1>
      %342 = arith.andi %341, %335 : vector<1x256xi1>
      %343 = vector.broadcast %331 : i32 to vector<1x256xi32>
      %344 = arith.addi %333, %343 : vector<1x256xi32>
      %345 = arith.select %342, %344, %333 : vector<1x256xi1>, vector<1x256xi32>
      %c0_i32_178 = arith.constant 0 : i32
      %346 = vector.broadcast %c0_i32_178 : i32 to vector<1x256xi32>
      %347 = arith.cmpi sgt, %345, %346 : vector<1x256xi32>
      %cst_179 = arith.constant 1.000000e+00 : f32
      %cst_180 = arith.constant 0.000000e+00 : f32
      %348 = vector.broadcast %cst_179 : f32 to vector<1x256xf32>
      %349 = vector.broadcast %cst_180 : f32 to vector<1x256xf32>
      %350 = arith.select %347, %348, %349 : vector<1x256xi1>, vector<1x256xf32>
      %c15_i32_181 = arith.constant 15 : i32
      %351 = vector.broadcast %c15_i32_181 : i32 to vector<1x256xi32>
      %352 = arith.cmpi slt, %345, %351 : vector<1x256xi32>
      %cst_182 = arith.constant 1.000000e+00 : f32
      %cst_183 = arith.constant 0.000000e+00 : f32
      %353 = vector.broadcast %cst_182 : f32 to vector<1x256xf32>
      %354 = vector.broadcast %cst_183 : f32 to vector<1x256xf32>
      %355 = arith.select %352, %353, %354 : vector<1x256xi1>, vector<1x256xf32>
      %356 = vector.extract_strided_slice %328 {offsets = [0, 0], sizes = [8, 256], strides = [1, 1]} : vector<8x290xf32> to vector<8x256xf32>
      %357 = vector.broadcast %350 : vector<1x256xf32> to vector<8x256xf32>
      %358 = arith.mulf %356, %357 : vector<8x256xf32>
      %c0_184 = arith.constant 0 : index
      %c0_185 = arith.constant 0 : index
      %c0_186 = arith.constant 0 : index
      %359 = vector.load %arg7[%c0_184, %c0_185, %c0_186] : memref<9x8x8xbf16, #tpu.memory_space<vmem>>, vector<1x8x8xbf16>
      %360 = vector.shape_cast %359 : vector<1x8x8xbf16> to vector<8x8xbf16>
      %361 = arith.truncf %358 : vector<8x256xf32> to vector<8x256xbf16>
      %cst_187 = arith.constant dense<0.000000e+00> : vector<8x256xf32>
      %362 = tpu.matmul %360, %361, %cst_187 {dimension_numbers = #tpu.dot_dimension_numbers<[1], [0], [0], [1], [0, 0, 1, 1], [], []>} : vector<8x8xbf16>, vector<8x256xbf16>, vector<8x256xf32> -> vector<8x256xf32>
      %363 = vector.extract_strided_slice %328 {offsets = [0, 1], sizes = [8, 256], strides = [1, 1]} : vector<8x290xf32> to vector<8x256xf32>
      %c1_188 = arith.constant 1 : index
      %c0_189 = arith.constant 0 : index
      %c0_190 = arith.constant 0 : index
      %364 = vector.load %arg7[%c1_188, %c0_189, %c0_190] : memref<9x8x8xbf16, #tpu.memory_space<vmem>>, vector<1x8x8xbf16>
      %365 = vector.shape_cast %364 : vector<1x8x8xbf16> to vector<8x8xbf16>
      %366 = arith.truncf %363 : vector<8x256xf32> to vector<8x256xbf16>
      %cst_191 = arith.constant dense<0.000000e+00> : vector<8x256xf32>
      %367 = tpu.matmul %365, %366, %cst_191 {dimension_numbers = #tpu.dot_dimension_numbers<[1], [0], [0], [1], [0, 0, 1, 1], [], []>} : vector<8x8xbf16>, vector<8x256xbf16>, vector<8x256xf32> -> vector<8x256xf32>
      %368 = arith.addf %362, %367 : vector<8x256xf32>
      %369 = vector.extract_strided_slice %328 {offsets = [0, 2], sizes = [8, 256], strides = [1, 1]} : vector<8x290xf32> to vector<8x256xf32>
      %370 = vector.broadcast %355 : vector<1x256xf32> to vector<8x256xf32>
      %371 = arith.mulf %369, %370 : vector<8x256xf32>
      %c2_192 = arith.constant 2 : index
      %c0_193 = arith.constant 0 : index
      %c0_194 = arith.constant 0 : index
      %372 = vector.load %arg7[%c2_192, %c0_193, %c0_194] : memref<9x8x8xbf16, #tpu.memory_space<vmem>>, vector<1x8x8xbf16>
      %373 = vector.shape_cast %372 : vector<1x8x8xbf16> to vector<8x8xbf16>
      %374 = arith.truncf %371 : vector<8x256xf32> to vector<8x256xbf16>
      %cst_195 = arith.constant dense<0.000000e+00> : vector<8x256xf32>
      %375 = tpu.matmul %373, %374, %cst_195 {dimension_numbers = #tpu.dot_dimension_numbers<[1], [0], [0], [1], [0, 0, 1, 1], [], []>} : vector<8x8xbf16>, vector<8x256xbf16>, vector<8x256xf32> -> vector<8x256xf32>
      %376 = arith.addf %368, %375 : vector<8x256xf32>
      %377 = vector.extract_strided_slice %328 {offsets = [0, 16], sizes = [8, 256], strides = [1, 1]} : vector<8x290xf32> to vector<8x256xf32>
      %378 = vector.broadcast %350 : vector<1x256xf32> to vector<8x256xf32>
      %379 = arith.mulf %377, %378 : vector<8x256xf32>
      %c3_196 = arith.constant 3 : index
      %c0_197 = arith.constant 0 : index
      %c0_198 = arith.constant 0 : index
      %380 = vector.load %arg7[%c3_196, %c0_197, %c0_198] : memref<9x8x8xbf16, #tpu.memory_space<vmem>>, vector<1x8x8xbf16>
      %381 = vector.shape_cast %380 : vector<1x8x8xbf16> to vector<8x8xbf16>
      %382 = arith.truncf %379 : vector<8x256xf32> to vector<8x256xbf16>
      %cst_199 = arith.constant dense<0.000000e+00> : vector<8x256xf32>
      %383 = tpu.matmul %381, %382, %cst_199 {dimension_numbers = #tpu.dot_dimension_numbers<[1], [0], [0], [1], [0, 0, 1, 1], [], []>} : vector<8x8xbf16>, vector<8x256xbf16>, vector<8x256xf32> -> vector<8x256xf32>
      %384 = arith.addf %376, %383 : vector<8x256xf32>
      %385 = vector.extract_strided_slice %328 {offsets = [0, 17], sizes = [8, 256], strides = [1, 1]} : vector<8x290xf32> to vector<8x256xf32>
      %c4_200 = arith.constant 4 : index
      %c0_201 = arith.constant 0 : index
      %c0_202 = arith.constant 0 : index
      %386 = vector.load %arg7[%c4_200, %c0_201, %c0_202] : memref<9x8x8xbf16, #tpu.memory_space<vmem>>, vector<1x8x8xbf16>
      %387 = vector.shape_cast %386 : vector<1x8x8xbf16> to vector<8x8xbf16>
      %388 = arith.truncf %385 : vector<8x256xf32> to vector<8x256xbf16>
      %cst_203 = arith.constant dense<0.000000e+00> : vector<8x256xf32>
      %389 = tpu.matmul %387, %388, %cst_203 {dimension_numbers = #tpu.dot_dimension_numbers<[1], [0], [0], [1], [0, 0, 1, 1], [], []>} : vector<8x8xbf16>, vector<8x256xbf16>, vector<8x256xf32> -> vector<8x256xf32>
      %390 = arith.addf %384, %389 : vector<8x256xf32>
      %391 = vector.extract_strided_slice %328 {offsets = [0, 18], sizes = [8, 256], strides = [1, 1]} : vector<8x290xf32> to vector<8x256xf32>
      %392 = vector.broadcast %355 : vector<1x256xf32> to vector<8x256xf32>
      %393 = arith.mulf %391, %392 : vector<8x256xf32>
      %c5_204 = arith.constant 5 : index
      %c0_205 = arith.constant 0 : index
      %c0_206 = arith.constant 0 : index
      %394 = vector.load %arg7[%c5_204, %c0_205, %c0_206] : memref<9x8x8xbf16, #tpu.memory_space<vmem>>, vector<1x8x8xbf16>
      %395 = vector.shape_cast %394 : vector<1x8x8xbf16> to vector<8x8xbf16>
      %396 = arith.truncf %393 : vector<8x256xf32> to vector<8x256xbf16>
      %cst_207 = arith.constant dense<0.000000e+00> : vector<8x256xf32>
      %397 = tpu.matmul %395, %396, %cst_207 {dimension_numbers = #tpu.dot_dimension_numbers<[1], [0], [0], [1], [0, 0, 1, 1], [], []>} : vector<8x8xbf16>, vector<8x256xbf16>, vector<8x256xf32> -> vector<8x256xf32>
      %398 = arith.addf %390, %397 : vector<8x256xf32>
      %399 = vector.extract_strided_slice %328 {offsets = [0, 32], sizes = [8, 256], strides = [1, 1]} : vector<8x290xf32> to vector<8x256xf32>
      %400 = vector.broadcast %350 : vector<1x256xf32> to vector<8x256xf32>
      %401 = arith.mulf %399, %400 : vector<8x256xf32>
      %c6_208 = arith.constant 6 : index
      %c0_209 = arith.constant 0 : index
      %c0_210 = arith.constant 0 : index
      %402 = vector.load %arg7[%c6_208, %c0_209, %c0_210] : memref<9x8x8xbf16, #tpu.memory_space<vmem>>, vector<1x8x8xbf16>
      %403 = vector.shape_cast %402 : vector<1x8x8xbf16> to vector<8x8xbf16>
      %404 = arith.truncf %401 : vector<8x256xf32> to vector<8x256xbf16>
      %cst_211 = arith.constant dense<0.000000e+00> : vector<8x256xf32>
      %405 = tpu.matmul %403, %404, %cst_211 {dimension_numbers = #tpu.dot_dimension_numbers<[1], [0], [0], [1], [0, 0, 1, 1], [], []>} : vector<8x8xbf16>, vector<8x256xbf16>, vector<8x256xf32> -> vector<8x256xf32>
      %406 = arith.addf %398, %405 : vector<8x256xf32>
      %407 = vector.extract_strided_slice %328 {offsets = [0, 33], sizes = [8, 256], strides = [1, 1]} : vector<8x290xf32> to vector<8x256xf32>
      %c7_212 = arith.constant 7 : index
      %c0_213 = arith.constant 0 : index
      %c0_214 = arith.constant 0 : index
      %408 = vector.load %arg7[%c7_212, %c0_213, %c0_214] : memref<9x8x8xbf16, #tpu.memory_space<vmem>>, vector<1x8x8xbf16>
      %409 = vector.shape_cast %408 : vector<1x8x8xbf16> to vector<8x8xbf16>
      %410 = arith.truncf %407 : vector<8x256xf32> to vector<8x256xbf16>
      %cst_215 = arith.constant dense<0.000000e+00> : vector<8x256xf32>
      %411 = tpu.matmul %409, %410, %cst_215 {dimension_numbers = #tpu.dot_dimension_numbers<[1], [0], [0], [1], [0, 0, 1, 1], [], []>} : vector<8x8xbf16>, vector<8x256xbf16>, vector<8x256xf32> -> vector<8x256xf32>
      %412 = arith.addf %406, %411 : vector<8x256xf32>
      %413 = vector.extract_strided_slice %328 {offsets = [0, 34], sizes = [8, 256], strides = [1, 1]} : vector<8x290xf32> to vector<8x256xf32>
      %414 = vector.broadcast %355 : vector<1x256xf32> to vector<8x256xf32>
      %415 = arith.mulf %413, %414 : vector<8x256xf32>
      %c8_216 = arith.constant 8 : index
      %c0_217 = arith.constant 0 : index
      %c0_218 = arith.constant 0 : index
      %416 = vector.load %arg7[%c8_216, %c0_217, %c0_218] : memref<9x8x8xbf16, #tpu.memory_space<vmem>>, vector<1x8x8xbf16>
      %417 = vector.shape_cast %416 : vector<1x8x8xbf16> to vector<8x8xbf16>
      %418 = arith.truncf %415 : vector<8x256xf32> to vector<8x256xbf16>
      %cst_219 = arith.constant dense<0.000000e+00> : vector<8x256xf32>
      %419 = tpu.matmul %417, %418, %cst_219 {dimension_numbers = #tpu.dot_dimension_numbers<[1], [0], [0], [1], [0, 0, 1, 1], [], []>} : vector<8x8xbf16>, vector<8x256xbf16>, vector<8x256xf32> -> vector<8x256xf32>
      %420 = arith.addf %412, %419 : vector<8x256xf32>
      %421 = arith.addf %326, %420 : vector<8x256xf32>
      %c0_220 = arith.constant 0 : index
      %c0_221 = arith.constant 0 : index
      %422 = vector.load %arg8[%c0_220, %c0_221] : memref<8x1xf32, #tpu.memory_space<vmem>>, vector<8x1xf32>
      %423 = vector.broadcast %422 : vector<8x1xf32> to vector<8x256xf32>
      %424 = arith.addf %421, %423 : vector<8x256xf32>
      %cst_222 = arith.constant 0.000000e+00 : f32
      %425 = vector.broadcast %cst_222 : f32 to vector<8x256xf32>
      %426 = arith.maximumf %424, %425 : vector<8x256xf32>
      %c0_223 = arith.constant 0 : index
      %c0_224 = arith.constant 0 : index
      %427 = vector.load %arg9[%c0_223, %c0_224] : memref<4x8xbf16, #tpu.memory_space<vmem>>, vector<4x8xbf16>
      %428 = arith.truncf %426 : vector<8x256xf32> to vector<8x256xbf16>
      %cst_225 = arith.constant dense<0.000000e+00> : vector<4x256xf32>
      %429 = tpu.matmul %427, %428, %cst_225 {dimension_numbers = #tpu.dot_dimension_numbers<[1], [0], [0], [1], [0, 0, 1, 1], [], []>} : vector<4x8xbf16>, vector<8x256xbf16>, vector<4x256xf32> -> vector<4x256xf32>
      %c0_226 = arith.constant 0 : index
      %c0_227 = arith.constant 0 : index
      %430 = vector.load %arg10[%c0_226, %c0_227] : memref<4x1xf32, #tpu.memory_space<vmem>>, vector<4x1xf32>
      %431 = vector.broadcast %430 : vector<4x1xf32> to vector<4x256xf32>
      %432 = arith.addf %429, %431 : vector<4x256xf32>
      %c0_228 = arith.constant 0 : index
      %c0_229 = arith.constant 0 : index
      %c0_230 = arith.constant 0 : index
      %433 = vector.load %arg15[%c0_228, %c0_229, %c0_230] : memref<2x4x256xf32, #tpu.memory_space<vmem>>, vector<1x4x256xf32>
      %434 = vector.shape_cast %433 : vector<1x4x256xf32> to vector<4x256xf32>
      %435 = vector.shape_cast %432 : vector<4x256xf32> to vector<1x4x256xf32>
      tpu.vector_store %arg15[%c0_228, %c0_229, %c0_230], %435 {strides = array<i32>} : memref<2x4x256xf32, #tpu.memory_space<vmem>>, vector<1x4x256xf32>,
      %c1_231 = arith.constant 1 : index
      %c0_232 = arith.constant 0 : index
      %c0_233 = arith.constant 0 : index
      %436 = vector.load %arg1[%c1_231, %c0_232, %c0_233] : memref<2x4x256xf32, #tpu.memory_space<vmem>>, vector<1x4x256xf32>
      %437 = vector.shape_cast %436 : vector<1x4x256xf32> to vector<4x256xf32>
      %cst_234 = arith.constant 0.000000e+00 : f32
      %438 = vector.broadcast %cst_234 : f32 to vector<4x17xf32>
      %439 = tpu.concatenate %438, %437, %438 in 1 : vector<4x17xf32>, vector<4x256xf32>, vector<4x17xf32> -> vector<4x290xf32>
      %440 = tpu.iota {dimensions = array<i32: 1>} : vector<1x256xi32>
      %c16_i32_235 = arith.constant 16 : i32
      %c0_i32_236 = arith.constant 0 : i32
      %441 = arith.cmpi eq, %c16_i32_235, %c0_i32_236 : i32
      %c1_i32_237 = arith.constant 1 : i32
      %442 = arith.select %441, %c1_i32_237, %c16_i32_235 : i32
      %443 = vector.broadcast %442 : i32 to vector<1x256xi32>
      %444 = arith.remsi %440, %443 : vector<1x256xi32>
      %c0_i32_238 = arith.constant 0 : i32
      %445 = vector.broadcast %c0_i32_238 : i32 to vector<1x256xi32>
      %446 = arith.cmpi ne, %444, %445 : vector<1x256xi32>
      %c0_i32_239 = arith.constant 0 : i32
      %447 = vector.broadcast %c0_i32_239 : i32 to vector<1x256xi32>
      %448 = arith.cmpi slt, %444, %447 : vector<1x256xi32>
      %c0_i32_240 = arith.constant 0 : i32
      %449 = arith.cmpi slt, %442, %c0_i32_240 : i32
      %450 = vector.broadcast %449 : i1 to vector<1x256xi1>
      %451 = vector.broadcast %450 : vector<1x256xi1> to vector<1x256xi1>
      %452 = arith.xori %448, %451 : vector<1x256xi1>
      %453 = arith.andi %452, %446 : vector<1x256xi1>
      %454 = vector.broadcast %442 : i32 to vector<1x256xi32>
      %455 = arith.addi %444, %454 : vector<1x256xi32>
      %456 = arith.select %453, %455, %444 : vector<1x256xi1>, vector<1x256xi32>
      %c0_i32_241 = arith.constant 0 : i32
      %457 = vector.broadcast %c0_i32_241 : i32 to vector<1x256xi32>
      %458 = arith.cmpi sgt, %456, %457 : vector<1x256xi32>
      %cst_242 = arith.constant 1.000000e+00 : f32
      %cst_243 = arith.constant 0.000000e+00 : f32
      %459 = vector.broadcast %cst_242 : f32 to vector<1x256xf32>
      %460 = vector.broadcast %cst_243 : f32 to vector<1x256xf32>
      %461 = arith.select %458, %459, %460 : vector<1x256xi1>, vector<1x256xf32>
      %c15_i32_244 = arith.constant 15 : i32
      %462 = vector.broadcast %c15_i32_244 : i32 to vector<1x256xi32>
      %463 = arith.cmpi slt, %456, %462 : vector<1x256xi32>
      %cst_245 = arith.constant 1.000000e+00 : f32
      %cst_246 = arith.constant 0.000000e+00 : f32
      %464 = vector.broadcast %cst_245 : f32 to vector<1x256xf32>
      %465 = vector.broadcast %cst_246 : f32 to vector<1x256xf32>
      %466 = arith.select %463, %464, %465 : vector<1x256xi1>, vector<1x256xf32>
      %467 = vector.extract_strided_slice %439 {offsets = [0, 0], sizes = [4, 256], strides = [1, 1]} : vector<4x290xf32> to vector<4x256xf32>
      %468 = vector.broadcast %461 : vector<1x256xf32> to vector<4x256xf32>
      %469 = arith.mulf %467, %468 : vector<4x256xf32>
      %c0_247 = arith.constant 0 : index
      %c0_248 = arith.constant 0 : index
      %c0_249 = arith.constant 0 : index
      %470 = vector.load %arg2[%c0_247, %c0_248, %c0_249] : memref<9x8x4xbf16, #tpu.memory_space<vmem>>, vector<1x8x4xbf16>
      %471 = vector.shape_cast %470 : vector<1x8x4xbf16> to vector<8x4xbf16>
      %472 = arith.truncf %469 : vector<4x256xf32> to vector<4x256xbf16>
      %cst_250 = arith.constant dense<0.000000e+00> : vector<8x256xf32>
      %473 = tpu.matmul %471, %472, %cst_250 {dimension_numbers = #tpu.dot_dimension_numbers<[1], [0], [0], [1], [0, 0, 1, 1], [], []>} : vector<8x4xbf16>, vector<4x256xbf16>, vector<8x256xf32> -> vector<8x256xf32>
      %474 = vector.extract_strided_slice %439 {offsets = [0, 1], sizes = [4, 256], strides = [1, 1]} : vector<4x290xf32> to vector<4x256xf32>
      %c1_251 = arith.constant 1 : index
      %c0_252 = arith.constant 0 : index
      %c0_253 = arith.constant 0 : index
      %475 = vector.load %arg2[%c1_251, %c0_252, %c0_253] : memref<9x8x4xbf16, #tpu.memory_space<vmem>>, vector<1x8x4xbf16>
      %476 = vector.shape_cast %475 : vector<1x8x4xbf16> to vector<8x4xbf16>
      %477 = arith.truncf %474 : vector<4x256xf32> to vector<4x256xbf16>
      %cst_254 = arith.constant dense<0.000000e+00> : vector<8x256xf32>
      %478 = tpu.matmul %476, %477, %cst_254 {dimension_numbers = #tpu.dot_dimension_numbers<[1], [0], [0], [1], [0, 0, 1, 1], [], []>} : vector<8x4xbf16>, vector<4x256xbf16>, vector<8x256xf32> -> vector<8x256xf32>
      %479 = arith.addf %473, %478 : vector<8x256xf32>
      %480 = vector.extract_strided_slice %439 {offsets = [0, 2], sizes = [4, 256], strides = [1, 1]} : vector<4x290xf32> to vector<4x256xf32>
      %481 = vector.broadcast %466 : vector<1x256xf32> to vector<4x256xf32>
      %482 = arith.mulf %480, %481 : vector<4x256xf32>
      %c2_255 = arith.constant 2 : index
      %c0_256 = arith.constant 0 : index
      %c0_257 = arith.constant 0 : index
      %483 = vector.load %arg2[%c2_255, %c0_256, %c0_257] : memref<9x8x4xbf16, #tpu.memory_space<vmem>>, vector<1x8x4xbf16>
      %484 = vector.shape_cast %483 : vector<1x8x4xbf16> to vector<8x4xbf16>
      %485 = arith.truncf %482 : vector<4x256xf32> to vector<4x256xbf16>
      %cst_258 = arith.constant dense<0.000000e+00> : vector<8x256xf32>
      %486 = tpu.matmul %484, %485, %cst_258 {dimension_numbers = #tpu.dot_dimension_numbers<[1], [0], [0], [1], [0, 0, 1, 1], [], []>} : vector<8x4xbf16>, vector<4x256xbf16>, vector<8x256xf32> -> vector<8x256xf32>
      %487 = arith.addf %479, %486 : vector<8x256xf32>
      %488 = vector.extract_strided_slice %439 {offsets = [0, 16], sizes = [4, 256], strides = [1, 1]} : vector<4x290xf32> to vector<4x256xf32>
      %489 = vector.broadcast %461 : vector<1x256xf32> to vector<4x256xf32>
      %490 = arith.mulf %488, %489 : vector<4x256xf32>
      %c3_259 = arith.constant 3 : index
      %c0_260 = arith.constant 0 : index
      %c0_261 = arith.constant 0 : index
      %491 = vector.load %arg2[%c3_259, %c0_260, %c0_261] : memref<9x8x4xbf16, #tpu.memory_space<vmem>>, vector<1x8x4xbf16>
      %492 = vector.shape_cast %491 : vector<1x8x4xbf16> to vector<8x4xbf16>
      %493 = arith.truncf %490 : vector<4x256xf32> to vector<4x256xbf16>
      %cst_262 = arith.constant dense<0.000000e+00> : vector<8x256xf32>
      %494 = tpu.matmul %492, %493, %cst_262 {dimension_numbers = #tpu.dot_dimension_numbers<[1], [0], [0], [1], [0, 0, 1, 1], [], []>} : vector<8x4xbf16>, vector<4x256xbf16>, vector<8x256xf32> -> vector<8x256xf32>
      %495 = arith.addf %487, %494 : vector<8x256xf32>
      %496 = vector.extract_strided_slice %439 {offsets = [0, 17], sizes = [4, 256], strides = [1, 1]} : vector<4x290xf32> to vector<4x256xf32>
      %c4_263 = arith.constant 4 : index
      %c0_264 = arith.constant 0 : index
      %c0_265 = arith.constant 0 : index
      %497 = vector.load %arg2[%c4_263, %c0_264, %c0_265] : memref<9x8x4xbf16, #tpu.memory_space<vmem>>, vector<1x8x4xbf16>
      %498 = vector.shape_cast %497 : vector<1x8x4xbf16> to vector<8x4xbf16>
      %499 = arith.truncf %496 : vector<4x256xf32> to vector<4x256xbf16>
      %cst_266 = arith.constant dense<0.000000e+00> : vector<8x256xf32>
      %500 = tpu.matmul %498, %499, %cst_266 {dimension_numbers = #tpu.dot_dimension_numbers<[1], [0], [0], [1], [0, 0, 1, 1], [], []>} : vector<8x4xbf16>, vector<4x256xbf16>, vector<8x256xf32> -> vector<8x256xf32>
      %501 = arith.addf %495, %500 : vector<8x256xf32>
      %502 = vector.extract_strided_slice %439 {offsets = [0, 18], sizes = [4, 256], strides = [1, 1]} : vector<4x290xf32> to vector<4x256xf32>
      %503 = vector.broadcast %466 : vector<1x256xf32> to vector<4x256xf32>
      %504 = arith.mulf %502, %503 : vector<4x256xf32>
      %c5_267 = arith.constant 5 : index
      %c0_268 = arith.constant 0 : index
      %c0_269 = arith.constant 0 : index
      %505 = vector.load %arg2[%c5_267, %c0_268, %c0_269] : memref<9x8x4xbf16, #tpu.memory_space<vmem>>, vector<1x8x4xbf16>
      %506 = vector.shape_cast %505 : vector<1x8x4xbf16> to vector<8x4xbf16>
      %507 = arith.truncf %504 : vector<4x256xf32> to vector<4x256xbf16>
      %cst_270 = arith.constant dense<0.000000e+00> : vector<8x256xf32>
      %508 = tpu.matmul %506, %507, %cst_270 {dimension_numbers = #tpu.dot_dimension_numbers<[1], [0], [0], [1], [0, 0, 1, 1], [], []>} : vector<8x4xbf16>, vector<4x256xbf16>, vector<8x256xf32> -> vector<8x256xf32>
      %509 = arith.addf %501, %508 : vector<8x256xf32>
      %510 = vector.extract_strided_slice %439 {offsets = [0, 32], sizes = [4, 256], strides = [1, 1]} : vector<4x290xf32> to vector<4x256xf32>
      %511 = vector.broadcast %461 : vector<1x256xf32> to vector<4x256xf32>
      %512 = arith.mulf %510, %511 : vector<4x256xf32>
      %c6_271 = arith.constant 6 : index
      %c0_272 = arith.constant 0 : index
      %c0_273 = arith.constant 0 : index
      %513 = vector.load %arg2[%c6_271, %c0_272, %c0_273] : memref<9x8x4xbf16, #tpu.memory_space<vmem>>, vector<1x8x4xbf16>
      %514 = vector.shape_cast %513 : vector<1x8x4xbf16> to vector<8x4xbf16>
      %515 = arith.truncf %512 : vector<4x256xf32> to vector<4x256xbf16>
      %cst_274 = arith.constant dense<0.000000e+00> : vector<8x256xf32>
      %516 = tpu.matmul %514, %515, %cst_274 {dimension_numbers = #tpu.dot_dimension_numbers<[1], [0], [0], [1], [0, 0, 1, 1], [], []>} : vector<8x4xbf16>, vector<4x256xbf16>, vector<8x256xf32> -> vector<8x256xf32>
      %517 = arith.addf %509, %516 : vector<8x256xf32>
      %518 = vector.extract_strided_slice %439 {offsets = [0, 33], sizes = [4, 256], strides = [1, 1]} : vector<4x290xf32> to vector<4x256xf32>
      %c7_275 = arith.constant 7 : index
      %c0_276 = arith.constant 0 : index
      %c0_277 = arith.constant 0 : index
      %519 = vector.load %arg2[%c7_275, %c0_276, %c0_277] : memref<9x8x4xbf16, #tpu.memory_space<vmem>>, vector<1x8x4xbf16>
      %520 = vector.shape_cast %519 : vector<1x8x4xbf16> to vector<8x4xbf16>
      %521 = arith.truncf %518 : vector<4x256xf32> to vector<4x256xbf16>
      %cst_278 = arith.constant dense<0.000000e+00> : vector<8x256xf32>
      %522 = tpu.matmul %520, %521, %cst_278 {dimension_numbers = #tpu.dot_dimension_numbers<[1], [0], [0], [1], [0, 0, 1, 1], [], []>} : vector<8x4xbf16>, vector<4x256xbf16>, vector<8x256xf32> -> vector<8x256xf32>
      %523 = arith.addf %517, %522 : vector<8x256xf32>
      %524 = vector.extract_strided_slice %439 {offsets = [0, 34], sizes = [4, 256], strides = [1, 1]} : vector<4x290xf32> to vector<4x256xf32>
      %525 = vector.broadcast %466 : vector<1x256xf32> to vector<4x256xf32>
      %526 = arith.mulf %524, %525 : vector<4x256xf32>
      %c8_279 = arith.constant 8 : index
      %c0_280 = arith.constant 0 : index
      %c0_281 = arith.constant 0 : index
      %527 = vector.load %arg2[%c8_279, %c0_280, %c0_281] : memref<9x8x4xbf16, #tpu.memory_space<vmem>>, vector<1x8x4xbf16>
      %528 = vector.shape_cast %527 : vector<1x8x4xbf16> to vector<8x4xbf16>
      %529 = arith.truncf %526 : vector<4x256xf32> to vector<4x256xbf16>
      %cst_282 = arith.constant dense<0.000000e+00> : vector<8x256xf32>
      %530 = tpu.matmul %528, %529, %cst_282 {dimension_numbers = #tpu.dot_dimension_numbers<[1], [0], [0], [1], [0, 0, 1, 1], [], []>} : vector<8x4xbf16>, vector<4x256xbf16>, vector<8x256xf32> -> vector<8x256xf32>
      %531 = arith.addf %523, %530 : vector<8x256xf32>
      %c0_283 = arith.constant 0 : index
      %c0_284 = arith.constant 0 : index
      %532 = vector.load %arg3[%c0_283, %c0_284] : memref<8x1xf32, #tpu.memory_space<vmem>>, vector<8x1xf32>
      %533 = vector.broadcast %532 : vector<8x1xf32> to vector<8x256xf32>
      %534 = arith.addf %531, %533 : vector<8x256xf32>
      %cst_285 = arith.constant 0.000000e+00 : f32
      %535 = vector.broadcast %cst_285 : f32 to vector<8x256xf32>
      %536 = arith.maximumf %534, %535 : vector<8x256xf32>
      %537 = arith.truncf %536 : vector<8x256xf32> to vector<8x256xbf16>
      %c0_286 = arith.constant 0 : index
      %c0_287 = arith.constant 0 : index
      %538 = vector.load %arg11[%c0_286, %c0_287] : memref<256x64xbf16, #tpu.memory_space<vmem>>, vector<256x64xbf16>
      %cst_288 = arith.constant dense<0.000000e+00> : vector<8x64xf32>
      %539 = tpu.matmul %537, %538, %cst_288 {dimension_numbers = #tpu.dot_dimension_numbers<[1], [0], [0], [1], [0, 0, 1, 1], [], []>} : vector<8x256xbf16>, vector<256x64xbf16>, vector<8x64xf32> -> vector<8x64xf32>
      %cst_289 = arith.constant 0.000000e+00 : f32
      %540 = vector.broadcast %cst_289 : f32 to vector<8x9xf32>
      %541 = tpu.concatenate %540, %539, %540 in 1 : vector<8x9xf32>, vector<8x64xf32>, vector<8x9xf32> -> vector<8x82xf32>
      %542 = tpu.iota {dimensions = array<i32: 1>} : vector<1x64xi32>
      %c8_i32_290 = arith.constant 8 : i32
      %c0_i32_291 = arith.constant 0 : i32
      %543 = arith.cmpi eq, %c8_i32_290, %c0_i32_291 : i32
      %c1_i32_292 = arith.constant 1 : i32
      %544 = arith.select %543, %c1_i32_292, %c8_i32_290 : i32
      %545 = vector.broadcast %544 : i32 to vector<1x64xi32>
      %546 = arith.remsi %542, %545 : vector<1x64xi32>
      %c0_i32_293 = arith.constant 0 : i32
      %547 = vector.broadcast %c0_i32_293 : i32 to vector<1x64xi32>
      %548 = arith.cmpi ne, %546, %547 : vector<1x64xi32>
      %c0_i32_294 = arith.constant 0 : i32
      %549 = vector.broadcast %c0_i32_294 : i32 to vector<1x64xi32>
      %550 = arith.cmpi slt, %546, %549 : vector<1x64xi32>
      %c0_i32_295 = arith.constant 0 : i32
      %551 = arith.cmpi slt, %544, %c0_i32_295 : i32
      %552 = vector.broadcast %551 : i1 to vector<1x64xi1>
      %553 = vector.broadcast %552 : vector<1x64xi1> to vector<1x64xi1>
      %554 = arith.xori %550, %553 : vector<1x64xi1>
      %555 = arith.andi %554, %548 : vector<1x64xi1>
      %556 = vector.broadcast %544 : i32 to vector<1x64xi32>
      %557 = arith.addi %546, %556 : vector<1x64xi32>
      %558 = arith.select %555, %557, %546 : vector<1x64xi1>, vector<1x64xi32>
      %c0_i32_296 = arith.constant 0 : i32
      %559 = vector.broadcast %c0_i32_296 : i32 to vector<1x64xi32>
      %560 = arith.cmpi sgt, %558, %559 : vector<1x64xi32>
      %cst_297 = arith.constant 1.000000e+00 : f32
      %cst_298 = arith.constant 0.000000e+00 : f32
      %561 = vector.broadcast %cst_297 : f32 to vector<1x64xf32>
      %562 = vector.broadcast %cst_298 : f32 to vector<1x64xf32>
      %563 = arith.select %560, %561, %562 : vector<1x64xi1>, vector<1x64xf32>
      %c7_i32_299 = arith.constant 7 : i32
      %564 = vector.broadcast %c7_i32_299 : i32 to vector<1x64xi32>
      %565 = arith.cmpi slt, %558, %564 : vector<1x64xi32>
      %cst_300 = arith.constant 1.000000e+00 : f32
      %cst_301 = arith.constant 0.000000e+00 : f32
      %566 = vector.broadcast %cst_300 : f32 to vector<1x64xf32>
      %567 = vector.broadcast %cst_301 : f32 to vector<1x64xf32>
      %568 = arith.select %565, %566, %567 : vector<1x64xi1>, vector<1x64xf32>
      %569 = vector.extract_strided_slice %541 {offsets = [0, 0], sizes = [8, 64], strides = [1, 1]} : vector<8x82xf32> to vector<8x64xf32>
      %570 = vector.broadcast %563 : vector<1x64xf32> to vector<8x64xf32>
      %571 = arith.mulf %569, %570 : vector<8x64xf32>
      %c0_302 = arith.constant 0 : index
      %c0_303 = arith.constant 0 : index
      %c0_304 = arith.constant 0 : index
      %572 = vector.load %arg4[%c0_302, %c0_303, %c0_304] : memref<9x16x8xbf16, #tpu.memory_space<vmem>>, vector<1x16x8xbf16>
      %573 = vector.shape_cast %572 : vector<1x16x8xbf16> to vector<16x8xbf16>
      %574 = arith.truncf %571 : vector<8x64xf32> to vector<8x64xbf16>
      %cst_305 = arith.constant dense<0.000000e+00> : vector<16x64xf32>
      %575 = tpu.matmul %573, %574, %cst_305 {dimension_numbers = #tpu.dot_dimension_numbers<[1], [0], [0], [1], [0, 0, 1, 1], [], []>} : vector<16x8xbf16>, vector<8x64xbf16>, vector<16x64xf32> -> vector<16x64xf32>
      %576 = vector.extract_strided_slice %541 {offsets = [0, 1], sizes = [8, 64], strides = [1, 1]} : vector<8x82xf32> to vector<8x64xf32>
      %c1_306 = arith.constant 1 : index
      %c0_307 = arith.constant 0 : index
      %c0_308 = arith.constant 0 : index
      %577 = vector.load %arg4[%c1_306, %c0_307, %c0_308] : memref<9x16x8xbf16, #tpu.memory_space<vmem>>, vector<1x16x8xbf16>
      %578 = vector.shape_cast %577 : vector<1x16x8xbf16> to vector<16x8xbf16>
      %579 = arith.truncf %576 : vector<8x64xf32> to vector<8x64xbf16>
      %cst_309 = arith.constant dense<0.000000e+00> : vector<16x64xf32>
      %580 = tpu.matmul %578, %579, %cst_309 {dimension_numbers = #tpu.dot_dimension_numbers<[1], [0], [0], [1], [0, 0, 1, 1], [], []>} : vector<16x8xbf16>, vector<8x64xbf16>, vector<16x64xf32> -> vector<16x64xf32>
      %581 = arith.addf %575, %580 : vector<16x64xf32>
      %582 = vector.extract_strided_slice %541 {offsets = [0, 2], sizes = [8, 64], strides = [1, 1]} : vector<8x82xf32> to vector<8x64xf32>
      %583 = vector.broadcast %568 : vector<1x64xf32> to vector<8x64xf32>
      %584 = arith.mulf %582, %583 : vector<8x64xf32>
      %c2_310 = arith.constant 2 : index
      %c0_311 = arith.constant 0 : index
      %c0_312 = arith.constant 0 : index
      %585 = vector.load %arg4[%c2_310, %c0_311, %c0_312] : memref<9x16x8xbf16, #tpu.memory_space<vmem>>, vector<1x16x8xbf16>
      %586 = vector.shape_cast %585 : vector<1x16x8xbf16> to vector<16x8xbf16>
      %587 = arith.truncf %584 : vector<8x64xf32> to vector<8x64xbf16>
      %cst_313 = arith.constant dense<0.000000e+00> : vector<16x64xf32>
      %588 = tpu.matmul %586, %587, %cst_313 {dimension_numbers = #tpu.dot_dimension_numbers<[1], [0], [0], [1], [0, 0, 1, 1], [], []>} : vector<16x8xbf16>, vector<8x64xbf16>, vector<16x64xf32> -> vector<16x64xf32>
      %589 = arith.addf %581, %588 : vector<16x64xf32>
      %590 = vector.extract_strided_slice %541 {offsets = [0, 8], sizes = [8, 64], strides = [1, 1]} : vector<8x82xf32> to vector<8x64xf32>
      %591 = vector.broadcast %563 : vector<1x64xf32> to vector<8x64xf32>
      %592 = arith.mulf %590, %591 : vector<8x64xf32>
      %c3_314 = arith.constant 3 : index
      %c0_315 = arith.constant 0 : index
      %c0_316 = arith.constant 0 : index
      %593 = vector.load %arg4[%c3_314, %c0_315, %c0_316] : memref<9x16x8xbf16, #tpu.memory_space<vmem>>, vector<1x16x8xbf16>
      %594 = vector.shape_cast %593 : vector<1x16x8xbf16> to vector<16x8xbf16>
      %595 = arith.truncf %592 : vector<8x64xf32> to vector<8x64xbf16>
      %cst_317 = arith.constant dense<0.000000e+00> : vector<16x64xf32>
      %596 = tpu.matmul %594, %595, %cst_317 {dimension_numbers = #tpu.dot_dimension_numbers<[1], [0], [0], [1], [0, 0, 1, 1], [], []>} : vector<16x8xbf16>, vector<8x64xbf16>, vector<16x64xf32> -> vector<16x64xf32>
      %597 = arith.addf %589, %596 : vector<16x64xf32>
      %598 = vector.extract_strided_slice %541 {offsets = [0, 9], sizes = [8, 64], strides = [1, 1]} : vector<8x82xf32> to vector<8x64xf32>
      %c4_318 = arith.constant 4 : index
      %c0_319 = arith.constant 0 : index
      %c0_320 = arith.constant 0 : index
      %599 = vector.load %arg4[%c4_318, %c0_319, %c0_320] : memref<9x16x8xbf16, #tpu.memory_space<vmem>>, vector<1x16x8xbf16>
      %600 = vector.shape_cast %599 : vector<1x16x8xbf16> to vector<16x8xbf16>
      %601 = arith.truncf %598 : vector<8x64xf32> to vector<8x64xbf16>
      %cst_321 = arith.constant dense<0.000000e+00> : vector<16x64xf32>
      %602 = tpu.matmul %600, %601, %cst_321 {dimension_numbers = #tpu.dot_dimension_numbers<[1], [0], [0], [1], [0, 0, 1, 1], [], []>} : vector<16x8xbf16>, vector<8x64xbf16>, vector<16x64xf32> -> vector<16x64xf32>
      %603 = arith.addf %597, %602 : vector<16x64xf32>
      %604 = vector.extract_strided_slice %541 {offsets = [0, 10], sizes = [8, 64], strides = [1, 1]} : vector<8x82xf32> to vector<8x64xf32>
      %605 = vector.broadcast %568 : vector<1x64xf32> to vector<8x64xf32>
      %606 = arith.mulf %604, %605 : vector<8x64xf32>
      %c5_322 = arith.constant 5 : index
      %c0_323 = arith.constant 0 : index
      %c0_324 = arith.constant 0 : index
      %607 = vector.load %arg4[%c5_322, %c0_323, %c0_324] : memref<9x16x8xbf16, #tpu.memory_space<vmem>>, vector<1x16x8xbf16>
      %608 = vector.shape_cast %607 : vector<1x16x8xbf16> to vector<16x8xbf16>
      %609 = arith.truncf %606 : vector<8x64xf32> to vector<8x64xbf16>
      %cst_325 = arith.constant dense<0.000000e+00> : vector<16x64xf32>
      %610 = tpu.matmul %608, %609, %cst_325 {dimension_numbers = #tpu.dot_dimension_numbers<[1], [0], [0], [1], [0, 0, 1, 1], [], []>} : vector<16x8xbf16>, vector<8x64xbf16>, vector<16x64xf32> -> vector<16x64xf32>
      %611 = arith.addf %603, %610 : vector<16x64xf32>
      %612 = vector.extract_strided_slice %541 {offsets = [0, 16], sizes = [8, 64], strides = [1, 1]} : vector<8x82xf32> to vector<8x64xf32>
      %613 = vector.broadcast %563 : vector<1x64xf32> to vector<8x64xf32>
      %614 = arith.mulf %612, %613 : vector<8x64xf32>
      %c6_326 = arith.constant 6 : index
      %c0_327 = arith.constant 0 : index
      %c0_328 = arith.constant 0 : index
      %615 = vector.load %arg4[%c6_326, %c0_327, %c0_328] : memref<9x16x8xbf16, #tpu.memory_space<vmem>>, vector<1x16x8xbf16>
      %616 = vector.shape_cast %615 : vector<1x16x8xbf16> to vector<16x8xbf16>
      %617 = arith.truncf %614 : vector<8x64xf32> to vector<8x64xbf16>
      %cst_329 = arith.constant dense<0.000000e+00> : vector<16x64xf32>
      %618 = tpu.matmul %616, %617, %cst_329 {dimension_numbers = #tpu.dot_dimension_numbers<[1], [0], [0], [1], [0, 0, 1, 1], [], []>} : vector<16x8xbf16>, vector<8x64xbf16>, vector<16x64xf32> -> vector<16x64xf32>
      %619 = arith.addf %611, %618 : vector<16x64xf32>
      %620 = vector.extract_strided_slice %541 {offsets = [0, 17], sizes = [8, 64], strides = [1, 1]} : vector<8x82xf32> to vector<8x64xf32>
      %c7_330 = arith.constant 7 : index
      %c0_331 = arith.constant 0 : index
      %c0_332 = arith.constant 0 : index
      %621 = vector.load %arg4[%c7_330, %c0_331, %c0_332] : memref<9x16x8xbf16, #tpu.memory_space<vmem>>, vector<1x16x8xbf16>
      %622 = vector.shape_cast %621 : vector<1x16x8xbf16> to vector<16x8xbf16>
      %623 = arith.truncf %620 : vector<8x64xf32> to vector<8x64xbf16>
      %cst_333 = arith.constant dense<0.000000e+00> : vector<16x64xf32>
      %624 = tpu.matmul %622, %623, %cst_333 {dimension_numbers = #tpu.dot_dimension_numbers<[1], [0], [0], [1], [0, 0, 1, 1], [], []>} : vector<16x8xbf16>, vector<8x64xbf16>, vector<16x64xf32> -> vector<16x64xf32>
      %625 = arith.addf %619, %624 : vector<16x64xf32>
      %626 = vector.extract_strided_slice %541 {offsets = [0, 18], sizes = [8, 64], strides = [1, 1]} : vector<8x82xf32> to vector<8x64xf32>
      %627 = vector.broadcast %568 : vector<1x64xf32> to vector<8x64xf32>
      %628 = arith.mulf %626, %627 : vector<8x64xf32>
      %c8_334 = arith.constant 8 : index
      %c0_335 = arith.constant 0 : index
      %c0_336 = arith.constant 0 : index
      %629 = vector.load %arg4[%c8_334, %c0_335, %c0_336] : memref<9x16x8xbf16, #tpu.memory_space<vmem>>, vector<1x16x8xbf16>
      %630 = vector.shape_cast %629 : vector<1x16x8xbf16> to vector<16x8xbf16>
      %631 = arith.truncf %628 : vector<8x64xf32> to vector<8x64xbf16>
      %cst_337 = arith.constant dense<0.000000e+00> : vector<16x64xf32>
      %632 = tpu.matmul %630, %631, %cst_337 {dimension_numbers = #tpu.dot_dimension_numbers<[1], [0], [0], [1], [0, 0, 1, 1], [], []>} : vector<16x8xbf16>, vector<8x64xbf16>, vector<16x64xf32> -> vector<16x64xf32>
      %633 = arith.addf %625, %632 : vector<16x64xf32>
      %c0_338 = arith.constant 0 : index
      %c0_339 = arith.constant 0 : index
      %634 = vector.load %arg5[%c0_338, %c0_339] : memref<16x1xf32, #tpu.memory_space<vmem>>, vector<16x1xf32>
      %635 = vector.broadcast %634 : vector<16x1xf32> to vector<16x64xf32>
      %636 = arith.addf %633, %635 : vector<16x64xf32>
      %cst_340 = arith.constant 0.000000e+00 : f32
      %637 = vector.broadcast %cst_340 : f32 to vector<16x64xf32>
      %638 = arith.maximumf %636, %637 : vector<16x64xf32>
      %639 = arith.truncf %638 : vector<16x64xf32> to vector<16x64xbf16>
      %c0_341 = arith.constant 0 : index
      %c0_342 = arith.constant 0 : index
      %640 = vector.load %arg12[%c0_341, %c0_342] : memref<64x256xbf16, #tpu.memory_space<vmem>>, vector<64x256xbf16>
      %cst_343 = arith.constant dense<0.000000e+00> : vector<16x256xf32>
      %641 = tpu.matmul %639, %640, %cst_343 {dimension_numbers = #tpu.dot_dimension_numbers<[1], [0], [0], [1], [0, 0, 1, 1], [], []>} : vector<16x64xbf16>, vector<64x256xbf16>, vector<16x256xf32> -> vector<16x256xf32>
      %cst_344 = arith.constant 0.000000e+00 : f32
      %642 = vector.broadcast %cst_344 : f32 to vector<16x17xf32>
      %643 = tpu.concatenate %642, %641, %642 in 1 : vector<16x17xf32>, vector<16x256xf32>, vector<16x17xf32> -> vector<16x290xf32>
      %644 = tpu.iota {dimensions = array<i32: 1>} : vector<1x256xi32>
      %c16_i32_345 = arith.constant 16 : i32
      %c0_i32_346 = arith.constant 0 : i32
      %645 = arith.cmpi eq, %c16_i32_345, %c0_i32_346 : i32
      %c1_i32_347 = arith.constant 1 : i32
      %646 = arith.select %645, %c1_i32_347, %c16_i32_345 : i32
      %647 = vector.broadcast %646 : i32 to vector<1x256xi32>
      %648 = arith.remsi %644, %647 : vector<1x256xi32>
      %c0_i32_348 = arith.constant 0 : i32
      %649 = vector.broadcast %c0_i32_348 : i32 to vector<1x256xi32>
      %650 = arith.cmpi ne, %648, %649 : vector<1x256xi32>
      %c0_i32_349 = arith.constant 0 : i32
      %651 = vector.broadcast %c0_i32_349 : i32 to vector<1x256xi32>
      %652 = arith.cmpi slt, %648, %651 : vector<1x256xi32>
      %c0_i32_350 = arith.constant 0 : i32
      %653 = arith.cmpi slt, %646, %c0_i32_350 : i32
      %654 = vector.broadcast %653 : i1 to vector<1x256xi1>
      %655 = vector.broadcast %654 : vector<1x256xi1> to vector<1x256xi1>
      %656 = arith.xori %652, %655 : vector<1x256xi1>
      %657 = arith.andi %656, %650 : vector<1x256xi1>
      %658 = vector.broadcast %646 : i32 to vector<1x256xi32>
      %659 = arith.addi %648, %658 : vector<1x256xi32>
      %660 = arith.select %657, %659, %648 : vector<1x256xi1>, vector<1x256xi32>
      %c0_i32_351 = arith.constant 0 : i32
      %661 = vector.broadcast %c0_i32_351 : i32 to vector<1x256xi32>
      %662 = arith.cmpi sgt, %660, %661 : vector<1x256xi32>
      %cst_352 = arith.constant 1.000000e+00 : f32
      %cst_353 = arith.constant 0.000000e+00 : f32
      %663 = vector.broadcast %cst_352 : f32 to vector<1x256xf32>
      %664 = vector.broadcast %cst_353 : f32 to vector<1x256xf32>
      %665 = arith.select %662, %663, %664 : vector<1x256xi1>, vector<1x256xf32>
      %c15_i32_354 = arith.constant 15 : i32
      %666 = vector.broadcast %c15_i32_354 : i32 to vector<1x256xi32>
      %667 = arith.cmpi slt, %660, %666 : vector<1x256xi32>
      %cst_355 = arith.constant 1.000000e+00 : f32
      %cst_356 = arith.constant 0.000000e+00 : f32
      %668 = vector.broadcast %cst_355 : f32 to vector<1x256xf32>
      %669 = vector.broadcast %cst_356 : f32 to vector<1x256xf32>
      %670 = arith.select %667, %668, %669 : vector<1x256xi1>, vector<1x256xf32>
      %671 = vector.extract_strided_slice %643 {offsets = [0, 0], sizes = [16, 256], strides = [1, 1]} : vector<16x290xf32> to vector<16x256xf32>
      %672 = vector.broadcast %665 : vector<1x256xf32> to vector<16x256xf32>
      %673 = arith.mulf %671, %672 : vector<16x256xf32>
      %c0_357 = arith.constant 0 : index
      %c0_358 = arith.constant 0 : index
      %c0_359 = arith.constant 0 : index
      %674 = vector.load %arg6[%c0_357, %c0_358, %c0_359] : memref<9x8x16xbf16, #tpu.memory_space<vmem>>, vector<1x8x16xbf16>
      %675 = vector.shape_cast %674 : vector<1x8x16xbf16> to vector<8x16xbf16>
      %676 = arith.truncf %673 : vector<16x256xf32> to vector<16x256xbf16>
      %cst_360 = arith.constant dense<0.000000e+00> : vector<8x256xf32>
      %677 = tpu.matmul %675, %676, %cst_360 {dimension_numbers = #tpu.dot_dimension_numbers<[1], [0], [0], [1], [0, 0, 1, 1], [], []>} : vector<8x16xbf16>, vector<16x256xbf16>, vector<8x256xf32> -> vector<8x256xf32>
      %678 = vector.extract_strided_slice %643 {offsets = [0, 1], sizes = [16, 256], strides = [1, 1]} : vector<16x290xf32> to vector<16x256xf32>
      %c1_361 = arith.constant 1 : index
      %c0_362 = arith.constant 0 : index
      %c0_363 = arith.constant 0 : index
      %679 = vector.load %arg6[%c1_361, %c0_362, %c0_363] : memref<9x8x16xbf16, #tpu.memory_space<vmem>>, vector<1x8x16xbf16>
      %680 = vector.shape_cast %679 : vector<1x8x16xbf16> to vector<8x16xbf16>
      %681 = arith.truncf %678 : vector<16x256xf32> to vector<16x256xbf16>
      %cst_364 = arith.constant dense<0.000000e+00> : vector<8x256xf32>
      %682 = tpu.matmul %680, %681, %cst_364 {dimension_numbers = #tpu.dot_dimension_numbers<[1], [0], [0], [1], [0, 0, 1, 1], [], []>} : vector<8x16xbf16>, vector<16x256xbf16>, vector<8x256xf32> -> vector<8x256xf32>
      %683 = arith.addf %677, %682 : vector<8x256xf32>
      %684 = vector.extract_strided_slice %643 {offsets = [0, 2], sizes = [16, 256], strides = [1, 1]} : vector<16x290xf32> to vector<16x256xf32>
      %685 = vector.broadcast %670 : vector<1x256xf32> to vector<16x256xf32>
      %686 = arith.mulf %684, %685 : vector<16x256xf32>
      %c2_365 = arith.constant 2 : index
      %c0_366 = arith.constant 0 : index
      %c0_367 = arith.constant 0 : index
      %687 = vector.load %arg6[%c2_365, %c0_366, %c0_367] : memref<9x8x16xbf16, #tpu.memory_space<vmem>>, vector<1x8x16xbf16>
      %688 = vector.shape_cast %687 : vector<1x8x16xbf16> to vector<8x16xbf16>
      %689 = arith.truncf %686 : vector<16x256xf32> to vector<16x256xbf16>
      %cst_368 = arith.constant dense<0.000000e+00> : vector<8x256xf32>
      %690 = tpu.matmul %688, %689, %cst_368 {dimension_numbers = #tpu.dot_dimension_numbers<[1], [0], [0], [1], [0, 0, 1, 1], [], []>} : vector<8x16xbf16>, vector<16x256xbf16>, vector<8x256xf32> -> vector<8x256xf32>
      %691 = arith.addf %683, %690 : vector<8x256xf32>
      %692 = vector.extract_strided_slice %643 {offsets = [0, 16], sizes = [16, 256], strides = [1, 1]} : vector<16x290xf32> to vector<16x256xf32>
      %693 = vector.broadcast %665 : vector<1x256xf32> to vector<16x256xf32>
      %694 = arith.mulf %692, %693 : vector<16x256xf32>
      %c3_369 = arith.constant 3 : index
      %c0_370 = arith.constant 0 : index
      %c0_371 = arith.constant 0 : index
      %695 = vector.load %arg6[%c3_369, %c0_370, %c0_371] : memref<9x8x16xbf16, #tpu.memory_space<vmem>>, vector<1x8x16xbf16>
      %696 = vector.shape_cast %695 : vector<1x8x16xbf16> to vector<8x16xbf16>
      %697 = arith.truncf %694 : vector<16x256xf32> to vector<16x256xbf16>
      %cst_372 = arith.constant dense<0.000000e+00> : vector<8x256xf32>
      %698 = tpu.matmul %696, %697, %cst_372 {dimension_numbers = #tpu.dot_dimension_numbers<[1], [0], [0], [1], [0, 0, 1, 1], [], []>} : vector<8x16xbf16>, vector<16x256xbf16>, vector<8x256xf32> -> vector<8x256xf32>
      %699 = arith.addf %691, %698 : vector<8x256xf32>
      %700 = vector.extract_strided_slice %643 {offsets = [0, 17], sizes = [16, 256], strides = [1, 1]} : vector<16x290xf32> to vector<16x256xf32>
      %c4_373 = arith.constant 4 : index
      %c0_374 = arith.constant 0 : index
      %c0_375 = arith.constant 0 : index
      %701 = vector.load %arg6[%c4_373, %c0_374, %c0_375] : memref<9x8x16xbf16, #tpu.memory_space<vmem>>, vector<1x8x16xbf16>
      %702 = vector.shape_cast %701 : vector<1x8x16xbf16> to vector<8x16xbf16>
      %703 = arith.truncf %700 : vector<16x256xf32> to vector<16x256xbf16>
      %cst_376 = arith.constant dense<0.000000e+00> : vector<8x256xf32>
      %704 = tpu.matmul %702, %703, %cst_376 {dimension_numbers = #tpu.dot_dimension_numbers<[1], [0], [0], [1], [0, 0, 1, 1], [], []>} : vector<8x16xbf16>, vector<16x256xbf16>, vector<8x256xf32> -> vector<8x256xf32>
      %705 = arith.addf %699, %704 : vector<8x256xf32>
      %706 = vector.extract_strided_slice %643 {offsets = [0, 18], sizes = [16, 256], strides = [1, 1]} : vector<16x290xf32> to vector<16x256xf32>
      %707 = vector.broadcast %670 : vector<1x256xf32> to vector<16x256xf32>
      %708 = arith.mulf %706, %707 : vector<16x256xf32>
      %c5_377 = arith.constant 5 : index
      %c0_378 = arith.constant 0 : index
      %c0_379 = arith.constant 0 : index
      %709 = vector.load %arg6[%c5_377, %c0_378, %c0_379] : memref<9x8x16xbf16, #tpu.memory_space<vmem>>, vector<1x8x16xbf16>
      %710 = vector.shape_cast %709 : vector<1x8x16xbf16> to vector<8x16xbf16>
      %711 = arith.truncf %708 : vector<16x256xf32> to vector<16x256xbf16>
      %cst_380 = arith.constant dense<0.000000e+00> : vector<8x256xf32>
      %712 = tpu.matmul %710, %711, %cst_380 {dimension_numbers = #tpu.dot_dimension_numbers<[1], [0], [0], [1], [0, 0, 1, 1], [], []>} : vector<8x16xbf16>, vector<16x256xbf16>, vector<8x256xf32> -> vector<8x256xf32>
      %713 = arith.addf %705, %712 : vector<8x256xf32>
      %714 = vector.extract_strided_slice %643 {offsets = [0, 32], sizes = [16, 256], strides = [1, 1]} : vector<16x290xf32> to vector<16x256xf32>
      %715 = vector.broadcast %665 : vector<1x256xf32> to vector<16x256xf32>
      %716 = arith.mulf %714, %715 : vector<16x256xf32>
      %c6_381 = arith.constant 6 : index
      %c0_382 = arith.constant 0 : index
      %c0_383 = arith.constant 0 : index
      %717 = vector.load %arg6[%c6_381, %c0_382, %c0_383] : memref<9x8x16xbf16, #tpu.memory_space<vmem>>, vector<1x8x16xbf16>
      %718 = vector.shape_cast %717 : vector<1x8x16xbf16> to vector<8x16xbf16>
      %719 = arith.truncf %716 : vector<16x256xf32> to vector<16x256xbf16>
      %cst_384 = arith.constant dense<0.000000e+00> : vector<8x256xf32>
      %720 = tpu.matmul %718, %719, %cst_384 {dimension_numbers = #tpu.dot_dimension_numbers<[1], [0], [0], [1], [0, 0, 1, 1], [], []>} : vector<8x16xbf16>, vector<16x256xbf16>, vector<8x256xf32> -> vector<8x256xf32>
      %721 = arith.addf %713, %720 : vector<8x256xf32>
      %722 = vector.extract_strided_slice %643 {offsets = [0, 33], sizes = [16, 256], strides = [1, 1]} : vector<16x290xf32> to vector<16x256xf32>
      %c7_385 = arith.constant 7 : index
      %c0_386 = arith.constant 0 : index
      %c0_387 = arith.constant 0 : index
      %723 = vector.load %arg6[%c7_385, %c0_386, %c0_387] : memref<9x8x16xbf16, #tpu.memory_space<vmem>>, vector<1x8x16xbf16>
      %724 = vector.shape_cast %723 : vector<1x8x16xbf16> to vector<8x16xbf16>
      %725 = arith.truncf %722 : vector<16x256xf32> to vector<16x256xbf16>
      %cst_388 = arith.constant dense<0.000000e+00> : vector<8x256xf32>
      %726 = tpu.matmul %724, %725, %cst_388 {dimension_numbers = #tpu.dot_dimension_numbers<[1], [0], [0], [1], [0, 0, 1, 1], [], []>} : vector<8x16xbf16>, vector<16x256xbf16>, vector<8x256xf32> -> vector<8x256xf32>
      %727 = arith.addf %721, %726 : vector<8x256xf32>
      %728 = vector.extract_strided_slice %643 {offsets = [0, 34], sizes = [16, 256], strides = [1, 1]} : vector<16x290xf32> to vector<16x256xf32>
      %729 = vector.broadcast %670 : vector<1x256xf32> to vector<16x256xf32>
      %730 = arith.mulf %728, %729 : vector<16x256xf32>
      %c8_389 = arith.constant 8 : index
      %c0_390 = arith.constant 0 : index
      %c0_391 = arith.constant 0 : index
      %731 = vector.load %arg6[%c8_389, %c0_390, %c0_391] : memref<9x8x16xbf16, #tpu.memory_space<vmem>>, vector<1x8x16xbf16>
      %732 = vector.shape_cast %731 : vector<1x8x16xbf16> to vector<8x16xbf16>
      %733 = arith.truncf %730 : vector<16x256xf32> to vector<16x256xbf16>
      %cst_392 = arith.constant dense<0.000000e+00> : vector<8x256xf32>
      %734 = tpu.matmul %732, %733, %cst_392 {dimension_numbers = #tpu.dot_dimension_numbers<[1], [0], [0], [1], [0, 0, 1, 1], [], []>} : vector<8x16xbf16>, vector<16x256xbf16>, vector<8x256xf32> -> vector<8x256xf32>
      %735 = arith.addf %727, %734 : vector<8x256xf32>
      %cst_393 = arith.constant 0.000000e+00 : f32
      %736 = vector.broadcast %cst_393 : f32 to vector<8x17xf32>
      %737 = tpu.concatenate %736, %536, %736 in 1 : vector<8x17xf32>, vector<8x256xf32>, vector<8x17xf32> -> vector<8x290xf32>
      %738 = tpu.iota {dimensions = array<i32: 1>} : vector<1x256xi32>
      %c16_i32_394 = arith.constant 16 : i32
      %c0_i32_395 = arith.constant 0 : i32
      %739 = arith.cmpi eq, %c16_i32_394, %c0_i32_395 : i32
      %c1_i32_396 = arith.constant 1 : i32
      %740 = arith.select %739, %c1_i32_396, %c16_i32_394 : i32
      %741 = vector.broadcast %740 : i32 to vector<1x256xi32>
      %742 = arith.remsi %738, %741 : vector<1x256xi32>
      %c0_i32_397 = arith.constant 0 : i32
      %743 = vector.broadcast %c0_i32_397 : i32 to vector<1x256xi32>
      %744 = arith.cmpi ne, %742, %743 : vector<1x256xi32>
      %c0_i32_398 = arith.constant 0 : i32
      %745 = vector.broadcast %c0_i32_398 : i32 to vector<1x256xi32>
      %746 = arith.cmpi slt, %742, %745 : vector<1x256xi32>
      %c0_i32_399 = arith.constant 0 : i32
      %747 = arith.cmpi slt, %740, %c0_i32_399 : i32
      %748 = vector.broadcast %747 : i1 to vector<1x256xi1>
      %749 = vector.broadcast %748 : vector<1x256xi1> to vector<1x256xi1>
      %750 = arith.xori %746, %749 : vector<1x256xi1>
      %751 = arith.andi %750, %744 : vector<1x256xi1>
      %752 = vector.broadcast %740 : i32 to vector<1x256xi32>
      %753 = arith.addi %742, %752 : vector<1x256xi32>
      %754 = arith.select %751, %753, %742 : vector<1x256xi1>, vector<1x256xi32>
      %c0_i32_400 = arith.constant 0 : i32
      %755 = vector.broadcast %c0_i32_400 : i32 to vector<1x256xi32>
      %756 = arith.cmpi sgt, %754, %755 : vector<1x256xi32>
      %cst_401 = arith.constant 1.000000e+00 : f32
      %cst_402 = arith.constant 0.000000e+00 : f32
      %757 = vector.broadcast %cst_401 : f32 to vector<1x256xf32>
      %758 = vector.broadcast %cst_402 : f32 to vector<1x256xf32>
      %759 = arith.select %756, %757, %758 : vector<1x256xi1>, vector<1x256xf32>
      %c15_i32_403 = arith.constant 15 : i32
      %760 = vector.broadcast %c15_i32_403 : i32 to vector<1x256xi32>
      %761 = arith.cmpi slt, %754, %760 : vector<1x256xi32>
      %cst_404 = arith.constant 1.000000e+00 : f32
      %cst_405 = arith.constant 0.000000e+00 : f32
      %762 = vector.broadcast %cst_404 : f32 to vector<1x256xf32>
      %763 = vector.broadcast %cst_405 : f32 to vector<1x256xf32>
      %764 = arith.select %761, %762, %763 : vector<1x256xi1>, vector<1x256xf32>
      %765 = vector.extract_strided_slice %737 {offsets = [0, 0], sizes = [8, 256], strides = [1, 1]} : vector<8x290xf32> to vector<8x256xf32>
      %766 = vector.broadcast %759 : vector<1x256xf32> to vector<8x256xf32>
      %767 = arith.mulf %765, %766 : vector<8x256xf32>
      %c0_406 = arith.constant 0 : index
      %c0_407 = arith.constant 0 : index
      %c0_408 = arith.constant 0 : index
      %768 = vector.load %arg7[%c0_406, %c0_407, %c0_408] : memref<9x8x8xbf16, #tpu.memory_space<vmem>>, vector<1x8x8xbf16>
      %769 = vector.shape_cast %768 : vector<1x8x8xbf16> to vector<8x8xbf16>
      %770 = arith.truncf %767 : vector<8x256xf32> to vector<8x256xbf16>
      %cst_409 = arith.constant dense<0.000000e+00> : vector<8x256xf32>
      %771 = tpu.matmul %769, %770, %cst_409 {dimension_numbers = #tpu.dot_dimension_numbers<[1], [0], [0], [1], [0, 0, 1, 1], [], []>} : vector<8x8xbf16>, vector<8x256xbf16>, vector<8x256xf32> -> vector<8x256xf32>
      %772 = vector.extract_strided_slice %737 {offsets = [0, 1], sizes = [8, 256], strides = [1, 1]} : vector<8x290xf32> to vector<8x256xf32>
      %c1_410 = arith.constant 1 : index
      %c0_411 = arith.constant 0 : index
      %c0_412 = arith.constant 0 : index
      %773 = vector.load %arg7[%c1_410, %c0_411, %c0_412] : memref<9x8x8xbf16, #tpu.memory_space<vmem>>, vector<1x8x8xbf16>
      %774 = vector.shape_cast %773 : vector<1x8x8xbf16> to vector<8x8xbf16>
      %775 = arith.truncf %772 : vector<8x256xf32> to vector<8x256xbf16>
      %cst_413 = arith.constant dense<0.000000e+00> : vector<8x256xf32>
      %776 = tpu.matmul %774, %775, %cst_413 {dimension_numbers = #tpu.dot_dimension_numbers<[1], [0], [0], [1], [0, 0, 1, 1], [], []>} : vector<8x8xbf16>, vector<8x256xbf16>, vector<8x256xf32> -> vector<8x256xf32>
      %777 = arith.addf %771, %776 : vector<8x256xf32>
      %778 = vector.extract_strided_slice %737 {offsets = [0, 2], sizes = [8, 256], strides = [1, 1]} : vector<8x290xf32> to vector<8x256xf32>
      %779 = vector.broadcast %764 : vector<1x256xf32> to vector<8x256xf32>
      %780 = arith.mulf %778, %779 : vector<8x256xf32>
      %c2_414 = arith.constant 2 : index
      %c0_415 = arith.constant 0 : index
      %c0_416 = arith.constant 0 : index
      %781 = vector.load %arg7[%c2_414, %c0_415, %c0_416] : memref<9x8x8xbf16, #tpu.memory_space<vmem>>, vector<1x8x8xbf16>
      %782 = vector.shape_cast %781 : vector<1x8x8xbf16> to vector<8x8xbf16>
      %783 = arith.truncf %780 : vector<8x256xf32> to vector<8x256xbf16>
      %cst_417 = arith.constant dense<0.000000e+00> : vector<8x256xf32>
      %784 = tpu.matmul %782, %783, %cst_417 {dimension_numbers = #tpu.dot_dimension_numbers<[1], [0], [0], [1], [0, 0, 1, 1], [], []>} : vector<8x8xbf16>, vector<8x256xbf16>, vector<8x256xf32> -> vector<8x256xf32>
      %785 = arith.addf %777, %784 : vector<8x256xf32>
      %786 = vector.extract_strided_slice %737 {offsets = [0, 16], sizes = [8, 256], strides = [1, 1]} : vector<8x290xf32> to vector<8x256xf32>
      %787 = vector.broadcast %759 : vector<1x256xf32> to vector<8x256xf32>
      %788 = arith.mulf %786, %787 : vector<8x256xf32>
      %c3_418 = arith.constant 3 : index
      %c0_419 = arith.constant 0 : index
      %c0_420 = arith.constant 0 : index
      %789 = vector.load %arg7[%c3_418, %c0_419, %c0_420] : memref<9x8x8xbf16, #tpu.memory_space<vmem>>, vector<1x8x8xbf16>
      %790 = vector.shape_cast %789 : vector<1x8x8xbf16> to vector<8x8xbf16>
      %791 = arith.truncf %788 : vector<8x256xf32> to vector<8x256xbf16>
      %cst_421 = arith.constant dense<0.000000e+00> : vector<8x256xf32>
      %792 = tpu.matmul %790, %791, %cst_421 {dimension_numbers = #tpu.dot_dimension_numbers<[1], [0], [0], [1], [0, 0, 1, 1], [], []>} : vector<8x8xbf16>, vector<8x256xbf16>, vector<8x256xf32> -> vector<8x256xf32>
      %793 = arith.addf %785, %792 : vector<8x256xf32>
      %794 = vector.extract_strided_slice %737 {offsets = [0, 17], sizes = [8, 256], strides = [1, 1]} : vector<8x290xf32> to vector<8x256xf32>
      %c4_422 = arith.constant 4 : index
      %c0_423 = arith.constant 0 : index
      %c0_424 = arith.constant 0 : index
      %795 = vector.load %arg7[%c4_422, %c0_423, %c0_424] : memref<9x8x8xbf16, #tpu.memory_space<vmem>>, vector<1x8x8xbf16>
      %796 = vector.shape_cast %795 : vector<1x8x8xbf16> to vector<8x8xbf16>
      %797 = arith.truncf %794 : vector<8x256xf32> to vector<8x256xbf16>
      %cst_425 = arith.constant dense<0.000000e+00> : vector<8x256xf32>
      %798 = tpu.matmul %796, %797, %cst_425 {dimension_numbers = #tpu.dot_dimension_numbers<[1], [0], [0], [1], [0, 0, 1, 1], [], []>} : vector<8x8xbf16>, vector<8x256xbf16>, vector<8x256xf32> -> vector<8x256xf32>
      %799 = arith.addf %793, %798 : vector<8x256xf32>
      %800 = vector.extract_strided_slice %737 {offsets = [0, 18], sizes = [8, 256], strides = [1, 1]} : vector<8x290xf32> to vector<8x256xf32>
      %801 = vector.broadcast %764 : vector<1x256xf32> to vector<8x256xf32>
      %802 = arith.mulf %800, %801 : vector<8x256xf32>
      %c5_426 = arith.constant 5 : index
      %c0_427 = arith.constant 0 : index
      %c0_428 = arith.constant 0 : index
      %803 = vector.load %arg7[%c5_426, %c0_427, %c0_428] : memref<9x8x8xbf16, #tpu.memory_space<vmem>>, vector<1x8x8xbf16>
      %804 = vector.shape_cast %803 : vector<1x8x8xbf16> to vector<8x8xbf16>
      %805 = arith.truncf %802 : vector<8x256xf32> to vector<8x256xbf16>
      %cst_429 = arith.constant dense<0.000000e+00> : vector<8x256xf32>
      %806 = tpu.matmul %804, %805, %cst_429 {dimension_numbers = #tpu.dot_dimension_numbers<[1], [0], [0], [1], [0, 0, 1, 1], [], []>} : vector<8x8xbf16>, vector<8x256xbf16>, vector<8x256xf32> -> vector<8x256xf32>
      %807 = arith.addf %799, %806 : vector<8x256xf32>
      %808 = vector.extract_strided_slice %737 {offsets = [0, 32], sizes = [8, 256], strides = [1, 1]} : vector<8x290xf32> to vector<8x256xf32>
      %809 = vector.broadcast %759 : vector<1x256xf32> to vector<8x256xf32>
      %810 = arith.mulf %808, %809 : vector<8x256xf32>
      %c6_430 = arith.constant 6 : index
      %c0_431 = arith.constant 0 : index
      %c0_432 = arith.constant 0 : index
      %811 = vector.load %arg7[%c6_430, %c0_431, %c0_432] : memref<9x8x8xbf16, #tpu.memory_space<vmem>>, vector<1x8x8xbf16>
      %812 = vector.shape_cast %811 : vector<1x8x8xbf16> to vector<8x8xbf16>
      %813 = arith.truncf %810 : vector<8x256xf32> to vector<8x256xbf16>
      %cst_433 = arith.constant dense<0.000000e+00> : vector<8x256xf32>
      %814 = tpu.matmul %812, %813, %cst_433 {dimension_numbers = #tpu.dot_dimension_numbers<[1], [0], [0], [1], [0, 0, 1, 1], [], []>} : vector<8x8xbf16>, vector<8x256xbf16>, vector<8x256xf32> -> vector<8x256xf32>
      %815 = arith.addf %807, %814 : vector<8x256xf32>
      %816 = vector.extract_strided_slice %737 {offsets = [0, 33], sizes = [8, 256], strides = [1, 1]} : vector<8x290xf32> to vector<8x256xf32>
      %c7_434 = arith.constant 7 : index
      %c0_435 = arith.constant 0 : index
      %c0_436 = arith.constant 0 : index
      %817 = vector.load %arg7[%c7_434, %c0_435, %c0_436] : memref<9x8x8xbf16, #tpu.memory_space<vmem>>, vector<1x8x8xbf16>
      %818 = vector.shape_cast %817 : vector<1x8x8xbf16> to vector<8x8xbf16>
      %819 = arith.truncf %816 : vector<8x256xf32> to vector<8x256xbf16>
      %cst_437 = arith.constant dense<0.000000e+00> : vector<8x256xf32>
      %820 = tpu.matmul %818, %819, %cst_437 {dimension_numbers = #tpu.dot_dimension_numbers<[1], [0], [0], [1], [0, 0, 1, 1], [], []>} : vector<8x8xbf16>, vector<8x256xbf16>, vector<8x256xf32> -> vector<8x256xf32>
      %821 = arith.addf %815, %820 : vector<8x256xf32>
      %822 = vector.extract_strided_slice %737 {offsets = [0, 34], sizes = [8, 256], strides = [1, 1]} : vector<8x290xf32> to vector<8x256xf32>
      %823 = vector.broadcast %764 : vector<1x256xf32> to vector<8x256xf32>
      %824 = arith.mulf %822, %823 : vector<8x256xf32>
      %c8_438 = arith.constant 8 : index
      %c0_439 = arith.constant 0 : index
      %c0_440 = arith.constant 0 : index
      %825 = vector.load %arg7[%c8_438, %c0_439, %c0_440] : memref<9x8x8xbf16, #tpu.memory_space<vmem>>, vector<1x8x8xbf16>
      %826 = vector.shape_cast %825 : vector<1x8x8xbf16> to vector<8x8xbf16>
      %827 = arith.truncf %824 : vector<8x256xf32> to vector<8x256xbf16>
      %cst_441 = arith.constant dense<0.000000e+00> : vector<8x256xf32>
      %828 = tpu.matmul %826, %827, %cst_441 {dimension_numbers = #tpu.dot_dimension_numbers<[1], [0], [0], [1], [0, 0, 1, 1], [], []>} : vector<8x8xbf16>, vector<8x256xbf16>, vector<8x256xf32> -> vector<8x256xf32>
      %829 = arith.addf %821, %828 : vector<8x256xf32>
      %830 = arith.addf %735, %829 : vector<8x256xf32>
      %c0_442 = arith.constant 0 : index
      %c0_443 = arith.constant 0 : index
      %831 = vector.load %arg8[%c0_442, %c0_443] : memref<8x1xf32, #tpu.memory_space<vmem>>, vector<8x1xf32>
      %832 = vector.broadcast %831 : vector<8x1xf32> to vector<8x256xf32>
      %833 = arith.addf %830, %832 : vector<8x256xf32>
      %cst_444 = arith.constant 0.000000e+00 : f32
      %834 = vector.broadcast %cst_444 : f32 to vector<8x256xf32>
      %835 = arith.maximumf %833, %834 : vector<8x256xf32>
      %c0_445 = arith.constant 0 : index
      %c0_446 = arith.constant 0 : index
      %836 = vector.load %arg9[%c0_445, %c0_446] : memref<4x8xbf16, #tpu.memory_space<vmem>>, vector<4x8xbf16>
      %837 = arith.truncf %835 : vector<8x256xf32> to vector<8x256xbf16>
      %cst_447 = arith.constant dense<0.000000e+00> : vector<4x256xf32>
      %838 = tpu.matmul %836, %837, %cst_447 {dimension_numbers = #tpu.dot_dimension_numbers<[1], [0], [0], [1], [0, 0, 1, 1], [], []>} : vector<4x8xbf16>, vector<8x256xbf16>, vector<4x256xf32> -> vector<4x256xf32>
      %c0_448 = arith.constant 0 : index
      %c0_449 = arith.constant 0 : index
      %839 = vector.load %arg10[%c0_448, %c0_449] : memref<4x1xf32, #tpu.memory_space<vmem>>, vector<4x1xf32>
      %840 = vector.broadcast %839 : vector<4x1xf32> to vector<4x256xf32>
      %841 = arith.addf %838, %840 : vector<4x256xf32>
      %c1_450 = arith.constant 1 : index
      %c0_451 = arith.constant 0 : index
      %c0_452 = arith.constant 0 : index
      %842 = vector.load %arg15[%c1_450, %c0_451, %c0_452] : memref<2x4x256xf32, #tpu.memory_space<vmem>>, vector<1x4x256xf32>
      %843 = vector.shape_cast %842 : vector<1x4x256xf32> to vector<4x256xf32>
      %844 = vector.shape_cast %841 : vector<4x256xf32> to vector<1x4x256xf32>
      tpu.vector_store %arg15[%c1_450, %c0_451, %c0_452], %844 {strides = array<i32>} : memref<2x4x256xf32, #tpu.memory_space<vmem>>, vector<1x4x256xf32>,
    } else {
    }
    %c0 = arith.constant 0 : index
    %c0_1 = arith.constant 0 : index
    %c0_2 = arith.constant 0 : index
    %3 = vector.load %arg15[%c0, %c0_1, %c0_2] : memref<2x4x256xf32, #tpu.memory_space<vmem>>, vector<2x1x256xf32>
    %4 = vector.shape_cast %3 : vector<2x1x256xf32> to vector<2x256xf32>
    %5 = arith.truncf %4 : vector<2x256xf32> to vector<2x256xbf16>
    %c0_3 = arith.constant 0 : index
    %c0_4 = arith.constant 0 : index
    %6 = vector.load %arg13[%c0_3, %c0_4] : memref<1024x512xbf16, #tpu.memory_space<vmem>>, vector<256x512xbf16>
    %cst = arith.constant dense<0.000000e+00> : vector<2x512xf32>
    %7 = tpu.matmul %5, %6, %cst {dimension_numbers = #tpu.dot_dimension_numbers<[1], [0], [0], [1], [0, 0, 1, 1], [], []>} : vector<2x256xbf16>, vector<256x512xbf16>, vector<2x512xf32> -> vector<2x512xf32>
    %c0_5 = arith.constant 0 : index
    %c1 = arith.constant 1 : index
    %c0_6 = arith.constant 0 : index
    %8 = vector.load %arg15[%c0_5, %c1, %c0_6] : memref<2x4x256xf32, #tpu.memory_space<vmem>>, vector<2x1x256xf32>
    %9 = vector.shape_cast %8 : vector<2x1x256xf32> to vector<2x256xf32>
    %10 = arith.truncf %9 : vector<2x256xf32> to vector<2x256xbf16>
    %c256 = arith.constant 256 : index
    %c0_7 = arith.constant 0 : index
    %11 = vector.load %arg13[%c256, %c0_7] : memref<1024x512xbf16, #tpu.memory_space<vmem>>, vector<256x512xbf16>
    %cst_8 = arith.constant dense<0.000000e+00> : vector<2x512xf32>
    %12 = tpu.matmul %10, %11, %cst_8 {dimension_numbers = #tpu.dot_dimension_numbers<[1], [0], [0], [1], [0, 0, 1, 1], [], []>} : vector<2x256xbf16>, vector<256x512xbf16>, vector<2x512xf32> -> vector<2x512xf32>
    %13 = arith.addf %7, %12 : vector<2x512xf32>
    %c0_9 = arith.constant 0 : index
    %c2 = arith.constant 2 : index
    %c0_10 = arith.constant 0 : index
    %14 = vector.load %arg15[%c0_9, %c2, %c0_10] : memref<2x4x256xf32, #tpu.memory_space<vmem>>, vector<2x1x256xf32>
    %15 = vector.shape_cast %14 : vector<2x1x256xf32> to vector<2x256xf32>
    %16 = arith.truncf %15 : vector<2x256xf32> to vector<2x256xbf16>
    %c512 = arith.constant 512 : index
    %c0_11 = arith.constant 0 : index
    %17 = vector.load %arg13[%c512, %c0_11] : memref<1024x512xbf16, #tpu.memory_space<vmem>>, vector<256x512xbf16>
    %cst_12 = arith.constant dense<0.000000e+00> : vector<2x512xf32>
    %18 = tpu.matmul %16, %17, %cst_12 {dimension_numbers = #tpu.dot_dimension_numbers<[1], [0], [0], [1], [0, 0, 1, 1], [], []>} : vector<2x256xbf16>, vector<256x512xbf16>, vector<2x512xf32> -> vector<2x512xf32>
    %19 = arith.addf %13, %18 : vector<2x512xf32>
    %c0_13 = arith.constant 0 : index
    %c3 = arith.constant 3 : index
    %c0_14 = arith.constant 0 : index
    %20 = vector.load %arg15[%c0_13, %c3, %c0_14] : memref<2x4x256xf32, #tpu.memory_space<vmem>>, vector<2x1x256xf32>
    %21 = vector.shape_cast %20 : vector<2x1x256xf32> to vector<2x256xf32>
    %22 = arith.truncf %21 : vector<2x256xf32> to vector<2x256xbf16>
    %c768 = arith.constant 768 : index
    %c0_15 = arith.constant 0 : index
    %23 = vector.load %arg13[%c768, %c0_15] : memref<1024x512xbf16, #tpu.memory_space<vmem>>, vector<256x512xbf16>
    %cst_16 = arith.constant dense<0.000000e+00> : vector<2x512xf32>
    %24 = tpu.matmul %22, %23, %cst_16 {dimension_numbers = #tpu.dot_dimension_numbers<[1], [0], [0], [1], [0, 0, 1, 1], [], []>} : vector<2x256xbf16>, vector<256x512xbf16>, vector<2x512xf32> -> vector<2x512xf32>
    %25 = arith.addf %19, %24 : vector<2x512xf32>
    %c0_17 = arith.constant 0 : index
    %c0_18 = arith.constant 0 : index
    %26 = vector.load %arg14[%c0_17, %c0_18] : memref<2x512xf32, #tpu.memory_space<vmem>>, vector<2x512xf32>
    tpu.vector_store %arg14[%c0_17, %c0_18], %25 {strides = array<i32>} : memref<2x512xf32, #tpu.memory_space<vmem>>, vector<2x512xf32>,
    return
  }
  func.func @transform_0(%arg0: i32) -> (i32, i32, i32) {
    %c0_i32 = arith.constant 0 : i32
    %c0_i32_0 = arith.constant 0 : i32
    %c0_i32_1 = arith.constant 0 : i32
    %c0_i32_2 = arith.constant 0 : i32
    return %c0_i32, %c0_i32_0, %c0_i32_1 : i32, i32, i32
  }
  func.func @transform_1(%arg0: i32) -> (i32, i32, i32) {
    %c0_i32 = arith.constant 0 : i32
    %c0_i32_0 = arith.constant 0 : i32
    %c0_i32_1 = arith.constant 0 : i32
    %c0_i32_2 = arith.constant 0 : i32
    return %c0_i32, %c0_i32_0, %c0_i32_1 : i32, i32, i32
  }
  func.func @transform_2(%arg0: i32) -> (i32, i32) {
    %c0_i32 = arith.constant 0 : i32
    %c0_i32_0 = arith.constant 0 : i32
    %c0_i32_1 = arith.constant 0 : i32
    return %c0_i32, %c0_i32_0 : i32, i32
  }
  func.func @transform_3(%arg0: i32) -> (i32, i32, i32) {
    %c0_i32 = arith.constant 0 : i32
    %c0_i32_0 = arith.constant 0 : i32
    %c0_i32_1 = arith.constant 0 : i32
    %c0_i32_2 = arith.constant 0 : i32
    return %c0_i32, %c0_i32_0, %c0_i32_1 : i32, i32, i32
  }
  func.func @transform_4(%arg0: i32) -> (i32, i32) {
    %c0_i32 = arith.constant 0 : i32
    %c0_i32_0 = arith.constant 0 : i32
    %c0_i32_1 = arith.constant 0 : i32
    return %c0_i32, %c0_i32_0 : i32, i32
  }
  func.func @transform_5(%arg0: i32) -> (i32, i32, i32) {
    %c0_i32 = arith.constant 0 : i32
    %c0_i32_0 = arith.constant 0 : i32
    %c0_i32_1 = arith.constant 0 : i32
    %c0_i32_2 = arith.constant 0 : i32
    return %c0_i32, %c0_i32_0, %c0_i32_1 : i32, i32, i32
  }
  func.func @transform_6(%arg0: i32) -> (i32, i32, i32) {
    %c0_i32 = arith.constant 0 : i32
    %c0_i32_0 = arith.constant 0 : i32
    %c0_i32_1 = arith.constant 0 : i32
    %c0_i32_2 = arith.constant 0 : i32
    return %c0_i32, %c0_i32_0, %c0_i32_1 : i32, i32, i32
  }
  func.func @transform_7(%arg0: i32) -> (i32, i32) {
    %c0_i32 = arith.constant 0 : i32
    %c0_i32_0 = arith.constant 0 : i32
    %c0_i32_1 = arith.constant 0 : i32
    return %c0_i32, %c0_i32_0 : i32, i32
  }
  func.func @transform_8(%arg0: i32) -> (i32, i32) {
    %c0_i32 = arith.constant 0 : i32
    %c0_i32_0 = arith.constant 0 : i32
    %c0_i32_1 = arith.constant 0 : i32
    return %c0_i32, %c0_i32_0 : i32, i32
  }
  func.func @transform_9(%arg0: i32) -> (i32, i32) {
    %c0_i32 = arith.constant 0 : i32
    %c0_i32_0 = arith.constant 0 : i32
    %c0_i32_1 = arith.constant 0 : i32
    return %c0_i32, %c0_i32_0 : i32, i32
  }
  func.func @transform_10(%arg0: i32) -> (i32, i32) {
    %c0_i32 = arith.constant 0 : i32
    %c0_i32_0 = arith.constant 0 : i32
    %c0_i32_1 = arith.constant 0 : i32
    return %c0_i32, %c0_i32_0 : i32, i32
  }
  func.func @transform_11(%arg0: i32) -> (i32, i32) {
    %c0_i32 = arith.constant 0 : i32
    %c0_i32_0 = arith.constant 0 : i32
    %c0_i32_1 = arith.constant 0 : i32
    return %c0_i32, %c0_i32_0 : i32, i32
  }
  func.func @transform_12(%arg0: i32) -> (i32, i32) {
    %c0_i32 = arith.constant 0 : i32
    %c0_i32_0 = arith.constant 0 : i32
    return %c0_i32, %arg0 : i32, i32
  }
  func.func @transform_13(%arg0: i32) -> (i32, i32) {
    %c0_i32 = arith.constant 0 : i32
    %c0_i32_0 = arith.constant 0 : i32
    return %c0_i32, %arg0 : i32, i32
  }
}

</mosaic_0001>

<llo_original>
// kernel: ls_unet_forward.1
$region0: #{ls_unet_forward.1}
  #allocation0 [shape = 'u32[]', space=smem, size = 0x4, offset = 0x4, fixed_abs, tag = 'smem constant byte address 0x4 - core index']
  #allocation1 [shape = 'u32[72,128]{1,0:T(1,128)}', space=vmem, size = 0x9000, scoped, tag = 'internal scratch']
  #allocation2 [shape = 'f32[2,4,256]{2,1,0:T(4,128)}', space=vmem, size = 0x2000, scoped, tag = 'scratch operand']
  %s0 = inlined_call_operand.vmem [shape: f32[2,4,256], index: 0, kind: input, shape index: {}]
  %s1 = inlined_call_operand.vmem [shape: bf16[9,8,4], index: 1, kind: input, shape index: {}]
  %s2 = inlined_call_operand.vmem [shape: f32[8,1], index: 2, kind: input, shape index: {}]
  %s3 = inlined_call_operand.vmem [shape: bf16[9,16,8], index: 3, kind: input, shape index: {}]
  %s4 = inlined_call_operand.vmem [shape: f32[16,1], index: 4, kind: input, shape index: {}]
  %s5 = inlined_call_operand.hbm [shape: bf16[9,8,16], index: 5, kind: input, shape index: {}]
  %s6 = inlined_call_operand.vmem [shape: bf16[9,8,8], index: 6, kind: input, shape index: {}]
  %s7 = inlined_call_operand.vmem [shape: f32[8,1], index: 7, kind: input, shape index: {}]
  %s8 = inlined_call_operand.hbm [shape: bf16[4,8], index: 8, kind: input, shape index: {}]
  %s9 = inlined_call_operand.vmem [shape: f32[4,1], index: 9, kind: input, shape index: {}]
  %s10 = inlined_call_operand.vmem [shape: bf16[256,64], index: 10, kind: input, shape index: {}]
  %s11 = inlined_call_operand.hbm [shape: bf16[64,256], index: 11, kind: input, shape index: {}]
  %s12 = inlined_call_operand.hbm [shape: bf16[1024,1024], index: 12, kind: input, shape index: {}]
  %s13 = inlined_call_operand.vmem [shape: f32[2,1024], index: 13, kind: output, shape index: {}]
  %s14 = sld [smem:[#allocation0]]
  $region105: #{ls_unet_forward.1} parent=0
    _
  %s16 = ssub.s32 1, %s14
  %s17 = scalar_select 0, %s16, %s14
  $region1: #{ls_unet_forward.1} parent=0
    #allocation3 [shape = 'u8[18432]{0}', space=vmem, size = 0x4800, scoped, tag = 'input window, operand 5, single buffered']
    #allocation4 [shape = 's32[2]{0}', space=sflag, size = 0x8, scoped, tag = 'scoped memory for ls_unet_forward.1']
    #allocation5 [shape = 'u8[1024]{0}', space=vmem, size = 0x400, scoped, tag = 'input window, operand 8, single buffered']
    #allocation6 [shape = 's32[1]{0}', space=sflag, size = 0x4, scoped, tag = 'scoped memory for ls_unet_forward.1']
    #allocation7 [shape = 'u8[32768]{0}', space=vmem, size = 0x8000, scoped, tag = 'input window, operand 11, single buffered']
    #allocation8 [shape = 'u8[2097152]{0}', space=vmem, size = 0x200000, scoped, tag = 'input window, operand 12']
    #allocation9 [shape = 's32[2]{0}', space=sflag, size = 0x8, scoped, tag = 'scoped memory for ls_unet_forward.1']
    %18 = vsyncpa [#allocation4], 0
    %19 = vsyncpa [#allocation6], 0
    %20 = vsyncpa [#allocation9], 0
    %s21 = scalar_lea.sflag [#allocation9], 1
    %22 = vsyncpa %s21, 0
    loop: start=0, step=1, limit=4
    $region2: #{ls_unet_forward.1} parent=1 // loop_pre_header
      _
    $region3: #{ls_unet_forward.1} parent=1 // loop_header
      %s24 = sphi 0, %s28
      %p25 = scmp.ge.s32.totalorder %s24, 4
      %s32 = sphi 0, %s32
      %s34 = sphi 0, %s32
      %s35 = sphi 0, %s34
      %s49 = sphi 0, %s35
      %s53 = sphi 0, %s53
      %s55 = sphi 0, %s53
      %s56 = sphi 0, %s55
      %s70 = sphi 0, %s56
      %s74 = sphi 0, %s74
      %s76 = sphi 0, %s74
      %s77 = sphi 0, %s76
      %s91 = sphi 0, %s77
      %s95 = sphi 0, %s95
      %s97 = sphi 0, %s95
      %s98 = sphi 0, %s97
      %s112 = sphi 0, %s98
      %s116 = sphi 0, %s116
      %s118 = sphi 0, %s116
      %s119 = sphi 0, %s118
      %s133 = sphi 0, %s119
      %s137 = sphi 0, %s137
      %s139 = sphi 0, %s137
      %s140 = sphi 0, %s139
      %s154 = sphi 0, %s140
      %s158 = sphi 0, %s158
      %s160 = sphi 0, %s158
      %s161 = sphi 0, %s160
      %s175 = sphi 0, %s161
      %s179 = sphi 0, %s179
      %s181 = sphi 0, %s179
      %s182 = sphi 0, %s181
      %s196 = sphi 0, %s182
      %s200 = sphi 0, %s200
      %s202 = sphi 0, %s200
      %s203 = sphi 0, %s202
      %s217 = sphi 0, %s203
      %s221 = sphi 0, %s221
      %s223 = sphi 0, %s221
      %s224 = sphi 0, %s223
      %s238 = sphi 0, %s224
      %s242 = sphi 0, %s242
      %s244 = sphi 0, %s242
      %s245 = sphi 0, %s244
      %s259 = sphi 0, %s245
      %s263 = sphi 0, %s263
      %s265 = sphi 0, %s263
      %s266 = sphi 0, %s265
      %s280 = sphi 0, %s266
      %s286 = sphi 0, %s288
      %s289 = sphi 0, %s286
      %s290 = sphi 0, %s289
      %s306 = sphi 0, %s290
      %s312 = sphi 0, %s314
      %s315 = sphi 0, %s312
      %s316 = sphi 0, %s315
      %s332 = sphi 0, %s316
    $region4: #{ls_unet_forward.1} parent=1 // loop_header_branch
      %27 = sbr.rel (%p25) target = $region8
    $region5: #{ls_unet_forward.1} parent=1 // loop_body
      %s29 = ssub.s32 %s24, 1
      %s30 = ssub.s32 %s24, 2
      %s31 = sadd.s32 %s24, 1
      %s33 = sadd.s32 %s32, 1
      %p36 = scmp.eq.s32.totalorder %s24, 1
      %p37 = scmp.ne.s32.totalorder %s32, %s34
      %p38 = scmp.eq.s32.totalorder %s24, 0
      %p39 = por %p37, %p38
      %p40 = scmp.ne.s32.totalorder %s32, %s34
      %p41 = scmp.eq.s32.totalorder %s29, 1
      %p42 = por %p40, %p41
      %p43 = scmp.ne.s32.totalorder %s34, %s35
      %p44 = scmp.eq.s32.totalorder %s29, 0
      %p45 = por %p43, %p44
      %p46 = scmp.ne.s32.totalorder %s34, %s35
      %p47 = scmp.eq.s32.totalorder %s30, 1
      %p48 = por %p46, %p47
      %p50 = scmp.ne.s32.totalorder %s35, %s49
      %p51 = scmp.eq.s32.totalorder %s30, 0
      %p52 = por %p50, %p51
      %s54 = sadd.s32 %s53, 1
      %p57 = scmp.eq.s32.totalorder %s24, 1
      %p58 = scmp.ne.s32.totalorder %s53, %s55
      %p59 = scmp.eq.s32.totalorder %s24, 0
      %p60 = por %p58, %p59
      %p61 = scmp.ne.s32.totalorder %s53, %s55
      %p62 = scmp.eq.s32.totalorder %s29, 1
      %p63 = por %p61, %p62
      %p64 = scmp.ne.s32.totalorder %s55, %s56
      %p65 = scmp.eq.s32.totalorder %s29, 0
      %p66 = por %p64, %p65
      %p67 = scmp.ne.s32.totalorder %s55, %s56
      %p68 = scmp.eq.s32.totalorder %s30, 1
      %p69 = por %p67, %p68
      %p71 = scmp.ne.s32.totalorder %s56, %s70
      %p72 = scmp.eq.s32.totalorder %s30, 0
      %p73 = por %p71, %p72
      %s75 = sadd.s32 %s74, 1
      %p78 = scmp.eq.s32.totalorder %s24, 1
      %p79 = scmp.ne.s32.totalorder %s74, %s76
      %p80 = scmp.eq.s32.totalorder %s24, 0
      %p81 = por %p79, %p80
      %p82 = scmp.ne.s32.totalorder %s74, %s76
      %p83 = scmp.eq.s32.totalorder %s29, 1
      %p84 = por %p82, %p83
      %p85 = scmp.ne.s32.totalorder %s76, %s77
      %p86 = scmp.eq.s32.totalorder %s29, 0
      %p87 = por %p85, %p86
      %p88 = scmp.ne.s32.totalorder %s76, %s77
      %p89 = scmp.eq.s32.totalorder %s30, 1
      %p90 = por %p88, %p89
      %p92 = scmp.ne.s32.totalorder %s77, %s91
      %p93 = scmp.eq.s32.totalorder %s30, 0
      %p94 = por %p92, %p93
      %s96 = sadd.s32 %s95, 1
      %p99 = scmp.eq.s32.totalorder %s24, 1
      %p100 = scmp.ne.s32.totalorder %s95, %s97
      %p101 = scmp.eq.s32.totalorder %s24, 0
      %p102 = por %p100, %p101
      %p103 = scmp.ne.s32.totalorder %s95, %s97
      %p104 = scmp.eq.s32.totalorder %s29, 1
      %p105 = por %p103, %p104
      %p106 = scmp.ne.s32.totalorder %s97, %s98
      %p107 = scmp.eq.s32.totalorder %s29, 0
      %p108 = por %p106, %p107
      %p109 = scmp.ne.s32.totalorder %s97, %s98
      %p110 = scmp.eq.s32.totalorder %s30, 1
      %p111 = por %p109, %p110
      %p113 = scmp.ne.s32.totalorder %s98, %s112
      %p114 = scmp.eq.s32.totalorder %s30, 0
      %p115 = por %p113, %p114
      %s117 = sadd.s32 %s116, 1
      %p120 = scmp.eq.s32.totalorder %s24, 1
      %p121 = scmp.ne.s32.totalorder %s116, %s118
      %p122 = scmp.eq.s32.totalorder %s24, 0
      %p123 = por %p121, %p122
      %p124 = scmp.ne.s32.totalorder %s116, %s118
      %p125 = scmp.eq.s32.totalorder %s29, 1
      %p126 = por %p124, %p125
      %p127 = scmp.ne.s32.totalorder %s118, %s119
      %p128 = scmp.eq.s32.totalorder %s29, 0
      %p129 = por %p127, %p128
      %p130 = scmp.ne.s32.totalorder %s118, %s119
      %p131 = scmp.eq.s32.totalorder %s30, 1
      %p132 = por %p130, %p131
      %p134 = scmp.ne.s32.totalorder %s119, %s133
      %p135 = scmp.eq.s32.totalorder %s30, 0
      %p136 = por %p134, %p135
      %s138 = sadd.s32 %s137, 1
      %p141 = scmp.eq.s32.totalorder %s24, 1
      %p142 = scmp.ne.s32.totalorder %s137, %s139
      %p143 = scmp.eq.s32.totalorder %s24, 0
      %p144 = por %p142, %p143
      %p145 = scmp.ne.s32.totalorder %s137, %s139
      %p146 = scmp.eq.s32.totalorder %s29, 1
      %p147 = por %p145, %p146
      %p148 = scmp.ne.s32.totalorder %s139, %s140
      %p149 = scmp.eq.s32.totalorder %s29, 0
      %p150 = por %p148, %p149
      %p151 = scmp.ne.s32.totalorder %s139, %s140
      %p152 = scmp.eq.s32.totalorder %s30, 1
      %p153 = por %p151, %p152
      %p155 = scmp.ne.s32.totalorder %s140, %s154
      %p156 = scmp.eq.s32.totalorder %s30, 0
      %p157 = por %p155, %p156
      %s159 = sadd.s32 %s158, 1
      %p162 = scmp.eq.s32.totalorder %s24, 1
      %p163 = scmp.ne.s32.totalorder %s158, %s160
      %p164 = scmp.eq.s32.totalorder %s24, 0
      %p165 = por %p163, %p164
      %p166 = scmp.ne.s32.totalorder %s158, %s160
      %p167 = scmp.eq.s32.totalorder %s29, 1
      %p168 = por %p166, %p167
      %p169 = scmp.ne.s32.totalorder %s160, %s161
      %p170 = scmp.eq.s32.totalorder %s29, 0
      %p171 = por %p169, %p170
      %p172 = scmp.ne.s32.totalorder %s160, %s161
      %p173 = scmp.eq.s32.totalorder %s30, 1
      %p174 = por %p172, %p173
      %p176 = scmp.ne.s32.totalorder %s161, %s175
      %p177 = scmp.eq.s32.totalorder %s30, 0
      %p178 = por %p176, %p177
      %s180 = sadd.s32 %s179, 1
      %p183 = scmp.eq.s32.totalorder %s24, 1
      %p184 = scmp.ne.s32.totalorder %s179, %s181
      %p185 = scmp.eq.s32.totalorder %s24, 0
      %p186 = por %p184, %p185
      %p187 = scmp.ne.s32.totalorder %s179, %s181
      %p188 = scmp.eq.s32.totalorder %s29, 1
      %p189 = por %p187, %p188
      %p190 = scmp.ne.s32.totalorder %s181, %s182
      %p191 = scmp.eq.s32.totalorder %s29, 0
      %p192 = por %p190, %p191
      %p193 = scmp.ne.s32.totalorder %s181, %s182
      %p194 = scmp.eq.s32.totalorder %s30, 1
      %p195 = por %p193, %p194
      %p197 = scmp.ne.s32.totalorder %s182, %s196
      %p198 = scmp.eq.s32.totalorder %s30, 0
      %p199 = por %p197, %p198
      %s201 = sadd.s32 %s200, 1
      %p204 = scmp.eq.s32.totalorder %s24, 1
      %p205 = scmp.ne.s32.totalorder %s200, %s202
      %p206 = scmp.eq.s32.totalorder %s24, 0
      %p207 = por %p205, %p206
      %p208 = scmp.ne.s32.totalorder %s200, %s202
      %p209 = scmp.eq.s32.totalorder %s29, 1
      %p210 = por %p208, %p209
      %p211 = scmp.ne.s32.totalorder %s202, %s203
      %p212 = scmp.eq.s32.totalorder %s29, 0
      %p213 = por %p211, %p212
      %p214 = scmp.ne.s32.totalorder %s202, %s203
      %p215 = scmp.eq.s32.totalorder %s30, 1
      %p216 = por %p214, %p215
      %p218 = scmp.ne.s32.totalorder %s203, %s217
      %p219 = scmp.eq.s32.totalorder %s30, 0
      %p220 = por %p218, %p219
      %s222 = sadd.s32 %s221, 1
      %p225 = scmp.eq.s32.totalorder %s24, 1
      %p226 = scmp.ne.s32.totalorder %s221, %s223
      %p227 = scmp.eq.s32.totalorder %s24, 0
      %p228 = por %p226, %p227
      %p229 = scmp.ne.s32.totalorder %s221, %s223
      %p230 = scmp.eq.s32.totalorder %s29, 1
      %p231 = por %p229, %p230
      %p232 = scmp.ne.s32.totalorder %s223, %s224
      %p233 = scmp.eq.s32.totalorder %s29, 0
      %p234 = por %p232, %p233
      %p235 = scmp.ne.s32.totalorder %s223, %s224
      %p236 = scmp.eq.s32.totalorder %s30, 1
      %p237 = por %p235, %p236
      %p239 = scmp.ne.s32.totalorder %s224, %s238
      %p240 = scmp.eq.s32.totalorder %s30, 0
      %p241 = por %p239, %p240
      %s243 = sadd.s32 %s242, 1
      %p246 = scmp.eq.s32.totalorder %s24, 1
      %p247 = scmp.ne.s32.totalorder %s242, %s244
      %p248 = scmp.eq.s32.totalorder %s24, 0
      %p249 = por %p247, %p248
      %p250 = scmp.ne.s32.totalorder %s242, %s244
      %p251 = scmp.eq.s32.totalorder %s29, 1
      %p252 = por %p250, %p251
      %p253 = scmp.ne.s32.totalorder %s244, %s245
      %p254 = scmp.eq.s32.totalorder %s29, 0
      %p255 = por %p253, %p254
      %p256 = scmp.ne.s32.totalorder %s244, %s245
      %p257 = scmp.eq.s32.totalorder %s30, 1
      %p258 = por %p256, %p257
      %p260 = scmp.ne.s32.totalorder %s245, %s259
      %p261 = scmp.eq.s32.totalorder %s30, 0
      %p262 = por %p260, %p261
      %s264 = sadd.s32 %s263, 1
      %p267 = scmp.eq.s32.totalorder %s24, 1
      %p268 = scmp.ne.s32.totalorder %s263, %s265
      %p269 = scmp.eq.s32.totalorder %s24, 0
      %p270 = por %p268, %p269
      %p271 = scmp.ne.s32.totalorder %s263, %s265
      %p272 = scmp.eq.s32.totalorder %s29, 1
      %p273 = por %p271, %p272
      %p274 = scmp.ne.s32.totalorder %s265, %s266
      %p275 = scmp.eq.s32.totalorder %s29, 0
      %p276 = por %p274, %p275
      %p277 = scmp.ne.s32.totalorder %s265, %s266
      %p278 = scmp.eq.s32.totalorder %s30, 1
      %p279 = por %p277, %p278
      %p281 = scmp.ne.s32.totalorder %s266, %s280
      %p282 = scmp.eq.s32.totalorder %s30, 0
      %p283 = por %p281, %p282
      %s284 = ssub.s32 %s24, %s31
      %p285 = scmp.eq.s32.totalorder %s284, 0
      %s287 = sadd.s32 %s286, 1
      %s288 = scalar_select %p285, %s286, %s287
      %p291 = pneg %p285
      %p292 = scmp.eq.s32.totalorder %s24, 1
      %p293 = por %p291, %p292
      %p294 = scmp.ne.s32.totalorder %s286, %s289
      %p295 = scmp.eq.s32.totalorder %s24, 0
      %p296 = por %p294, %p295
      %p297 = scmp.ne.s32.totalorder %s286, %s289
      %p298 = scmp.eq.s32.totalorder %s29, 1
      %p299 = por %p297, %p298
      %p300 = scmp.ne.s32.totalorder %s289, %s290
      %p301 = scmp.eq.s32.totalorder %s29, 0
      %p302 = por %p300, %p301
      %p303 = scmp.ne.s32.totalorder %s289, %s290
      %p304 = scmp.eq.s32.totalorder %s30, 1
      %p305 = por %p303, %p304
      %p307 = scmp.ne.s32.totalorder %s290, %s306
      %p308 = scmp.eq.s32.totalorder %s30, 0
      %p309 = por %p307, %p308
      %s310 = ssub.s32 %s24, %s31
      %p311 = scmp.eq.s32.totalorder %s310, 0
      %s313 = sadd.s32 %s312, 1
      %s314 = scalar_select %p311, %s312, %s313
      %p317 = pneg %p311
      %p318 = scmp.eq.s32.totalorder %s24, 1
      %p319 = por %p317, %p318
      %p320 = scmp.ne.s32.totalorder %s312, %s315
      %p321 = scmp.eq.s32.totalorder %s24, 0
      %p322 = por %p320, %p321
      %p323 = scmp.ne.s32.totalorder %s312, %s315
      %p324 = scmp.eq.s32.totalorder %s29, 1
      %p325 = por %p323, %p324
      %p326 = scmp.ne.s32.totalorder %s315, %s316
      %p327 = scmp.eq.s32.totalorder %s29, 0
      %p328 = por %p326, %p327
      %p329 = scmp.ne.s32.totalorder %s315, %s316
      %p330 = scmp.eq.s32.totalorder %s30, 1
      %p331 = por %p329, %p330
      %p333 = scmp.ne.s32.totalorder %s316, %s332
      %p334 = scmp.eq.s32.totalorder %s30, 0
      %p335 = por %p333, %p334
      %p336 = scmp.le.s32.totalorder 1, %s24
      %p337 = scmp.lt.s32.totalorder %s24, 3
      %p338 = pnand %p336, %p337
      %p339 = pneg %p338
      // Predicated region
      $region9: #{ls_unet_forward.1} parent=5 // pred_check
        _
      $region10: #{ls_unet_forward.1} parent=5 // pred_check_branch
        %341 = sbr.rel (%p338) target = $region12
      $region11: #{ls_unet_forward.1} parent=5 // pred_region
        %s342 = ssub.s32 %s24, 1
        // Predicated region
        $region13: #{ls_unet_forward.1} parent=11 // pred_check
          %p343 = pneg %p45
        $region14: #{ls_unet_forward.1} parent=11 // pred_check_branch
          %345 = sbr.rel (%p343) target = $region16
        $region15: #{ls_unet_forward.1} parent=11 // pred_region
          _
        $region16: #{ls_unet_forward.1} parent=11 // pred_fallthru
          _
        // Predicated region
        $region17: #{ls_unet_forward.1} parent=11 // pred_check
          %p346 = pneg %p66
        $region18: #{ls_unet_forward.1} parent=11 // pred_check_branch
          %348 = sbr.rel (%p346) target = $region20
        $region19: #{ls_unet_forward.1} parent=11 // pred_region
          _
        $region20: #{ls_unet_forward.1} parent=11 // pred_fallthru
          _
        // Predicated region
        $region21: #{ls_unet_forward.1} parent=11 // pred_check
          %p349 = pneg %p87
        $region22: #{ls_unet_forward.1} parent=11 // pred_check_branch
          %351 = sbr.rel (%p349) target = $region24
        $region23: #{ls_unet_forward.1} parent=11 // pred_region
          _
        $region24: #{ls_unet_forward.1} parent=11 // pred_fallthru
          _
        // Predicated region
        $region25: #{ls_unet_forward.1} parent=11 // pred_check
          %p352 = pneg %p108
        $region26: #{ls_unet_forward.1} parent=11 // pred_check_branch
          %354 = sbr.rel (%p352) target = $region28
        $region27: #{ls_unet_forward.1} parent=11 // pred_region
          _
        $region28: #{ls_unet_forward.1} parent=11 // pred_fallthru
          _
        // Predicated region
        $region29: #{ls_unet_forward.1} parent=11 // pred_check
          %p355 = pneg %p129
        $region30: #{ls_unet_forward.1} parent=11 // pred_check_branch
          %357 = sbr.rel (%p355) target = $region32
        $region31: #{ls_unet_forward.1} parent=11 // pred_region
          _
        $region32: #{ls_unet_forward.1} parent=11 // pred_fallthru
          _
        // Predicated region
        $region33: #{ls_unet_forward.1} parent=11 // pred_check
          %p358 = pneg %p150
        $region34: #{ls_unet_forward.1} parent=11 // pred_check_branch
          %360 = sbr.rel (%p358) target = $region36
        $region35: #{ls_unet_forward.1} parent=11 // pred_region
          %362 = vsyncadd [#allocation4], 0
          %s363 = sshll.u32 %s5, 4
          %s364 = int_to_ptr.hbm [resolvable:$true] %s363
          %s365 = sshll.u32 [#allocation3], 4
          %s366 = int_to_ptr.vmem [resolvable:$true] %s365
          %371 = dma.hbm_to_vmem [thread:$0]  %s364, 576, %s366, [#allocation4], 64, 64, 4
        $region36: #{ls_unet_forward.1} parent=11 // pred_fallthru
          _
        // Predicated region
        $region37: #{ls_unet_forward.1} parent=11 // pred_check
          %p372 = pneg %p171
        $region38: #{ls_unet_forward.1} parent=11 // pred_check_branch
          %374 = sbr.rel (%p372) target = $region40
        $region39: #{ls_unet_forward.1} parent=11 // pred_region
          _
        $region40: #{ls_unet_forward.1} parent=11 // pred_fallthru
          _
        // Predicated region
        $region41: #{ls_unet_forward.1} parent=11 // pred_check
          %p375 = pneg %p192
        $region42: #{ls_unet_forward.1} parent=11 // pred_check_branch
          %377 = sbr.rel (%p375) target = $region44
        $region43: #{ls_unet_forward.1} parent=11 // pred_region
          _
        $region44: #{ls_unet_forward.1} parent=11 // pred_fallthru
          _
        // Predicated region
        $region45: #{ls_unet_forward.1} parent=11 // pred_check
          %p378 = pneg %p213
        $region46: #{ls_unet_forward.1} parent=11 // pred_check_branch
          %380 = sbr.rel (%p378) target = $region48
        $region47: #{ls_unet_forward.1} parent=11 // pred_region
          %382 = vsyncadd [#allocation6], 0
          %s384 = sshll.u32 %s8, 4
          %s385 = int_to_ptr.hbm [resolvable:$true] %s384
          %s386 = sshll.u32 [#allocation5], 4
          %s387 = int_to_ptr.vmem [resolvable:$true] %s386
          %389 = dma.hbm_to_vmem [thread:$0]  %s385, 32, %s387, [#allocation6]
        $region48: #{ls_unet_forward.1} parent=11 // pred_fallthru
          _
        // Predicated region
        $region49: #{ls_unet_forward.1} parent=11 // pred_check
          %p390 = pneg %p234
        $region50: #{ls_unet_forward.1} parent=11 // pred_check_branch
          %392 = sbr.rel (%p390) target = $region52
        $region51: #{ls_unet_forward.1} parent=11 // pred_region
          _
        $region52: #{ls_unet_forward.1} parent=11 // pred_fallthru
          _
        // Predicated region
        $region53: #{ls_unet_forward.1} parent=11 // pred_check
          %p393 = pneg %p255
        $region54: #{ls_unet_forward.1} parent=11 // pred_check_branch
          %395 = sbr.rel (%p393) target = $region56
        $region55: #{ls_unet_forward.1} parent=11 // pred_region
          _
        $region56: #{ls_unet_forward.1} parent=11 // pred_fallthru
          _
        // Predicated region
        $region57: #{ls_unet_forward.1} parent=11 // pred_check
          %p396 = pneg %p276
        $region58: #{ls_unet_forward.1} parent=11 // pred_check_branch
          %398 = sbr.rel (%p396) target = $region60
        $region59: #{ls_unet_forward.1} parent=11 // pred_region
          %400 = vsyncadd [#allocation6], 0
          %s401 = sshll.u32 %s11, 4
          %s402 = int_to_ptr.hbm [resolvable:$true] %s401
          %s403 = sshll.u32 [#allocation7], 4
          %s404 = int_to_ptr.vmem [resolvable:$true] %s403
          %409 = dma.hbm_to_vmem [thread:$0]  %s402, 1024, %s404, [#allocation6], 128, 128, 8
        $region60: #{ls_unet_forward.1} parent=11 // pred_fallthru
          _
      $region12: #{ls_unet_forward.1} parent=5 // pred_fallthru
        _
      %p410 = scmp.lt.s32.totalorder %s24, 2
      // Predicated region
      $region61: #{ls_unet_forward.1} parent=5 // pred_check
        %p411 = pneg %p410
      $region62: #{ls_unet_forward.1} parent=5 // pred_check_branch
        %413 = sbr.rel (%p411) target = $region64
      $region63: #{ls_unet_forward.1} parent=5 // pred_region
        // Predicated region
        $region65: #{ls_unet_forward.1} parent=63 // pred_check
          %p414 = pneg %p296
        $region66: #{ls_unet_forward.1} parent=63 // pred_check_branch
          %416 = sbr.rel (%p414) target = $region68
        $region67: #{ls_unet_forward.1} parent=63 // pred_region
          %s417 = sand.u32 %s286, 1
          %s418 = scalar_lea.sflag [#allocation9], %s417
          %s419 = sand.u32 %s286, 1
          %s420 = smul.addr %s419, 2048
          %s421 = scalar_lea.vmem [#allocation8], %s420
          %s422 = smul.u32 4, %s24
          %424 = vsyncadd %s418, 0
          %s425 = smul.addr %s422, 4
          %s426 = scalar_lea.hbm %s12, %s425
          %s427 = sshll.u32 %s426, 4
          %s428 = int_to_ptr.hbm [resolvable:$true] %s427
          %s429 = sshll.u32 %s421, 4
          %s430 = int_to_ptr.vmem [resolvable:$true] %s429
          %435 = dma.hbm_to_vmem [thread:$0]  %s428, 32768, %s430, %s418, 512, 256, 16
        $region68: #{ls_unet_forward.1} parent=63 // pred_fallthru
          _
      $region64: #{ls_unet_forward.1} parent=5 // pred_fallthru
        _
      %p436 = scmp.le.s32.totalorder 1, %s24
      %p437 = scmp.lt.s32.totalorder %s24, 3
      %p438 = pnand %p436, %p437
      %p439 = pneg %p438
      // Predicated region
      $region69: #{ls_unet_forward.1} parent=5 // pred_check
        _
      $region70: #{ls_unet_forward.1} parent=5 // pred_check_branch
        %441 = sbr.rel (%p438) target = $region72
      $region71: #{ls_unet_forward.1} parent=5 // pred_region
        %s442 = ssub.s32 %s24, 1
        // Predicated region
        $region73: #{ls_unet_forward.1} parent=71 // pred_check
          %p443 = pneg %p150
        $region74: #{ls_unet_forward.1} parent=71 // pred_check_branch
          %445 = sbr.rel (%p443) target = $region76
        $region75: #{ls_unet_forward.1} parent=71 // pred_region
          %447 = dma.done [#allocation4], 576
        $region76: #{ls_unet_forward.1} parent=71 // pred_fallthru
          _
        // Predicated region
        $region77: #{ls_unet_forward.1} parent=71 // pred_check
          %p448 = pneg %p213
        $region78: #{ls_unet_forward.1} parent=71 // pred_check_branch
          %450 = sbr.rel (%p448) target = $region80
        $region79: #{ls_unet_forward.1} parent=71 // pred_region
          %452 = dma.done [#allocation6], 32
        $region80: #{ls_unet_forward.1} parent=71 // pred_fallthru
          _
        // Predicated region
        $region81: #{ls_unet_forward.1} parent=71 // pred_check
          %p453 = pneg %p276
        $region82: #{ls_unet_forward.1} parent=71 // pred_check_branch
          %455 = sbr.rel (%p453) target = $region84
        $region83: #{ls_unet_forward.1} parent=71 // pred_region
          %457 = dma.done [#allocation6], 1024
        $region84: #{ls_unet_forward.1} parent=71 // pred_fallthru
          _
        %s458 = sand.u32 %s289, 1
        %s459 = scalar_lea.sflag [#allocation9], %s458
        %s460 = sand.u32 %s289, 1
        %s461 = smul.addr %s460, 2048
        %s462 = scalar_lea.vmem [#allocation8], %s461
        // Predicated region
        $region85: #{ls_unet_forward.1} parent=71 // pred_check
          %p463 = pneg %p302
        $region86: #{ls_unet_forward.1} parent=71 // pred_check_branch
          %465 = sbr.rel (%p463) target = $region88
        $region87: #{ls_unet_forward.1} parent=71 // pred_region
          %467 = dma.done %s459, 32768
        $region88: #{ls_unet_forward.1} parent=71 // pred_fallthru
          _
        %p468 = pneg %p45
        %p469 = pneg %p42
        %p470 = pneg %p66
        %p471 = pneg %p63
        %p472 = pneg %p87
        %p473 = pneg %p84
        %p474 = pneg %p108
        %p475 = pneg %p105
        %p476 = pneg %p129
        %p477 = pneg %p126
        %p478 = pneg %p150
        %p479 = pneg %p147
        %p480 = pneg %p171
        %p481 = pneg %p168
        %p482 = pneg %p192
        %p483 = pneg %p189
        %p484 = pneg %p213
        %p485 = pneg %p210
        %p486 = pneg %p234
        %p487 = pneg %p231
        %p488 = pneg %p255
        %p489 = pneg %p252
        %p490 = pneg %p276
        %p491 = pneg %p273
        %s492 = sand.u32 %s289, 1
        %s493 = scalar_lea.sflag [#allocation9], %s492
        %s494 = sand.u32 %s289, 1
        %s495 = smul.addr %s494, 2048
        %s496 = scalar_lea.vmem [#allocation8], %s495
        %p497 = pneg %p302
        %p498 = pneg %p299
        %p499 = pneg %p328
        %p500 = pneg %p325
        %s501 = smul.u32 4, %s29
        %p502 = scmp.lt.s32.totalorder %s501, 7
        %s503 = scalar_select %p502, %s501, 7
        %s504 = smul.addr %s503, 2
        %s505 = scalar_lea.vmem %s13, %s504
        %s506 = smul.u32 4, %s29
        %s507 = smul.u32 4, %s29
        %p508 = scmp.lt.s32.totalorder %s507, 7
        %s509 = scalar_select %p508, %s507, 7
        %s510 = smul.addr %s509, 2
        %s511 = scalar_lea.vmem %s13, %s510
        %s512 = smul.u32 4, %s29
        %p514 = scmp.eq.s32.totalorder %s29, 0
        // Predicated region
        $region89: #{ls_unet_forward.1} parent=71 // pred_check
          %p515 = pneg %p514
        $region90: #{ls_unet_forward.1} parent=71 // pred_check_branch
          %517 = sbr.rel (%p515) target = $region92
        $region91: #{ls_unet_forward.1} parent=71 // pred_region
          %v518 = vld [vmem:[%s0] sm:$0xff]
          %520 = vst [vmem:[#allocation1] ss:$2 sm:$0xff] %v518
          %v521 = vld.sshfl [vmem:[#allocation1] sm:$0xff pattern:$0x75316420]
          %v522 = vld.sshfl [vmem:[#allocation1 + $0x8] sm:$0xff pattern:$0x75316420]
          %523 = vrot.lane.b32.xlu0 %v521, 17
          %v524 = vpop.permute.xlu0 %523
          %525 = vrot.lane.b32.xlu0 %v522, 17
          %v526 = vpop.permute.xlu0 %525
          %vm527 = vcmask 138240
          %v528 = vsel %vm527, %v524, %v526
          %v532 = vsel %vm527, 0.0, %v524
          %v533 = vsel %vm527, %v526, 0.0
          %v534 = vlaneseq
          %v535 = vand.u32 %v534, 127
          %v536 = vadd.s32 %v535, 128
          %vm537 = vcmp.lt.s32.totalorder %v535, 0
          %v538 = vsub.s32 0, %v535
          %v539 = vsel %vm537, %v538, %v535
          %v540 = vshrl.u32 %v539, 4
          %v541 = vand.u32 %v539, 15
          %v542 = vsub.s32 0, %v541
          %v543 = vsel %vm537, %v542, %v541
          %vm544 = vcmp.lt.s32.totalorder %v536, 0
          %v545 = vsub.s32 0, %v536
          %v546 = vsel %vm544, %v545, %v536
          %v547 = vshrl.u32 %v546, 4
          %v548 = vand.u32 %v546, 15
          %v549 = vsub.s32 0, %v548
          %v550 = vsel %vm544, %v549, %v548
          %vm551 = vcmp.ne.s32.totalorder %v543, 0
          %vm552 = vcmp.ne.s32.totalorder %v550, 0
          %vm553 = vcmp.lt.s32.totalorder %v543, 0
          %vm554 = vcmp.lt.s32.totalorder %v550, 0
          %vm555 = vmand %vm553, %vm551
          %vm556 = vmand %vm554, %vm552
          %v557 = vadd.s32 %v543, 16
          %v558 = vadd.s32 %v550, 16
          %v559 = vsel %vm555, %v557, %v543
          %v560 = vsel %vm556, %v558, %v550
          %vm561 = vcmp.gt.s32.totalorder %v559, 0
          %vm562 = vcmp.gt.s32.totalorder %v560, 0
          %v563 = vsel %vm561, 1.0, 0.0
          %v564 = vsel %vm562, 1.0, 0.0
          %vm565 = vcmp.lt.s32.totalorder %v559, 15
          %vm566 = vcmp.lt.s32.totalorder %v560, 15
          %v567 = vsel %vm565, 1.0, 0.0
          %v568 = vsel %vm566, 1.0, 0.0
          %v569 = vmul.f32 %v532, %v563
          %v570 = vmul.f32 %v528, %v564
          %v571 = vld [vmem:[%s1] sm:$0xf]
          %v572 = vpack.c.bf16 %v569, %v569
          %v573 = vpack.c.bf16 %v570, %v570
          %s574 = scalar_lea.vmem %s1, 4
          %v575 = vld [vmem:[%s574] sm:$0xf]
          %v576 = vpack.c.bf16 %v532, %v532
          %v577 = vpack.c.bf16 %v528, %v528
          %v578 = vpack.c.bf16 %v533, %v533
          %582 = vrot.lane.b32.xlu0 %v576, 127
          %v583 = vpop.permute.xlu0 %582
          %584 = vrot.lane.b32.xlu0 %v577, 127
          %v585 = vpop.permute.xlu0 %584
          %586 = vrot.lane.b32.xlu0 %v578, 127
          %v587 = vpop.permute.xlu0 %586
          %vm588 = vcmask 1039360
          %v589 = vsel %vm588, %v583, %v585
          %v590 = vsel %vm588, %v585, %v587
          %vm591 = vcmask 31744
          %v593 = vsel %vm591, %v575, 0
          %vm595 = vcmask 1041408
          %v597 = vsel %vm595, %v589, 0
          %v600 = vsel %vm595, %v590, 0
          %602 = vmatpush.bf16.msra.mxu0 0
          %603 = vmatpush.bf16.msra.mxu0 0
          %604 = vmatpush.bf16.msra.mxu0 0
          %605 = vmatpush.bf16.msra.mxu0 0
          %606 = vmatpush.bf16.msra.mxu0 0
          %607 = vmatpush.bf16.msra.mxu0 0
          %608 = vmatpush.bf16.msra.mxu0 0
          %609 = vmatpush.bf16.msra.mxu0 %v597
          %610 = vmatmul.bf16.gmra.mxu0 %v593
          %v611 = vpop.f32.mrf.mxu0
          %v612 = vadd.f32 0.0, %v611
          %v613 = vpop.f32.mrf.mxu0
          %614 = vdwg.mxu0
          %615 = vmatpush.bf16.msra.mxu0 0
          %616 = vmatpush.bf16.msra.mxu0 0
          %617 = vmatpush.bf16.msra.mxu0 0
          %618 = vmatpush.bf16.msra.mxu0 0
          %619 = vmatpush.bf16.msra.mxu0 0
          %620 = vmatpush.bf16.msra.mxu0 0
          %621 = vmatpush.bf16.msra.mxu0 0
          %622 = vmatpush.bf16.msra.mxu0 %v600
          %623 = vmatmul.bf16.gmra.mxu0 %v593
          %v624 = vpop.f32.mrf.mxu0
          %v625 = vadd.f32 0.0, %v624
          %v626 = vpop.f32.mrf.mxu0
          %627 = vdwg.mxu0
          %v629 = vsel %vm591, %v571, 0
          %v632 = vsel %vm595, %v572, 0
          %v635 = vsel %vm595, %v573, 0
          %637 = vmatpush.bf16.msra.mxu0 0
          %638 = vmatpush.bf16.msra.mxu0 0
          %639 = vmatpush.bf16.msra.mxu0 0
          %640 = vmatpush.bf16.msra.mxu0 0
          %641 = vmatpush.bf16.msra.mxu0 0
          %642 = vmatpush.bf16.msra.mxu0 0
          %643 = vmatpush.bf16.msra.mxu0 0
          %644 = vmatpush.bf16.msra.mxu0 %v632
          %645 = vmatmul.bf16.gmra.mxu0 %v629
          %v646 = vpop.f32.mrf.mxu0
          %v647 = vadd.f32 %v612, %v646
          %v648 = vpop.f32.mrf.mxu0
          %649 = vdwg.mxu0
          %650 = vmatpush.bf16.msra.mxu0 0
          %651 = vmatpush.bf16.msra.mxu0 0
          %652 = vmatpush.bf16.msra.mxu0 0
          %653 = vmatpush.bf16.msra.mxu0 0
          %654 = vmatpush.bf16.msra.mxu0 0
          %655 = vmatpush.bf16.msra.mxu0 0
          %656 = vmatpush.bf16.msra.mxu0 0
          %657 = vmatpush.bf16.msra.mxu0 %v635
          %658 = vmatmul.bf16.gmra.mxu0 %v629
          %v659 = vpop.f32.mrf.mxu0
          %v660 = vadd.f32 %v625, %v659
          %v661 = vpop.f32.mrf.mxu0
          %662 = vdwg.mxu0
          %665 = vrot.lane.b32.xlu0 %v567, 2
          %v666 = vpop.permute.xlu0 %665
          %667 = vrot.lane.b32.xlu0 %v568, 2
          %v668 = vpop.permute.xlu0 %667
          %vm669 = vcmask 15360
          %v670 = vsel %vm669, %v666, %v668
          %v674 = vmul.f32 %v532, %v666
          %v675 = vmul.f32 %v528, %v670
          %v676 = vmul.f32 %v533, %v668
          %s677 = scalar_lea.vmem %s1, 8
          %v678 = vld [vmem:[%s677] sm:$0xf]
          %v679 = vpack.c.bf16 %v674, %v674
          %v680 = vpack.c.bf16 %v675, %v675
          %v681 = vpack.c.bf16 %v676, %v676
          %685 = vrot.lane.b32.xlu0 %v679, 126
          %v686 = vpop.permute.xlu0 %685
          %687 = vrot.lane.b32.xlu0 %v680, 126
          %v688 = vpop.permute.xlu0 %687
          %689 = vrot.lane.b32.xlu0 %v681, 126
          %v690 = vpop.permute.xlu0 %689
          %vm691 = vcmask 1031168
          %v692 = vsel %vm691, %v686, %v688
          %v693 = vsel %vm691, %v688, %v690
          %v695 = vsel %vm591, %v678, 0
          %v698 = vsel %vm595, %v692, 0
          %v701 = vsel %vm595, %v693, 0
          %703 = vmatpush.bf16.msra.mxu0 0
          %704 = vmatpush.bf16.msra.mxu0 0
          %705 = vmatpush.bf16.msra.mxu0 0
          %706 = vmatpush.bf16.msra.mxu0 0
          %707 = vmatpush.bf16.msra.mxu0 0
          %708 = vmatpush.bf16.msra.mxu0 0
          %709 = vmatpush.bf16.msra.mxu0 0
          %710 = vmatpush.bf16.msra.mxu0 %v698
          %711 = vmatmul.bf16.gmra.mxu0 %v695
          %v712 = vpop.f32.mrf.mxu0
          %v713 = vadd.f32 0.0, %v712
          %v714 = vpop.f32.mrf.mxu0
          %715 = vdwg.mxu0
          %716 = vmatpush.bf16.msra.mxu0 0
          %717 = vmatpush.bf16.msra.mxu0 0
          %718 = vmatpush.bf16.msra.mxu0 0
          %719 = vmatpush.bf16.msra.mxu0 0
          %720 = vmatpush.bf16.msra.mxu0 0
          %721 = vmatpush.bf16.msra.mxu0 0
          %722 = vmatpush.bf16.msra.mxu0 0
          %723 = vmatpush.bf16.msra.mxu0 %v701
          %724 = vmatmul.bf16.gmra.mxu0 %v695
          %v725 = vpop.f32.mrf.mxu0
          %v726 = vadd.f32 0.0, %v725
          %v727 = vpop.f32.mrf.mxu0
          %728 = vdwg.mxu0
          %v729 = vadd.f32 %v647, %v713
          %v730 = vadd.f32 %v660, %v726
          %733 = vrot.lane.b32.xlu0 %v563, 16
          %v734 = vpop.permute.xlu0 %733
          %735 = vrot.lane.b32.xlu0 %v564, 16
          %v736 = vpop.permute.xlu0 %735
          %vm737 = vcmask 130048
          %v738 = vsel %vm737, %v734, %v736
          %v742 = vmul.f32 %v532, %v734
          %v743 = vmul.f32 %v528, %v738
          %v744 = vmul.f32 %v533, %v736
          %s745 = scalar_lea.vmem %s1, 12
          %v746 = vld [vmem:[%s745] sm:$0xf]
          %v747 = vpack.c.bf16 %v742, %v742
          %v748 = vpack.c.bf16 %v743, %v743
          %v749 = vpack.c.bf16 %v744, %v744
          %753 = vrot.lane.b32.xlu0 %v747, 112
          %v754 = vpop.permute.xlu0 %753
          %755 = vrot.lane.b32.xlu0 %v748, 112
          %v756 = vpop.permute.xlu0 %755
          %757 = vrot.lane.b32.xlu0 %v749, 112
          %v758 = vpop.permute.xlu0 %757
          %vm759 = vcmask 916480
          %v760 = vsel %vm759, %v754, %v756
          %v761 = vsel %vm759, %v756, %v758
          %v763 = vsel %vm591, %v746, 0
          %v766 = vsel %vm595, %v760, 0
          %v769 = vsel %vm595, %v761, 0
          %771 = vmatpush.bf16.msra.mxu0 0
          %772 = vmatpush.bf16.msra.mxu0 0
          %773 = vmatpush.bf16.msra.mxu0 0
          %774 = vmatpush.bf16.msra.mxu0 0
          %775 = vmatpush.bf16.msra.mxu0 0
          %776 = vmatpush.bf16.msra.mxu0 0
          %777 = vmatpush.bf16.msra.mxu0 0
          %778 = vmatpush.bf16.msra.mxu0 %v766
          %779 = vmatmul.bf16.gmra.mxu0 %v763
          %v780 = vpop.f32.mrf.mxu0
          %v781 = vadd.f32 0.0, %v780
          %v782 = vpop.f32.mrf.mxu0
          %783 = vdwg.mxu0
          %784 = vmatpush.bf16.msra.mxu0 0
          %785 = vmatpush.bf16.msra.mxu0 0
          %786 = vmatpush.bf16.msra.mxu0 0
          %787 = vmatpush.bf16.msra.mxu0 0
          %788 = vmatpush.bf16.msra.mxu0 0
          %789 = vmatpush.bf16.msra.mxu0 0
          %790 = vmatpush.bf16.msra.mxu0 0
          %791 = vmatpush.bf16.msra.mxu0 %v769
          %792 = vmatmul.bf16.gmra.mxu0 %v763
          %v793 = vpop.f32.mrf.mxu0
          %v794 = vadd.f32 0.0, %v793
          %v795 = vpop.f32.mrf.mxu0
          %796 = vdwg.mxu0
          %v797 = vadd.f32 %v729, %v781
          %v798 = vadd.f32 %v730, %v794
          %s799 = scalar_lea.vmem %s1, 16
          %v800 = vld [vmem:[%s799] sm:$0xf]
          %801 = vrot.lane.b32.xlu0 %v576, 111
          %v802 = vpop.permute.xlu0 %801
          %803 = vrot.lane.b32.xlu0 %v577, 111
          %v804 = vpop.permute.xlu0 %803
          %805 = vrot.lane.b32.xlu0 %v578, 111
          %v806 = vpop.permute.xlu0 %805
          %vm807 = vcmask 908288
          %v808 = vsel %vm807, %v802, %v804
          %v809 = vsel %vm807, %v804, %v806
          %v811 = vsel %vm591, %v800, 0
          %v814 = vsel %vm595, %v808, 0
          %v817 = vsel %vm595, %v809, 0
          %819 = vmatpush.bf16.msra.mxu0 0
          %820 = vmatpush.bf16.msra.mxu0 0
          %821 = vmatpush.bf16.msra.mxu0 0
          %822 = vmatpush.bf16.msra.mxu0 0
          %823 = vmatpush.bf16.msra.mxu0 0
          %824 = vmatpush.bf16.msra.mxu0 0
          %825 = vmatpush.bf16.msra.mxu0 0
          %826 = vmatpush.bf16.msra.mxu0 %v814
          %827 = vmatmul.bf16.gmra.mxu0 %v811
          %v828 = vpop.f32.mrf.mxu0
          %v829 = vadd.f32 0.0, %v828
          %v830 = vpop.f32.mrf.mxu0
          %831 = vdwg.mxu0
          %832 = vmatpush.bf16.msra.mxu0 0
          %833 = vmatpush.bf16.msra.mxu0 0
          %834 = vmatpush.bf16.msra.mxu0 0
          %835 = vmatpush.bf16.msra.mxu0 0
          %836 = vmatpush.bf16.msra.mxu0 0
          %837 = vmatpush.bf16.msra.mxu0 0
          %838 = vmatpush.bf16.msra.mxu0 0
          %839 = vmatpush.bf16.msra.mxu0 %v817
          %840 = vmatmul.bf16.gmra.mxu0 %v811
          %v841 = vpop.f32.mrf.mxu0
          %v842 = vadd.f32 0.0, %v841
          %v843 = vpop.f32.mrf.mxu0
          %844 = vdwg.mxu0
          %v845 = vadd.f32 %v797, %v829
          %v846 = vadd.f32 %v798, %v842
          %847 = vrot.lane.b32.xlu0 %v567, 18
          %v848 = vpop.permute.xlu0 %847
          %849 = vrot.lane.b32.xlu0 %v568, 18
          %v850 = vpop.permute.xlu0 %849
          %vm851 = vcmask 146432
          %v852 = vsel %vm851, %v848, %v850
          %v856 = vmul.f32 %v532, %v848
          %v857 = vmul.f32 %v528, %v852
          %v858 = vmul.f32 %v533, %v850
          %s859 = scalar_lea.vmem %s1, 20
          %v860 = vld [vmem:[%s859] sm:$0xf]
          %v861 = vpack.c.bf16 %v856, %v856
          %v862 = vpack.c.bf16 %v857, %v857
          %v863 = vpack.c.bf16 %v858, %v858
          %867 = vrot.lane.b32.xlu0 %v861, 110
          %v868 = vpop.permute.xlu0 %867
          %869 = vrot.lane.b32.xlu0 %v862, 110
          %v870 = vpop.permute.xlu0 %869
          %871 = vrot.lane.b32.xlu0 %v863, 110
          %v872 = vpop.permute.xlu0 %871
          %vm873 = vcmask 900096
          %v874 = vsel %vm873, %v868, %v870
          %v875 = vsel %vm873, %v870, %v872
          %v877 = vsel %vm591, %v860, 0
          %v880 = vsel %vm595, %v874, 0
          %v883 = vsel %vm595, %v875, 0
          %885 = vmatpush.bf16.msra.mxu0 0
          %886 = vmatpush.bf16.msra.mxu0 0
          %887 = vmatpush.bf16.msra.mxu0 0
          %888 = vmatpush.bf16.msra.mxu0 0
          %889 = vmatpush.bf16.msra.mxu0 0
          %890 = vmatpush.bf16.msra.mxu0 0
          %891 = vmatpush.bf16.msra.mxu0 0
          %892 = vmatpush.bf16.msra.mxu0 %v880
          %893 = vmatmul.bf16.gmra.mxu0 %v877
          %v894 = vpop.f32.mrf.mxu0
          %v895 = vadd.f32 0.0, %v894
          %v896 = vpop.f32.mrf.mxu0
          %897 = vdwg.mxu0
          %898 = vmatpush.bf16.msra.mxu0 0
          %899 = vmatpush.bf16.msra.mxu0 0
          %900 = vmatpush.bf16.msra.mxu0 0
          %901 = vmatpush.bf16.msra.mxu0 0
          %902 = vmatpush.bf16.msra.mxu0 0
          %903 = vmatpush.bf16.msra.mxu0 0
          %904 = vmatpush.bf16.msra.mxu0 0
          %905 = vmatpush.bf16.msra.mxu0 %v883
          %906 = vmatmul.bf16.gmra.mxu0 %v877
          %v907 = vpop.f32.mrf.mxu0
          %v908 = vadd.f32 0.0, %v907
          %v909 = vpop.f32.mrf.mxu0
          %910 = vdwg.mxu0
          %v911 = vadd.f32 %v845, %v895
          %v912 = vadd.f32 %v846, %v908
          %913 = vrot.lane.b32.xlu0 %v563, 32
          %v914 = vpop.permute.xlu0 %913
          %915 = vrot.lane.b32.xlu0 %v564, 32
          %v916 = vpop.permute.xlu0 %915
          %vm917 = vcmask 261120
          %v918 = vsel %vm917, %v914, %v916
          %v922 = vmul.f32 %v532, %v914
          %v923 = vmul.f32 %v528, %v918
          %v924 = vmul.f32 %v533, %v916
          %s925 = scalar_lea.vmem %s1, 24
          %v926 = vld [vmem:[%s925] sm:$0xf]
          %v927 = vpack.c.bf16 %v922, %v922
          %v928 = vpack.c.bf16 %v923, %v923
          %v929 = vpack.c.bf16 %v924, %v924
          %933 = vrot.lane.b32.xlu0 %v927, 96
          %v934 = vpop.permute.xlu0 %933
          %935 = vrot.lane.b32.xlu0 %v928, 96
          %v936 = vpop.permute.xlu0 %935
          %937 = vrot.lane.b32.xlu0 %v929, 96
          %v938 = vpop.permute.xlu0 %937
          %vm939 = vcmask 785408
          %v940 = vsel %vm939, %v934, %v936
          %v941 = vsel %vm939, %v936, %v938
          %v943 = vsel %vm591, %v926, 0
          %v946 = vsel %vm595, %v940, 0
          %v949 = vsel %vm595, %v941, 0
          %951 = vmatpush.bf16.msra.mxu0 0
          %952 = vmatpush.bf16.msra.mxu0 0
          %953 = vmatpush.bf16.msra.mxu0 0
          %954 = vmatpush.bf16.msra.mxu0 0
          %955 = vmatpush.bf16.msra.mxu0 0
          %956 = vmatpush.bf16.msra.mxu0 0
          %957 = vmatpush.bf16.msra.mxu0 0
          %958 = vmatpush.bf16.msra.mxu0 %v946
          %959 = vmatmul.bf16.gmra.mxu0 %v943
          %v960 = vpop.f32.mrf.mxu0
          %v961 = vadd.f32 0.0, %v960
          %v962 = vpop.f32.mrf.mxu0
          %963 = vdwg.mxu0
          %964 = vmatpush.bf16.msra.mxu0 0
          %965 = vmatpush.bf16.msra.mxu0 0
          %966 = vmatpush.bf16.msra.mxu0 0
          %967 = vmatpush.bf16.msra.mxu0 0
          %968 = vmatpush.bf16.msra.mxu0 0
          %969 = vmatpush.bf16.msra.mxu0 0
          %970 = vmatpush.bf16.msra.mxu0 0
          %971 = vmatpush.bf16.msra.mxu0 %v949
          %972 = vmatmul.bf16.gmra.mxu0 %v943
          %v973 = vpop.f32.mrf.mxu0
          %v974 = vadd.f32 0.0, %v973
          %v975 = vpop.f32.mrf.mxu0
          %976 = vdwg.mxu0
          %v977 = vadd.f32 %v911, %v961
          %v978 = vadd.f32 %v912, %v974
          %s979 = scalar_lea.vmem %s1, 28
          %v980 = vld [vmem:[%s979] sm:$0xf]
          %981 = vrot.lane.b32.xlu0 %v576, 95
          %v982 = vpop.permute.xlu0 %981
          %983 = vrot.lane.b32.xlu0 %v577, 95
          %v984 = vpop.permute.xlu0 %983
          %985 = vrot.lane.b32.xlu0 %v578, 95
          %v986 = vpop.permute.xlu0 %985
          %vm987 = vcmask 777216
          %v988 = vsel %vm987, %v982, %v984
          %v989 = vsel %vm987, %v984, %v986
          %v991 = vsel %vm591, %v980, 0
          %v994 = vsel %vm595, %v988, 0
          %v997 = vsel %vm595, %v989, 0
          %999 = vmatpush.bf16.msra.mxu0 0
          %1000 = vmatpush.bf16.msra.mxu0 0
          %1001 = vmatpush.bf16.msra.mxu0 0
          %1002 = vmatpush.bf16.msra.mxu0 0
          %1003 = vmatpush.bf16.msra.mxu0 0
          %1004 = vmatpush.bf16.msra.mxu0 0
          %1005 = vmatpush.bf16.msra.mxu0 0
          %1006 = vmatpush.bf16.msra.mxu0 %v994
          %1007 = vmatmul.bf16.gmra.mxu0 %v991
          %v1008 = vpop.f32.mrf.mxu0
          %v1009 = vadd.f32 0.0, %v1008
          %v1010 = vpop.f32.mrf.mxu0
          %1011 = vdwg.mxu0
          %1012 = vmatpush.bf16.msra.mxu0 0
          %1013 = vmatpush.bf16.msra.mxu0 0
          %1014 = vmatpush.bf16.msra.mxu0 0
          %1015 = vmatpush.bf16.msra.mxu0 0
          %1016 = vmatpush.bf16.msra.mxu0 0
          %1017 = vmatpush.bf16.msra.mxu0 0
          %1018 = vmatpush.bf16.msra.mxu0 0
          %1019 = vmatpush.bf16.msra.mxu0 %v997
          %1020 = vmatmul.bf16.gmra.mxu0 %v991
          %v1021 = vpop.f32.mrf.mxu0
          %v1022 = vadd.f32 0.0, %v1021
          %v1023 = vpop.f32.mrf.mxu0
          %1024 = vdwg.mxu0
          %v1025 = vadd.f32 %v977, %v1009
          %v1026 = vadd.f32 %v978, %v1022
          %1027 = vrot.lane.b32.xlu0 %v567, 34
          %v1028 = vpop.permute.xlu0 %1027
          %1029 = vrot.lane.b32.xlu0 %v568, 34
          %v1030 = vpop.permute.xlu0 %1029
          %vm1031 = vcmask 277504
          %v1032 = vsel %vm1031, %v1028, %v1030
          %v1036 = vmul.f32 %v532, %v1028
          %v1037 = vmul.f32 %v528, %v1032
          %v1038 = vmul.f32 %v533, %v1030
          %s1039 = scalar_lea.vmem %s1, 32
          %v1040 = vld [vmem:[%s1039] sm:$0xf]
          %v1041 = vpack.c.bf16 %v1036, %v1036
          %v1042 = vpack.c.bf16 %v1037, %v1037
          %v1043 = vpack.c.bf16 %v1038, %v1038
          %1047 = vrot.lane.b32.xlu0 %v1041, 94
          %v1048 = vpop.permute.xlu0 %1047
          %1049 = vrot.lane.b32.xlu0 %v1042, 94
          %v1050 = vpop.permute.xlu0 %1049
          %1051 = vrot.lane.b32.xlu0 %v1043, 94
          %v1052 = vpop.permute.xlu0 %1051
          %vm1053 = vcmask 769024
          %v1054 = vsel %vm1053, %v1048, %v1050
          %v1055 = vsel %vm1053, %v1050, %v1052
          %v1057 = vsel %vm591, %v1040, 0
          %v1060 = vsel %vm595, %v1054, 0
          %v1063 = vsel %vm595, %v1055, 0
          %1065 = vmatpush.bf16.msra.mxu0 0
          %1066 = vmatpush.bf16.msra.mxu0 0
          %1067 = vmatpush.bf16.msra.mxu0 0
          %1068 = vmatpush.bf16.msra.mxu0 0
          %1069 = vmatpush.bf16.msra.mxu0 0
          %1070 = vmatpush.bf16.msra.mxu0 0
          %1071 = vmatpush.bf16.msra.mxu0 0
          %1072 = vmatpush.bf16.msra.mxu0 %v1060
          %1073 = vmatmul.bf16.gmra.mxu0 %v1057
          %v1074 = vpop.f32.mrf.mxu0
          %v1075 = vadd.f32 0.0, %v1074
          %v1076 = vpop.f32.mrf.mxu0
          %1077 = vdwg.mxu0
          %1078 = vmatpush.bf16.msra.mxu0 0
          %1079 = vmatpush.bf16.msra.mxu0 0
          %1080 = vmatpush.bf16.msra.mxu0 0
          %1081 = vmatpush.bf16.msra.mxu0 0
          %1082 = vmatpush.bf16.msra.mxu0 0
          %1083 = vmatpush.bf16.msra.mxu0 0
          %1084 = vmatpush.bf16.msra.mxu0 0
          %1085 = vmatpush.bf16.msra.mxu0 %v1063
          %1086 = vmatmul.bf16.gmra.mxu0 %v1057
          %v1087 = vpop.f32.mrf.mxu0
          %v1088 = vadd.f32 0.0, %v1087
          %v1089 = vpop.f32.mrf.mxu0
          %1090 = vdwg.mxu0
          %v1091 = vadd.f32 %v1025, %v1075
          %v1092 = vadd.f32 %v1026, %v1088
          %v1093 = vld [vmem:[%s2] sm:$0xff]
          %1095 = vset.pattern.permute.xlu0 0
          %1096 = vperm.xlu0 %1095, %v1093
          %v1097 = vpop.permute.xlu0 %1096
          %v1099 = vadd.f32 %v1091, %v1097
          %v1100 = vadd.f32 %v1092, %v1097
          %v1101 = vmax.f32 %v1099, 0.0
          %v1102 = vmax.f32 %v1100, 0.0
          %v1103 = vpack.c.bf16 %v1101, %v1101
          %v1104 = vpack.c.bf16 %v1102, %v1102
          %v1105 = vld [vmem:[%s10] sm:$0xf]
          %v1106 = vld [vmem:[%s10 + $0x4] sm:$0xf]
          %v1107 = vld [vmem:[%s10 + $0x8] sm:$0xf]
          %v1108 = vld [vmem:[%s10 + $0xc] sm:$0xf]
          %v1109 = vld [vmem:[%s10 + $0x10] sm:$0xf]
          %v1110 = vld [vmem:[%s10 + $0x14] sm:$0xf]
          %v1111 = vld [vmem:[%s10 + $0x18] sm:$0xf]
          %v1112 = vld [vmem:[%s10 + $0x1c] sm:$0xf]
          %v1113 = vld [vmem:[%s10 + $0x20] sm:$0xf]
          %v1114 = vld [vmem:[%s10 + $0x24] sm:$0xf]
          %v1115 = vld [vmem:[%s10 + $0x28] sm:$0xf]
          %v1116 = vld [vmem:[%s10 + $0x2c] sm:$0xf]
          %v1117 = vld [vmem:[%s10 + $0x30] sm:$0xf]
          %v1118 = vld [vmem:[%s10 + $0x34] sm:$0xf]
          %v1119 = vld [vmem:[%s10 + $0x38] sm:$0xf]
          %v1120 = vld [vmem:[%s10 + $0x3c] sm:$0xf]
          %v1121 = vld [vmem:[%s10 + $0x40] sm:$0xf]
          %v1122 = vld [vmem:[%s10 + $0x44] sm:$0xf]
          %v1123 = vld [vmem:[%s10 + $0x48] sm:$0xf]
          %v1124 = vld [vmem:[%s10 + $0x4c] sm:$0xf]
          %v1125 = vld [vmem:[%s10 + $0x50] sm:$0xf]
          %v1126 = vld [vmem:[%s10 + $0x54] sm:$0xf]
          %v1127 = vld [vmem:[%s10 + $0x58] sm:$0xf]
          %v1128 = vld [vmem:[%s10 + $0x5c] sm:$0xf]
          %v1129 = vld [vmem:[%s10 + $0x60] sm:$0xf]
          %v1130 = vld [vmem:[%s10 + $0x64] sm:$0xf]
          %v1131 = vld [vmem:[%s10 + $0x68] sm:$0xf]
          %v1132 = vld [vmem:[%s10 + $0x6c] sm:$0xf]
          %v1133 = vld [vmem:[%s10 + $0x70] sm:$0xf]
          %v1134 = vld [vmem:[%s10 + $0x74] sm:$0xf]
          %v1135 = vld [vmem:[%s10 + $0x78] sm:$0xf]
          %v1136 = vld [vmem:[%s10 + $0x7c] sm:$0xf]
          %v1169 = vunpack.c.l.b16 %v1105
          %v1170 = vunpack.c.l.b16 %v1106
          %v1171 = vunpack.c.l.b16 %v1107
          %v1172 = vunpack.c.l.b16 %v1108
          %v1173 = vunpack.c.l.b16 %v1109
          %v1174 = vunpack.c.l.b16 %v1110
          %v1175 = vunpack.c.l.b16 %v1111
          %v1176 = vunpack.c.l.b16 %v1112
          %v1177 = vunpack.c.l.b16 %v1113
          %v1178 = vunpack.c.l.b16 %v1114
          %v1179 = vunpack.c.l.b16 %v1115
          %v1180 = vunpack.c.l.b16 %v1116
          %v1181 = vunpack.c.l.b16 %v1117
          %v1182 = vunpack.c.l.b16 %v1118
          %v1183 = vunpack.c.l.b16 %v1119
          %v1184 = vunpack.c.l.b16 %v1120
          %v1185 = vunpack.c.l.b16 %v1121
          %v1186 = vunpack.c.l.b16 %v1122
          %v1187 = vunpack.c.l.b16 %v1123
          %v1188 = vunpack.c.l.b16 %v1124
          %v1189 = vunpack.c.l.b16 %v1125
          %v1190 = vunpack.c.l.b16 %v1126
          %v1191 = vunpack.c.l.b16 %v1127
          %v1192 = vunpack.c.l.b16 %v1128
          %v1193 = vunpack.c.l.b16 %v1129
          %v1194 = vunpack.c.l.b16 %v1130
          %v1195 = vunpack.c.l.b16 %v1131
          %v1196 = vunpack.c.l.b16 %v1132
          %v1197 = vunpack.c.l.b16 %v1133
          %v1198 = vunpack.c.l.b16 %v1134
          %v1199 = vunpack.c.l.b16 %v1135
          %v1200 = vunpack.c.l.b16 %v1136
          %v1201 = vpack.c.b16 %v1170, %v1169
          %v1202 = vpack.c.b16 %v1172, %v1171
          %v1203 = vpack.c.b16 %v1174, %v1173
          %v1204 = vpack.c.b16 %v1176, %v1175
          %v1205 = vpack.c.b16 %v1178, %v1177
          %v1206 = vpack.c.b16 %v1180, %v1179
          %v1207 = vpack.c.b16 %v1182, %v1181
          %v1208 = vpack.c.b16 %v1184, %v1183
          %v1209 = vpack.c.b16 %v1186, %v1185
          %v1210 = vpack.c.b16 %v1188, %v1187
          %v1211 = vpack.c.b16 %v1190, %v1189
          %v1212 = vpack.c.b16 %v1192, %v1191
          %v1213 = vpack.c.b16 %v1194, %v1193
          %v1214 = vpack.c.b16 %v1196, %v1195
          %v1215 = vpack.c.b16 %v1198, %v1197
          %v1216 = vpack.c.b16 %v1200, %v1199
          %1233 = vmatpush.bf16.msra.mxu0 %v1208
          %1234 = vmatpush.bf16.msra.mxu0 %v1207
          %1235 = vmatpush.bf16.msra.mxu0 %v1206
          %1236 = vmatpush.bf16.msra.mxu0 %v1205
          %1237 = vmatpush.bf16.msra.mxu0 %v1204
          %1238 = vmatpush.bf16.msra.mxu0 %v1203
          %1239 = vmatpush.bf16.msra.mxu0 %v1202
          %1240 = vmatpush.bf16.msra.mxu0 %v1201
          %1241 = vmatmul.bf16.gmra.mxu0 %v1103
          %v1242 = vpop.f32.mrf.mxu0
          %v1243 = vadd.f32 0.0, %v1242
          %v1244 = vpop.f32.mrf.mxu0
          %1245 = vdwg.mxu0
          %1246 = vmatpush.bf16.msra.mxu0 %v1216
          %1247 = vmatpush.bf16.msra.mxu0 %v1215
          %1248 = vmatpush.bf16.msra.mxu0 %v1214
          %1249 = vmatpush.bf16.msra.mxu0 %v1213
          %1250 = vmatpush.bf16.msra.mxu0 %v1212
          %1251 = vmatpush.bf16.msra.mxu0 %v1211
          %1252 = vmatpush.bf16.msra.mxu0 %v1210
          %1253 = vmatpush.bf16.msra.mxu0 %v1209
          %1254 = vmatmul.bf16.gmra.mxu0 %v1104
          %v1255 = vpop.f32.mrf.mxu0
          %v1256 = vadd.f32 %v1243, %v1255
          %v1257 = vpop.f32.mrf.mxu0
          %1258 = vdwg.mxu0
          %1260 = vrot.lane.b32.xlu0 %v1256, 9
          %v1261 = vpop.permute.xlu0 %1260
          %vm1263 = vcmask 72704
          %v1264 = vsel %vm1263, 0.0, %v1261
          %vm1265 = vcmask 596992
          %v1266 = vsel %vm1265, %v1264, 0.0
          %vm1267 = vcmp.lt.s32.totalorder %v535, 0
          %v1268 = vsub.s32 0, %v535
          %v1269 = vsel %vm1267, %v1268, %v535
          %v1270 = vshrl.u32 %v1269, 3
          %v1271 = vand.u32 %v1269, 7
          %v1272 = vsub.s32 0, %v1271
          %v1273 = vsel %vm1267, %v1272, %v1271
          %vm1274 = vcmp.ne.s32.totalorder %v1273, 0
          %vm1275 = vcmp.lt.s32.totalorder %v1273, 0
          %vm1276 = vmand %vm1275, %vm1274
          %v1277 = vadd.s32 %v1273, 8
          %v1278 = vsel %vm1276, %v1277, %v1273
          %vm1279 = vcmp.gt.s32.totalorder %v1278, 0
          %v1280 = vsel %vm1279, 1.0, 0.0
          %vm1281 = vcmp.lt.s32.totalorder %v1278, 7
          %v1282 = vsel %vm1281, 1.0, 0.0
          %v1283 = vmul.f32 %v1266, %v1280
          %v1284 = vld [vmem:[%s3] sm:$0xf]
          %v1285 = vld [vmem:[%s3 + $0x4] sm:$0xf]
          %v1286 = vpack.c.bf16 %v1283, %v1283
          %s1287 = scalar_lea.vmem %s3, 8
          %v1288 = vld [vmem:[%s1287] sm:$0xf]
          %v1289 = vld [vmem:[%s1287 + $0x4] sm:$0xf]
          %v1290 = vpack.c.bf16 %v1266, %v1266
          %v1293 = vunpack.c.l.b16 %v1288
          %v1294 = vunpack.c.l.b16 %v1289
          %v1295 = vpack.c.b16 %v1294, %v1293
          %1297 = vrot.lane.b32.xlu0 %v1290, 127
          %v1298 = vpop.permute.xlu0 %1297
          %vm1299 = vcmask 64512
          %v1301 = vsel %vm1299, %v1295, 0
          %vm1303 = vcmask 1043456
          %v1305 = vsel %vm1303, %v1298, 0
          %1307 = vmatpush.bf16.msra.mxu0 0
          %1308 = vmatpush.bf16.msra.mxu0 0
          %1309 = vmatpush.bf16.msra.mxu0 0
          %1310 = vmatpush.bf16.msra.mxu0 0
          %1311 = vmatpush.bf16.msra.mxu0 0
          %1312 = vmatpush.bf16.msra.mxu0 0
          %1313 = vmatpush.bf16.msra.mxu0 0
          %1314 = vmatpush.bf16.msra.mxu0 %v1305
          %1315 = vmatmul.bf16.gmra.mxu0 %v1301
          %v1316 = vpop.f32.mrf.mxu0
          %v1317 = vadd.f32 0.0, %v1316
          %v1318 = vpop.f32.mrf.mxu0
          %v1319 = vadd.f32 0.0, %v1318
          %1320 = vdwg.mxu0
          %v1323 = vunpack.c.l.b16 %v1284
          %v1324 = vunpack.c.l.b16 %v1285
          %v1325 = vpack.c.b16 %v1324, %v1323
          %v1327 = vsel %vm1299, %v1325, 0
          %v1330 = vsel %vm1303, %v1286, 0
          %1332 = vmatpush.bf16.msra.mxu0 0
          %1333 = vmatpush.bf16.msra.mxu0 0
          %1334 = vmatpush.bf16.msra.mxu0 0
          %1335 = vmatpush.bf16.msra.mxu0 0
          %1336 = vmatpush.bf16.msra.mxu0 0
          %1337 = vmatpush.bf16.msra.mxu0 0
          %1338 = vmatpush.bf16.msra.mxu0 0
          %1339 = vmatpush.bf16.msra.mxu0 %v1330
          %1340 = vmatmul.bf16.gmra.mxu0 %v1327
          %v1341 = vpop.f32.mrf.mxu0
          %v1342 = vadd.f32 %v1317, %v1341
          %v1343 = vpop.f32.mrf.mxu0
          %v1344 = vadd.f32 %v1319, %v1343
          %1345 = vdwg.mxu0
          %1347 = vrot.lane.b32.xlu0 %v1282, 2
          %v1348 = vpop.permute.xlu0 %1347
          %v1350 = vmul.f32 %v1266, %v1348
          %s1351 = scalar_lea.vmem %s3, 16
          %v1352 = vld [vmem:[%s1351] sm:$0xf]
          %v1353 = vld [vmem:[%s1351 + $0x4] sm:$0xf]
          %v1354 = vpack.c.bf16 %v1350, %v1350
          %v1357 = vunpack.c.l.b16 %v1352
          %v1358 = vunpack.c.l.b16 %v1353
          %v1359 = vpack.c.b16 %v1358, %v1357
          %1361 = vrot.lane.b32.xlu0 %v1354, 126
          %v1362 = vpop.permute.xlu0 %1361
          %v1364 = vsel %vm1299, %v1359, 0
          %v1367 = vsel %vm1303, %v1362, 0
          %1369 = vmatpush.bf16.msra.mxu0 0
          %1370 = vmatpush.bf16.msra.mxu0 0
          %1371 = vmatpush.bf16.msra.mxu0 0
          %1372 = vmatpush.bf16.msra.mxu0 0
          %1373 = vmatpush.bf16.msra.mxu0 0
          %1374 = vmatpush.bf16.msra.mxu0 0
          %1375 = vmatpush.bf16.msra.mxu0 0
          %1376 = vmatpush.bf16.msra.mxu0 %v1367
          %1377 = vmatmul.bf16.gmra.mxu0 %v1364
          %v1378 = vpop.f32.mrf.mxu0
          %v1379 = vadd.f32 0.0, %v1378
          %v1380 = vpop.f32.mrf.mxu0
          %v1381 = vadd.f32 0.0, %v1380
          %1382 = vdwg.mxu0
          %v1383 = vadd.f32 %v1342, %v1379
          %v1384 = vadd.f32 %v1344, %v1381
          %1386 = vrot.lane.b32.xlu0 %v1280, 8
          %v1387 = vpop.permute.xlu0 %1386
          %v1389 = vmul.f32 %v1266, %v1387
          %s1390 = scalar_lea.vmem %s3, 24
          %v1391 = vld [vmem:[%s1390] sm:$0xf]
          %v1392 = vld [vmem:[%s1390 + $0x4] sm:$0xf]
          %v1393 = vpack.c.bf16 %v1389, %v1389
          %v1396 = vunpack.c.l.b16 %v1391
          %v1397 = vunpack.c.l.b16 %v1392
          %v1398 = vpack.c.b16 %v1397, %v1396
          %1400 = vrot.lane.b32.xlu0 %v1393, 120
          %v1401 = vpop.permute.xlu0 %1400
          %v1403 = vsel %vm1299, %v1398, 0
          %v1406 = vsel %vm1303, %v1401, 0
          %1408 = vmatpush.bf16.msra.mxu0 0
          %1409 = vmatpush.bf16.msra.mxu0 0
          %1410 = vmatpush.bf16.msra.mxu0 0
          %1411 = vmatpush.bf16.msra.mxu0 0
          %1412 = vmatpush.bf16.msra.mxu0 0
          %1413 = vmatpush.bf16.msra.mxu0 0
          %1414 = vmatpush.bf16.msra.mxu0 0
          %1415 = vmatpush.bf16.msra.mxu0 %v1406
          %1416 = vmatmul.bf16.gmra.mxu0 %v1403
          %v1417 = vpop.f32.mrf.mxu0
          %v1418 = vadd.f32 0.0, %v1417
          %v1419 = vpop.f32.mrf.mxu0
          %v1420 = vadd.f32 0.0, %v1419
          %1421 = vdwg.mxu0
          %v1422 = vadd.f32 %v1383, %v1418
          %v1423 = vadd.f32 %v1384, %v1420
          %s1424 = scalar_lea.vmem %s3, 32
          %v1425 = vld [vmem:[%s1424] sm:$0xf]
          %v1426 = vld [vmem:[%s1424 + $0x4] sm:$0xf]
          %v1429 = vunpack.c.l.b16 %v1425
          %v1430 = vunpack.c.l.b16 %v1426
          %v1431 = vpack.c.b16 %v1430, %v1429
          %1432 = vrot.lane.b32.xlu0 %v1290, 119
          %v1433 = vpop.permute.xlu0 %1432
          %v1435 = vsel %vm1299, %v1431, 0
          %v1438 = vsel %vm1303, %v1433, 0
          %1440 = vmatpush.bf16.msra.mxu0 0
          %1441 = vmatpush.bf16.msra.mxu0 0
          %1442 = vmatpush.bf16.msra.mxu0 0
          %1443 = vmatpush.bf16.msra.mxu0 0
          %1444 = vmatpush.bf16.msra.mxu0 0
          %1445 = vmatpush.bf16.msra.mxu0 0
          %1446 = vmatpush.bf16.msra.mxu0 0
          %1447 = vmatpush.bf16.msra.mxu0 %v1438
          %1448 = vmatmul.bf16.gmra.mxu0 %v1435
          %v1449 = vpop.f32.mrf.mxu0
          %v1450 = vadd.f32 0.0, %v1449
          %v1451 = vpop.f32.mrf.mxu0
          %v1452 = vadd.f32 0.0, %v1451
          %1453 = vdwg.mxu0
          %v1454 = vadd.f32 %v1422, %v1450
          %v1455 = vadd.f32 %v1423, %v1452
          %1456 = vrot.lane.b32.xlu0 %v1282, 10
          %v1457 = vpop.permute.xlu0 %1456
          %v1459 = vmul.f32 %v1266, %v1457
          %s1460 = scalar_lea.vmem %s3, 40
          %v1461 = vld [vmem:[%s1460] sm:$0xf]
          %v1462 = vld [vmem:[%s1460 + $0x4] sm:$0xf]
          %v1463 = vpack.c.bf16 %v1459, %v1459
          %v1466 = vunpack.c.l.b16 %v1461
          %v1467 = vunpack.c.l.b16 %v1462
          %v1468 = vpack.c.b16 %v1467, %v1466
          %1470 = vrot.lane.b32.xlu0 %v1463, 118
          %v1471 = vpop.permute.xlu0 %1470
          %v1473 = vsel %vm1299, %v1468, 0
          %v1476 = vsel %vm1303, %v1471, 0
          %1478 = vmatpush.bf16.msra.mxu0 0
          %1479 = vmatpush.bf16.msra.mxu0 0
          %1480 = vmatpush.bf16.msra.mxu0 0
          %1481 = vmatpush.bf16.msra.mxu0 0
          %1482 = vmatpush.bf16.msra.mxu0 0
          %1483 = vmatpush.bf16.msra.mxu0 0
          %1484 = vmatpush.bf16.msra.mxu0 0
          %1485 = vmatpush.bf16.msra.mxu0 %v1476
          %1486 = vmatmul.bf16.gmra.mxu0 %v1473
          %v1487 = vpop.f32.mrf.mxu0
          %v1488 = vadd.f32 0.0, %v1487
          %v1489 = vpop.f32.mrf.mxu0
          %v1490 = vadd.f32 0.0, %v1489
          %1491 = vdwg.mxu0
          %v1492 = vadd.f32 %v1454, %v1488
          %v1493 = vadd.f32 %v1455, %v1490
          %1494 = vrot.lane.b32.xlu0 %v1280, 16
          %v1495 = vpop.permute.xlu0 %1494
          %v1497 = vmul.f32 %v1266, %v1495
          %s1498 = scalar_lea.vmem %s3, 48
          %v1499 = vld [vmem:[%s1498] sm:$0xf]
          %v1500 = vld [vmem:[%s1498 + $0x4] sm:$0xf]
          %v1501 = vpack.c.bf16 %v1497, %v1497
          %v1504 = vunpack.c.l.b16 %v1499
          %v1505 = vunpack.c.l.b16 %v1500
          %v1506 = vpack.c.b16 %v1505, %v1504
          %1508 = vrot.lane.b32.xlu0 %v1501, 112
          %v1509 = vpop.permute.xlu0 %1508
          %v1511 = vsel %vm1299, %v1506, 0
          %v1514 = vsel %vm1303, %v1509, 0
          %1516 = vmatpush.bf16.msra.mxu0 0
          %1517 = vmatpush.bf16.msra.mxu0 0
          %1518 = vmatpush.bf16.msra.mxu0 0
          %1519 = vmatpush.bf16.msra.mxu0 0
          %1520 = vmatpush.bf16.msra.mxu0 0
          %1521 = vmatpush.bf16.msra.mxu0 0
          %1522 = vmatpush.bf16.msra.mxu0 0
          %1523 = vmatpush.bf16.msra.mxu0 %v1514
          %1524 = vmatmul.bf16.gmra.mxu0 %v1511
          %v1525 = vpop.f32.mrf.mxu0
          %v1526 = vadd.f32 0.0, %v1525
          %v1527 = vpop.f32.mrf.mxu0
          %v1528 = vadd.f32 0.0, %v1527
          %1529 = vdwg.mxu0
          %v1530 = vadd.f32 %v1492, %v1526
          %v1531 = vadd.f32 %v1493, %v1528
          %s1532 = scalar_lea.vmem %s3, 56
          %v1533 = vld [vmem:[%s1532] sm:$0xf]
          %v1534 = vld [vmem:[%s1532 + $0x4] sm:$0xf]
          %v1537 = vunpack.c.l.b16 %v1533
          %v1538 = vunpack.c.l.b16 %v1534
          %v1539 = vpack.c.b16 %v1538, %v1537
          %1540 = vrot.lane.b32.xlu0 %v1290, 111
          %v1541 = vpop.permute.xlu0 %1540
          %v1543 = vsel %vm1299, %v1539, 0
          %v1546 = vsel %vm1303, %v1541, 0
          %1548 = vmatpush.bf16.msra.mxu0 0
          %1549 = vmatpush.bf16.msra.mxu0 0
          %1550 = vmatpush.bf16.msra.mxu0 0
          %1551 = vmatpush.bf16.msra.mxu0 0
          %1552 = vmatpush.bf16.msra.mxu0 0
          %1553 = vmatpush.bf16.msra.mxu0 0
          %1554 = vmatpush.bf16.msra.mxu0 0
          %1555 = vmatpush.bf16.msra.mxu0 %v1546
          %1556 = vmatmul.bf16.gmra.mxu0 %v1543
          %v1557 = vpop.f32.mrf.mxu0
          %v1558 = vadd.f32 0.0, %v1557
          %v1559 = vpop.f32.mrf.mxu0
          %v1560 = vadd.f32 0.0, %v1559
          %1561 = vdwg.mxu0
          %v1562 = vadd.f32 %v1530, %v1558
          %v1563 = vadd.f32 %v1531, %v1560
          %1564 = vrot.lane.b32.xlu0 %v1282, 18
          %v1565 = vpop.permute.xlu0 %1564
          %v1567 = vmul.f32 %v1266, %v1565
          %s1568 = scalar_lea.vmem %s3, 64
          %v1569 = vld [vmem:[%s1568] sm:$0xf]
          %v1570 = vld [vmem:[%s1568 + $0x4] sm:$0xf]
          %v1571 = vpack.c.bf16 %v1567, %v1567
          %v1574 = vunpack.c.l.b16 %v1569
          %v1575 = vunpack.c.l.b16 %v1570
          %v1576 = vpack.c.b16 %v1575, %v1574
          %1578 = vrot.lane.b32.xlu0 %v1571, 110
          %v1579 = vpop.permute.xlu0 %1578
          %v1581 = vsel %vm1299, %v1576, 0
          %v1584 = vsel %vm1303, %v1579, 0
          %1586 = vmatpush.bf16.msra.mxu0 0
          %1587 = vmatpush.bf16.msra.mxu0 0
          %1588 = vmatpush.bf16.msra.mxu0 0
          %1589 = vmatpush.bf16.msra.mxu0 0
          %1590 = vmatpush.bf16.msra.mxu0 0
          %1591 = vmatpush.bf16.msra.mxu0 0
          %1592 = vmatpush.bf16.msra.mxu0 0
          %1593 = vmatpush.bf16.msra.mxu0 %v1584
          %1594 = vmatmul.bf16.gmra.mxu0 %v1581
          %v1595 = vpop.f32.mrf.mxu0
          %v1596 = vadd.f32 0.0, %v1595
          %v1597 = vpop.f32.mrf.mxu0
          %v1598 = vadd.f32 0.0, %v1597
          %1599 = vdwg.mxu0
          %v1600 = vadd.f32 %v1562, %v1596
          %v1601 = vadd.f32 %v1563, %v1598
          %v1602 = vld [vmem:[%s4] sm:$0xff]
          %v1603 = vld [vmem:[%s4 + $0x8] sm:$0xff]
          %1605 = vset.pattern.permute.xlu0 0
          %1606 = vperm.xlu0 %1605, %v1602
          %v1607 = vpop.permute.xlu0 %1606
          %1610 = vset.pattern.permute.xlu0 0
          %1611 = vperm.xlu0 %1610, %v1603
          %v1612 = vpop.permute.xlu0 %1611
          %v1614 = vadd.f32 %v1600, %v1607
          %v1615 = vadd.f32 %v1601, %v1612
          %v1616 = vmax.f32 %v1614, 0.0
          %v1617 = vmax.f32 %v1615, 0.0
          %v1618 = vpack.c.bf16 %v1617, %v1616
          %v1619 = vld [vmem:[#allocation7] sm:$0xff]
          %v1620 = vld [vmem:[#allocation7 + $0x8] sm:$0xff]
          %v1621 = vld [vmem:[#allocation7 + $0x10] sm:$0xff]
          %v1622 = vld [vmem:[#allocation7 + $0x18] sm:$0xff]
          %v1623 = vld [vmem:[#allocation7 + $0x20] sm:$0xff]
          %v1624 = vld [vmem:[#allocation7 + $0x28] sm:$0xff]
          %v1625 = vld [vmem:[#allocation7 + $0x30] sm:$0xff]
          %v1626 = vld [vmem:[#allocation7 + $0x38] sm:$0xff]
          %v1635 = vunpack.c.l.b16 %v1619
          %v1636 = vunpack.c.h.b16 %v1619
          %v1637 = vunpack.c.l.b16 %v1620
          %v1638 = vunpack.c.h.b16 %v1620
          %v1639 = vunpack.c.l.b16 %v1621
          %v1640 = vunpack.c.h.b16 %v1621
          %v1641 = vunpack.c.l.b16 %v1622
          %v1642 = vunpack.c.h.b16 %v1622
          %v1643 = vunpack.c.l.b16 %v1623
          %v1644 = vunpack.c.h.b16 %v1623
          %v1645 = vunpack.c.l.b16 %v1624
          %v1646 = vunpack.c.h.b16 %v1624
          %v1647 = vunpack.c.l.b16 %v1625
          %v1648 = vunpack.c.h.b16 %v1625
          %v1649 = vunpack.c.l.b16 %v1626
          %v1650 = vunpack.c.h.b16 %v1626
          %v1651 = vpack.c.b16 %v1637, %v1635
          %v1652 = vpack.c.b16 %v1638, %v1636
          %v1653 = vpack.c.b16 %v1641, %v1639
          %v1654 = vpack.c.b16 %v1642, %v1640
          %v1655 = vpack.c.b16 %v1645, %v1643
          %v1656 = vpack.c.b16 %v1646, %v1644
          %v1657 = vpack.c.b16 %v1649, %v1647
          %v1658 = vpack.c.b16 %v1650, %v1648
          %vm1667 = vcmask 523264
          %v1669 = vsel %vm1667, %v1618, 0
          %1671 = vmatpush.bf16.msra.mxu0 0
          %1672 = vmatpush.bf16.msra.mxu0 0
          %1673 = vmatpush.bf16.msra.mxu0 0
          %1674 = vmatpush.bf16.msra.mxu0 0
          %1675 = vmatpush.bf16.msra.mxu0 %v1657
          %1676 = vmatpush.bf16.msra.mxu0 %v1655
          %1677 = vmatpush.bf16.msra.mxu0 %v1653
          %1678 = vmatpush.bf16.msra.mxu0 %v1651
          %1679 = vmatmul.bf16.gmra.mxu0 %v1669
          %v1680 = vpop.f32.mrf.mxu0
          %v1681 = vadd.f32 0.0, %v1680
          %v1682 = vpop.f32.mrf.mxu0
          %v1683 = vadd.f32 0.0, %v1682
          %1684 = vdwg.mxu0
          %1685 = vmatpush.bf16.msra.mxu0 0
          %1686 = vmatpush.bf16.msra.mxu0 0
          %1687 = vmatpush.bf16.msra.mxu0 0
          %1688 = vmatpush.bf16.msra.mxu0 0
          %1689 = vmatpush.bf16.msra.mxu0 %v1658
          %1690 = vmatpush.bf16.msra.mxu0 %v1656
          %1691 = vmatpush.bf16.msra.mxu0 %v1654
          %1692 = vmatpush.bf16.msra.mxu0 %v1652
          %1693 = vmatmul.bf16.gmra.mxu0 %v1669
          %v1694 = vpop.f32.mrf.mxu0
          %v1695 = vadd.f32 0.0, %v1694
          %v1696 = vpop.f32.mrf.mxu0
          %v1697 = vadd.f32 0.0, %v1696
          %1698 = vdwg.mxu0
          %1703 = vrot.lane.b32.xlu0 %v1681, 17
          %v1704 = vpop.permute.xlu0 %1703
          %1705 = vrot.lane.b32.xlu0 %v1695, 17
          %v1706 = vpop.permute.xlu0 %1705
          %1707 = vrot.lane.b32.xlu0 %v1683, 17
          %v1708 = vpop.permute.xlu0 %1707
          %1709 = vrot.lane.b32.xlu0 %v1697, 17
          %v1710 = vpop.permute.xlu0 %1709
          %v1711 = vsel %vm527, %v1704, %v1706
          %v1712 = vsel %vm527, %v1708, %v1710
          %v1719 = vsel %vm527, 0.0, %v1704
          %v1720 = vsel %vm527, 0.0, %v1708
          %v1721 = vsel %vm527, %v1706, 0.0
          %v1722 = vsel %vm527, %v1710, 0.0
          %v1723 = vmul.f32 %v1719, %v563
          %v1724 = vmul.f32 %v1711, %v564
          %v1725 = vmul.f32 %v1720, %v563
          %v1726 = vmul.f32 %v1712, %v564
          %v1727 = vld [vmem:[#allocation3] sm:$0xf]
          %v1728 = vpack.c.bf16 %v1725, %v1723
          %v1729 = vpack.c.bf16 %v1726, %v1724
          %s1730 = scalar_lea.vmem [#allocation3], 4
          %v1731 = vld [vmem:[%s1730] sm:$0xf]
          %v1732 = vpack.c.bf16 %v1720, %v1719
          %v1733 = vpack.c.bf16 %v1712, %v1711
          %v1734 = vpack.c.bf16 %v1722, %v1721
          %1738 = vrot.lane.b32.xlu0 %v1732, 127
          %v1739 = vpop.permute.xlu0 %1738
          %1740 = vrot.lane.b32.xlu0 %v1733, 127
          %v1741 = vpop.permute.xlu0 %1740
          %1742 = vrot.lane.b32.xlu0 %v1734, 127
          %v1743 = vpop.permute.xlu0 %1742
          %v1744 = vsel %vm588, %v1739, %v1741
          %v1745 = vsel %vm588, %v1741, %v1743
          %v1749 = vsel %vm737, %v1731, 0
          %1751 = vmatpush.bf16.msra.mxu0 0
          %1752 = vmatpush.bf16.msra.mxu0 0
          %1753 = vmatpush.bf16.msra.mxu0 0
          %1754 = vmatpush.bf16.msra.mxu0 0
          %1755 = vmatpush.bf16.msra.mxu0 0
          %1756 = vmatpush.bf16.msra.mxu0 0
          %1757 = vmatpush.bf16.msra.mxu0 0
          %1758 = vmatpush.bf16.msra.mxu0 %v1744
          %1759 = vmatmul.bf16.gmra.mxu0 %v1749
          %v1760 = vpop.f32.mrf.mxu0
          %v1761 = vadd.f32 0.0, %v1760
          %v1762 = vpop.f32.mrf.mxu0
          %1763 = vdwg.mxu0
          %1764 = vmatpush.bf16.msra.mxu0 0
          %1765 = vmatpush.bf16.msra.mxu0 0
          %1766 = vmatpush.bf16.msra.mxu0 0
          %1767 = vmatpush.bf16.msra.mxu0 0
          %1768 = vmatpush.bf16.msra.mxu0 0
          %1769 = vmatpush.bf16.msra.mxu0 0
          %1770 = vmatpush.bf16.msra.mxu0 0
          %1771 = vmatpush.bf16.msra.mxu0 %v1745
          %1772 = vmatmul.bf16.gmra.mxu0 %v1749
          %v1773 = vpop.f32.mrf.mxu0
          %v1774 = vadd.f32 0.0, %v1773
          %v1775 = vpop.f32.mrf.mxu0
          %1776 = vdwg.mxu0
          %v1778 = vsel %vm737, %v1727, 0
          %1780 = vmatpush.bf16.msra.mxu0 0
          %1781 = vmatpush.bf16.msra.mxu0 0
          %1782 = vmatpush.bf16.msra.mxu0 0
          %1783 = vmatpush.bf16.msra.mxu0 0
          %1784 = vmatpush.bf16.msra.mxu0 0
          %1785 = vmatpush.bf16.msra.mxu0 0
          %1786 = vmatpush.bf16.msra.mxu0 0
          %1787 = vmatpush.bf16.msra.mxu0 %v1728
          %1788 = vmatmul.bf16.gmra.mxu0 %v1778
          %v1789 = vpop.f32.mrf.mxu0
          %v1790 = vadd.f32 %v1761, %v1789
          %v1791 = vpop.f32.mrf.mxu0
          %1792 = vdwg.mxu0
          %1793 = vmatpush.bf16.msra.mxu0 0
          %1794 = vmatpush.bf16.msra.mxu0 0
          %1795 = vmatpush.bf16.msra.mxu0 0
          %1796 = vmatpush.bf16.msra.mxu0 0
          %1797 = vmatpush.bf16.msra.mxu0 0
          %1798 = vmatpush.bf16.msra.mxu0 0
          %1799 = vmatpush.bf16.msra.mxu0 0
          %1800 = vmatpush.bf16.msra.mxu0 %v1729
          %1801 = vmatmul.bf16.gmra.mxu0 %v1778
          %v1802 = vpop.f32.mrf.mxu0
          %v1803 = vadd.f32 %v1774, %v1802
          %v1804 = vpop.f32.mrf.mxu0
          %1805 = vdwg.mxu0
          %v1806 = vmul.f32 %v1719, %v666
          %v1807 = vmul.f32 %v1711, %v670
          %v1808 = vmul.f32 %v1721, %v668
          %v1809 = vmul.f32 %v1720, %v666
          %v1810 = vmul.f32 %v1712, %v670
          %v1811 = vmul.f32 %v1722, %v668
          %s1812 = scalar_lea.vmem [#allocation3], 8
          %v1813 = vld [vmem:[%s1812] sm:$0xf]
          %v1814 = vpack.c.bf16 %v1809, %v1806
          %v1815 = vpack.c.bf16 %v1810, %v1807
          %v1816 = vpack.c.bf16 %v1811, %v1808
          %1820 = vrot.lane.b32.xlu0 %v1814, 126
          %v1821 = vpop.permute.xlu0 %1820
          %1822 = vrot.lane.b32.xlu0 %v1815, 126
          %v1823 = vpop.permute.xlu0 %1822
          %1824 = vrot.lane.b32.xlu0 %v1816, 126
          %v1825 = vpop.permute.xlu0 %1824
          %v1826 = vsel %vm691, %v1821, %v1823
          %v1827 = vsel %vm691, %v1823, %v1825
          %v1831 = vsel %vm737, %v1813, 0
          %1833 = vmatpush.bf16.msra.mxu0 0
          %1834 = vmatpush.bf16.msra.mxu0 0
          %1835 = vmatpush.bf16.msra.mxu0 0
          %1836 = vmatpush.bf16.msra.mxu0 0
          %1837 = vmatpush.bf16.msra.mxu0 0
          %1838 = vmatpush.bf16.msra.mxu0 0
          %1839 = vmatpush.bf16.msra.mxu0 0
          %1840 = vmatpush.bf16.msra.mxu0 %v1826
          %1841 = vmatmul.bf16.gmra.mxu0 %v1831
          %v1842 = vpop.f32.mrf.mxu0
          %v1843 = vadd.f32 0.0, %v1842
          %v1844 = vpop.f32.mrf.mxu0
          %1845 = vdwg.mxu0
          %1846 = vmatpush.bf16.msra.mxu0 0
          %1847 = vmatpush.bf16.msra.mxu0 0
          %1848 = vmatpush.bf16.msra.mxu0 0
          %1849 = vmatpush.bf16.msra.mxu0 0
          %1850 = vmatpush.bf16.msra.mxu0 0
          %1851 = vmatpush.bf16.msra.mxu0 0
          %1852 = vmatpush.bf16.msra.mxu0 0
          %1853 = vmatpush.bf16.msra.mxu0 %v1827
          %1854 = vmatmul.bf16.gmra.mxu0 %v1831
          %v1855 = vpop.f32.mrf.mxu0
          %v1856 = vadd.f32 0.0, %v1855
          %v1857 = vpop.f32.mrf.mxu0
          %1858 = vdwg.mxu0
          %v1859 = vadd.f32 %v1790, %v1843
          %v1860 = vadd.f32 %v1803, %v1856
          %v1861 = vmul.f32 %v1719, %v734
          %v1862 = vmul.f32 %v1711, %v738
          %v1863 = vmul.f32 %v1721, %v736
          %v1864 = vmul.f32 %v1720, %v734
          %v1865 = vmul.f32 %v1712, %v738
          %v1866 = vmul.f32 %v1722, %v736
          %s1867 = scalar_lea.vmem [#allocation3], 12
          %v1868 = vld [vmem:[%s1867] sm:$0xf]
          %v1869 = vpack.c.bf16 %v1864, %v1861
          %v1870 = vpack.c.bf16 %v1865, %v1862
          %v1871 = vpack.c.bf16 %v1866, %v1863
          %1875 = vrot.lane.b32.xlu0 %v1869, 112
          %v1876 = vpop.permute.xlu0 %1875
          %1877 = vrot.lane.b32.xlu0 %v1870, 112
          %v1878 = vpop.permute.xlu0 %1877
          %1879 = vrot.lane.b32.xlu0 %v1871, 112
          %v1880 = vpop.permute.xlu0 %1879
          %v1881 = vsel %vm759, %v1876, %v1878
          %v1882 = vsel %vm759, %v1878, %v1880
          %v1886 = vsel %vm737, %v1868, 0
          %1888 = vmatpush.bf16.msra.mxu0 0
          %1889 = vmatpush.bf16.msra.mxu0 0
          %1890 = vmatpush.bf16.msra.mxu0 0
          %1891 = vmatpush.bf16.msra.mxu0 0
          %1892 = vmatpush.bf16.msra.mxu0 0
          %1893 = vmatpush.bf16.msra.mxu0 0
          %1894 = vmatpush.bf16.msra.mxu0 0
          %1895 = vmatpush.bf16.msra.mxu0 %v1881
          %1896 = vmatmul.bf16.gmra.mxu0 %v1886
          %v1897 = vpop.f32.mrf.mxu0
          %v1898 = vadd.f32 0.0, %v1897
          %v1899 = vpop.f32.mrf.mxu0
          %1900 = vdwg.mxu0
          %1901 = vmatpush.bf16.msra.mxu0 0
          %1902 = vmatpush.bf16.msra.mxu0 0
          %1903 = vmatpush.bf16.msra.mxu0 0
          %1904 = vmatpush.bf16.msra.mxu0 0
          %1905 = vmatpush.bf16.msra.mxu0 0
          %1906 = vmatpush.bf16.msra.mxu0 0
          %1907 = vmatpush.bf16.msra.mxu0 0
          %1908 = vmatpush.bf16.msra.mxu0 %v1882
          %1909 = vmatmul.bf16.gmra.mxu0 %v1886
          %v1910 = vpop.f32.mrf.mxu0
          %v1911 = vadd.f32 0.0, %v1910
          %v1912 = vpop.f32.mrf.mxu0
          %1913 = vdwg.mxu0
          %v1914 = vadd.f32 %v1859, %v1898
          %v1915 = vadd.f32 %v1860, %v1911
          %s1916 = scalar_lea.vmem [#allocation3], 16
          %v1917 = vld [vmem:[%s1916] sm:$0xf]
          %1918 = vrot.lane.b32.xlu0 %v1732, 111
          %v1919 = vpop.permute.xlu0 %1918
          %1920 = vrot.lane.b32.xlu0 %v1733, 111
          %v1921 = vpop.permute.xlu0 %1920
          %1922 = vrot.lane.b32.xlu0 %v1734, 111
          %v1923 = vpop.permute.xlu0 %1922
          %v1924 = vsel %vm807, %v1919, %v1921
          %v1925 = vsel %vm807, %v1921, %v1923
          %v1929 = vsel %vm737, %v1917, 0
          %1931 = vmatpush.bf16.msra.mxu0 0
          %1932 = vmatpush.bf16.msra.mxu0 0
          %1933 = vmatpush.bf16.msra.mxu0 0
          %1934 = vmatpush.bf16.msra.mxu0 0
          %1935 = vmatpush.bf16.msra.mxu0 0
          %1936 = vmatpush.bf16.msra.mxu0 0
          %1937 = vmatpush.bf16.msra.mxu0 0
          %1938 = vmatpush.bf16.msra.mxu0 %v1924
          %1939 = vmatmul.bf16.gmra.mxu0 %v1929
          %v1940 = vpop.f32.mrf.mxu0
          %v1941 = vadd.f32 0.0, %v1940
          %v1942 = vpop.f32.mrf.mxu0
          %1943 = vdwg.mxu0
          %1944 = vmatpush.bf16.msra.mxu0 0
          %1945 = vmatpush.bf16.msra.mxu0 0
          %1946 = vmatpush.bf16.msra.mxu0 0
          %1947 = vmatpush.bf16.msra.mxu0 0
          %1948 = vmatpush.bf16.msra.mxu0 0
          %1949 = vmatpush.bf16.msra.mxu0 0
          %1950 = vmatpush.bf16.msra.mxu0 0
          %1951 = vmatpush.bf16.msra.mxu0 %v1925
          %1952 = vmatmul.bf16.gmra.mxu0 %v1929
          %v1953 = vpop.f32.mrf.mxu0
          %v1954 = vadd.f32 0.0, %v1953
          %v1955 = vpop.f32.mrf.mxu0
          %1956 = vdwg.mxu0
          %v1957 = vadd.f32 %v1914, %v1941
          %v1958 = vadd.f32 %v1915, %v1954
          %v1959 = vmul.f32 %v1719, %v848
          %v1960 = vmul.f32 %v1711, %v852
          %v1961 = vmul.f32 %v1721, %v850
          %v1962 = vmul.f32 %v1720, %v848
          %v1963 = vmul.f32 %v1712, %v852
          %v1964 = vmul.f32 %v1722, %v850
          %s1965 = scalar_lea.vmem [#allocation3], 20
          %v1966 = vld [vmem:[%s1965] sm:$0xf]
          %v1967 = vpack.c.bf16 %v1962, %v1959
          %v1968 = vpack.c.bf16 %v1963, %v1960
          %v1969 = vpack.c.bf16 %v1964, %v1961
          %1973 = vrot.lane.b32.xlu0 %v1967, 110
          %v1974 = vpop.permute.xlu0 %1973
          %1975 = vrot.lane.b32.xlu0 %v1968, 110
          %v1976 = vpop.permute.xlu0 %1975
          %1977 = vrot.lane.b32.xlu0 %v1969, 110
          %v1978 = vpop.permute.xlu0 %1977
          %v1979 = vsel %vm873, %v1974, %v1976
          %v1980 = vsel %vm873, %v1976, %v1978
          %v1984 = vsel %vm737, %v1966, 0
          %1986 = vmatpush.bf16.msra.mxu0 0
          %1987 = vmatpush.bf16.msra.mxu0 0
          %1988 = vmatpush.bf16.msra.mxu0 0
          %1989 = vmatpush.bf16.msra.mxu0 0
          %1990 = vmatpush.bf16.msra.mxu0 0
          %1991 = vmatpush.bf16.msra.mxu0 0
          %1992 = vmatpush.bf16.msra.mxu0 0
          %1993 = vmatpush.bf16.msra.mxu0 %v1979
          %1994 = vmatmul.bf16.gmra.mxu0 %v1984
          %v1995 = vpop.f32.mrf.mxu0
          %v1996 = vadd.f32 0.0, %v1995
          %v1997 = vpop.f32.mrf.mxu0
          %1998 = vdwg.mxu0
          %1999 = vmatpush.bf16.msra.mxu0 0
          %2000 = vmatpush.bf16.msra.mxu0 0
          %2001 = vmatpush.bf16.msra.mxu0 0
          %2002 = vmatpush.bf16.msra.mxu0 0
          %2003 = vmatpush.bf16.msra.mxu0 0
          %2004 = vmatpush.bf16.msra.mxu0 0
          %2005 = vmatpush.bf16.msra.mxu0 0
          %2006 = vmatpush.bf16.msra.mxu0 %v1980
          %2007 = vmatmul.bf16.gmra.mxu0 %v1984
          %v2008 = vpop.f32.mrf.mxu0
          %v2009 = vadd.f32 0.0, %v2008
          %v2010 = vpop.f32.mrf.mxu0
          %2011 = vdwg.mxu0
          %v2012 = vadd.f32 %v1957, %v1996
          %v2013 = vadd.f32 %v1958, %v2009
          %v2014 = vmul.f32 %v1719, %v914
          %v2015 = vmul.f32 %v1711, %v918
          %v2016 = vmul.f32 %v1721, %v916
          %v2017 = vmul.f32 %v1720, %v914
          %v2018 = vmul.f32 %v1712, %v918
          %v2019 = vmul.f32 %v1722, %v916
          %s2020 = scalar_lea.vmem [#allocation3], 24
          %v2021 = vld [vmem:[%s2020] sm:$0xf]
          %v2022 = vpack.c.bf16 %v2017, %v2014
          %v2023 = vpack.c.bf16 %v2018, %v2015
          %v2024 = vpack.c.bf16 %v2019, %v2016
          %2028 = vrot.lane.b32.xlu0 %v2022, 96
          %v2029 = vpop.permute.xlu0 %2028
          %2030 = vrot.lane.b32.xlu0 %v2023, 96
          %v2031 = vpop.permute.xlu0 %2030
          %2032 = vrot.lane.b32.xlu0 %v2024, 96
          %v2033 = vpop.permute.xlu0 %2032
          %v2034 = vsel %vm939, %v2029, %v2031
          %v2035 = vsel %vm939, %v2031, %v2033
          %v2039 = vsel %vm737, %v2021, 0
          %2041 = vmatpush.bf16.msra.mxu0 0
          %2042 = vmatpush.bf16.msra.mxu0 0
          %2043 = vmatpush.bf16.msra.mxu0 0
          %2044 = vmatpush.bf16.msra.mxu0 0
          %2045 = vmatpush.bf16.msra.mxu0 0
          %2046 = vmatpush.bf16.msra.mxu0 0
          %2047 = vmatpush.bf16.msra.mxu0 0
          %2048 = vmatpush.bf16.msra.mxu0 %v2034
          %2049 = vmatmul.bf16.gmra.mxu0 %v2039
          %v2050 = vpop.f32.mrf.mxu0
          %v2051 = vadd.f32 0.0, %v2050
          %v2052 = vpop.f32.mrf.mxu0
          %2053 = vdwg.mxu0
          %2054 = vmatpush.bf16.msra.mxu0 0
          %2055 = vmatpush.bf16.msra.mxu0 0
          %2056 = vmatpush.bf16.msra.mxu0 0
          %2057 = vmatpush.bf16.msra.mxu0 0
          %2058 = vmatpush.bf16.msra.mxu0 0
          %2059 = vmatpush.bf16.msra.mxu0 0
          %2060 = vmatpush.bf16.msra.mxu0 0
          %2061 = vmatpush.bf16.msra.mxu0 %v2035
          %2062 = vmatmul.bf16.gmra.mxu0 %v2039
          %v2063 = vpop.f32.mrf.mxu0
          %v2064 = vadd.f32 0.0, %v2063
          %v2065 = vpop.f32.mrf.mxu0
          %2066 = vdwg.mxu0
          %v2067 = vadd.f32 %v2012, %v2051
          %v2068 = vadd.f32 %v2013, %v2064
          %s2069 = scalar_lea.vmem [#allocation3], 28
          %v2070 = vld [vmem:[%s2069] sm:$0xf]
          %2071 = vrot.lane.b32.xlu0 %v1732, 95
          %v2072 = vpop.permute.xlu0 %2071
          %2073 = vrot.lane.b32.xlu0 %v1733, 95
          %v2074 = vpop.permute.xlu0 %2073
          %2075 = vrot.lane.b32.xlu0 %v1734, 95
          %v2076 = vpop.permute.xlu0 %2075
          %v2077 = vsel %vm987, %v2072, %v2074
          %v2078 = vsel %vm987, %v2074, %v2076
          %v2082 = vsel %vm737, %v2070, 0
          %2084 = vmatpush.bf16.msra.mxu0 0
          %2085 = vmatpush.bf16.msra.mxu0 0
          %2086 = vmatpush.bf16.msra.mxu0 0
          %2087 = vmatpush.bf16.msra.mxu0 0
          %2088 = vmatpush.bf16.msra.mxu0 0
          %2089 = vmatpush.bf16.msra.mxu0 0
          %2090 = vmatpush.bf16.msra.mxu0 0
          %2091 = vmatpush.bf16.msra.mxu0 %v2077
          %2092 = vmatmul.bf16.gmra.mxu0 %v2082
          %v2093 = vpop.f32.mrf.mxu0
          %v2094 = vadd.f32 0.0, %v2093
          %v2095 = vpop.f32.mrf.mxu0
          %2096 = vdwg.mxu0
          %2097 = vmatpush.bf16.msra.mxu0 0
          %2098 = vmatpush.bf16.msra.mxu0 0
          %2099 = vmatpush.bf16.msra.mxu0 0
          %2100 = vmatpush.bf16.msra.mxu0 0
          %2101 = vmatpush.bf16.msra.mxu0 0
          %2102 = vmatpush.bf16.msra.mxu0 0
          %2103 = vmatpush.bf16.msra.mxu0 0
          %2104 = vmatpush.bf16.msra.mxu0 %v2078
          %2105 = vmatmul.bf16.gmra.mxu0 %v2082
          %v2106 = vpop.f32.mrf.mxu0
          %v2107 = vadd.f32 0.0, %v2106
          %v2108 = vpop.f32.mrf.mxu0
          %2109 = vdwg.mxu0
          %v2110 = vadd.f32 %v2067, %v2094
          %v2111 = vadd.f32 %v2068, %v2107
          %v2112 = vmul.f32 %v1719, %v1028
          %v2113 = vmul.f32 %v1711, %v1032
          %v2114 = vmul.f32 %v1721, %v1030
          %v2115 = vmul.f32 %v1720, %v1028
          %v2116 = vmul.f32 %v1712, %v1032
          %v2117 = vmul.f32 %v1722, %v1030
          %s2118 = scalar_lea.vmem [#allocation3], 32
          %v2119 = vld [vmem:[%s2118] sm:$0xf]
          %v2120 = vpack.c.bf16 %v2115, %v2112
          %v2121 = vpack.c.bf16 %v2116, %v2113
          %v2122 = vpack.c.bf16 %v2117, %v2114
          %2126 = vrot.lane.b32.xlu0 %v2120, 94
          %v2127 = vpop.permute.xlu0 %2126
          %2128 = vrot.lane.b32.xlu0 %v2121, 94
          %v2129 = vpop.permute.xlu0 %2128
          %2130 = vrot.lane.b32.xlu0 %v2122, 94
          %v2131 = vpop.permute.xlu0 %2130
          %v2132 = vsel %vm1053, %v2127, %v2129
          %v2133 = vsel %vm1053, %v2129, %v2131
          %v2137 = vsel %vm737, %v2119, 0
          %2139 = vmatpush.bf16.msra.mxu0 0
          %2140 = vmatpush.bf16.msra.mxu0 0
          %2141 = vmatpush.bf16.msra.mxu0 0
          %2142 = vmatpush.bf16.msra.mxu0 0
          %2143 = vmatpush.bf16.msra.mxu0 0
          %2144 = vmatpush.bf16.msra.mxu0 0
          %2145 = vmatpush.bf16.msra.mxu0 0
          %2146 = vmatpush.bf16.msra.mxu0 %v2132
          %2147 = vmatmul.bf16.gmra.mxu0 %v2137
          %v2148 = vpop.f32.mrf.mxu0
          %v2149 = vadd.f32 0.0, %v2148
          %v2150 = vpop.f32.mrf.mxu0
          %2151 = vdwg.mxu0
          %2152 = vmatpush.bf16.msra.mxu0 0
          %2153 = vmatpush.bf16.msra.mxu0 0
          %2154 = vmatpush.bf16.msra.mxu0 0
          %2155 = vmatpush.bf16.msra.mxu0 0
          %2156 = vmatpush.bf16.msra.mxu0 0
          %2157 = vmatpush.bf16.msra.mxu0 0
          %2158 = vmatpush.bf16.msra.mxu0 0
          %2159 = vmatpush.bf16.msra.mxu0 %v2133
          %2160 = vmatmul.bf16.gmra.mxu0 %v2137
          %v2161 = vpop.f32.mrf.mxu0
          %v2162 = vadd.f32 0.0, %v2161
          %v2163 = vpop.f32.mrf.mxu0
          %2164 = vdwg.mxu0
          %v2165 = vadd.f32 %v2110, %v2149
          %v2166 = vadd.f32 %v2111, %v2162
          %2169 = vrot.lane.b32.xlu0 %v1101, 17
          %v2170 = vpop.permute.xlu0 %2169
          %2171 = vrot.lane.b32.xlu0 %v1102, 17
          %v2172 = vpop.permute.xlu0 %2171
          %v2173 = vsel %vm527, %v2170, %v2172
          %v2177 = vsel %vm527, 0.0, %v2170
          %v2178 = vsel %vm527, %v2172, 0.0
          %v2179 = vmul.f32 %v2177, %v563
          %v2180 = vmul.f32 %v2173, %v564
          %v2181 = vld [vmem:[%s6] sm:$0xf]
          %v2182 = vpack.c.bf16 %v2179, %v2179
          %v2183 = vpack.c.bf16 %v2180, %v2180
          %s2184 = scalar_lea.vmem %s6, 4
          %v2185 = vld [vmem:[%s2184] sm:$0xf]
          %v2186 = vpack.c.bf16 %v2177, %v2177
          %v2187 = vpack.c.bf16 %v2173, %v2173
          %v2188 = vpack.c.bf16 %v2178, %v2178
          %2192 = vrot.lane.b32.xlu0 %v2186, 127
          %v2193 = vpop.permute.xlu0 %2192
          %2194 = vrot.lane.b32.xlu0 %v2187, 127
          %v2195 = vpop.permute.xlu0 %2194
          %2196 = vrot.lane.b32.xlu0 %v2188, 127
          %v2197 = vpop.permute.xlu0 %2196
          %v2198 = vsel %vm588, %v2193, %v2195
          %v2199 = vsel %vm588, %v2195, %v2197
          %v2201 = vsel %vm1299, %v2185, 0
          %v2204 = vsel %vm1303, %v2198, 0
          %v2207 = vsel %vm1303, %v2199, 0
          %2209 = vmatpush.bf16.msra.mxu0 0
          %2210 = vmatpush.bf16.msra.mxu0 0
          %2211 = vmatpush.bf16.msra.mxu0 0
          %2212 = vmatpush.bf16.msra.mxu0 0
          %2213 = vmatpush.bf16.msra.mxu0 0
          %2214 = vmatpush.bf16.msra.mxu0 0
          %2215 = vmatpush.bf16.msra.mxu0 0
          %2216 = vmatpush.bf16.msra.mxu0 %v2204
          %2217 = vmatmul.bf16.gmra.mxu0 %v2201
          %v2218 = vpop.f32.mrf.mxu0
          %v2219 = vadd.f32 0.0, %v2218
          %v2220 = vpop.f32.mrf.mxu0
          %2221 = vdwg.mxu0
          %2222 = vmatpush.bf16.msra.mxu0 0
          %2223 = vmatpush.bf16.msra.mxu0 0
          %2224 = vmatpush.bf16.msra.mxu0 0
          %2225 = vmatpush.bf16.msra.mxu0 0
          %2226 = vmatpush.bf16.msra.mxu0 0
          %2227 = vmatpush.bf16.msra.mxu0 0
          %2228 = vmatpush.bf16.msra.mxu0 0
          %2229 = vmatpush.bf16.msra.mxu0 %v2207
          %2230 = vmatmul.bf16.gmra.mxu0 %v2201
          %v2231 = vpop.f32.mrf.mxu0
          %v2232 = vadd.f32 0.0, %v2231
          %v2233 = vpop.f32.mrf.mxu0
          %2234 = vdwg.mxu0
          %v2236 = vsel %vm1299, %v2181, 0
          %v2239 = vsel %vm1303, %v2182, 0
          %v2242 = vsel %vm1303, %v2183, 0
          %2244 = vmatpush.bf16.msra.mxu0 0
          %2245 = vmatpush.bf16.msra.mxu0 0
          %2246 = vmatpush.bf16.msra.mxu0 0
          %2247 = vmatpush.bf16.msra.mxu0 0
          %2248 = vmatpush.bf16.msra.mxu0 0
          %2249 = vmatpush.bf16.msra.mxu0 0
          %2250 = vmatpush.bf16.msra.mxu0 0
          %2251 = vmatpush.bf16.msra.mxu0 %v2239
          %2252 = vmatmul.bf16.gmra.mxu0 %v2236
          %v2253 = vpop.f32.mrf.mxu0
          %v2254 = vadd.f32 %v2219, %v2253
          %v2255 = vpop.f32.mrf.mxu0
          %2256 = vdwg.mxu0
          %2257 = vmatpush.bf16.msra.mxu0 0
          %2258 = vmatpush.bf16.msra.mxu0 0
          %2259 = vmatpush.bf16.msra.mxu0 0
          %2260 = vmatpush.bf16.msra.mxu0 0
          %2261 = vmatpush.bf16.msra.mxu0 0
          %2262 = vmatpush.bf16.msra.mxu0 0
          %2263 = vmatpush.bf16.msra.mxu0 0
          %2264 = vmatpush.bf16.msra.mxu0 %v2242
          %2265 = vmatmul.bf16.gmra.mxu0 %v2236
          %v2266 = vpop.f32.mrf.mxu0
          %v2267 = vadd.f32 %v2232, %v2266
          %v2268 = vpop.f32.mrf.mxu0
          %2269 = vdwg.mxu0
          %v2270 = vmul.f32 %v2177, %v666
          %v2271 = vmul.f32 %v2173, %v670
          %v2272 = vmul.f32 %v2178, %v668
          %s2273 = scalar_lea.vmem %s6, 8
          %v2274 = vld [vmem:[%s2273] sm:$0xf]
          %v2275 = vpack.c.bf16 %v2270, %v2270
          %v2276 = vpack.c.bf16 %v2271, %v2271
          %v2277 = vpack.c.bf16 %v2272, %v2272
          %2281 = vrot.lane.b32.xlu0 %v2275, 126
          %v2282 = vpop.permute.xlu0 %2281
          %2283 = vrot.lane.b32.xlu0 %v2276, 126
          %v2284 = vpop.permute.xlu0 %2283
          %2285 = vrot.lane.b32.xlu0 %v2277, 126
          %v2286 = vpop.permute.xlu0 %2285
          %v2287 = vsel %vm691, %v2282, %v2284
          %v2288 = vsel %vm691, %v2284, %v2286
          %v2290 = vsel %vm1299, %v2274, 0
          %v2293 = vsel %vm1303, %v2287, 0
          %v2296 = vsel %vm1303, %v2288, 0
          %2298 = vmatpush.bf16.msra.mxu0 0
          %2299 = vmatpush.bf16.msra.mxu0 0
          %2300 = vmatpush.bf16.msra.mxu0 0
          %2301 = vmatpush.bf16.msra.mxu0 0
          %2302 = vmatpush.bf16.msra.mxu0 0
          %2303 = vmatpush.bf16.msra.mxu0 0
          %2304 = vmatpush.bf16.msra.mxu0 0
          %2305 = vmatpush.bf16.msra.mxu0 %v2293
          %2306 = vmatmul.bf16.gmra.mxu0 %v2290
          %v2307 = vpop.f32.mrf.mxu0
          %v2308 = vadd.f32 0.0, %v2307
          %v2309 = vpop.f32.mrf.mxu0
          %2310 = vdwg.mxu0
          %2311 = vmatpush.bf16.msra.mxu0 0
          %2312 = vmatpush.bf16.msra.mxu0 0
          %2313 = vmatpush.bf16.msra.mxu0 0
          %2314 = vmatpush.bf16.msra.mxu0 0
          %2315 = vmatpush.bf16.msra.mxu0 0
          %2316 = vmatpush.bf16.msra.mxu0 0
          %2317 = vmatpush.bf16.msra.mxu0 0
          %2318 = vmatpush.bf16.msra.mxu0 %v2296
          %2319 = vmatmul.bf16.gmra.mxu0 %v2290
          %v2320 = vpop.f32.mrf.mxu0
          %v2321 = vadd.f32 0.0, %v2320
          %v2322 = vpop.f32.mrf.mxu0
          %2323 = vdwg.mxu0
          %v2324 = vadd.f32 %v2254, %v2308
          %v2325 = vadd.f32 %v2267, %v2321
          %v2326 = vmul.f32 %v2177, %v734
          %v2327 = vmul.f32 %v2173, %v738
          %v2328 = vmul.f32 %v2178, %v736
          %s2329 = scalar_lea.vmem %s6, 12
          %v2330 = vld [vmem:[%s2329] sm:$0xf]
          %v2331 = vpack.c.bf16 %v2326, %v2326
          %v2332 = vpack.c.bf16 %v2327, %v2327
          %v2333 = vpack.c.bf16 %v2328, %v2328
          %2337 = vrot.lane.b32.xlu0 %v2331, 112
          %v2338 = vpop.permute.xlu0 %2337
          %2339 = vrot.lane.b32.xlu0 %v2332, 112
          %v2340 = vpop.permute.xlu0 %2339
          %2341 = vrot.lane.b32.xlu0 %v2333, 112
          %v2342 = vpop.permute.xlu0 %2341
          %v2343 = vsel %vm759, %v2338, %v2340
          %v2344 = vsel %vm759, %v2340, %v2342
          %v2346 = vsel %vm1299, %v2330, 0
          %v2349 = vsel %vm1303, %v2343, 0
          %v2352 = vsel %vm1303, %v2344, 0
          %2354 = vmatpush.bf16.msra.mxu0 0
          %2355 = vmatpush.bf16.msra.mxu0 0
          %2356 = vmatpush.bf16.msra.mxu0 0
          %2357 = vmatpush.bf16.msra.mxu0 0
          %2358 = vmatpush.bf16.msra.mxu0 0
          %2359 = vmatpush.bf16.msra.mxu0 0
          %2360 = vmatpush.bf16.msra.mxu0 0
          %2361 = vmatpush.bf16.msra.mxu0 %v2349
          %2362 = vmatmul.bf16.gmra.mxu0 %v2346
          %v2363 = vpop.f32.mrf.mxu0
          %v2364 = vadd.f32 0.0, %v2363
          %v2365 = vpop.f32.mrf.mxu0
          %2366 = vdwg.mxu0
          %2367 = vmatpush.bf16.msra.mxu0 0
          %2368 = vmatpush.bf16.msra.mxu0 0
          %2369 = vmatpush.bf16.msra.mxu0 0
          %2370 = vmatpush.bf16.msra.mxu0 0
          %2371 = vmatpush.bf16.msra.mxu0 0
          %2372 = vmatpush.bf16.msra.mxu0 0
          %2373 = vmatpush.bf16.msra.mxu0 0
          %2374 = vmatpush.bf16.msra.mxu0 %v2352
          %2375 = vmatmul.bf16.gmra.mxu0 %v2346
          %v2376 = vpop.f32.mrf.mxu0
          %v2377 = vadd.f32 0.0, %v2376
          %v2378 = vpop.f32.mrf.mxu0
          %2379 = vdwg.mxu0
          %v2380 = vadd.f32 %v2324, %v2364
          %v2381 = vadd.f32 %v2325, %v2377
          %s2382 = scalar_lea.vmem %s6, 16
          %v2383 = vld [vmem:[%s2382] sm:$0xf]
          %2384 = vrot.lane.b32.xlu0 %v2186, 111
          %v2385 = vpop.permute.xlu0 %2384
          %2386 = vrot.lane.b32.xlu0 %v2187, 111
          %v2387 = vpop.permute.xlu0 %2386
          %2388 = vrot.lane.b32.xlu0 %v2188, 111
          %v2389 = vpop.permute.xlu0 %2388
          %v2390 = vsel %vm807, %v2385, %v2387
          %v2391 = vsel %vm807, %v2387, %v2389
          %v2393 = vsel %vm1299, %v2383, 0
          %v2396 = vsel %vm1303, %v2390, 0
          %v2399 = vsel %vm1303, %v2391, 0
          %2401 = vmatpush.bf16.msra.mxu0 0
          %2402 = vmatpush.bf16.msra.mxu0 0
          %2403 = vmatpush.bf16.msra.mxu0 0
          %2404 = vmatpush.bf16.msra.mxu0 0
          %2405 = vmatpush.bf16.msra.mxu0 0
          %2406 = vmatpush.bf16.msra.mxu0 0
          %2407 = vmatpush.bf16.msra.mxu0 0
          %2408 = vmatpush.bf16.msra.mxu0 %v2396
          %2409 = vmatmul.bf16.gmra.mxu0 %v2393
          %v2410 = vpop.f32.mrf.mxu0
          %v2411 = vadd.f32 0.0, %v2410
          %v2412 = vpop.f32.mrf.mxu0
          %2413 = vdwg.mxu0
          %2414 = vmatpush.bf16.msra.mxu0 0
          %2415 = vmatpush.bf16.msra.mxu0 0
          %2416 = vmatpush.bf16.msra.mxu0 0
          %2417 = vmatpush.bf16.msra.mxu0 0
          %2418 = vmatpush.bf16.msra.mxu0 0
          %2419 = vmatpush.bf16.msra.mxu0 0
          %2420 = vmatpush.bf16.msra.mxu0 0
          %2421 = vmatpush.bf16.msra.mxu0 %v2399
          %2422 = vmatmul.bf16.gmra.mxu0 %v2393
          %v2423 = vpop.f32.mrf.mxu0
          %v2424 = vadd.f32 0.0, %v2423
          %v2425 = vpop.f32.mrf.mxu0
          %2426 = vdwg.mxu0
          %v2427 = vadd.f32 %v2380, %v2411
          %v2428 = vadd.f32 %v2381, %v2424
          %v2429 = vmul.f32 %v2177, %v848
          %v2430 = vmul.f32 %v2173, %v852
          %v2431 = vmul.f32 %v2178, %v850
          %s2432 = scalar_lea.vmem %s6, 20
          %v2433 = vld [vmem:[%s2432] sm:$0xf]
          %v2434 = vpack.c.bf16 %v2429, %v2429
          %v2435 = vpack.c.bf16 %v2430, %v2430
          %v2436 = vpack.c.bf16 %v2431, %v2431
          %2440 = vrot.lane.b32.xlu0 %v2434, 110
          %v2441 = vpop.permute.xlu0 %2440
          %2442 = vrot.lane.b32.xlu0 %v2435, 110
          %v2443 = vpop.permute.xlu0 %2442
          %2444 = vrot.lane.b32.xlu0 %v2436, 110
          %v2445 = vpop.permute.xlu0 %2444
          %v2446 = vsel %vm873, %v2441, %v2443
          %v2447 = vsel %vm873, %v2443, %v2445
          %v2449 = vsel %vm1299, %v2433, 0
          %v2452 = vsel %vm1303, %v2446, 0
          %v2455 = vsel %vm1303, %v2447, 0
          %2457 = vmatpush.bf16.msra.mxu0 0
          %2458 = vmatpush.bf16.msra.mxu0 0
          %2459 = vmatpush.bf16.msra.mxu0 0
          %2460 = vmatpush.bf16.msra.mxu0 0
          %2461 = vmatpush.bf16.msra.mxu0 0
          %2462 = vmatpush.bf16.msra.mxu0 0
          %2463 = vmatpush.bf16.msra.mxu0 0
          %2464 = vmatpush.bf16.msra.mxu0 %v2452
          %2465 = vmatmul.bf16.gmra.mxu0 %v2449
          %v2466 = vpop.f32.mrf.mxu0
          %v2467 = vadd.f32 0.0, %v2466
          %v2468 = vpop.f32.mrf.mxu0
          %2469 = vdwg.mxu0
          %2470 = vmatpush.bf16.msra.mxu0 0
          %2471 = vmatpush.bf16.msra.mxu0 0
          %2472 = vmatpush.bf16.msra.mxu0 0
          %2473 = vmatpush.bf16.msra.mxu0 0
          %2474 = vmatpush.bf16.msra.mxu0 0
          %2475 = vmatpush.bf16.msra.mxu0 0
          %2476 = vmatpush.bf16.msra.mxu0 0
          %2477 = vmatpush.bf16.msra.mxu0 %v2455
          %2478 = vmatmul.bf16.gmra.mxu0 %v2449
          %v2479 = vpop.f32.mrf.mxu0
          %v2480 = vadd.f32 0.0, %v2479
          %v2481 = vpop.f32.mrf.mxu0
          %2482 = vdwg.mxu0
          %v2483 = vadd.f32 %v2427, %v2467
          %v2484 = vadd.f32 %v2428, %v2480
          %v2485 = vmul.f32 %v2177, %v914
          %v2486 = vmul.f32 %v2173, %v918
          %v2487 = vmul.f32 %v2178, %v916
          %s2488 = scalar_lea.vmem %s6, 24
          %v2489 = vld [vmem:[%s2488] sm:$0xf]
          %v2490 = vpack.c.bf16 %v2485, %v2485
          %v2491 = vpack.c.bf16 %v2486, %v2486
          %v2492 = vpack.c.bf16 %v2487, %v2487
          %2496 = vrot.lane.b32.xlu0 %v2490, 96
          %v2497 = vpop.permute.xlu0 %2496
          %2498 = vrot.lane.b32.xlu0 %v2491, 96
          %v2499 = vpop.permute.xlu0 %2498
          %2500 = vrot.lane.b32.xlu0 %v2492, 96
          %v2501 = vpop.permute.xlu0 %2500
          %v2502 = vsel %vm939, %v2497, %v2499
          %v2503 = vsel %vm939, %v2499, %v2501
          %v2505 = vsel %vm1299, %v2489, 0
          %v2508 = vsel %vm1303, %v2502, 0
          %v2511 = vsel %vm1303, %v2503, 0
          %2513 = vmatpush.bf16.msra.mxu0 0
          %2514 = vmatpush.bf16.msra.mxu0 0
          %2515 = vmatpush.bf16.msra.mxu0 0
          %2516 = vmatpush.bf16.msra.mxu0 0
          %2517 = vmatpush.bf16.msra.mxu0 0
          %2518 = vmatpush.bf16.msra.mxu0 0
          %2519 = vmatpush.bf16.msra.mxu0 0
          %2520 = vmatpush.bf16.msra.mxu0 %v2508
          %2521 = vmatmul.bf16.gmra.mxu0 %v2505
          %v2522 = vpop.f32.mrf.mxu0
          %v2523 = vadd.f32 0.0, %v2522
          %v2524 = vpop.f32.mrf.mxu0
          %2525 = vdwg.mxu0
          %2526 = vmatpush.bf16.msra.mxu0 0
          %2527 = vmatpush.bf16.msra.mxu0 0
          %2528 = vmatpush.bf16.msra.mxu0 0
          %2529 = vmatpush.bf16.msra.mxu0 0
          %2530 = vmatpush.bf16.msra.mxu0 0
          %2531 = vmatpush.bf16.msra.mxu0 0
          %2532 = vmatpush.bf16.msra.mxu0 0
          %2533 = vmatpush.bf16.msra.mxu0 %v2511
          %2534 = vmatmul.bf16.gmra.mxu0 %v2505
          %v2535 = vpop.f32.mrf.mxu0
          %v2536 = vadd.f32 0.0, %v2535
          %v2537 = vpop.f32.mrf.mxu0
          %2538 = vdwg.mxu0
          %v2539 = vadd.f32 %v2483, %v2523
          %v2540 = vadd.f32 %v2484, %v2536
          %s2541 = scalar_lea.vmem %s6, 28
          %v2542 = vld [vmem:[%s2541] sm:$0xf]
          %2543 = vrot.lane.b32.xlu0 %v2186, 95
          %v2544 = vpop.permute.xlu0 %2543
          %2545 = vrot.lane.b32.xlu0 %v2187, 95
          %v2546 = vpop.permute.xlu0 %2545
          %2547 = vrot.lane.b32.xlu0 %v2188, 95
          %v2548 = vpop.permute.xlu0 %2547
          %v2549 = vsel %vm987, %v2544, %v2546
          %v2550 = vsel %vm987, %v2546, %v2548
          %v2552 = vsel %vm1299, %v2542, 0
          %v2555 = vsel %vm1303, %v2549, 0
          %v2558 = vsel %vm1303, %v2550, 0
          %2560 = vmatpush.bf16.msra.mxu0 0
          %2561 = vmatpush.bf16.msra.mxu0 0
          %2562 = vmatpush.bf16.msra.mxu0 0
          %2563 = vmatpush.bf16.msra.mxu0 0
          %2564 = vmatpush.bf16.msra.mxu0 0
          %2565 = vmatpush.bf16.msra.mxu0 0
          %2566 = vmatpush.bf16.msra.mxu0 0
          %2567 = vmatpush.bf16.msra.mxu0 %v2555
          %2568 = vmatmul.bf16.gmra.mxu0 %v2552
          %v2569 = vpop.f32.mrf.mxu0
          %v2570 = vadd.f32 0.0, %v2569
          %v2571 = vpop.f32.mrf.mxu0
          %2572 = vdwg.mxu0
          %2573 = vmatpush.bf16.msra.mxu0 0
          %2574 = vmatpush.bf16.msra.mxu0 0
          %2575 = vmatpush.bf16.msra.mxu0 0
          %2576 = vmatpush.bf16.msra.mxu0 0
          %2577 = vmatpush.bf16.msra.mxu0 0
          %2578 = vmatpush.bf16.msra.mxu0 0
          %2579 = vmatpush.bf16.msra.mxu0 0
          %2580 = vmatpush.bf16.msra.mxu0 %v2558
          %2581 = vmatmul.bf16.gmra.mxu0 %v2552
          %v2582 = vpop.f32.mrf.mxu0
          %v2583 = vadd.f32 0.0, %v2582
          %v2584 = vpop.f32.mrf.mxu0
          %2585 = vdwg.mxu0
          %v2586 = vadd.f32 %v2539, %v2570
          %v2587 = vadd.f32 %v2540, %v2583
          %v2588 = vmul.f32 %v2177, %v1028
          %v2589 = vmul.f32 %v2173, %v1032
          %v2590 = vmul.f32 %v2178, %v1030
          %s2591 = scalar_lea.vmem %s6, 32
          %v2592 = vld [vmem:[%s2591] sm:$0xf]
          %v2593 = vpack.c.bf16 %v2588, %v2588
          %v2594 = vpack.c.bf16 %v2589, %v2589
          %v2595 = vpack.c.bf16 %v2590, %v2590
          %2599 = vrot.lane.b32.xlu0 %v2593, 94
          %v2600 = vpop.permute.xlu0 %2599
          %2601 = vrot.lane.b32.xlu0 %v2594, 94
          %v2602 = vpop.permute.xlu0 %2601
          %2603 = vrot.lane.b32.xlu0 %v2595, 94
          %v2604 = vpop.permute.xlu0 %2603
          %v2605 = vsel %vm1053, %v2600, %v2602
          %v2606 = vsel %vm1053, %v2602, %v2604
          %v2608 = vsel %vm1299, %v2592, 0
          %v2611 = vsel %vm1303, %v2605, 0
          %v2614 = vsel %vm1303, %v2606, 0
          %2616 = vmatpush.bf16.msra.mxu0 0
          %2617 = vmatpush.bf16.msra.mxu0 0
          %2618 = vmatpush.bf16.msra.mxu0 0
          %2619 = vmatpush.bf16.msra.mxu0 0
          %2620 = vmatpush.bf16.msra.mxu0 0
          %2621 = vmatpush.bf16.msra.mxu0 0
          %2622 = vmatpush.bf16.msra.mxu0 0
          %2623 = vmatpush.bf16.msra.mxu0 %v2611
          %2624 = vmatmul.bf16.gmra.mxu0 %v2608
          %v2625 = vpop.f32.mrf.mxu0
          %v2626 = vadd.f32 0.0, %v2625
          %v2627 = vpop.f32.mrf.mxu0
          %2628 = vdwg.mxu0
          %2629 = vmatpush.bf16.msra.mxu0 0
          %2630 = vmatpush.bf16.msra.mxu0 0
          %2631 = vmatpush.bf16.msra.mxu0 0
          %2632 = vmatpush.bf16.msra.mxu0 0
          %2633 = vmatpush.bf16.msra.mxu0 0
          %2634 = vmatpush.bf16.msra.mxu0 0
          %2635 = vmatpush.bf16.msra.mxu0 0
          %2636 = vmatpush.bf16.msra.mxu0 %v2614
          %2637 = vmatmul.bf16.gmra.mxu0 %v2608
          %v2638 = vpop.f32.mrf.mxu0
          %v2639 = vadd.f32 0.0, %v2638
          %v2640 = vpop.f32.mrf.mxu0
          %2641 = vdwg.mxu0
          %v2642 = vadd.f32 %v2586, %v2626
          %v2643 = vadd.f32 %v2587, %v2639
          %v2644 = vadd.f32 %v2165, %v2642
          %v2645 = vadd.f32 %v2166, %v2643
          %v2646 = vld [vmem:[%s7] sm:$0xff]
          %2648 = vset.pattern.permute.xlu0 0
          %2649 = vperm.xlu0 %2648, %v2646
          %v2650 = vpop.permute.xlu0 %2649
          %v2652 = vadd.f32 %v2644, %v2650
          %v2653 = vadd.f32 %v2645, %v2650
          %v2654 = vmax.f32 %v2652, 0.0
          %v2655 = vmax.f32 %v2653, 0.0
          %v2656 = vld [vmem:[#allocation5] sm:$0x3]
          %v2657 = vpack.c.bf16 %v2654, %v2654
          %v2658 = vpack.c.bf16 %v2655, %v2655
          %v2659 = vld [vmem:[%s9] sm:$0xf]
          %2661 = vset.pattern.permute.xlu0 0
          %2662 = vperm.xlu0 %2661, %v2659
          %v2663 = vpop.permute.xlu0 %2662
          %v2666 = vsel %vm1299, %v2656, 0
          %v2669 = vsel %vm1303, %v2657, 0
          %v2672 = vsel %vm1303, %v2658, 0
          %2674 = vmatpush.bf16.msra.mxu0 0
          %2675 = vmatpush.bf16.msra.mxu0 0
          %2676 = vmatpush.bf16.msra.mxu0 0
          %2677 = vmatpush.bf16.msra.mxu0 0
          %2678 = vmatpush.bf16.msra.mxu0 0
          %2679 = vmatpush.bf16.msra.mxu0 0
          %2680 = vmatpush.bf16.msra.mxu0 0
          %2681 = vmatpush.bf16.msra.mxu0 %v2669
          %2682 = vmatmul.bf16.gmra.mxu0 %v2666
          %v2683 = vpop.f32.mrf.mxu0
          %v2684 = vadd.f32 %v2663, %v2683
          %v2685 = vpop.f32.mrf.mxu0
          %2686 = vdwg.mxu0
          %2687 = vmatpush.bf16.msra.mxu0 0
          %2688 = vmatpush.bf16.msra.mxu0 0
          %2689 = vmatpush.bf16.msra.mxu0 0
          %2690 = vmatpush.bf16.msra.mxu0 0
          %2691 = vmatpush.bf16.msra.mxu0 0
          %2692 = vmatpush.bf16.msra.mxu0 0
          %2693 = vmatpush.bf16.msra.mxu0 0
          %2694 = vmatpush.bf16.msra.mxu0 %v2672
          %2695 = vmatmul.bf16.gmra.mxu0 %v2666
          %v2696 = vpop.f32.mrf.mxu0
          %v2697 = vadd.f32 %v2663, %v2696
          %v2698 = vpop.f32.mrf.mxu0
          %2699 = vdwg.mxu0
          %v2702 = vrot.slane %v2697, 4
          %v2703 = vsel %vm1303, %v2684, %v2702
          %2705 = vst [vmem:[#allocation2] sm:$0xff] %v2703
          %s2706 = scalar_lea.vmem %s0, 8
          %v2707 = vld [vmem:[%s2706] sm:$0xff]
          %2709 = vst [vmem:[#allocation1] ss:$2 sm:$0xff] %v2707
          %v2710 = vld.sshfl [vmem:[#allocation1] sm:$0xff pattern:$0x75316420]
          %v2711 = vld.sshfl [vmem:[#allocation1 + $0x8] sm:$0xff pattern:$0x75316420]
          %2712 = vrot.lane.b32.xlu0 %v2710, 17
          %v2713 = vpop.permute.xlu0 %2712
          %2714 = vrot.lane.b32.xlu0 %v2711, 17
          %v2715 = vpop.permute.xlu0 %2714
          %v2716 = vsel %vm527, %v2713, %v2715
          %v2720 = vsel %vm527, 0.0, %v2713
          %v2721 = vsel %vm527, %v2715, 0.0
          %v2722 = vmul.f32 %v2720, %v563
          %v2723 = vmul.f32 %v2716, %v564
          %v2724 = vld [vmem:[%s1] sm:$0xf]
          %v2725 = vpack.c.bf16 %v2722, %v2722
          %v2726 = vpack.c.bf16 %v2723, %v2723
          %v2727 = vld [vmem:[%s574] sm:$0xf]
          %v2728 = vpack.c.bf16 %v2720, %v2720
          %v2729 = vpack.c.bf16 %v2716, %v2716
          %v2730 = vpack.c.bf16 %v2721, %v2721
          %2734 = vrot.lane.b32.xlu0 %v2728, 127
          %v2735 = vpop.permute.xlu0 %2734
          %2736 = vrot.lane.b32.xlu0 %v2729, 127
          %v2737 = vpop.permute.xlu0 %2736
          %2738 = vrot.lane.b32.xlu0 %v2730, 127
          %v2739 = vpop.permute.xlu0 %2738
          %v2740 = vsel %vm588, %v2735, %v2737
          %v2741 = vsel %vm588, %v2737, %v2739
          %v2743 = vsel %vm591, %v2727, 0
          %v2746 = vsel %vm595, %v2740, 0
          %v2749 = vsel %vm595, %v2741, 0
          %2751 = vmatpush.bf16.msra.mxu0 0
          %2752 = vmatpush.bf16.msra.mxu0 0
          %2753 = vmatpush.bf16.msra.mxu0 0
          %2754 = vmatpush.bf16.msra.mxu0 0
          %2755 = vmatpush.bf16.msra.mxu0 0
          %2756 = vmatpush.bf16.msra.mxu0 0
          %2757 = vmatpush.bf16.msra.mxu0 0
          %2758 = vmatpush.bf16.msra.mxu0 %v2746
          %2759 = vmatmul.bf16.gmra.mxu0 %v2743
          %v2760 = vpop.f32.mrf.mxu0
          %v2761 = vadd.f32 0.0, %v2760
          %v2762 = vpop.f32.mrf.mxu0
          %2763 = vdwg.mxu0
          %2764 = vmatpush.bf16.msra.mxu0 0
          %2765 = vmatpush.bf16.msra.mxu0 0
          %2766 = vmatpush.bf16.msra.mxu0 0
          %2767 = vmatpush.bf16.msra.mxu0 0
          %2768 = vmatpush.bf16.msra.mxu0 0
          %2769 = vmatpush.bf16.msra.mxu0 0
          %2770 = vmatpush.bf16.msra.mxu0 0
          %2771 = vmatpush.bf16.msra.mxu0 %v2749
          %2772 = vmatmul.bf16.gmra.mxu0 %v2743
          %v2773 = vpop.f32.mrf.mxu0
          %v2774 = vadd.f32 0.0, %v2773
          %v2775 = vpop.f32.mrf.mxu0
          %2776 = vdwg.mxu0
          %v2778 = vsel %vm591, %v2724, 0
          %v2781 = vsel %vm595, %v2725, 0
          %v2784 = vsel %vm595, %v2726, 0
          %2786 = vmatpush.bf16.msra.mxu0 0
          %2787 = vmatpush.bf16.msra.mxu0 0
          %2788 = vmatpush.bf16.msra.mxu0 0
          %2789 = vmatpush.bf16.msra.mxu0 0
          %2790 = vmatpush.bf16.msra.mxu0 0
          %2791 = vmatpush.bf16.msra.mxu0 0
          %2792 = vmatpush.bf16.msra.mxu0 0
          %2793 = vmatpush.bf16.msra.mxu0 %v2781
          %2794 = vmatmul.bf16.gmra.mxu0 %v2778
          %v2795 = vpop.f32.mrf.mxu0
          %v2796 = vadd.f32 %v2761, %v2795
          %v2797 = vpop.f32.mrf.mxu0
          %2798 = vdwg.mxu0
          %2799 = vmatpush.bf16.msra.mxu0 0
          %2800 = vmatpush.bf16.msra.mxu0 0
          %2801 = vmatpush.bf16.msra.mxu0 0
          %2802 = vmatpush.bf16.msra.mxu0 0
          %2803 = vmatpush.bf16.msra.mxu0 0
          %2804 = vmatpush.bf16.msra.mxu0 0
          %2805 = vmatpush.bf16.msra.mxu0 0
          %2806 = vmatpush.bf16.msra.mxu0 %v2784
          %2807 = vmatmul.bf16.gmra.mxu0 %v2778
          %v2808 = vpop.f32.mrf.mxu0
          %v2809 = vadd.f32 %v2774, %v2808
          %v2810 = vpop.f32.mrf.mxu0
          %2811 = vdwg.mxu0
          %v2812 = vmul.f32 %v2720, %v666
          %v2813 = vmul.f32 %v2716, %v670
          %v2814 = vmul.f32 %v2721, %v668
          %v2815 = vld [vmem:[%s677] sm:$0xf]
          %v2816 = vpack.c.bf16 %v2812, %v2812
          %v2817 = vpack.c.bf16 %v2813, %v2813
          %v2818 = vpack.c.bf16 %v2814, %v2814
          %2822 = vrot.lane.b32.xlu0 %v2816, 126
          %v2823 = vpop.permute.xlu0 %2822
          %2824 = vrot.lane.b32.xlu0 %v2817, 126
          %v2825 = vpop.permute.xlu0 %2824
          %2826 = vrot.lane.b32.xlu0 %v2818, 126
          %v2827 = vpop.permute.xlu0 %2826
          %v2828 = vsel %vm691, %v2823, %v2825
          %v2829 = vsel %vm691, %v2825, %v2827
          %v2831 = vsel %vm591, %v2815, 0
          %v2834 = vsel %vm595, %v2828, 0
          %v2837 = vsel %vm595, %v2829, 0
          %2839 = vmatpush.bf16.msra.mxu0 0
          %2840 = vmatpush.bf16.msra.mxu0 0
          %2841 = vmatpush.bf16.msra.mxu0 0
          %2842 = vmatpush.bf16.msra.mxu0 0
          %2843 = vmatpush.bf16.msra.mxu0 0
          %2844 = vmatpush.bf16.msra.mxu0 0
          %2845 = vmatpush.bf16.msra.mxu0 0
          %2846 = vmatpush.bf16.msra.mxu0 %v2834
          %2847 = vmatmul.bf16.gmra.mxu0 %v2831
          %v2848 = vpop.f32.mrf.mxu0
          %v2849 = vadd.f32 0.0, %v2848
          %v2850 = vpop.f32.mrf.mxu0
          %2851 = vdwg.mxu0
          %2852 = vmatpush.bf16.msra.mxu0 0
          %2853 = vmatpush.bf16.msra.mxu0 0
          %2854 = vmatpush.bf16.msra.mxu0 0
          %2855 = vmatpush.bf16.msra.mxu0 0
          %2856 = vmatpush.bf16.msra.mxu0 0
          %2857 = vmatpush.bf16.msra.mxu0 0
          %2858 = vmatpush.bf16.msra.mxu0 0
          %2859 = vmatpush.bf16.msra.mxu0 %v2837
          %2860 = vmatmul.bf16.gmra.mxu0 %v2831
          %v2861 = vpop.f32.mrf.mxu0
          %v2862 = vadd.f32 0.0, %v2861
          %v2863 = vpop.f32.mrf.mxu0
          %2864 = vdwg.mxu0
          %v2865 = vadd.f32 %v2796, %v2849
          %v2866 = vadd.f32 %v2809, %v2862
          %v2867 = vmul.f32 %v2720, %v734
          %v2868 = vmul.f32 %v2716, %v738
          %v2869 = vmul.f32 %v2721, %v736
          %v2870 = vld [vmem:[%s745] sm:$0xf]
          %v2871 = vpack.c.bf16 %v2867, %v2867
          %v2872 = vpack.c.bf16 %v2868, %v2868
          %v2873 = vpack.c.bf16 %v2869, %v2869
          %2877 = vrot.lane.b32.xlu0 %v2871, 112
          %v2878 = vpop.permute.xlu0 %2877
          %2879 = vrot.lane.b32.xlu0 %v2872, 112
          %v2880 = vpop.permute.xlu0 %2879
          %2881 = vrot.lane.b32.xlu0 %v2873, 112
          %v2882 = vpop.permute.xlu0 %2881
          %v2883 = vsel %vm759, %v2878, %v2880
          %v2884 = vsel %vm759, %v2880, %v2882
          %v2886 = vsel %vm591, %v2870, 0
          %v2889 = vsel %vm595, %v2883, 0
          %v2892 = vsel %vm595, %v2884, 0
          %2894 = vmatpush.bf16.msra.mxu0 0
          %2895 = vmatpush.bf16.msra.mxu0 0
          %2896 = vmatpush.bf16.msra.mxu0 0
          %2897 = vmatpush.bf16.msra.mxu0 0
          %2898 = vmatpush.bf16.msra.mxu0 0
          %2899 = vmatpush.bf16.msra.mxu0 0
          %2900 = vmatpush.bf16.msra.mxu0 0
          %2901 = vmatpush.bf16.msra.mxu0 %v2889
          %2902 = vmatmul.bf16.gmra.mxu0 %v2886
          %v2903 = vpop.f32.mrf.mxu0
          %v2904 = vadd.f32 0.0, %v2903
          %v2905 = vpop.f32.mrf.mxu0
          %2906 = vdwg.mxu0
          %2907 = vmatpush.bf16.msra.mxu0 0
          %2908 = vmatpush.bf16.msra.mxu0 0
          %2909 = vmatpush.bf16.msra.mxu0 0
          %2910 = vmatpush.bf16.msra.mxu0 0
          %2911 = vmatpush.bf16.msra.mxu0 0
          %2912 = vmatpush.bf16.msra.mxu0 0
          %2913 = vmatpush.bf16.msra.mxu0 0
          %2914 = vmatpush.bf16.msra.mxu0 %v2892
          %2915 = vmatmul.bf16.gmra.mxu0 %v2886
          %v2916 = vpop.f32.mrf.mxu0
          %v2917 = vadd.f32 0.0, %v2916
          %v2918 = vpop.f32.mrf.mxu0
          %2919 = vdwg.mxu0
          %v2920 = vadd.f32 %v2865, %v2904
          %v2921 = vadd.f32 %v2866, %v2917
          %v2922 = vld [vmem:[%s799] sm:$0xf]
          %2923 = vrot.lane.b32.xlu0 %v2728, 111
          %v2924 = vpop.permute.xlu0 %2923
          %2925 = vrot.lane.b32.xlu0 %v2729, 111
          %v2926 = vpop.permute.xlu0 %2925
          %2927 = vrot.lane.b32.xlu0 %v2730, 111
          %v2928 = vpop.permute.xlu0 %2927
          %v2929 = vsel %vm807, %v2924, %v2926
          %v2930 = vsel %vm807, %v2926, %v2928
          %v2932 = vsel %vm591, %v2922, 0
          %v2935 = vsel %vm595, %v2929, 0
          %v2938 = vsel %vm595, %v2930, 0
          %2940 = vmatpush.bf16.msra.mxu0 0
          %2941 = vmatpush.bf16.msra.mxu0 0
          %2942 = vmatpush.bf16.msra.mxu0 0
          %2943 = vmatpush.bf16.msra.mxu0 0
          %2944 = vmatpush.bf16.msra.mxu0 0
          %2945 = vmatpush.bf16.msra.mxu0 0
          %2946 = vmatpush.bf16.msra.mxu0 0
          %2947 = vmatpush.bf16.msra.mxu0 %v2935
          %2948 = vmatmul.bf16.gmra.mxu0 %v2932
          %v2949 = vpop.f32.mrf.mxu0
          %v2950 = vadd.f32 0.0, %v2949
          %v2951 = vpop.f32.mrf.mxu0
          %2952 = vdwg.mxu0
          %2953 = vmatpush.bf16.msra.mxu0 0
          %2954 = vmatpush.bf16.msra.mxu0 0
          %2955 = vmatpush.bf16.msra.mxu0 0
          %2956 = vmatpush.bf16.msra.mxu0 0
          %2957 = vmatpush.bf16.msra.mxu0 0
          %2958 = vmatpush.bf16.msra.mxu0 0
          %2959 = vmatpush.bf16.msra.mxu0 0
          %2960 = vmatpush.bf16.msra.mxu0 %v2938
          %2961 = vmatmul.bf16.gmra.mxu0 %v2932
          %v2962 = vpop.f32.mrf.mxu0
          %v2963 = vadd.f32 0.0, %v2962
          %v2964 = vpop.f32.mrf.mxu0
          %2965 = vdwg.mxu0
          %v2966 = vadd.f32 %v2920, %v2950
          %v2967 = vadd.f32 %v2921, %v2963
          %v2968 = vmul.f32 %v2720, %v848
          %v2969 = vmul.f32 %v2716, %v852
          %v2970 = vmul.f32 %v2721, %v850
          %v2971 = vld [vmem:[%s859] sm:$0xf]
          %v2972 = vpack.c.bf16 %v2968, %v2968
          %v2973 = vpack.c.bf16 %v2969, %v2969
          %v2974 = vpack.c.bf16 %v2970, %v2970
          %2978 = vrot.lane.b32.xlu0 %v2972, 110
          %v2979 = vpop.permute.xlu0 %2978
          %2980 = vrot.lane.b32.xlu0 %v2973, 110
          %v2981 = vpop.permute.xlu0 %2980
          %2982 = vrot.lane.b32.xlu0 %v2974, 110
          %v2983 = vpop.permute.xlu0 %2982
          %v2984 = vsel %vm873, %v2979, %v2981
          %v2985 = vsel %vm873, %v2981, %v2983
          %v2987 = vsel %vm591, %v2971, 0
          %v2990 = vsel %vm595, %v2984, 0
          %v2993 = vsel %vm595, %v2985, 0
          %2995 = vmatpush.bf16.msra.mxu0 0
          %2996 = vmatpush.bf16.msra.mxu0 0
          %2997 = vmatpush.bf16.msra.mxu0 0
          %2998 = vmatpush.bf16.msra.mxu0 0
          %2999 = vmatpush.bf16.msra.mxu0 0
          %3000 = vmatpush.bf16.msra.mxu0 0
          %3001 = vmatpush.bf16.msra.mxu0 0
          %3002 = vmatpush.bf16.msra.mxu0 %v2990
          %3003 = vmatmul.bf16.gmra.mxu0 %v2987
          %v3004 = vpop.f32.mrf.mxu0
          %v3005 = vadd.f32 0.0, %v3004
          %v3006 = vpop.f32.mrf.mxu0
          %3007 = vdwg.mxu0
          %3008 = vmatpush.bf16.msra.mxu0 0
          %3009 = vmatpush.bf16.msra.mxu0 0
          %3010 = vmatpush.bf16.msra.mxu0 0
          %3011 = vmatpush.bf16.msra.mxu0 0
          %3012 = vmatpush.bf16.msra.mxu0 0
          %3013 = vmatpush.bf16.msra.mxu0 0
          %3014 = vmatpush.bf16.msra.mxu0 0
          %3015 = vmatpush.bf16.msra.mxu0 %v2993
          %3016 = vmatmul.bf16.gmra.mxu0 %v2987
          %v3017 = vpop.f32.mrf.mxu0
          %v3018 = vadd.f32 0.0, %v3017
          %v3019 = vpop.f32.mrf.mxu0
          %3020 = vdwg.mxu0
          %v3021 = vadd.f32 %v2966, %v3005
          %v3022 = vadd.f32 %v2967, %v3018
          %v3023 = vmul.f32 %v2720, %v914
          %v3024 = vmul.f32 %v2716, %v918
          %v3025 = vmul.f32 %v2721, %v916
          %v3026 = vld [vmem:[%s925] sm:$0xf]
          %v3027 = vpack.c.bf16 %v3023, %v3023
          %v3028 = vpack.c.bf16 %v3024, %v3024
          %v3029 = vpack.c.bf16 %v3025, %v3025
          %3033 = vrot.lane.b32.xlu0 %v3027, 96
          %v3034 = vpop.permute.xlu0 %3033
          %3035 = vrot.lane.b32.xlu0 %v3028, 96
          %v3036 = vpop.permute.xlu0 %3035
          %3037 = vrot.lane.b32.xlu0 %v3029, 96
          %v3038 = vpop.permute.xlu0 %3037
          %v3039 = vsel %vm939, %v3034, %v3036
          %v3040 = vsel %vm939, %v3036, %v3038
          %v3042 = vsel %vm591, %v3026, 0
          %v3045 = vsel %vm595, %v3039, 0
          %v3048 = vsel %vm595, %v3040, 0
          %3050 = vmatpush.bf16.msra.mxu0 0
          %3051 = vmatpush.bf16.msra.mxu0 0
          %3052 = vmatpush.bf16.msra.mxu0 0
          %3053 = vmatpush.bf16.msra.mxu0 0
          %3054 = vmatpush.bf16.msra.mxu0 0
          %3055 = vmatpush.bf16.msra.mxu0 0
          %3056 = vmatpush.bf16.msra.mxu0 0
          %3057 = vmatpush.bf16.msra.mxu0 %v3045
          %3058 = vmatmul.bf16.gmra.mxu0 %v3042
          %v3059 = vpop.f32.mrf.mxu0
          %v3060 = vadd.f32 0.0, %v3059
          %v3061 = vpop.f32.mrf.mxu0
          %3062 = vdwg.mxu0
          %3063 = vmatpush.bf16.msra.mxu0 0
          %3064 = vmatpush.bf16.msra.mxu0 0
          %3065 = vmatpush.bf16.msra.mxu0 0
          %3066 = vmatpush.bf16.msra.mxu0 0
          %3067 = vmatpush.bf16.msra.mxu0 0
          %3068 = vmatpush.bf16.msra.mxu0 0
          %3069 = vmatpush.bf16.msra.mxu0 0
          %3070 = vmatpush.bf16.msra.mxu0 %v3048
          %3071 = vmatmul.bf16.gmra.mxu0 %v3042
          %v3072 = vpop.f32.mrf.mxu0
          %v3073 = vadd.f32 0.0, %v3072
          %v3074 = vpop.f32.mrf.mxu0
          %3075 = vdwg.mxu0
          %v3076 = vadd.f32 %v3021, %v3060
          %v3077 = vadd.f32 %v3022, %v3073
          %v3078 = vld [vmem:[%s979] sm:$0xf]
          %3079 = vrot.lane.b32.xlu0 %v2728, 95
          %v3080 = vpop.permute.xlu0 %3079
          %3081 = vrot.lane.b32.xlu0 %v2729, 95
          %v3082 = vpop.permute.xlu0 %3081
          %3083 = vrot.lane.b32.xlu0 %v2730, 95
          %v3084 = vpop.permute.xlu0 %3083
          %v3085 = vsel %vm987, %v3080, %v3082
          %v3086 = vsel %vm987, %v3082, %v3084
          %v3088 = vsel %vm591, %v3078, 0
          %v3091 = vsel %vm595, %v3085, 0
          %v3094 = vsel %vm595, %v3086, 0
          %3096 = vmatpush.bf16.msra.mxu0 0
          %3097 = vmatpush.bf16.msra.mxu0 0
          %3098 = vmatpush.bf16.msra.mxu0 0
          %3099 = vmatpush.bf16.msra.mxu0 0
          %3100 = vmatpush.bf16.msra.mxu0 0
          %3101 = vmatpush.bf16.msra.mxu0 0
          %3102 = vmatpush.bf16.msra.mxu0 0
          %3103 = vmatpush.bf16.msra.mxu0 %v3091
          %3104 = vmatmul.bf16.gmra.mxu0 %v3088
          %v3105 = vpop.f32.mrf.mxu0
          %v3106 = vadd.f32 0.0, %v3105
          %v3107 = vpop.f32.mrf.mxu0
          %3108 = vdwg.mxu0
          %3109 = vmatpush.bf16.msra.mxu0 0
          %3110 = vmatpush.bf16.msra.mxu0 0
          %3111 = vmatpush.bf16.msra.mxu0 0
          %3112 = vmatpush.bf16.msra.mxu0 0
          %3113 = vmatpush.bf16.msra.mxu0 0
          %3114 = vmatpush.bf16.msra.mxu0 0
          %3115 = vmatpush.bf16.msra.mxu0 0
          %3116 = vmatpush.bf16.msra.mxu0 %v3094
          %3117 = vmatmul.bf16.gmra.mxu0 %v3088
          %v3118 = vpop.f32.mrf.mxu0
          %v3119 = vadd.f32 0.0, %v3118
          %v3120 = vpop.f32.mrf.mxu0
          %3121 = vdwg.mxu0
          %v3122 = vadd.f32 %v3076, %v3106
          %v3123 = vadd.f32 %v3077, %v3119
          %v3124 = vmul.f32 %v2720, %v1028
          %v3125 = vmul.f32 %v2716, %v1032
          %v3126 = vmul.f32 %v2721, %v1030
          %v3127 = vld [vmem:[%s1039] sm:$0xf]
          %v3128 = vpack.c.bf16 %v3124, %v3124
          %v3129 = vpack.c.bf16 %v3125, %v3125
          %v3130 = vpack.c.bf16 %v3126, %v3126
          %3134 = vrot.lane.b32.xlu0 %v3128, 94
          %v3135 = vpop.permute.xlu0 %3134
          %3136 = vrot.lane.b32.xlu0 %v3129, 94
          %v3137 = vpop.permute.xlu0 %3136
          %3138 = vrot.lane.b32.xlu0 %v3130, 94
          %v3139 = vpop.permute.xlu0 %3138
          %v3140 = vsel %vm1053, %v3135, %v3137
          %v3141 = vsel %vm1053, %v3137, %v3139
          %v3143 = vsel %vm591, %v3127, 0
          %v3146 = vsel %vm595, %v3140, 0
          %v3149 = vsel %vm595, %v3141, 0
          %3151 = vmatpush.bf16.msra.mxu0 0
          %3152 = vmatpush.bf16.msra.mxu0 0
          %3153 = vmatpush.bf16.msra.mxu0 0
          %3154 = vmatpush.bf16.msra.mxu0 0
          %3155 = vmatpush.bf16.msra.mxu0 0
          %3156 = vmatpush.bf16.msra.mxu0 0
          %3157 = vmatpush.bf16.msra.mxu0 0
          %3158 = vmatpush.bf16.msra.mxu0 %v3146
          %3159 = vmatmul.bf16.gmra.mxu0 %v3143
          %v3160 = vpop.f32.mrf.mxu0
          %v3161 = vadd.f32 0.0, %v3160
          %v3162 = vpop.f32.mrf.mxu0
          %3163 = vdwg.mxu0
          %3164 = vmatpush.bf16.msra.mxu0 0
          %3165 = vmatpush.bf16.msra.mxu0 0
          %3166 = vmatpush.bf16.msra.mxu0 0
          %3167 = vmatpush.bf16.msra.mxu0 0
          %3168 = vmatpush.bf16.msra.mxu0 0
          %3169 = vmatpush.bf16.msra.mxu0 0
          %3170 = vmatpush.bf16.msra.mxu0 0
          %3171 = vmatpush.bf16.msra.mxu0 %v3149
          %3172 = vmatmul.bf16.gmra.mxu0 %v3143
          %v3173 = vpop.f32.mrf.mxu0
          %v3174 = vadd.f32 0.0, %v3173
          %v3175 = vpop.f32.mrf.mxu0
          %3176 = vdwg.mxu0
          %v3177 = vadd.f32 %v3122, %v3161
          %v3178 = vadd.f32 %v3123, %v3174
          %v3179 = vld [vmem:[%s2] sm:$0xff]
          %3181 = vset.pattern.permute.xlu0 0
          %3182 = vperm.xlu0 %3181, %v3179
          %v3183 = vpop.permute.xlu0 %3182
          %v3185 = vadd.f32 %v3177, %v3183
          %v3186 = vadd.f32 %v3178, %v3183
          %v3187 = vmax.f32 %v3185, 0.0
          %v3188 = vmax.f32 %v3186, 0.0
          %v3189 = vpack.c.bf16 %v3187, %v3187
          %v3190 = vpack.c.bf16 %v3188, %v3188
          %v3191 = vld [vmem:[%s10] sm:$0xf]
          %v3192 = vld [vmem:[%s10 + $0x4] sm:$0xf]
          %v3193 = vld [vmem:[%s10 + $0x8] sm:$0xf]
          %v3194 = vld [vmem:[%s10 + $0xc] sm:$0xf]
          %v3195 = vld [vmem:[%s10 + $0x10] sm:$0xf]
          %v3196 = vld [vmem:[%s10 + $0x14] sm:$0xf]
          %v3197 = vld [vmem:[%s10 + $0x18] sm:$0xf]
          %v3198 = vld [vmem:[%s10 + $0x1c] sm:$0xf]
          %v3199 = vld [vmem:[%s10 + $0x20] sm:$0xf]
          %v3200 = vld [vmem:[%s10 + $0x24] sm:$0xf]
          %v3201 = vld [vmem:[%s10 + $0x28] sm:$0xf]
          %v3202 = vld [vmem:[%s10 + $0x2c] sm:$0xf]
          %v3203 = vld [vmem:[%s10 + $0x30] sm:$0xf]
          %v3204 = vld [vmem:[%s10 + $0x34] sm:$0xf]
          %v3205 = vld [vmem:[%s10 + $0x38] sm:$0xf]
          %v3206 = vld [vmem:[%s10 + $0x3c] sm:$0xf]
          %v3207 = vld [vmem:[%s10 + $0x40] sm:$0xf]
          %v3208 = vld [vmem:[%s10 + $0x44] sm:$0xf]
          %v3209 = vld [vmem:[%s10 + $0x48] sm:$0xf]
          %v3210 = vld [vmem:[%s10 + $0x4c] sm:$0xf]
          %v3211 = vld [vmem:[%s10 + $0x50] sm:$0xf]
          %v3212 = vld [vmem:[%s10 + $0x54] sm:$0xf]
          %v3213 = vld [vmem:[%s10 + $0x58] sm:$0xf]
          %v3214 = vld [vmem:[%s10 + $0x5c] sm:$0xf]
          %v3215 = vld [vmem:[%s10 + $0x60] sm:$0xf]
          %v3216 = vld [vmem:[%s10 + $0x64] sm:$0xf]
          %v3217 = vld [vmem:[%s10 + $0x68] sm:$0xf]
          %v3218 = vld [vmem:[%s10 + $0x6c] sm:$0xf]
          %v3219 = vld [vmem:[%s10 + $0x70] sm:$0xf]
          %v3220 = vld [vmem:[%s10 + $0x74] sm:$0xf]
          %v3221 = vld [vmem:[%s10 + $0x78] sm:$0xf]
          %v3222 = vld [vmem:[%s10 + $0x7c] sm:$0xf]
          %v3255 = vunpack.c.l.b16 %v3191
          %v3256 = vunpack.c.l.b16 %v3192
          %v3257 = vunpack.c.l.b16 %v3193
          %v3258 = vunpack.c.l.b16 %v3194
          %v3259 = vunpack.c.l.b16 %v3195
          %v3260 = vunpack.c.l.b16 %v3196
          %v3261 = vunpack.c.l.b16 %v3197
          %v3262 = vunpack.c.l.b16 %v3198
          %v3263 = vunpack.c.l.b16 %v3199
          %v3264 = vunpack.c.l.b16 %v3200
          %v3265 = vunpack.c.l.b16 %v3201
          %v3266 = vunpack.c.l.b16 %v3202
          %v3267 = vunpack.c.l.b16 %v3203
          %v3268 = vunpack.c.l.b16 %v3204
          %v3269 = vunpack.c.l.b16 %v3205
          %v3270 = vunpack.c.l.b16 %v3206
          %v3271 = vunpack.c.l.b16 %v3207
          %v3272 = vunpack.c.l.b16 %v3208
          %v3273 = vunpack.c.l.b16 %v3209
          %v3274 = vunpack.c.l.b16 %v3210
          %v3275 = vunpack.c.l.b16 %v3211
          %v3276 = vunpack.c.l.b16 %v3212
          %v3277 = vunpack.c.l.b16 %v3213
          %v3278 = vunpack.c.l.b16 %v3214
          %v3279 = vunpack.c.l.b16 %v3215
          %v3280 = vunpack.c.l.b16 %v3216
          %v3281 = vunpack.c.l.b16 %v3217
          %v3282 = vunpack.c.l.b16 %v3218
          %v3283 = vunpack.c.l.b16 %v3219
          %v3284 = vunpack.c.l.b16 %v3220
          %v3285 = vunpack.c.l.b16 %v3221
          %v3286 = vunpack.c.l.b16 %v3222
          %v3287 = vpack.c.b16 %v3256, %v3255
          %v3288 = vpack.c.b16 %v3258, %v3257
          %v3289 = vpack.c.b16 %v3260, %v3259
          %v3290 = vpack.c.b16 %v3262, %v3261
          %v3291 = vpack.c.b16 %v3264, %v3263
          %v3292 = vpack.c.b16 %v3266, %v3265
          %v3293 = vpack.c.b16 %v3268, %v3267
          %v3294 = vpack.c.b16 %v3270, %v3269
          %v3295 = vpack.c.b16 %v3272, %v3271
          %v3296 = vpack.c.b16 %v3274, %v3273
          %v3297 = vpack.c.b16 %v3276, %v3275
          %v3298 = vpack.c.b16 %v3278, %v3277
          %v3299 = vpack.c.b16 %v3280, %v3279
          %v3300 = vpack.c.b16 %v3282, %v3281
          %v3301 = vpack.c.b16 %v3284, %v3283
          %v3302 = vpack.c.b16 %v3286, %v3285
          %3319 = vmatpush.bf16.msra.mxu0 %v3294
          %3320 = vmatpush.bf16.msra.mxu0 %v3293
          %3321 = vmatpush.bf16.msra.mxu0 %v3292
          %3322 = vmatpush.bf16.msra.mxu0 %v3291
          %3323 = vmatpush.bf16.msra.mxu0 %v3290
          %3324 = vmatpush.bf16.msra.mxu0 %v3289
          %3325 = vmatpush.bf16.msra.mxu0 %v3288
          %3326 = vmatpush.bf16.msra.mxu0 %v3287
          %3327 = vmatmul.bf16.gmra.mxu0 %v3189
          %v3328 = vpop.f32.mrf.mxu0
          %v3329 = vadd.f32 0.0, %v3328
          %v3330 = vpop.f32.mrf.mxu0
          %3331 = vdwg.mxu0
          %3332 = vmatpush.bf16.msra.mxu0 %v3302
          %3333 = vmatpush.bf16.msra.mxu0 %v3301
          %3334 = vmatpush.bf16.msra.mxu0 %v3300
          %3335 = vmatpush.bf16.msra.mxu0 %v3299
          %3336 = vmatpush.bf16.msra.mxu0 %v3298
          %3337 = vmatpush.bf16.msra.mxu0 %v3297
          %3338 = vmatpush.bf16.msra.mxu0 %v3296
          %3339 = vmatpush.bf16.msra.mxu0 %v3295
          %3340 = vmatmul.bf16.gmra.mxu0 %v3190
          %v3341 = vpop.f32.mrf.mxu0
          %v3342 = vadd.f32 %v3329, %v3341
          %v3343 = vpop.f32.mrf.mxu0
          %3344 = vdwg.mxu0
          %3346 = vrot.lane.b32.xlu0 %v3342, 9
          %v3347 = vpop.permute.xlu0 %3346
          %v3349 = vsel %vm1263, 0.0, %v3347
          %v3350 = vsel %vm1265, %v3349, 0.0
          %v3351 = vmul.f32 %v3350, %v1280
          %v3352 = vld [vmem:[%s3] sm:$0xf]
          %v3353 = vld [vmem:[%s3 + $0x4] sm:$0xf]
          %v3354 = vpack.c.bf16 %v3351, %v3351
          %v3355 = vld [vmem:[%s1287] sm:$0xf]
          %v3356 = vld [vmem:[%s1287 + $0x4] sm:$0xf]
          %v3357 = vpack.c.bf16 %v3350, %v3350
          %v3360 = vunpack.c.l.b16 %v3355
          %v3361 = vunpack.c.l.b16 %v3356
          %v3362 = vpack.c.b16 %v3361, %v3360
          %3364 = vrot.lane.b32.xlu0 %v3357, 127
          %v3365 = vpop.permute.xlu0 %3364
          %v3367 = vsel %vm1299, %v3362, 0
          %v3370 = vsel %vm1303, %v3365, 0
          %3372 = vmatpush.bf16.msra.mxu0 0
          %3373 = vmatpush.bf16.msra.mxu0 0
          %3374 = vmatpush.bf16.msra.mxu0 0
          %3375 = vmatpush.bf16.msra.mxu0 0
          %3376 = vmatpush.bf16.msra.mxu0 0
          %3377 = vmatpush.bf16.msra.mxu0 0
          %3378 = vmatpush.bf16.msra.mxu0 0
          %3379 = vmatpush.bf16.msra.mxu0 %v3370
          %3380 = vmatmul.bf16.gmra.mxu0 %v3367
          %v3381 = vpop.f32.mrf.mxu0
          %v3382 = vadd.f32 0.0, %v3381
          %v3383 = vpop.f32.mrf.mxu0
          %v3384 = vadd.f32 0.0, %v3383
          %3385 = vdwg.mxu0
          %v3388 = vunpack.c.l.b16 %v3352
          %v3389 = vunpack.c.l.b16 %v3353
          %v3390 = vpack.c.b16 %v3389, %v3388
          %v3392 = vsel %vm1299, %v3390, 0
          %v3395 = vsel %vm1303, %v3354, 0
          %3397 = vmatpush.bf16.msra.mxu0 0
          %3398 = vmatpush.bf16.msra.mxu0 0
          %3399 = vmatpush.bf16.msra.mxu0 0
          %3400 = vmatpush.bf16.msra.mxu0 0
          %3401 = vmatpush.bf16.msra.mxu0 0
          %3402 = vmatpush.bf16.msra.mxu0 0
          %3403 = vmatpush.bf16.msra.mxu0 0
          %3404 = vmatpush.bf16.msra.mxu0 %v3395
          %3405 = vmatmul.bf16.gmra.mxu0 %v3392
          %v3406 = vpop.f32.mrf.mxu0
          %v3407 = vadd.f32 %v3382, %v3406
          %v3408 = vpop.f32.mrf.mxu0
          %v3409 = vadd.f32 %v3384, %v3408
          %3410 = vdwg.mxu0
          %v3411 = vmul.f32 %v3350, %v1348
          %v3412 = vld [vmem:[%s1351] sm:$0xf]
          %v3413 = vld [vmem:[%s1351 + $0x4] sm:$0xf]
          %v3414 = vpack.c.bf16 %v3411, %v3411
          %v3417 = vunpack.c.l.b16 %v3412
          %v3418 = vunpack.c.l.b16 %v3413
          %v3419 = vpack.c.b16 %v3418, %v3417
          %3421 = vrot.lane.b32.xlu0 %v3414, 126
          %v3422 = vpop.permute.xlu0 %3421
          %v3424 = vsel %vm1299, %v3419, 0
          %v3427 = vsel %vm1303, %v3422, 0
          %3429 = vmatpush.bf16.msra.mxu0 0
          %3430 = vmatpush.bf16.msra.mxu0 0
          %3431 = vmatpush.bf16.msra.mxu0 0
          %3432 = vmatpush.bf16.msra.mxu0 0
          %3433 = vmatpush.bf16.msra.mxu0 0
          %3434 = vmatpush.bf16.msra.mxu0 0
          %3435 = vmatpush.bf16.msra.mxu0 0
          %3436 = vmatpush.bf16.msra.mxu0 %v3427
          %3437 = vmatmul.bf16.gmra.mxu0 %v3424
          %v3438 = vpop.f32.mrf.mxu0
          %v3439 = vadd.f32 0.0, %v3438
          %v3440 = vpop.f32.mrf.mxu0
          %v3441 = vadd.f32 0.0, %v3440
          %3442 = vdwg.mxu0
          %v3443 = vadd.f32 %v3407, %v3439
          %v3444 = vadd.f32 %v3409, %v3441
          %v3445 = vmul.f32 %v3350, %v1387
          %v3446 = vld [vmem:[%s1390] sm:$0xf]
          %v3447 = vld [vmem:[%s1390 + $0x4] sm:$0xf]
          %v3448 = vpack.c.bf16 %v3445, %v3445
          %v3451 = vunpack.c.l.b16 %v3446
          %v3452 = vunpack.c.l.b16 %v3447
          %v3453 = vpack.c.b16 %v3452, %v3451
          %3455 = vrot.lane.b32.xlu0 %v3448, 120
          %v3456 = vpop.permute.xlu0 %3455
          %v3458 = vsel %vm1299, %v3453, 0
          %v3461 = vsel %vm1303, %v3456, 0
          %3463 = vmatpush.bf16.msra.mxu0 0
          %3464 = vmatpush.bf16.msra.mxu0 0
          %3465 = vmatpush.bf16.msra.mxu0 0
          %3466 = vmatpush.bf16.msra.mxu0 0
          %3467 = vmatpush.bf16.msra.mxu0 0
          %3468 = vmatpush.bf16.msra.mxu0 0
          %3469 = vmatpush.bf16.msra.mxu0 0
          %3470 = vmatpush.bf16.msra.mxu0 %v3461
          %3471 = vmatmul.bf16.gmra.mxu0 %v3458
          %v3472 = vpop.f32.mrf.mxu0
          %v3473 = vadd.f32 0.0, %v3472
          %v3474 = vpop.f32.mrf.mxu0
          %v3475 = vadd.f32 0.0, %v3474
          %3476 = vdwg.mxu0
          %v3477 = vadd.f32 %v3443, %v3473
          %v3478 = vadd.f32 %v3444, %v3475
          %v3479 = vld [vmem:[%s1424] sm:$0xf]
          %v3480 = vld [vmem:[%s1424 + $0x4] sm:$0xf]
          %v3483 = vunpack.c.l.b16 %v3479
          %v3484 = vunpack.c.l.b16 %v3480
          %v3485 = vpack.c.b16 %v3484, %v3483
          %3486 = vrot.lane.b32.xlu0 %v3357, 119
          %v3487 = vpop.permute.xlu0 %3486
          %v3489 = vsel %vm1299, %v3485, 0
          %v3492 = vsel %vm1303, %v3487, 0
          %3494 = vmatpush.bf16.msra.mxu0 0
          %3495 = vmatpush.bf16.msra.mxu0 0
          %3496 = vmatpush.bf16.msra.mxu0 0
          %3497 = vmatpush.bf16.msra.mxu0 0
          %3498 = vmatpush.bf16.msra.mxu0 0
          %3499 = vmatpush.bf16.msra.mxu0 0
          %3500 = vmatpush.bf16.msra.mxu0 0
          %3501 = vmatpush.bf16.msra.mxu0 %v3492
          %3502 = vmatmul.bf16.gmra.mxu0 %v3489
          %v3503 = vpop.f32.mrf.mxu0
          %v3504 = vadd.f32 0.0, %v3503
          %v3505 = vpop.f32.mrf.mxu0
          %v3506 = vadd.f32 0.0, %v3505
          %3507 = vdwg.mxu0
          %v3508 = vadd.f32 %v3477, %v3504
          %v3509 = vadd.f32 %v3478, %v3506
          %v3510 = vmul.f32 %v3350, %v1457
          %v3511 = vld [vmem:[%s1460] sm:$0xf]
          %v3512 = vld [vmem:[%s1460 + $0x4] sm:$0xf]
          %v3513 = vpack.c.bf16 %v3510, %v3510
          %v3516 = vunpack.c.l.b16 %v3511
          %v3517 = vunpack.c.l.b16 %v3512
          %v3518 = vpack.c.b16 %v3517, %v3516
          %3520 = vrot.lane.b32.xlu0 %v3513, 118
          %v3521 = vpop.permute.xlu0 %3520
          %v3523 = vsel %vm1299, %v3518, 0
          %v3526 = vsel %vm1303, %v3521, 0
          %3528 = vmatpush.bf16.msra.mxu0 0
          %3529 = vmatpush.bf16.msra.mxu0 0
          %3530 = vmatpush.bf16.msra.mxu0 0
          %3531 = vmatpush.bf16.msra.mxu0 0
          %3532 = vmatpush.bf16.msra.mxu0 0
          %3533 = vmatpush.bf16.msra.mxu0 0
          %3534 = vmatpush.bf16.msra.mxu0 0
          %3535 = vmatpush.bf16.msra.mxu0 %v3526
          %3536 = vmatmul.bf16.gmra.mxu0 %v3523
          %v3537 = vpop.f32.mrf.mxu0
          %v3538 = vadd.f32 0.0, %v3537
          %v3539 = vpop.f32.mrf.mxu0
          %v3540 = vadd.f32 0.0, %v3539
          %3541 = vdwg.mxu0
          %v3542 = vadd.f32 %v3508, %v3538
          %v3543 = vadd.f32 %v3509, %v3540
          %v3544 = vmul.f32 %v3350, %v1495
          %v3545 = vld [vmem:[%s1498] sm:$0xf]
          %v3546 = vld [vmem:[%s1498 + $0x4] sm:$0xf]
          %v3547 = vpack.c.bf16 %v3544, %v3544
          %v3550 = vunpack.c.l.b16 %v3545
          %v3551 = vunpack.c.l.b16 %v3546
          %v3552 = vpack.c.b16 %v3551, %v3550
          %3554 = vrot.lane.b32.xlu0 %v3547, 112
          %v3555 = vpop.permute.xlu0 %3554
          %v3557 = vsel %vm1299, %v3552, 0
          %v3560 = vsel %vm1303, %v3555, 0
          %3562 = vmatpush.bf16.msra.mxu0 0
          %3563 = vmatpush.bf16.msra.mxu0 0
          %3564 = vmatpush.bf16.msra.mxu0 0
          %3565 = vmatpush.bf16.msra.mxu0 0
          %3566 = vmatpush.bf16.msra.mxu0 0
          %3567 = vmatpush.bf16.msra.mxu0 0
          %3568 = vmatpush.bf16.msra.mxu0 0
          %3569 = vmatpush.bf16.msra.mxu0 %v3560
          %3570 = vmatmul.bf16.gmra.mxu0 %v3557
          %v3571 = vpop.f32.mrf.mxu0
          %v3572 = vadd.f32 0.0, %v3571
          %v3573 = vpop.f32.mrf.mxu0
          %v3574 = vadd.f32 0.0, %v3573
          %3575 = vdwg.mxu0
          %v3576 = vadd.f32 %v3542, %v3572
          %v3577 = vadd.f32 %v3543, %v3574
          %v3578 = vld [vmem:[%s1532] sm:$0xf]
          %v3579 = vld [vmem:[%s1532 + $0x4] sm:$0xf]
          %v3582 = vunpack.c.l.b16 %v3578
          %v3583 = vunpack.c.l.b16 %v3579
          %v3584 = vpack.c.b16 %v3583, %v3582
          %3585 = vrot.lane.b32.xlu0 %v3357, 111
          %v3586 = vpop.permute.xlu0 %3585
          %v3588 = vsel %vm1299, %v3584, 0
          %v3591 = vsel %vm1303, %v3586, 0
          %3593 = vmatpush.bf16.msra.mxu0 0
          %3594 = vmatpush.bf16.msra.mxu0 0
          %3595 = vmatpush.bf16.msra.mxu0 0
          %3596 = vmatpush.bf16.msra.mxu0 0
          %3597 = vmatpush.bf16.msra.mxu0 0
          %3598 = vmatpush.bf16.msra.mxu0 0
          %3599 = vmatpush.bf16.msra.mxu0 0
          %3600 = vmatpush.bf16.msra.mxu0 %v3591
          %3601 = vmatmul.bf16.gmra.mxu0 %v3588
          %v3602 = vpop.f32.mrf.mxu0
          %v3603 = vadd.f32 0.0, %v3602
          %v3604 = vpop.f32.mrf.mxu0
          %v3605 = vadd.f32 0.0, %v3604
          %3606 = vdwg.mxu0
          %v3607 = vadd.f32 %v3576, %v3603
          %v3608 = vadd.f32 %v3577, %v3605
          %v3609 = vmul.f32 %v3350, %v1565
          %v3610 = vld [vmem:[%s1568] sm:$0xf]
          %v3611 = vld [vmem:[%s1568 + $0x4] sm:$0xf]
          %v3612 = vpack.c.bf16 %v3609, %v3609
          %v3615 = vunpack.c.l.b16 %v3610
          %v3616 = vunpack.c.l.b16 %v3611
          %v3617 = vpack.c.b16 %v3616, %v3615
          %3619 = vrot.lane.b32.xlu0 %v3612, 110
          %v3620 = vpop.permute.xlu0 %3619
          %v3622 = vsel %vm1299, %v3617, 0
          %v3625 = vsel %vm1303, %v3620, 0
          %3627 = vmatpush.bf16.msra.mxu0 0
          %3628 = vmatpush.bf16.msra.mxu0 0
          %3629 = vmatpush.bf16.msra.mxu0 0
          %3630 = vmatpush.bf16.msra.mxu0 0
          %3631 = vmatpush.bf16.msra.mxu0 0
          %3632 = vmatpush.bf16.msra.mxu0 0
          %3633 = vmatpush.bf16.msra.mxu0 0
          %3634 = vmatpush.bf16.msra.mxu0 %v3625
          %3635 = vmatmul.bf16.gmra.mxu0 %v3622
          %v3636 = vpop.f32.mrf.mxu0
          %v3637 = vadd.f32 0.0, %v3636
          %v3638 = vpop.f32.mrf.mxu0
          %v3639 = vadd.f32 0.0, %v3638
          %3640 = vdwg.mxu0
          %v3641 = vadd.f32 %v3607, %v3637
          %v3642 = vadd.f32 %v3608, %v3639
          %v3643 = vld [vmem:[%s4] sm:$0xff]
          %v3644 = vld [vmem:[%s4 + $0x8] sm:$0xff]
          %3646 = vset.pattern.permute.xlu0 0
          %3647 = vperm.xlu0 %3646, %v3643
          %v3648 = vpop.permute.xlu0 %3647
          %3651 = vset.pattern.permute.xlu0 0
          %3652 = vperm.xlu0 %3651, %v3644
          %v3653 = vpop.permute.xlu0 %3652
          %v3655 = vadd.f32 %v3641, %v3648
          %v3656 = vadd.f32 %v3642, %v3653
          %v3657 = vmax.f32 %v3655, 0.0
          %v3658 = vmax.f32 %v3656, 0.0
          %v3659 = vpack.c.bf16 %v3658, %v3657
          %v3660 = vld [vmem:[#allocation7] sm:$0xff]
          %v3661 = vld [vmem:[#allocation7 + $0x8] sm:$0xff]
          %v3662 = vld [vmem:[#allocation7 + $0x10] sm:$0xff]
          %v3663 = vld [vmem:[#allocation7 + $0x18] sm:$0xff]
          %v3664 = vld [vmem:[#allocation7 + $0x20] sm:$0xff]
          %v3665 = vld [vmem:[#allocation7 + $0x28] sm:$0xff]
          %v3666 = vld [vmem:[#allocation7 + $0x30] sm:$0xff]
          %v3667 = vld [vmem:[#allocation7 + $0x38] sm:$0xff]
          %v3676 = vunpack.c.l.b16 %v3660
          %v3677 = vunpack.c.h.b16 %v3660
          %v3678 = vunpack.c.l.b16 %v3661
          %v3679 = vunpack.c.h.b16 %v3661
          %v3680 = vunpack.c.l.b16 %v3662
          %v3681 = vunpack.c.h.b16 %v3662
          %v3682 = vunpack.c.l.b16 %v3663
          %v3683 = vunpack.c.h.b16 %v3663
          %v3684 = vunpack.c.l.b16 %v3664
          %v3685 = vunpack.c.h.b16 %v3664
          %v3686 = vunpack.c.l.b16 %v3665
          %v3687 = vunpack.c.h.b16 %v3665
          %v3688 = vunpack.c.l.b16 %v3666
          %v3689 = vunpack.c.h.b16 %v3666
          %v3690 = vunpack.c.l.b16 %v3667
          %v3691 = vunpack.c.h.b16 %v3667
          %v3692 = vpack.c.b16 %v3678, %v3676
          %v3693 = vpack.c.b16 %v3679, %v3677
          %v3694 = vpack.c.b16 %v3682, %v3680
          %v3695 = vpack.c.b16 %v3683, %v3681
          %v3696 = vpack.c.b16 %v3686, %v3684
          %v3697 = vpack.c.b16 %v3687, %v3685
          %v3698 = vpack.c.b16 %v3690, %v3688
          %v3699 = vpack.c.b16 %v3691, %v3689
          %v3709 = vsel %vm1667, %v3659, 0
          %3711 = vmatpush.bf16.msra.mxu0 0
          %3712 = vmatpush.bf16.msra.mxu0 0
          %3713 = vmatpush.bf16.msra.mxu0 0
          %3714 = vmatpush.bf16.msra.mxu0 0
          %3715 = vmatpush.bf16.msra.mxu0 %v3698
          %3716 = vmatpush.bf16.msra.mxu0 %v3696
          %3717 = vmatpush.bf16.msra.mxu0 %v3694
          %3718 = vmatpush.bf16.msra.mxu0 %v3692
          %3719 = vmatmul.bf16.gmra.mxu0 %v3709
          %v3720 = vpop.f32.mrf.mxu0
          %v3721 = vadd.f32 0.0, %v3720
          %v3722 = vpop.f32.mrf.mxu0
          %v3723 = vadd.f32 0.0, %v3722
          %3724 = vdwg.mxu0
          %3725 = vmatpush.bf16.msra.mxu0 0
          %3726 = vmatpush.bf16.msra.mxu0 0
          %3727 = vmatpush.bf16.msra.mxu0 0
          %3728 = vmatpush.bf16.msra.mxu0 0
          %3729 = vmatpush.bf16.msra.mxu0 %v3699
          %3730 = vmatpush.bf16.msra.mxu0 %v3697
          %3731 = vmatpush.bf16.msra.mxu0 %v3695
          %3732 = vmatpush.bf16.msra.mxu0 %v3693
          %3733 = vmatmul.bf16.gmra.mxu0 %v3709
          %v3734 = vpop.f32.mrf.mxu0
          %v3735 = vadd.f32 0.0, %v3734
          %v3736 = vpop.f32.mrf.mxu0
          %v3737 = vadd.f32 0.0, %v3736
          %3738 = vdwg.mxu0
          %3743 = vrot.lane.b32.xlu0 %v3721, 17
          %v3744 = vpop.permute.xlu0 %3743
          %3745 = vrot.lane.b32.xlu0 %v3735, 17
          %v3746 = vpop.permute.xlu0 %3745
          %3747 = vrot.lane.b32.xlu0 %v3723, 17
          %v3748 = vpop.permute.xlu0 %3747
          %3749 = vrot.lane.b32.xlu0 %v3737, 17
          %v3750 = vpop.permute.xlu0 %3749
          %v3751 = vsel %vm527, %v3744, %v3746
          %v3752 = vsel %vm527, %v3748, %v3750
          %v3759 = vsel %vm527, 0.0, %v3744
          %v3760 = vsel %vm527, 0.0, %v3748
          %v3761 = vsel %vm527, %v3746, 0.0
          %v3762 = vsel %vm527, %v3750, 0.0
          %v3763 = vmul.f32 %v3759, %v563
          %v3764 = vmul.f32 %v3751, %v564
          %v3765 = vmul.f32 %v3760, %v563
          %v3766 = vmul.f32 %v3752, %v564
          %v3767 = vld [vmem:[#allocation3] sm:$0xf]
          %v3768 = vpack.c.bf16 %v3765, %v3763
          %v3769 = vpack.c.bf16 %v3766, %v3764
          %v3770 = vld [vmem:[%s1730] sm:$0xf]
          %v3771 = vpack.c.bf16 %v3760, %v3759
          %v3772 = vpack.c.bf16 %v3752, %v3751
          %v3773 = vpack.c.bf16 %v3762, %v3761
          %3777 = vrot.lane.b32.xlu0 %v3771, 127
          %v3778 = vpop.permute.xlu0 %3777
          %3779 = vrot.lane.b32.xlu0 %v3772, 127
          %v3780 = vpop.permute.xlu0 %3779
          %3781 = vrot.lane.b32.xlu0 %v3773, 127
          %v3782 = vpop.permute.xlu0 %3781
          %v3783 = vsel %vm588, %v3778, %v3780
          %v3784 = vsel %vm588, %v3780, %v3782
          %v3788 = vsel %vm737, %v3770, 0
          %3790 = vmatpush.bf16.msra.mxu0 0
          %3791 = vmatpush.bf16.msra.mxu0 0
          %3792 = vmatpush.bf16.msra.mxu0 0
          %3793 = vmatpush.bf16.msra.mxu0 0
          %3794 = vmatpush.bf16.msra.mxu0 0
          %3795 = vmatpush.bf16.msra.mxu0 0
          %3796 = vmatpush.bf16.msra.mxu0 0
          %3797 = vmatpush.bf16.msra.mxu0 %v3783
          %3798 = vmatmul.bf16.gmra.mxu0 %v3788
          %v3799 = vpop.f32.mrf.mxu0
          %v3800 = vadd.f32 0.0, %v3799
          %v3801 = vpop.f32.mrf.mxu0
          %3802 = vdwg.mxu0
          %3803 = vmatpush.bf16.msra.mxu0 0
          %3804 = vmatpush.bf16.msra.mxu0 0
          %3805 = vmatpush.bf16.msra.mxu0 0
          %3806 = vmatpush.bf16.msra.mxu0 0
          %3807 = vmatpush.bf16.msra.mxu0 0
          %3808 = vmatpush.bf16.msra.mxu0 0
          %3809 = vmatpush.bf16.msra.mxu0 0
          %3810 = vmatpush.bf16.msra.mxu0 %v3784
          %3811 = vmatmul.bf16.gmra.mxu0 %v3788
          %v3812 = vpop.f32.mrf.mxu0
          %v3813 = vadd.f32 0.0, %v3812
          %v3814 = vpop.f32.mrf.mxu0
          %3815 = vdwg.mxu0
          %v3817 = vsel %vm737, %v3767, 0
          %3819 = vmatpush.bf16.msra.mxu0 0
          %3820 = vmatpush.bf16.msra.mxu0 0
          %3821 = vmatpush.bf16.msra.mxu0 0
          %3822 = vmatpush.bf16.msra.mxu0 0
          %3823 = vmatpush.bf16.msra.mxu0 0
          %3824 = vmatpush.bf16.msra.mxu0 0
          %3825 = vmatpush.bf16.msra.mxu0 0
          %3826 = vmatpush.bf16.msra.mxu0 %v3768
          %3827 = vmatmul.bf16.gmra.mxu0 %v3817
          %v3828 = vpop.f32.mrf.mxu0
          %v3829 = vadd.f32 %v3800, %v3828
          %v3830 = vpop.f32.mrf.mxu0
          %3831 = vdwg.mxu0
          %3832 = vmatpush.bf16.msra.mxu0 0
          %3833 = vmatpush.bf16.msra.mxu0 0
          %3834 = vmatpush.bf16.msra.mxu0 0
          %3835 = vmatpush.bf16.msra.mxu0 0
          %3836 = vmatpush.bf16.msra.mxu0 0
          %3837 = vmatpush.bf16.msra.mxu0 0
          %3838 = vmatpush.bf16.msra.mxu0 0
          %3839 = vmatpush.bf16.msra.mxu0 %v3769
          %3840 = vmatmul.bf16.gmra.mxu0 %v3817
          %v3841 = vpop.f32.mrf.mxu0
          %v3842 = vadd.f32 %v3813, %v3841
          %v3843 = vpop.f32.mrf.mxu0
          %3844 = vdwg.mxu0
          %v3845 = vmul.f32 %v3759, %v666
          %v3846 = vmul.f32 %v3751, %v670
          %v3847 = vmul.f32 %v3761, %v668
          %v3848 = vmul.f32 %v3760, %v666
          %v3849 = vmul.f32 %v3752, %v670
          %v3850 = vmul.f32 %v3762, %v668
          %v3851 = vld [vmem:[%s1812] sm:$0xf]
          %v3852 = vpack.c.bf16 %v3848, %v3845
          %v3853 = vpack.c.bf16 %v3849, %v3846
          %v3854 = vpack.c.bf16 %v3850, %v3847
          %3858 = vrot.lane.b32.xlu0 %v3852, 126
          %v3859 = vpop.permute.xlu0 %3858
          %3860 = vrot.lane.b32.xlu0 %v3853, 126
          %v3861 = vpop.permute.xlu0 %3860
          %3862 = vrot.lane.b32.xlu0 %v3854, 126
          %v3863 = vpop.permute.xlu0 %3862
          %v3864 = vsel %vm691, %v3859, %v3861
          %v3865 = vsel %vm691, %v3861, %v3863
          %v3869 = vsel %vm737, %v3851, 0
          %3871 = vmatpush.bf16.msra.mxu0 0
          %3872 = vmatpush.bf16.msra.mxu0 0
          %3873 = vmatpush.bf16.msra.mxu0 0
          %3874 = vmatpush.bf16.msra.mxu0 0
          %3875 = vmatpush.bf16.msra.mxu0 0
          %3876 = vmatpush.bf16.msra.mxu0 0
          %3877 = vmatpush.bf16.msra.mxu0 0
          %3878 = vmatpush.bf16.msra.mxu0 %v3864
          %3879 = vmatmul.bf16.gmra.mxu0 %v3869
          %v3880 = vpop.f32.mrf.mxu0
          %v3881 = vadd.f32 0.0, %v3880
          %v3882 = vpop.f32.mrf.mxu0
          %3883 = vdwg.mxu0
          %3884 = vmatpush.bf16.msra.mxu0 0
          %3885 = vmatpush.bf16.msra.mxu0 0
          %3886 = vmatpush.bf16.msra.mxu0 0
          %3887 = vmatpush.bf16.msra.mxu0 0
          %3888 = vmatpush.bf16.msra.mxu0 0
          %3889 = vmatpush.bf16.msra.mxu0 0
          %3890 = vmatpush.bf16.msra.mxu0 0
          %3891 = vmatpush.bf16.msra.mxu0 %v3865
          %3892 = vmatmul.bf16.gmra.mxu0 %v3869
          %v3893 = vpop.f32.mrf.mxu0
          %v3894 = vadd.f32 0.0, %v3893
          %v3895 = vpop.f32.mrf.mxu0
          %3896 = vdwg.mxu0
          %v3897 = vadd.f32 %v3829, %v3881
          %v3898 = vadd.f32 %v3842, %v3894
          %v3899 = vmul.f32 %v3759, %v734
          %v3900 = vmul.f32 %v3751, %v738
          %v3901 = vmul.f32 %v3761, %v736
          %v3902 = vmul.f32 %v3760, %v734
          %v3903 = vmul.f32 %v3752, %v738
          %v3904 = vmul.f32 %v3762, %v736
          %v3905 = vld [vmem:[%s1867] sm:$0xf]
          %v3906 = vpack.c.bf16 %v3902, %v3899
          %v3907 = vpack.c.bf16 %v3903, %v3900
          %v3908 = vpack.c.bf16 %v3904, %v3901
          %3912 = vrot.lane.b32.xlu0 %v3906, 112
          %v3913 = vpop.permute.xlu0 %3912
          %3914 = vrot.lane.b32.xlu0 %v3907, 112
          %v3915 = vpop.permute.xlu0 %3914
          %3916 = vrot.lane.b32.xlu0 %v3908, 112
          %v3917 = vpop.permute.xlu0 %3916
          %v3918 = vsel %vm759, %v3913, %v3915
          %v3919 = vsel %vm759, %v3915, %v3917
          %v3923 = vsel %vm737, %v3905, 0
          %3925 = vmatpush.bf16.msra.mxu0 0
          %3926 = vmatpush.bf16.msra.mxu0 0
          %3927 = vmatpush.bf16.msra.mxu0 0
          %3928 = vmatpush.bf16.msra.mxu0 0
          %3929 = vmatpush.bf16.msra.mxu0 0
          %3930 = vmatpush.bf16.msra.mxu0 0
          %3931 = vmatpush.bf16.msra.mxu0 0
          %3932 = vmatpush.bf16.msra.mxu0 %v3918
          %3933 = vmatmul.bf16.gmra.mxu0 %v3923
          %v3934 = vpop.f32.mrf.mxu0
          %v3935 = vadd.f32 0.0, %v3934
          %v3936 = vpop.f32.mrf.mxu0
          %3937 = vdwg.mxu0
          %3938 = vmatpush.bf16.msra.mxu0 0
          %3939 = vmatpush.bf16.msra.mxu0 0
          %3940 = vmatpush.bf16.msra.mxu0 0
          %3941 = vmatpush.bf16.msra.mxu0 0
          %3942 = vmatpush.bf16.msra.mxu0 0
          %3943 = vmatpush.bf16.msra.mxu0 0
          %3944 = vmatpush.bf16.msra.mxu0 0
          %3945 = vmatpush.bf16.msra.mxu0 %v3919
          %3946 = vmatmul.bf16.gmra.mxu0 %v3923
          %v3947 = vpop.f32.mrf.mxu0
          %v3948 = vadd.f32 0.0, %v3947
          %v3949 = vpop.f32.mrf.mxu0
          %3950 = vdwg.mxu0
          %v3951 = vadd.f32 %v3897, %v3935
          %v3952 = vadd.f32 %v3898, %v3948
          %v3953 = vld [vmem:[%s1916] sm:$0xf]
          %3954 = vrot.lane.b32.xlu0 %v3771, 111
          %v3955 = vpop.permute.xlu0 %3954
          %3956 = vrot.lane.b32.xlu0 %v3772, 111
          %v3957 = vpop.permute.xlu0 %3956
          %3958 = vrot.lane.b32.xlu0 %v3773, 111
          %v3959 = vpop.permute.xlu0 %3958
          %v3960 = vsel %vm807, %v3955, %v3957
          %v3961 = vsel %vm807, %v3957, %v3959
          %v3965 = vsel %vm737, %v3953, 0
          %3967 = vmatpush.bf16.msra.mxu0 0
          %3968 = vmatpush.bf16.msra.mxu0 0
          %3969 = vmatpush.bf16.msra.mxu0 0
          %3970 = vmatpush.bf16.msra.mxu0 0
          %3971 = vmatpush.bf16.msra.mxu0 0
          %3972 = vmatpush.bf16.msra.mxu0 0
          %3973 = vmatpush.bf16.msra.mxu0 0
          %3974 = vmatpush.bf16.msra.mxu0 %v3960
          %3975 = vmatmul.bf16.gmra.mxu0 %v3965
          %v3976 = vpop.f32.mrf.mxu0
          %v3977 = vadd.f32 0.0, %v3976
          %v3978 = vpop.f32.mrf.mxu0
          %3979 = vdwg.mxu0
          %3980 = vmatpush.bf16.msra.mxu0 0
          %3981 = vmatpush.bf16.msra.mxu0 0
          %3982 = vmatpush.bf16.msra.mxu0 0
          %3983 = vmatpush.bf16.msra.mxu0 0
          %3984 = vmatpush.bf16.msra.mxu0 0
          %3985 = vmatpush.bf16.msra.mxu0 0
          %3986 = vmatpush.bf16.msra.mxu0 0
          %3987 = vmatpush.bf16.msra.mxu0 %v3961
          %3988 = vmatmul.bf16.gmra.mxu0 %v3965
          %v3989 = vpop.f32.mrf.mxu0
          %v3990 = vadd.f32 0.0, %v3989
          %v3991 = vpop.f32.mrf.mxu0
          %3992 = vdwg.mxu0
          %v3993 = vadd.f32 %v3951, %v3977
          %v3994 = vadd.f32 %v3952, %v3990
          %v3995 = vmul.f32 %v3759, %v848
          %v3996 = vmul.f32 %v3751, %v852
          %v3997 = vmul.f32 %v3761, %v850
          %v3998 = vmul.f32 %v3760, %v848
          %v3999 = vmul.f32 %v3752, %v852
          %v4000 = vmul.f32 %v3762, %v850
          %v4001 = vld [vmem:[%s1965] sm:$0xf]
          %v4002 = vpack.c.bf16 %v3998, %v3995
          %v4003 = vpack.c.bf16 %v3999, %v3996
          %v4004 = vpack.c.bf16 %v4000, %v3997
          %4008 = vrot.lane.b32.xlu0 %v4002, 110
          %v4009 = vpop.permute.xlu0 %4008
          %4010 = vrot.lane.b32.xlu0 %v4003, 110
          %v4011 = vpop.permute.xlu0 %4010
          %4012 = vrot.lane.b32.xlu0 %v4004, 110
          %v4013 = vpop.permute.xlu0 %4012
          %v4014 = vsel %vm873, %v4009, %v4011
          %v4015 = vsel %vm873, %v4011, %v4013
          %v4019 = vsel %vm737, %v4001, 0
          %4021 = vmatpush.bf16.msra.mxu0 0
          %4022 = vmatpush.bf16.msra.mxu0 0
          %4023 = vmatpush.bf16.msra.mxu0 0
          %4024 = vmatpush.bf16.msra.mxu0 0
          %4025 = vmatpush.bf16.msra.mxu0 0
          %4026 = vmatpush.bf16.msra.mxu0 0
          %4027 = vmatpush.bf16.msra.mxu0 0
          %4028 = vmatpush.bf16.msra.mxu0 %v4014
          %4029 = vmatmul.bf16.gmra.mxu0 %v4019
          %v4030 = vpop.f32.mrf.mxu0
          %v4031 = vadd.f32 0.0, %v4030
          %v4032 = vpop.f32.mrf.mxu0
          %4033 = vdwg.mxu0
          %4034 = vmatpush.bf16.msra.mxu0 0
          %4035 = vmatpush.bf16.msra.mxu0 0
          %4036 = vmatpush.bf16.msra.mxu0 0
          %4037 = vmatpush.bf16.msra.mxu0 0
          %4038 = vmatpush.bf16.msra.mxu0 0
          %4039 = vmatpush.bf16.msra.mxu0 0
          %4040 = vmatpush.bf16.msra.mxu0 0
          %4041 = vmatpush.bf16.msra.mxu0 %v4015
          %4042 = vmatmul.bf16.gmra.mxu0 %v4019
          %v4043 = vpop.f32.mrf.mxu0
          %v4044 = vadd.f32 0.0, %v4043
          %v4045 = vpop.f32.mrf.mxu0
          %4046 = vdwg.mxu0
          %v4047 = vadd.f32 %v3993, %v4031
          %v4048 = vadd.f32 %v3994, %v4044
          %v4049 = vmul.f32 %v3759, %v914
          %v4050 = vmul.f32 %v3751, %v918
          %v4051 = vmul.f32 %v3761, %v916
          %v4052 = vmul.f32 %v3760, %v914
          %v4053 = vmul.f32 %v3752, %v918
          %v4054 = vmul.f32 %v3762, %v916
          %v4055 = vld [vmem:[%s2020] sm:$0xf]
          %v4056 = vpack.c.bf16 %v4052, %v4049
          %v4057 = vpack.c.bf16 %v4053, %v4050
          %v4058 = vpack.c.bf16 %v4054, %v4051
          %4062 = vrot.lane.b32.xlu0 %v4056, 96
          %v4063 = vpop.permute.xlu0 %4062
          %4064 = vrot.lane.b32.xlu0 %v4057, 96
          %v4065 = vpop.permute.xlu0 %4064
          %4066 = vrot.lane.b32.xlu0 %v4058, 96
          %v4067 = vpop.permute.xlu0 %4066
          %v4068 = vsel %vm939, %v4063, %v4065
          %v4069 = vsel %vm939, %v4065, %v4067
          %v4073 = vsel %vm737, %v4055, 0
          %4075 = vmatpush.bf16.msra.mxu0 0
          %4076 = vmatpush.bf16.msra.mxu0 0
          %4077 = vmatpush.bf16.msra.mxu0 0
          %4078 = vmatpush.bf16.msra.mxu0 0
          %4079 = vmatpush.bf16.msra.mxu0 0
          %4080 = vmatpush.bf16.msra.mxu0 0
          %4081 = vmatpush.bf16.msra.mxu0 0
          %4082 = vmatpush.bf16.msra.mxu0 %v4068
          %4083 = vmatmul.bf16.gmra.mxu0 %v4073
          %v4084 = vpop.f32.mrf.mxu0
          %v4085 = vadd.f32 0.0, %v4084
          %v4086 = vpop.f32.mrf.mxu0
          %4087 = vdwg.mxu0
          %4088 = vmatpush.bf16.msra.mxu0 0
          %4089 = vmatpush.bf16.msra.mxu0 0
          %4090 = vmatpush.bf16.msra.mxu0 0
          %4091 = vmatpush.bf16.msra.mxu0 0
          %4092 = vmatpush.bf16.msra.mxu0 0
          %4093 = vmatpush.bf16.msra.mxu0 0
          %4094 = vmatpush.bf16.msra.mxu0 0
          %4095 = vmatpush.bf16.msra.mxu0 %v4069
          %4096 = vmatmul.bf16.gmra.mxu0 %v4073
          %v4097 = vpop.f32.mrf.mxu0
          %v4098 = vadd.f32 0.0, %v4097
          %v4099 = vpop.f32.mrf.mxu0
          %4100 = vdwg.mxu0
          %v4101 = vadd.f32 %v4047, %v4085
          %v4102 = vadd.f32 %v4048, %v4098
          %v4103 = vld [vmem:[%s2069] sm:$0xf]
          %4104 = vrot.lane.b32.xlu0 %v3771, 95
          %v4105 = vpop.permute.xlu0 %4104
          %4106 = vrot.lane.b32.xlu0 %v3772, 95
          %v4107 = vpop.permute.xlu0 %4106
          %4108 = vrot.lane.b32.xlu0 %v3773, 95
          %v4109 = vpop.permute.xlu0 %4108
          %v4110 = vsel %vm987, %v4105, %v4107
          %v4111 = vsel %vm987, %v4107, %v4109
          %v4115 = vsel %vm737, %v4103, 0
          %4117 = vmatpush.bf16.msra.mxu0 0
          %4118 = vmatpush.bf16.msra.mxu0 0
          %4119 = vmatpush.bf16.msra.mxu0 0
          %4120 = vmatpush.bf16.msra.mxu0 0
          %4121 = vmatpush.bf16.msra.mxu0 0
          %4122 = vmatpush.bf16.msra.mxu0 0
          %4123 = vmatpush.bf16.msra.mxu0 0
          %4124 = vmatpush.bf16.msra.mxu0 %v4110
          %4125 = vmatmul.bf16.gmra.mxu0 %v4115
          %v4126 = vpop.f32.mrf.mxu0
          %v4127 = vadd.f32 0.0, %v4126
          %v4128 = vpop.f32.mrf.mxu0
          %4129 = vdwg.mxu0
          %4130 = vmatpush.bf16.msra.mxu0 0
          %4131 = vmatpush.bf16.msra.mxu0 0
          %4132 = vmatpush.bf16.msra.mxu0 0
          %4133 = vmatpush.bf16.msra.mxu0 0
          %4134 = vmatpush.bf16.msra.mxu0 0
          %4135 = vmatpush.bf16.msra.mxu0 0
          %4136 = vmatpush.bf16.msra.mxu0 0
          %4137 = vmatpush.bf16.msra.mxu0 %v4111
          %4138 = vmatmul.bf16.gmra.mxu0 %v4115
          %v4139 = vpop.f32.mrf.mxu0
          %v4140 = vadd.f32 0.0, %v4139
          %v4141 = vpop.f32.mrf.mxu0
          %4142 = vdwg.mxu0
          %v4143 = vadd.f32 %v4101, %v4127
          %v4144 = vadd.f32 %v4102, %v4140
          %v4145 = vmul.f32 %v3759, %v1028
          %v4146 = vmul.f32 %v3751, %v1032
          %v4147 = vmul.f32 %v3761, %v1030
          %v4148 = vmul.f32 %v3760, %v1028
          %v4149 = vmul.f32 %v3752, %v1032
          %v4150 = vmul.f32 %v3762, %v1030
          %v4151 = vld [vmem:[%s2118] sm:$0xf]
          %v4152 = vpack.c.bf16 %v4148, %v4145
          %v4153 = vpack.c.bf16 %v4149, %v4146
          %v4154 = vpack.c.bf16 %v4150, %v4147
          %4158 = vrot.lane.b32.xlu0 %v4152, 94
          %v4159 = vpop.permute.xlu0 %4158
          %4160 = vrot.lane.b32.xlu0 %v4153, 94
          %v4161 = vpop.permute.xlu0 %4160
          %4162 = vrot.lane.b32.xlu0 %v4154, 94
          %v4163 = vpop.permute.xlu0 %4162
          %v4164 = vsel %vm1053, %v4159, %v4161
          %v4165 = vsel %vm1053, %v4161, %v4163
          %v4169 = vsel %vm737, %v4151, 0
          %4171 = vmatpush.bf16.msra.mxu0 0
          %4172 = vmatpush.bf16.msra.mxu0 0
          %4173 = vmatpush.bf16.msra.mxu0 0
          %4174 = vmatpush.bf16.msra.mxu0 0
          %4175 = vmatpush.bf16.msra.mxu0 0
          %4176 = vmatpush.bf16.msra.mxu0 0
          %4177 = vmatpush.bf16.msra.mxu0 0
          %4178 = vmatpush.bf16.msra.mxu0 %v4164
          %4179 = vmatmul.bf16.gmra.mxu0 %v4169
          %v4180 = vpop.f32.mrf.mxu0
          %v4181 = vadd.f32 0.0, %v4180
          %v4182 = vpop.f32.mrf.mxu0
          %4183 = vdwg.mxu0
          %4184 = vmatpush.bf16.msra.mxu0 0
          %4185 = vmatpush.bf16.msra.mxu0 0
          %4186 = vmatpush.bf16.msra.mxu0 0
          %4187 = vmatpush.bf16.msra.mxu0 0
          %4188 = vmatpush.bf16.msra.mxu0 0
          %4189 = vmatpush.bf16.msra.mxu0 0
          %4190 = vmatpush.bf16.msra.mxu0 0
          %4191 = vmatpush.bf16.msra.mxu0 %v4165
          %4192 = vmatmul.bf16.gmra.mxu0 %v4169
          %v4193 = vpop.f32.mrf.mxu0
          %v4194 = vadd.f32 0.0, %v4193
          %v4195 = vpop.f32.mrf.mxu0
          %4196 = vdwg.mxu0
          %v4197 = vadd.f32 %v4143, %v4181
          %v4198 = vadd.f32 %v4144, %v4194
          %4201 = vrot.lane.b32.xlu0 %v3187, 17
          %v4202 = vpop.permute.xlu0 %4201
          %4203 = vrot.lane.b32.xlu0 %v3188, 17
          %v4204 = vpop.permute.xlu0 %4203
          %v4205 = vsel %vm527, %v4202, %v4204
          %v4209 = vsel %vm527, 0.0, %v4202
          %v4210 = vsel %vm527, %v4204, 0.0
          %v4211 = vmul.f32 %v4209, %v563
          %v4212 = vmul.f32 %v4205, %v564
          %v4213 = vld [vmem:[%s6] sm:$0xf]
          %v4214 = vpack.c.bf16 %v4211, %v4211
          %v4215 = vpack.c.bf16 %v4212, %v4212
          %v4216 = vld [vmem:[%s2184] sm:$0xf]
          %v4217 = vpack.c.bf16 %v4209, %v4209
          %v4218 = vpack.c.bf16 %v4205, %v4205
          %v4219 = vpack.c.bf16 %v4210, %v4210
          %4223 = vrot.lane.b32.xlu0 %v4217, 127
          %v4224 = vpop.permute.xlu0 %4223
          %4225 = vrot.lane.b32.xlu0 %v4218, 127
          %v4226 = vpop.permute.xlu0 %4225
          %4227 = vrot.lane.b32.xlu0 %v4219, 127
          %v4228 = vpop.permute.xlu0 %4227
          %v4229 = vsel %vm588, %v4224, %v4226
          %v4230 = vsel %vm588, %v4226, %v4228
          %v4232 = vsel %vm1299, %v4216, 0
          %v4235 = vsel %vm1303, %v4229, 0
          %v4238 = vsel %vm1303, %v4230, 0
          %4240 = vmatpush.bf16.msra.mxu0 0
          %4241 = vmatpush.bf16.msra.mxu0 0
          %4242 = vmatpush.bf16.msra.mxu0 0
          %4243 = vmatpush.bf16.msra.mxu0 0
          %4244 = vmatpush.bf16.msra.mxu0 0
          %4245 = vmatpush.bf16.msra.mxu0 0
          %4246 = vmatpush.bf16.msra.mxu0 0
          %4247 = vmatpush.bf16.msra.mxu0 %v4235
          %4248 = vmatmul.bf16.gmra.mxu0 %v4232
          %v4249 = vpop.f32.mrf.mxu0
          %v4250 = vadd.f32 0.0, %v4249
          %v4251 = vpop.f32.mrf.mxu0
          %4252 = vdwg.mxu0
          %4253 = vmatpush.bf16.msra.mxu0 0
          %4254 = vmatpush.bf16.msra.mxu0 0
          %4255 = vmatpush.bf16.msra.mxu0 0
          %4256 = vmatpush.bf16.msra.mxu0 0
          %4257 = vmatpush.bf16.msra.mxu0 0
          %4258 = vmatpush.bf16.msra.mxu0 0
          %4259 = vmatpush.bf16.msra.mxu0 0
          %4260 = vmatpush.bf16.msra.mxu0 %v4238
          %4261 = vmatmul.bf16.gmra.mxu0 %v4232
          %v4262 = vpop.f32.mrf.mxu0
          %v4263 = vadd.f32 0.0, %v4262
          %v4264 = vpop.f32.mrf.mxu0
          %4265 = vdwg.mxu0
          %v4267 = vsel %vm1299, %v4213, 0
          %v4270 = vsel %vm1303, %v4214, 0
          %v4273 = vsel %vm1303, %v4215, 0
          %4275 = vmatpush.bf16.msra.mxu0 0
          %4276 = vmatpush.bf16.msra.mxu0 0
          %4277 = vmatpush.bf16.msra.mxu0 0
          %4278 = vmatpush.bf16.msra.mxu0 0
          %4279 = vmatpush.bf16.msra.mxu0 0
          %4280 = vmatpush.bf16.msra.mxu0 0
          %4281 = vmatpush.bf16.msra.mxu0 0
          %4282 = vmatpush.bf16.msra.mxu0 %v4270
          %4283 = vmatmul.bf16.gmra.mxu0 %v4267
          %v4284 = vpop.f32.mrf.mxu0
          %v4285 = vadd.f32 %v4250, %v4284
          %v4286 = vpop.f32.mrf.mxu0
          %4287 = vdwg.mxu0
          %4288 = vmatpush.bf16.msra.mxu0 0
          %4289 = vmatpush.bf16.msra.mxu0 0
          %4290 = vmatpush.bf16.msra.mxu0 0
          %4291 = vmatpush.bf16.msra.mxu0 0
          %4292 = vmatpush.bf16.msra.mxu0 0
          %4293 = vmatpush.bf16.msra.mxu0 0
          %4294 = vmatpush.bf16.msra.mxu0 0
          %4295 = vmatpush.bf16.msra.mxu0 %v4273
          %4296 = vmatmul.bf16.gmra.mxu0 %v4267
          %v4297 = vpop.f32.mrf.mxu0
          %v4298 = vadd.f32 %v4263, %v4297
          %v4299 = vpop.f32.mrf.mxu0
          %4300 = vdwg.mxu0
          %v4301 = vmul.f32 %v4209, %v666
          %v4302 = vmul.f32 %v4205, %v670
          %v4303 = vmul.f32 %v4210, %v668
          %v4304 = vld [vmem:[%s2273] sm:$0xf]
          %v4305 = vpack.c.bf16 %v4301, %v4301
          %v4306 = vpack.c.bf16 %v4302, %v4302
          %v4307 = vpack.c.bf16 %v4303, %v4303
          %4311 = vrot.lane.b32.xlu0 %v4305, 126
          %v4312 = vpop.permute.xlu0 %4311
          %4313 = vrot.lane.b32.xlu0 %v4306, 126
          %v4314 = vpop.permute.xlu0 %4313
          %4315 = vrot.lane.b32.xlu0 %v4307, 126
          %v4316 = vpop.permute.xlu0 %4315
          %v4317 = vsel %vm691, %v4312, %v4314
          %v4318 = vsel %vm691, %v4314, %v4316
          %v4320 = vsel %vm1299, %v4304, 0
          %v4323 = vsel %vm1303, %v4317, 0
          %v4326 = vsel %vm1303, %v4318, 0
          %4328 = vmatpush.bf16.msra.mxu0 0
          %4329 = vmatpush.bf16.msra.mxu0 0
          %4330 = vmatpush.bf16.msra.mxu0 0
          %4331 = vmatpush.bf16.msra.mxu0 0
          %4332 = vmatpush.bf16.msra.mxu0 0
          %4333 = vmatpush.bf16.msra.mxu0 0
          %4334 = vmatpush.bf16.msra.mxu0 0
          %4335 = vmatpush.bf16.msra.mxu0 %v4323
          %4336 = vmatmul.bf16.gmra.mxu0 %v4320
          %v4337 = vpop.f32.mrf.mxu0
          %v4338 = vadd.f32 0.0, %v4337
          %v4339 = vpop.f32.mrf.mxu0
          %4340 = vdwg.mxu0
          %4341 = vmatpush.bf16.msra.mxu0 0
          %4342 = vmatpush.bf16.msra.mxu0 0
          %4343 = vmatpush.bf16.msra.mxu0 0
          %4344 = vmatpush.bf16.msra.mxu0 0
          %4345 = vmatpush.bf16.msra.mxu0 0
          %4346 = vmatpush.bf16.msra.mxu0 0
          %4347 = vmatpush.bf16.msra.mxu0 0
          %4348 = vmatpush.bf16.msra.mxu0 %v4326
          %4349 = vmatmul.bf16.gmra.mxu0 %v4320
          %v4350 = vpop.f32.mrf.mxu0
          %v4351 = vadd.f32 0.0, %v4350
          %v4352 = vpop.f32.mrf.mxu0
          %4353 = vdwg.mxu0
          %v4354 = vadd.f32 %v4285, %v4338
          %v4355 = vadd.f32 %v4298, %v4351
          %v4356 = vmul.f32 %v4209, %v734
          %v4357 = vmul.f32 %v4205, %v738
          %v4358 = vmul.f32 %v4210, %v736
          %v4359 = vld [vmem:[%s2329] sm:$0xf]
          %v4360 = vpack.c.bf16 %v4356, %v4356
          %v4361 = vpack.c.bf16 %v4357, %v4357
          %v4362 = vpack.c.bf16 %v4358, %v4358
          %4366 = vrot.lane.b32.xlu0 %v4360, 112
          %v4367 = vpop.permute.xlu0 %4366
          %4368 = vrot.lane.b32.xlu0 %v4361, 112
          %v4369 = vpop.permute.xlu0 %4368
          %4370 = vrot.lane.b32.xlu0 %v4362, 112
          %v4371 = vpop.permute.xlu0 %4370
          %v4372 = vsel %vm759, %v4367, %v4369
          %v4373 = vsel %vm759, %v4369, %v4371
          %v4375 = vsel %vm1299, %v4359, 0
          %v4378 = vsel %vm1303, %v4372, 0
          %v4381 = vsel %vm1303, %v4373, 0
          %4383 = vmatpush.bf16.msra.mxu0 0
          %4384 = vmatpush.bf16.msra.mxu0 0
          %4385 = vmatpush.bf16.msra.mxu0 0
          %4386 = vmatpush.bf16.msra.mxu0 0
          %4387 = vmatpush.bf16.msra.mxu0 0
          %4388 = vmatpush.bf16.msra.mxu0 0
          %4389 = vmatpush.bf16.msra.mxu0 0
          %4390 = vmatpush.bf16.msra.mxu0 %v4378
          %4391 = vmatmul.bf16.gmra.mxu0 %v4375
          %v4392 = vpop.f32.mrf.mxu0
          %v4393 = vadd.f32 0.0, %v4392
          %v4394 = vpop.f32.mrf.mxu0
          %4395 = vdwg.mxu0
          %4396 = vmatpush.bf16.msra.mxu0 0
          %4397 = vmatpush.bf16.msra.mxu0 0
          %4398 = vmatpush.bf16.msra.mxu0 0
          %4399 = vmatpush.bf16.msra.mxu0 0
          %4400 = vmatpush.bf16.msra.mxu0 0
          %4401 = vmatpush.bf16.msra.mxu0 0
          %4402 = vmatpush.bf16.msra.mxu0 0
          %4403 = vmatpush.bf16.msra.mxu0 %v4381
          %4404 = vmatmul.bf16.gmra.mxu0 %v4375
          %v4405 = vpop.f32.mrf.mxu0
          %v4406 = vadd.f32 0.0, %v4405
          %v4407 = vpop.f32.mrf.mxu0
          %4408 = vdwg.mxu0
          %v4409 = vadd.f32 %v4354, %v4393
          %v4410 = vadd.f32 %v4355, %v4406
          %v4411 = vld [vmem:[%s2382] sm:$0xf]
          %4412 = vrot.lane.b32.xlu0 %v4217, 111
          %v4413 = vpop.permute.xlu0 %4412
          %4414 = vrot.lane.b32.xlu0 %v4218, 111
          %v4415 = vpop.permute.xlu0 %4414
          %4416 = vrot.lane.b32.xlu0 %v4219, 111
          %v4417 = vpop.permute.xlu0 %4416
          %v4418 = vsel %vm807, %v4413, %v4415
          %v4419 = vsel %vm807, %v4415, %v4417
          %v4421 = vsel %vm1299, %v4411, 0
          %v4424 = vsel %vm1303, %v4418, 0
          %v4427 = vsel %vm1303, %v4419, 0
          %4429 = vmatpush.bf16.msra.mxu0 0
          %4430 = vmatpush.bf16.msra.mxu0 0
          %4431 = vmatpush.bf16.msra.mxu0 0
          %4432 = vmatpush.bf16.msra.mxu0 0
          %4433 = vmatpush.bf16.msra.mxu0 0
          %4434 = vmatpush.bf16.msra.mxu0 0
          %4435 = vmatpush.bf16.msra.mxu0 0
          %4436 = vmatpush.bf16.msra.mxu0 %v4424
          %4437 = vmatmul.bf16.gmra.mxu0 %v4421
          %v4438 = vpop.f32.mrf.mxu0
          %v4439 = vadd.f32 0.0, %v4438
          %v4440 = vpop.f32.mrf.mxu0
          %4441 = vdwg.mxu0
          %4442 = vmatpush.bf16.msra.mxu0 0
          %4443 = vmatpush.bf16.msra.mxu0 0
          %4444 = vmatpush.bf16.msra.mxu0 0
          %4445 = vmatpush.bf16.msra.mxu0 0
          %4446 = vmatpush.bf16.msra.mxu0 0
          %4447 = vmatpush.bf16.msra.mxu0 0
          %4448 = vmatpush.bf16.msra.mxu0 0
          %4449 = vmatpush.bf16.msra.mxu0 %v4427
          %4450 = vmatmul.bf16.gmra.mxu0 %v4421
          %v4451 = vpop.f32.mrf.mxu0
          %v4452 = vadd.f32 0.0, %v4451
          %v4453 = vpop.f32.mrf.mxu0
          %4454 = vdwg.mxu0
          %v4455 = vadd.f32 %v4409, %v4439
          %v4456 = vadd.f32 %v4410, %v4452
          %v4457 = vmul.f32 %v4209, %v848
          %v4458 = vmul.f32 %v4205, %v852
          %v4459 = vmul.f32 %v4210, %v850
          %v4460 = vld [vmem:[%s2432] sm:$0xf]
          %v4461 = vpack.c.bf16 %v4457, %v4457
          %v4462 = vpack.c.bf16 %v4458, %v4458
          %v4463 = vpack.c.bf16 %v4459, %v4459
          %4467 = vrot.lane.b32.xlu0 %v4461, 110
          %v4468 = vpop.permute.xlu0 %4467
          %4469 = vrot.lane.b32.xlu0 %v4462, 110
          %v4470 = vpop.permute.xlu0 %4469
          %4471 = vrot.lane.b32.xlu0 %v4463, 110
          %v4472 = vpop.permute.xlu0 %4471
          %v4473 = vsel %vm873, %v4468, %v4470
          %v4474 = vsel %vm873, %v4470, %v4472
          %v4476 = vsel %vm1299, %v4460, 0
          %v4479 = vsel %vm1303, %v4473, 0
          %v4482 = vsel %vm1303, %v4474, 0
          %4484 = vmatpush.bf16.msra.mxu0 0
          %4485 = vmatpush.bf16.msra.mxu0 0
          %4486 = vmatpush.bf16.msra.mxu0 0
          %4487 = vmatpush.bf16.msra.mxu0 0
          %4488 = vmatpush.bf16.msra.mxu0 0
          %4489 = vmatpush.bf16.msra.mxu0 0
          %4490 = vmatpush.bf16.msra.mxu0 0
          %4491 = vmatpush.bf16.msra.mxu0 %v4479
          %4492 = vmatmul.bf16.gmra.mxu0 %v4476
          %v4493 = vpop.f32.mrf.mxu0
          %v4494 = vadd.f32 0.0, %v4493
          %v4495 = vpop.f32.mrf.mxu0
          %4496 = vdwg.mxu0
          %4497 = vmatpush.bf16.msra.mxu0 0
          %4498 = vmatpush.bf16.msra.mxu0 0
          %4499 = vmatpush.bf16.msra.mxu0 0
          %4500 = vmatpush.bf16.msra.mxu0 0
          %4501 = vmatpush.bf16.msra.mxu0 0
          %4502 = vmatpush.bf16.msra.mxu0 0
          %4503 = vmatpush.bf16.msra.mxu0 0
          %4504 = vmatpush.bf16.msra.mxu0 %v4482
          %4505 = vmatmul.bf16.gmra.mxu0 %v4476
          %v4506 = vpop.f32.mrf.mxu0
          %v4507 = vadd.f32 0.0, %v4506
          %v4508 = vpop.f32.mrf.mxu0
          %4509 = vdwg.mxu0
          %v4510 = vadd.f32 %v4455, %v4494
          %v4511 = vadd.f32 %v4456, %v4507
          %v4512 = vmul.f32 %v4209, %v914
          %v4513 = vmul.f32 %v4205, %v918
          %v4514 = vmul.f32 %v4210, %v916
          %v4515 = vld [vmem:[%s2488] sm:$0xf]
          %v4516 = vpack.c.bf16 %v4512, %v4512
          %v4517 = vpack.c.bf16 %v4513, %v4513
          %v4518 = vpack.c.bf16 %v4514, %v4514
          %4522 = vrot.lane.b32.xlu0 %v4516, 96
          %v4523 = vpop.permute.xlu0 %4522
          %4524 = vrot.lane.b32.xlu0 %v4517, 96
          %v4525 = vpop.permute.xlu0 %4524
          %4526 = vrot.lane.b32.xlu0 %v4518, 96
          %v4527 = vpop.permute.xlu0 %4526
          %v4528 = vsel %vm939, %v4523, %v4525
          %v4529 = vsel %vm939, %v4525, %v4527
          %v4531 = vsel %vm1299, %v4515, 0
          %v4534 = vsel %vm1303, %v4528, 0
          %v4537 = vsel %vm1303, %v4529, 0
          %4539 = vmatpush.bf16.msra.mxu0 0
          %4540 = vmatpush.bf16.msra.mxu0 0
          %4541 = vmatpush.bf16.msra.mxu0 0
          %4542 = vmatpush.bf16.msra.mxu0 0
          %4543 = vmatpush.bf16.msra.mxu0 0
          %4544 = vmatpush.bf16.msra.mxu0 0
          %4545 = vmatpush.bf16.msra.mxu0 0
          %4546 = vmatpush.bf16.msra.mxu0 %v4534
          %4547 = vmatmul.bf16.gmra.mxu0 %v4531
          %v4548 = vpop.f32.mrf.mxu0
          %v4549 = vadd.f32 0.0, %v4548
          %v4550 = vpop.f32.mrf.mxu0
          %4551 = vdwg.mxu0
          %4552 = vmatpush.bf16.msra.mxu0 0
          %4553 = vmatpush.bf16.msra.mxu0 0
          %4554 = vmatpush.bf16.msra.mxu0 0
          %4555 = vmatpush.bf16.msra.mxu0 0
          %4556 = vmatpush.bf16.msra.mxu0 0
          %4557 = vmatpush.bf16.msra.mxu0 0
          %4558 = vmatpush.bf16.msra.mxu0 0
          %4559 = vmatpush.bf16.msra.mxu0 %v4537
          %4560 = vmatmul.bf16.gmra.mxu0 %v4531
          %v4561 = vpop.f32.mrf.mxu0
          %v4562 = vadd.f32 0.0, %v4561
          %v4563 = vpop.f32.mrf.mxu0
          %4564 = vdwg.mxu0
          %v4565 = vadd.f32 %v4510, %v4549
          %v4566 = vadd.f32 %v4511, %v4562
          %v4567 = vld [vmem:[%s2541] sm:$0xf]
          %4568 = vrot.lane.b32.xlu0 %v4217, 95
          %v4569 = vpop.permute.xlu0 %4568
          %4570 = vrot.lane.b32.xlu0 %v4218, 95
          %v4571 = vpop.permute.xlu0 %4570
          %4572 = vrot.lane.b32.xlu0 %v4219, 95
          %v4573 = vpop.permute.xlu0 %4572
          %v4574 = vsel %vm987, %v4569, %v4571
          %v4575 = vsel %vm987, %v4571, %v4573
          %v4577 = vsel %vm1299, %v4567, 0
          %v4580 = vsel %vm1303, %v4574, 0
          %v4583 = vsel %vm1303, %v4575, 0
          %4585 = vmatpush.bf16.msra.mxu0 0
          %4586 = vmatpush.bf16.msra.mxu0 0
          %4587 = vmatpush.bf16.msra.mxu0 0
          %4588 = vmatpush.bf16.msra.mxu0 0
          %4589 = vmatpush.bf16.msra.mxu0 0
          %4590 = vmatpush.bf16.msra.mxu0 0
          %4591 = vmatpush.bf16.msra.mxu0 0
          %4592 = vmatpush.bf16.msra.mxu0 %v4580
          %4593 = vmatmul.bf16.gmra.mxu0 %v4577
          %v4594 = vpop.f32.mrf.mxu0
          %v4595 = vadd.f32 0.0, %v4594
          %v4596 = vpop.f32.mrf.mxu0
          %4597 = vdwg.mxu0
          %4598 = vmatpush.bf16.msra.mxu0 0
          %4599 = vmatpush.bf16.msra.mxu0 0
          %4600 = vmatpush.bf16.msra.mxu0 0
          %4601 = vmatpush.bf16.msra.mxu0 0
          %4602 = vmatpush.bf16.msra.mxu0 0
          %4603 = vmatpush.bf16.msra.mxu0 0
          %4604 = vmatpush.bf16.msra.mxu0 0
          %4605 = vmatpush.bf16.msra.mxu0 %v4583
          %4606 = vmatmul.bf16.gmra.mxu0 %v4577
          %v4607 = vpop.f32.mrf.mxu0
          %v4608 = vadd.f32 0.0, %v4607
          %v4609 = vpop.f32.mrf.mxu0
          %4610 = vdwg.mxu0
          %v4611 = vadd.f32 %v4565, %v4595
          %v4612 = vadd.f32 %v4566, %v4608
          %v4613 = vmul.f32 %v4209, %v1028
          %v4614 = vmul.f32 %v4205, %v1032
          %v4615 = vmul.f32 %v4210, %v1030
          %v4616 = vld [vmem:[%s2591] sm:$0xf]
          %v4617 = vpack.c.bf16 %v4613, %v4613
          %v4618 = vpack.c.bf16 %v4614, %v4614
          %v4619 = vpack.c.bf16 %v4615, %v4615
          %4623 = vrot.lane.b32.xlu0 %v4617, 94
          %v4624 = vpop.permute.xlu0 %4623
          %4625 = vrot.lane.b32.xlu0 %v4618, 94
          %v4626 = vpop.permute.xlu0 %4625
          %4627 = vrot.lane.b32.xlu0 %v4619, 94
          %v4628 = vpop.permute.xlu0 %4627
          %v4629 = vsel %vm1053, %v4624, %v4626
          %v4630 = vsel %vm1053, %v4626, %v4628
          %v4632 = vsel %vm1299, %v4616, 0
          %v4635 = vsel %vm1303, %v4629, 0
          %v4638 = vsel %vm1303, %v4630, 0
          %4640 = vmatpush.bf16.msra.mxu0 0
          %4641 = vmatpush.bf16.msra.mxu0 0
          %4642 = vmatpush.bf16.msra.mxu0 0
          %4643 = vmatpush.bf16.msra.mxu0 0
          %4644 = vmatpush.bf16.msra.mxu0 0
          %4645 = vmatpush.bf16.msra.mxu0 0
          %4646 = vmatpush.bf16.msra.mxu0 0
          %4647 = vmatpush.bf16.msra.mxu0 %v4635
          %4648 = vmatmul.bf16.gmra.mxu0 %v4632
          %v4649 = vpop.f32.mrf.mxu0
          %v4650 = vadd.f32 0.0, %v4649
          %v4651 = vpop.f32.mrf.mxu0
          %4652 = vdwg.mxu0
          %4653 = vmatpush.bf16.msra.mxu0 0
          %4654 = vmatpush.bf16.msra.mxu0 0
          %4655 = vmatpush.bf16.msra.mxu0 0
          %4656 = vmatpush.bf16.msra.mxu0 0
          %4657 = vmatpush.bf16.msra.mxu0 0
          %4658 = vmatpush.bf16.msra.mxu0 0
          %4659 = vmatpush.bf16.msra.mxu0 0
          %4660 = vmatpush.bf16.msra.mxu0 %v4638
          %4661 = vmatmul.bf16.gmra.mxu0 %v4632
          %v4662 = vpop.f32.mrf.mxu0
          %v4663 = vadd.f32 0.0, %v4662
          %v4664 = vpop.f32.mrf.mxu0
          %4665 = vdwg.mxu0
          %v4666 = vadd.f32 %v4611, %v4650
          %v4667 = vadd.f32 %v4612, %v4663
          %v4668 = vadd.f32 %v4197, %v4666
          %v4669 = vadd.f32 %v4198, %v4667
          %v4670 = vld [vmem:[%s7] sm:$0xff]
          %4672 = vset.pattern.permute.xlu0 0
          %4673 = vperm.xlu0 %4672, %v4670
          %v4674 = vpop.permute.xlu0 %4673
          %v4676 = vadd.f32 %v4668, %v4674
          %v4677 = vadd.f32 %v4669, %v4674
          %v4678 = vmax.f32 %v4676, 0.0
          %v4679 = vmax.f32 %v4677, 0.0
          %v4680 = vld [vmem:[#allocation5] sm:$0x3]
          %v4681 = vpack.c.bf16 %v4678, %v4678
          %v4682 = vpack.c.bf16 %v4679, %v4679
          %v4683 = vld [vmem:[%s9] sm:$0xf]
          %4685 = vset.pattern.permute.xlu0 0
          %4686 = vperm.xlu0 %4685, %v4683
          %v4687 = vpop.permute.xlu0 %4686
          %v4690 = vsel %vm1299, %v4680, 0
          %v4693 = vsel %vm1303, %v4681, 0
          %v4696 = vsel %vm1303, %v4682, 0
          %4698 = vmatpush.bf16.msra.mxu0 0
          %4699 = vmatpush.bf16.msra.mxu0 0
          %4700 = vmatpush.bf16.msra.mxu0 0
          %4701 = vmatpush.bf16.msra.mxu0 0
          %4702 = vmatpush.bf16.msra.mxu0 0
          %4703 = vmatpush.bf16.msra.mxu0 0
          %4704 = vmatpush.bf16.msra.mxu0 0
          %4705 = vmatpush.bf16.msra.mxu0 %v4693
          %4706 = vmatmul.bf16.gmra.mxu0 %v4690
          %v4707 = vpop.f32.mrf.mxu0
          %v4708 = vadd.f32 %v4687, %v4707
          %v4709 = vpop.f32.mrf.mxu0
          %4710 = vdwg.mxu0
          %4711 = vmatpush.bf16.msra.mxu0 0
          %4712 = vmatpush.bf16.msra.mxu0 0
          %4713 = vmatpush.bf16.msra.mxu0 0
          %4714 = vmatpush.bf16.msra.mxu0 0
          %4715 = vmatpush.bf16.msra.mxu0 0
          %4716 = vmatpush.bf16.msra.mxu0 0
          %4717 = vmatpush.bf16.msra.mxu0 0
          %4718 = vmatpush.bf16.msra.mxu0 %v4696
          %4719 = vmatmul.bf16.gmra.mxu0 %v4690
          %v4720 = vpop.f32.mrf.mxu0
          %v4721 = vadd.f32 %v4687, %v4720
          %v4722 = vpop.f32.mrf.mxu0
          %4723 = vdwg.mxu0
          %v4726 = vrot.slane %v4721, 4
          %v4727 = vsel %vm1303, %v4708, %v4726
          %s4729 = scalar_lea.vmem [#allocation2], 8
          %4730 = vst [vmem:[%s4729] sm:$0xff] %v4727
        $region92: #{ls_unet_forward.1} parent=71 // pred_fallthru
          _
        %v4731 = vld [vmem:[#allocation2] ss:$4 sm:$0x3]
        %s4732 = scalar_lea.vmem [#allocation2], 8
        %v4733 = vld [vmem:[%s4732] ss:$4 sm:$0x3]
        %v4736 = vperm.slane %v4731, 0
        %v4737 = vperm.slane %v4731, 1
        %v4738 = vperm.slane %v4733, 0
        %v4739 = vperm.slane %v4733, 1
        %v4744 = vpack.c.bf16 %v4736, %v4736
        %v4745 = vpack.c.bf16 %v4737, %v4737
        %v4746 = vpack.c.bf16 %v4738, %v4738
        %v4747 = vpack.c.bf16 %v4739, %v4739
        %v4748 = vld [vmem:[%s462] sm:$0xff]
        %v4749 = vld [vmem:[%s462 + $0x8] sm:$0xff]
        %v4750 = vld [vmem:[%s462 + $0x10] sm:$0xff]
        %v4751 = vld [vmem:[%s462 + $0x18] sm:$0xff]
        %v4752 = vld [vmem:[%s462 + $0x20] sm:$0xff]
        %v4753 = vld [vmem:[%s462 + $0x28] sm:$0xff]
        %v4754 = vld [vmem:[%s462 + $0x30] sm:$0xff]
        %v4755 = vld [vmem:[%s462 + $0x38] sm:$0xff]
        %v4756 = vld [vmem:[%s462 + $0x40] sm:$0xff]
        %v4757 = vld [vmem:[%s462 + $0x48] sm:$0xff]
        %v4758 = vld [vmem:[%s462 + $0x50] sm:$0xff]
        %v4759 = vld [vmem:[%s462 + $0x58] sm:$0xff]
        %v4760 = vld [vmem:[%s462 + $0x60] sm:$0xff]
        %v4761 = vld [vmem:[%s462 + $0x68] sm:$0xff]
        %v4762 = vld [vmem:[%s462 + $0x70] sm:$0xff]
        %v4763 = vld [vmem:[%s462 + $0x78] sm:$0xff]
        %v4764 = vld [vmem:[%s462 + $0x80] sm:$0xff]
        %v4765 = vld [vmem:[%s462 + $0x88] sm:$0xff]
        %v4766 = vld [vmem:[%s462 + $0x90] sm:$0xff]
        %v4767 = vld [vmem:[%s462 + $0x98] sm:$0xff]
        %v4768 = vld [vmem:[%s462 + $0xa0] sm:$0xff]
        %v4769 = vld [vmem:[%s462 + $0xa8] sm:$0xff]
        %v4770 = vld [vmem:[%s462 + $0xb0] sm:$0xff]
        %v4771 = vld [vmem:[%s462 + $0xb8] sm:$0xff]
        %v4772 = vld [vmem:[%s462 + $0xc0] sm:$0xff]
        %v4773 = vld [vmem:[%s462 + $0xc8] sm:$0xff]
        %v4774 = vld [vmem:[%s462 + $0xd0] sm:$0xff]
        %v4775 = vld [vmem:[%s462 + $0xd8] sm:$0xff]
        %v4776 = vld [vmem:[%s462 + $0xe0] sm:$0xff]
        %v4777 = vld [vmem:[%s462 + $0xe8] sm:$0xff]
        %v4778 = vld [vmem:[%s462 + $0xf0] sm:$0xff]
        %v4779 = vld [vmem:[%s462 + $0xf8] sm:$0xff]
        %v4780 = vld [vmem:[%s462 + $0x100] sm:$0xff]
        %v4781 = vld [vmem:[%s462 + $0x108] sm:$0xff]
        %v4782 = vld [vmem:[%s462 + $0x110] sm:$0xff]
        %v4783 = vld [vmem:[%s462 + $0x118] sm:$0xff]
        %v4784 = vld [vmem:[%s462 + $0x120] sm:$0xff]
        %v4785 = vld [vmem:[%s462 + $0x128] sm:$0xff]
        %v4786 = vld [vmem:[%s462 + $0x130] sm:$0xff]
        %v4787 = vld [vmem:[%s462 + $0x138] sm:$0xff]
        %v4788 = vld [vmem:[%s462 + $0x140] sm:$0xff]
        %v4789 = vld [vmem:[%s462 + $0x148] sm:$0xff]
        %v4790 = vld [vmem:[%s462 + $0x150] sm:$0xff]
        %v4791 = vld [vmem:[%s462 + $0x158] sm:$0xff]
        %v4792 = vld [vmem:[%s462 + $0x160] sm:$0xff]
        %v4793 = vld [vmem:[%s462 + $0x168] sm:$0xff]
        %v4794 = vld [vmem:[%s462 + $0x170] sm:$0xff]
        %v4795 = vld [vmem:[%s462 + $0x178] sm:$0xff]
        %v4796 = vld [vmem:[%s462 + $0x180] sm:$0xff]
        %v4797 = vld [vmem:[%s462 + $0x188] sm:$0xff]
        %v4798 = vld [vmem:[%s462 + $0x190] sm:$0xff]
        %v4799 = vld [vmem:[%s462 + $0x198] sm:$0xff]
        %v4800 = vld [vmem:[%s462 + $0x1a0] sm:$0xff]
        %v4801 = vld [vmem:[%s462 + $0x1a8] sm:$0xff]
        %v4802 = vld [vmem:[%s462 + $0x1b0] sm:$0xff]
        %v4803 = vld [vmem:[%s462 + $0x1b8] sm:$0xff]
        %v4804 = vld [vmem:[%s462 + $0x1c0] sm:$0xff]
        %v4805 = vld [vmem:[%s462 + $0x1c8] sm:$0xff]
        %v4806 = vld [vmem:[%s462 + $0x1d0] sm:$0xff]
        %v4807 = vld [vmem:[%s462 + $0x1d8] sm:$0xff]
        %v4808 = vld [vmem:[%s462 + $0x1e0] sm:$0xff]
        %v4809 = vld [vmem:[%s462 + $0x1e8] sm:$0xff]
        %v4810 = vld [vmem:[%s462 + $0x1f0] sm:$0xff]
        %v4811 = vld [vmem:[%s462 + $0x1f8] sm:$0xff]
        %s4812 = scalar_lea.vmem [#allocation2], 1
        %v4813 = vld [vmem:[%s4812] ss:$4 sm:$0x3]
        %s4814 = scalar_lea.vmem [#allocation2], 9
        %v4815 = vld [vmem:[%s4814] ss:$4 sm:$0x3]
        %v4818 = vperm.slane %v4813, 0
        %v4819 = vperm.slane %v4813, 1
        %v4820 = vperm.slane %v4815, 0
        %v4821 = vperm.slane %v4815, 1
        %v4826 = vpack.c.bf16 %v4818, %v4818
        %v4827 = vpack.c.bf16 %v4819, %v4819
        %v4828 = vpack.c.bf16 %v4820, %v4820
        %v4829 = vpack.c.bf16 %v4821, %v4821
        %v4830 = vld [vmem:[%s462 + $0x200] sm:$0xff]
        %v4831 = vld [vmem:[%s462 + $0x208] sm:$0xff]
        %v4832 = vld [vmem:[%s462 + $0x210] sm:$0xff]
        %v4833 = vld [vmem:[%s462 + $0x218] sm:$0xff]
        %v4834 = vld [vmem:[%s462 + $0x220] sm:$0xff]
        %v4835 = vld [vmem:[%s462 + $0x228] sm:$0xff]
        %v4836 = vld [vmem:[%s462 + $0x230] sm:$0xff]
        %v4837 = vld [vmem:[%s462 + $0x238] sm:$0xff]
        %v4838 = vld [vmem:[%s462 + $0x240] sm:$0xff]
        %v4839 = vld [vmem:[%s462 + $0x248] sm:$0xff]
        %v4840 = vld [vmem:[%s462 + $0x250] sm:$0xff]
        %v4841 = vld [vmem:[%s462 + $0x258] sm:$0xff]
        %v4842 = vld [vmem:[%s462 + $0x260] sm:$0xff]
        %v4843 = vld [vmem:[%s462 + $0x268] sm:$0xff]
        %v4844 = vld [vmem:[%s462 + $0x270] sm:$0xff]
        %v4845 = vld [vmem:[%s462 + $0x278] sm:$0xff]
        %v4846 = vld [vmem:[%s462 + $0x280] sm:$0xff]
        %v4847 = vld [vmem:[%s462 + $0x288] sm:$0xff]
        %v4848 = vld [vmem:[%s462 + $0x290] sm:$0xff]
        %v4849 = vld [vmem:[%s462 + $0x298] sm:$0xff]
        %v4850 = vld [vmem:[%s462 + $0x2a0] sm:$0xff]
        %v4851 = vld [vmem:[%s462 + $0x2a8] sm:$0xff]
        %v4852 = vld [vmem:[%s462 + $0x2b0] sm:$0xff]
        %v4853 = vld [vmem:[%s462 + $0x2b8] sm:$0xff]
        %v4854 = vld [vmem:[%s462 + $0x2c0] sm:$0xff]
        %v4855 = vld [vmem:[%s462 + $0x2c8] sm:$0xff]
        %v4856 = vld [vmem:[%s462 + $0x2d0] sm:$0xff]
        %v4857 = vld [vmem:[%s462 + $0x2d8] sm:$0xff]
        %v4858 = vld [vmem:[%s462 + $0x2e0] sm:$0xff]
        %v4859 = vld [vmem:[%s462 + $0x2e8] sm:$0xff]
        %v4860 = vld [vmem:[%s462 + $0x2f0] sm:$0xff]
        %v4861 = vld [vmem:[%s462 + $0x2f8] sm:$0xff]
        %v4862 = vld [vmem:[%s462 + $0x300] sm:$0xff]
        %v4863 = vld [vmem:[%s462 + $0x308] sm:$0xff]
        %v4864 = vld [vmem:[%s462 + $0x310] sm:$0xff]
        %v4865 = vld [vmem:[%s462 + $0x318] sm:$0xff]
        %v4866 = vld [vmem:[%s462 + $0x320] sm:$0xff]
        %v4867 = vld [vmem:[%s462 + $0x328] sm:$0xff]
        %v4868 = vld [vmem:[%s462 + $0x330] sm:$0xff]
        %v4869 = vld [vmem:[%s462 + $0x338] sm:$0xff]
        %v4870 = vld [vmem:[%s462 + $0x340] sm:$0xff]
        %v4871 = vld [vmem:[%s462 + $0x348] sm:$0xff]
        %v4872 = vld [vmem:[%s462 + $0x350] sm:$0xff]
        %v4873 = vld [vmem:[%s462 + $0x358] sm:$0xff]
        %v4874 = vld [vmem:[%s462 + $0x360] sm:$0xff]
        %v4875 = vld [vmem:[%s462 + $0x368] sm:$0xff]
        %v4876 = vld [vmem:[%s462 + $0x370] sm:$0xff]
        %v4877 = vld [vmem:[%s462 + $0x378] sm:$0xff]
        %v4878 = vld [vmem:[%s462 + $0x380] sm:$0xff]
        %v4879 = vld [vmem:[%s462 + $0x388] sm:$0xff]
        %v4880 = vld [vmem:[%s462 + $0x390] sm:$0xff]
        %v4881 = vld [vmem:[%s462 + $0x398] sm:$0xff]
        %v4882 = vld [vmem:[%s462 + $0x3a0] sm:$0xff]
        %v4883 = vld [vmem:[%s462 + $0x3a8] sm:$0xff]
        %v4884 = vld [vmem:[%s462 + $0x3b0] sm:$0xff]
        %v4885 = vld [vmem:[%s462 + $0x3b8] sm:$0xff]
        %v4886 = vld [vmem:[%s462 + $0x3c0] sm:$0xff]
        %v4887 = vld [vmem:[%s462 + $0x3c8] sm:$0xff]
        %v4888 = vld [vmem:[%s462 + $0x3d0] sm:$0xff]
        %v4889 = vld [vmem:[%s462 + $0x3d8] sm:$0xff]
        %v4890 = vld [vmem:[%s462 + $0x3e0] sm:$0xff]
        %v4891 = vld [vmem:[%s462 + $0x3e8] sm:$0xff]
        %v4892 = vld [vmem:[%s462 + $0x3f0] sm:$0xff]
        %v4893 = vld [vmem:[%s462 + $0x3f8] sm:$0xff]
        %v4898 = vunpack.c.l.b16 %v4826
        %v4899 = vunpack.c.l.b16 %v4827
        %v4900 = vunpack.c.l.b16 %v4828
        %v4901 = vunpack.c.l.b16 %v4829
        %v4902 = vrot.slane %v4900, 7
        %vm4903 = vcmask 1041409
        %v4904 = vsel %vm4903, %v4902, %v4898
        %v4905 = vrot.slane %v4901, 7
        %v4906 = vsel %vm4903, %v4905, %v4899
        %v4907 = vpack.c.b16 %v4904, %v4904
        %v4908 = vpack.c.b16 %v4906, %v4906
        %v4975 = vunpack.c.l.b16 %v4830
        %v4976 = vunpack.c.h.b16 %v4830
        %v4977 = vunpack.c.l.b16 %v4831
        %v4978 = vunpack.c.h.b16 %v4831
        %v4979 = vunpack.c.l.b16 %v4832
        %v4980 = vunpack.c.h.b16 %v4832
        %v4981 = vunpack.c.l.b16 %v4833
        %v4982 = vunpack.c.h.b16 %v4833
        %v4983 = vunpack.c.l.b16 %v4834
        %v4984 = vunpack.c.h.b16 %v4834
        %v4985 = vunpack.c.l.b16 %v4835
        %v4986 = vunpack.c.h.b16 %v4835
        %v4987 = vunpack.c.l.b16 %v4836
        %v4988 = vunpack.c.h.b16 %v4836
        %v4989 = vunpack.c.l.b16 %v4837
        %v4990 = vunpack.c.h.b16 %v4837
        %v4991 = vunpack.c.l.b16 %v4838
        %v4992 = vunpack.c.h.b16 %v4838
        %v4993 = vunpack.c.l.b16 %v4839
        %v4994 = vunpack.c.h.b16 %v4839
        %v4995 = vunpack.c.l.b16 %v4840
        %v4996 = vunpack.c.h.b16 %v4840
        %v4997 = vunpack.c.l.b16 %v4841
        %v4998 = vunpack.c.h.b16 %v4841
        %v4999 = vunpack.c.l.b16 %v4842
        %v5000 = vunpack.c.h.b16 %v4842
        %v5001 = vunpack.c.l.b16 %v4843
        %v5002 = vunpack.c.h.b16 %v4843
        %v5003 = vunpack.c.l.b16 %v4844
        %v5004 = vunpack.c.h.b16 %v4844
        %v5005 = vunpack.c.l.b16 %v4845
        %v5006 = vunpack.c.h.b16 %v4845
        %v5007 = vunpack.c.l.b16 %v4846
        %v5008 = vunpack.c.h.b16 %v4846
        %v5009 = vunpack.c.l.b16 %v4847
        %v5010 = vunpack.c.h.b16 %v4847
        %v5011 = vunpack.c.l.b16 %v4848
        %v5012 = vunpack.c.h.b16 %v4848
        %v5013 = vunpack.c.l.b16 %v4849
        %v5014 = vunpack.c.h.b16 %v4849
        %v5015 = vunpack.c.l.b16 %v4850
        %v5016 = vunpack.c.h.b16 %v4850
        %v5017 = vunpack.c.l.b16 %v4851
        %v5018 = vunpack.c.h.b16 %v4851
        %v5019 = vunpack.c.l.b16 %v4852
        %v5020 = vunpack.c.h.b16 %v4852
        %v5021 = vunpack.c.l.b16 %v4853
        %v5022 = vunpack.c.h.b16 %v4853
        %v5023 = vunpack.c.l.b16 %v4854
        %v5024 = vunpack.c.h.b16 %v4854
        %v5025 = vunpack.c.l.b16 %v4855
        %v5026 = vunpack.c.h.b16 %v4855
        %v5027 = vunpack.c.l.b16 %v4856
        %v5028 = vunpack.c.h.b16 %v4856
        %v5029 = vunpack.c.l.b16 %v4857
        %v5030 = vunpack.c.h.b16 %v4857
        %v5031 = vunpack.c.l.b16 %v4858
        %v5032 = vunpack.c.h.b16 %v4858
        %v5033 = vunpack.c.l.b16 %v4859
        %v5034 = vunpack.c.h.b16 %v4859
        %v5035 = vunpack.c.l.b16 %v4860
        %v5036 = vunpack.c.h.b16 %v4860
        %v5037 = vunpack.c.l.b16 %v4861
        %v5038 = vunpack.c.h.b16 %v4861
        %v5039 = vunpack.c.l.b16 %v4862
        %v5040 = vunpack.c.h.b16 %v4862
        %v5041 = vunpack.c.l.b16 %v4863
        %v5042 = vunpack.c.h.b16 %v4863
        %v5043 = vunpack.c.l.b16 %v4864
        %v5044 = vunpack.c.h.b16 %v4864
        %v5045 = vunpack.c.l.b16 %v4865
        %v5046 = vunpack.c.h.b16 %v4865
        %v5047 = vunpack.c.l.b16 %v4866
        %v5048 = vunpack.c.h.b16 %v4866
        %v5049 = vunpack.c.l.b16 %v4867
        %v5050 = vunpack.c.h.b16 %v4867
        %v5051 = vunpack.c.l.b16 %v4868
        %v5052 = vunpack.c.h.b16 %v4868
        %v5053 = vunpack.c.l.b16 %v4869
        %v5054 = vunpack.c.h.b16 %v4869
        %v5055 = vunpack.c.l.b16 %v4870
        %v5056 = vunpack.c.h.b16 %v4870
        %v5057 = vunpack.c.l.b16 %v4871
        %v5058 = vunpack.c.h.b16 %v4871
        %v5059 = vunpack.c.l.b16 %v4872
        %v5060 = vunpack.c.h.b16 %v4872
        %v5061 = vunpack.c.l.b16 %v4873
        %v5062 = vunpack.c.h.b16 %v4873
        %v5063 = vunpack.c.l.b16 %v4874
        %v5064 = vunpack.c.h.b16 %v4874
        %v5065 = vunpack.c.l.b16 %v4875
        %v5066 = vunpack.c.h.b16 %v4875
        %v5067 = vunpack.c.l.b16 %v4876
        %v5068 = vunpack.c.h.b16 %v4876
        %v5069 = vunpack.c.l.b16 %v4877
        %v5070 = vunpack.c.h.b16 %v4877
        %v5071 = vunpack.c.l.b16 %v4878
        %v5072 = vunpack.c.h.b16 %v4878
        %v5073 = vunpack.c.l.b16 %v4879
        %v5074 = vunpack.c.h.b16 %v4879
        %v5075 = vunpack.c.l.b16 %v4880
        %v5076 = vunpack.c.h.b16 %v4880
        %v5077 = vunpack.c.l.b16 %v4881
        %v5078 = vunpack.c.h.b16 %v4881
        %v5079 = vunpack.c.l.b16 %v4882
        %v5080 = vunpack.c.h.b16 %v4882
        %v5081 = vunpack.c.l.b16 %v4883
        %v5082 = vunpack.c.h.b16 %v4883
        %v5083 = vunpack.c.l.b16 %v4884
        %v5084 = vunpack.c.h.b16 %v4884
        %v5085 = vunpack.c.l.b16 %v4885
        %v5086 = vunpack.c.h.b16 %v4885
        %v5087 = vunpack.c.l.b16 %v4886
        %v5088 = vunpack.c.h.b16 %v4886
        %v5089 = vunpack.c.l.b16 %v4887
        %v5090 = vunpack.c.h.b16 %v4887
        %v5091 = vunpack.c.l.b16 %v4888
        %v5092 = vunpack.c.h.b16 %v4888
        %v5093 = vunpack.c.l.b16 %v4889
        %v5094 = vunpack.c.h.b16 %v4889
        %v5095 = vunpack.c.l.b16 %v4890
        %v5096 = vunpack.c.h.b16 %v4890
        %v5097 = vunpack.c.l.b16 %v4891
        %v5098 = vunpack.c.h.b16 %v4891
        %v5099 = vunpack.c.l.b16 %v4892
        %v5100 = vunpack.c.h.b16 %v4892
        %v5101 = vunpack.c.l.b16 %v4893
        %v5102 = vunpack.c.h.b16 %v4893
        %v5103 = vpack.c.b16 %v4979, %v4975
        %v5104 = vpack.c.b16 %v4980, %v4976
        %v5105 = vpack.c.b16 %v4981, %v4977
        %v5106 = vpack.c.b16 %v4982, %v4978
        %v5107 = vpack.c.b16 %v4987, %v4983
        %v5108 = vpack.c.b16 %v4988, %v4984
        %v5109 = vpack.c.b16 %v4989, %v4985
        %v5110 = vpack.c.b16 %v4990, %v4986
        %v5111 = vpack.c.b16 %v4995, %v4991
        %v5112 = vpack.c.b16 %v4996, %v4992
        %v5113 = vpack.c.b16 %v4997, %v4993
        %v5114 = vpack.c.b16 %v4998, %v4994
        %v5115 = vpack.c.b16 %v5003, %v4999
        %v5116 = vpack.c.b16 %v5004, %v5000
        %v5117 = vpack.c.b16 %v5005, %v5001
        %v5118 = vpack.c.b16 %v5006, %v5002
        %v5119 = vpack.c.b16 %v5011, %v5007
        %v5120 = vpack.c.b16 %v5012, %v5008
        %v5121 = vpack.c.b16 %v5013, %v5009
        %v5122 = vpack.c.b16 %v5014, %v5010
        %v5123 = vpack.c.b16 %v5019, %v5015
        %v5124 = vpack.c.b16 %v5020, %v5016
        %v5125 = vpack.c.b16 %v5021, %v5017
        %v5126 = vpack.c.b16 %v5022, %v5018
        %v5127 = vpack.c.b16 %v5027, %v5023
        %v5128 = vpack.c.b16 %v5028, %v5024
        %v5129 = vpack.c.b16 %v5029, %v5025
        %v5130 = vpack.c.b16 %v5030, %v5026
        %v5131 = vpack.c.b16 %v5035, %v5031
        %v5132 = vpack.c.b16 %v5036, %v5032
        %v5133 = vpack.c.b16 %v5037, %v5033
        %v5134 = vpack.c.b16 %v5038, %v5034
        %v5135 = vpack.c.b16 %v5043, %v5039
        %v5136 = vpack.c.b16 %v5044, %v5040
        %v5137 = vpack.c.b16 %v5045, %v5041
        %v5138 = vpack.c.b16 %v5046, %v5042
        %v5139 = vpack.c.b16 %v5051, %v5047
        %v5140 = vpack.c.b16 %v5052, %v5048
        %v5141 = vpack.c.b16 %v5053, %v5049
        %v5142 = vpack.c.b16 %v5054, %v5050
        %v5143 = vpack.c.b16 %v5059, %v5055
        %v5144 = vpack.c.b16 %v5060, %v5056
        %v5145 = vpack.c.b16 %v5061, %v5057
        %v5146 = vpack.c.b16 %v5062, %v5058
        %v5147 = vpack.c.b16 %v5067, %v5063
        %v5148 = vpack.c.b16 %v5068, %v5064
        %v5149 = vpack.c.b16 %v5069, %v5065
        %v5150 = vpack.c.b16 %v5070, %v5066
        %v5151 = vpack.c.b16 %v5075, %v5071
        %v5152 = vpack.c.b16 %v5076, %v5072
        %v5153 = vpack.c.b16 %v5077, %v5073
        %v5154 = vpack.c.b16 %v5078, %v5074
        %v5155 = vpack.c.b16 %v5083, %v5079
        %v5156 = vpack.c.b16 %v5084, %v5080
        %v5157 = vpack.c.b16 %v5085, %v5081
        %v5158 = vpack.c.b16 %v5086, %v5082
        %v5159 = vpack.c.b16 %v5091, %v5087
        %v5160 = vpack.c.b16 %v5092, %v5088
        %v5161 = vpack.c.b16 %v5093, %v5089
        %v5162 = vpack.c.b16 %v5094, %v5090
        %v5163 = vpack.c.b16 %v5099, %v5095
        %v5164 = vpack.c.b16 %v5100, %v5096
        %v5165 = vpack.c.b16 %v5101, %v5097
        %v5166 = vpack.c.b16 %v5102, %v5098
        %5231 = vmatpush.bf16.msra.mxu0 %v5131
        %5232 = vmatpush.bf16.msra.mxu0 %v5127
        %5233 = vmatpush.bf16.msra.mxu0 %v5123
        %5234 = vmatpush.bf16.msra.mxu0 %v5119
        %5235 = vmatpush.bf16.msra.mxu0 %v5115
        %5236 = vmatpush.bf16.msra.mxu0 %v5111
        %5237 = vmatpush.bf16.msra.mxu0 %v5107
        %5238 = vmatpush.bf16.msra.mxu0 %v5103
        %5239 = vmatmul.bf16.gmra.mxu0 %v4907
        %v5240 = vpop.f32.mrf.mxu0
        %v5241 = vadd.f32 0.0, %v5240
        %v5242 = vpop.f32.mrf.mxu0
        %5243 = vdwg.mxu0
        %5244 = vmatpush.bf16.msra.mxu0 %v5163
        %5245 = vmatpush.bf16.msra.mxu0 %v5159
        %5246 = vmatpush.bf16.msra.mxu0 %v5155
        %5247 = vmatpush.bf16.msra.mxu0 %v5151
        %5248 = vmatpush.bf16.msra.mxu0 %v5147
        %5249 = vmatpush.bf16.msra.mxu0 %v5143
        %5250 = vmatpush.bf16.msra.mxu0 %v5139
        %5251 = vmatpush.bf16.msra.mxu0 %v5135
        %5252 = vmatmul.bf16.gmra.mxu0 %v4908
        %v5253 = vpop.f32.mrf.mxu0
        %v5254 = vadd.f32 %v5241, %v5253
        %v5255 = vpop.f32.mrf.mxu0
        %5256 = vdwg.mxu0
        %5257 = vmatpush.bf16.msra.mxu0 %v5132
        %5258 = vmatpush.bf16.msra.mxu0 %v5128
        %5259 = vmatpush.bf16.msra.mxu0 %v5124
        %5260 = vmatpush.bf16.msra.mxu0 %v5120
        %5261 = vmatpush.bf16.msra.mxu0 %v5116
        %5262 = vmatpush.bf16.msra.mxu0 %v5112
        %5263 = vmatpush.bf16.msra.mxu0 %v5108
        %5264 = vmatpush.bf16.msra.mxu0 %v5104
        %5265 = vmatmul.bf16.gmra.mxu0 %v4907
        %v5266 = vpop.f32.mrf.mxu0
        %v5267 = vadd.f32 0.0, %v5266
        %v5268 = vpop.f32.mrf.mxu0
        %5269 = vdwg.mxu0
        %5270 = vmatpush.bf16.msra.mxu0 %v5164
        %5271 = vmatpush.bf16.msra.mxu0 %v5160
        %5272 = vmatpush.bf16.msra.mxu0 %v5156
        %5273 = vmatpush.bf16.msra.mxu0 %v5152
        %5274 = vmatpush.bf16.msra.mxu0 %v5148
        %5275 = vmatpush.bf16.msra.mxu0 %v5144
        %5276 = vmatpush.bf16.msra.mxu0 %v5140
        %5277 = vmatpush.bf16.msra.mxu0 %v5136
        %5278 = vmatmul.bf16.gmra.mxu0 %v4908
        %v5279 = vpop.f32.mrf.mxu0
        %v5280 = vadd.f32 %v5267, %v5279
        %v5281 = vpop.f32.mrf.mxu0
        %5282 = vdwg.mxu0
        %5283 = vmatpush.bf16.msra.mxu0 %v5133
        %5284 = vmatpush.bf16.msra.mxu0 %v5129
        %5285 = vmatpush.bf16.msra.mxu0 %v5125
        %5286 = vmatpush.bf16.msra.mxu0 %v5121
        %5287 = vmatpush.bf16.msra.mxu0 %v5117
        %5288 = vmatpush.bf16.msra.mxu0 %v5113
        %5289 = vmatpush.bf16.msra.mxu0 %v5109
        %5290 = vmatpush.bf16.msra.mxu0 %v5105
        %5291 = vmatmul.bf16.gmra.mxu0 %v4907
        %v5292 = vpop.f32.mrf.mxu0
        %v5293 = vadd.f32 0.0, %v5292
        %v5294 = vpop.f32.mrf.mxu0
        %5295 = vdwg.mxu0
        %5296 = vmatpush.bf16.msra.mxu0 %v5165
        %5297 = vmatpush.bf16.msra.mxu0 %v5161
        %5298 = vmatpush.bf16.msra.mxu0 %v5157
        %5299 = vmatpush.bf16.msra.mxu0 %v5153
        %5300 = vmatpush.bf16.msra.mxu0 %v5149
        %5301 = vmatpush.bf16.msra.mxu0 %v5145
        %5302 = vmatpush.bf16.msra.mxu0 %v5141
        %5303 = vmatpush.bf16.msra.mxu0 %v5137
        %5304 = vmatmul.bf16.gmra.mxu0 %v4908
        %v5305 = vpop.f32.mrf.mxu0
        %v5306 = vadd.f32 %v5293, %v5305
        %v5307 = vpop.f32.mrf.mxu0
        %5308 = vdwg.mxu0
        %5309 = vmatpush.bf16.msra.mxu0 %v5134
        %5310 = vmatpush.bf16.msra.mxu0 %v5130
        %5311 = vmatpush.bf16.msra.mxu0 %v5126
        %5312 = vmatpush.bf16.msra.mxu0 %v5122
        %5313 = vmatpush.bf16.msra.mxu0 %v5118
        %5314 = vmatpush.bf16.msra.mxu0 %v5114
        %5315 = vmatpush.bf16.msra.mxu0 %v5110
        %5316 = vmatpush.bf16.msra.mxu0 %v5106
        %5317 = vmatmul.bf16.gmra.mxu0 %v4907
        %v5318 = vpop.f32.mrf.mxu0
        %v5319 = vadd.f32 0.0, %v5318
        %v5320 = vpop.f32.mrf.mxu0
        %5321 = vdwg.mxu0
        %5322 = vmatpush.bf16.msra.mxu0 %v5166
        %5323 = vmatpush.bf16.msra.mxu0 %v5162
        %5324 = vmatpush.bf16.msra.mxu0 %v5158
        %5325 = vmatpush.bf16.msra.mxu0 %v5154
        %5326 = vmatpush.bf16.msra.mxu0 %v5150
        %5327 = vmatpush.bf16.msra.mxu0 %v5146
        %5328 = vmatpush.bf16.msra.mxu0 %v5142
        %5329 = vmatpush.bf16.msra.mxu0 %v5138
        %5330 = vmatmul.bf16.gmra.mxu0 %v4908
        %v5331 = vpop.f32.mrf.mxu0
        %v5332 = vadd.f32 %v5319, %v5331
        %v5333 = vpop.f32.mrf.mxu0
        %5334 = vdwg.mxu0
        %v5339 = vunpack.c.l.b16 %v4744
        %v5340 = vunpack.c.l.b16 %v4745
        %v5341 = vunpack.c.l.b16 %v4746
        %v5342 = vunpack.c.l.b16 %v4747
        %v5343 = vrot.slane %v5341, 7
        %v5344 = vsel %vm4903, %v5343, %v5339
        %v5345 = vrot.slane %v5342, 7
        %v5346 = vsel %vm4903, %v5345, %v5340
        %v5347 = vpack.c.b16 %v5344, %v5344
        %v5348 = vpack.c.b16 %v5346, %v5346
        %v5415 = vunpack.c.l.b16 %v4748
        %v5416 = vunpack.c.h.b16 %v4748
        %v5417 = vunpack.c.l.b16 %v4749
        %v5418 = vunpack.c.h.b16 %v4749
        %v5419 = vunpack.c.l.b16 %v4750
        %v5420 = vunpack.c.h.b16 %v4750
        %v5421 = vunpack.c.l.b16 %v4751
        %v5422 = vunpack.c.h.b16 %v4751
        %v5423 = vunpack.c.l.b16 %v4752
        %v5424 = vunpack.c.h.b16 %v4752
        %v5425 = vunpack.c.l.b16 %v4753
        %v5426 = vunpack.c.h.b16 %v4753
        %v5427 = vunpack.c.l.b16 %v4754
        %v5428 = vunpack.c.h.b16 %v4754
        %v5429 = vunpack.c.l.b16 %v4755
        %v5430 = vunpack.c.h.b16 %v4755
        %v5431 = vunpack.c.l.b16 %v4756
        %v5432 = vunpack.c.h.b16 %v4756
        %v5433 = vunpack.c.l.b16 %v4757
        %v5434 = vunpack.c.h.b16 %v4757
        %v5435 = vunpack.c.l.b16 %v4758
        %v5436 = vunpack.c.h.b16 %v4758
        %v5437 = vunpack.c.l.b16 %v4759
        %v5438 = vunpack.c.h.b16 %v4759
        %v5439 = vunpack.c.l.b16 %v4760
        %v5440 = vunpack.c.h.b16 %v4760
        %v5441 = vunpack.c.l.b16 %v4761
        %v5442 = vunpack.c.h.b16 %v4761
        %v5443 = vunpack.c.l.b16 %v4762
        %v5444 = vunpack.c.h.b16 %v4762
        %v5445 = vunpack.c.l.b16 %v4763
        %v5446 = vunpack.c.h.b16 %v4763
        %v5447 = vunpack.c.l.b16 %v4764
        %v5448 = vunpack.c.h.b16 %v4764
        %v5449 = vunpack.c.l.b16 %v4765
        %v5450 = vunpack.c.h.b16 %v4765
        %v5451 = vunpack.c.l.b16 %v4766
        %v5452 = vunpack.c.h.b16 %v4766
        %v5453 = vunpack.c.l.b16 %v4767
        %v5454 = vunpack.c.h.b16 %v4767
        %v5455 = vunpack.c.l.b16 %v4768
        %v5456 = vunpack.c.h.b16 %v4768
        %v5457 = vunpack.c.l.b16 %v4769
        %v5458 = vunpack.c.h.b16 %v4769
        %v5459 = vunpack.c.l.b16 %v4770
        %v5460 = vunpack.c.h.b16 %v4770
        %v5461 = vunpack.c.l.b16 %v4771
        %v5462 = vunpack.c.h.b16 %v4771
        %v5463 = vunpack.c.l.b16 %v4772
        %v5464 = vunpack.c.h.b16 %v4772
        %v5465 = vunpack.c.l.b16 %v4773
        %v5466 = vunpack.c.h.b16 %v4773
        %v5467 = vunpack.c.l.b16 %v4774
        %v5468 = vunpack.c.h.b16 %v4774
        %v5469 = vunpack.c.l.b16 %v4775
        %v5470 = vunpack.c.h.b16 %v4775
        %v5471 = vunpack.c.l.b16 %v4776
        %v5472 = vunpack.c.h.b16 %v4776
        %v5473 = vunpack.c.l.b16 %v4777
        %v5474 = vunpack.c.h.b16 %v4777
        %v5475 = vunpack.c.l.b16 %v4778
        %v5476 = vunpack.c.h.b16 %v4778
        %v5477 = vunpack.c.l.b16 %v4779
        %v5478 = vunpack.c.h.b16 %v4779
        %v5479 = vunpack.c.l.b16 %v4780
        %v5480 = vunpack.c.h.b16 %v4780
        %v5481 = vunpack.c.l.b16 %v4781
        %v5482 = vunpack.c.h.b16 %v4781
        %v5483 = vunpack.c.l.b16 %v4782
        %v5484 = vunpack.c.h.b16 %v4782
        %v5485 = vunpack.c.l.b16 %v4783
        %v5486 = vunpack.c.h.b16 %v4783
        %v5487 = vunpack.c.l.b16 %v4784
        %v5488 = vunpack.c.h.b16 %v4784
        %v5489 = vunpack.c.l.b16 %v4785
        %v5490 = vunpack.c.h.b16 %v4785
        %v5491 = vunpack.c.l.b16 %v4786
        %v5492 = vunpack.c.h.b16 %v4786
        %v5493 = vunpack.c.l.b16 %v4787
        %v5494 = vunpack.c.h.b16 %v4787
        %v5495 = vunpack.c.l.b16 %v4788
        %v5496 = vunpack.c.h.b16 %v4788
        %v5497 = vunpack.c.l.b16 %v4789
        %v5498 = vunpack.c.h.b16 %v4789
        %v5499 = vunpack.c.l.b16 %v4790
        %v5500 = vunpack.c.h.b16 %v4790
        %v5501 = vunpack.c.l.b16 %v4791
        %v5502 = vunpack.c.h.b16 %v4791
        %v5503 = vunpack.c.l.b16 %v4792
        %v5504 = vunpack.c.h.b16 %v4792
        %v5505 = vunpack.c.l.b16 %v4793
        %v5506 = vunpack.c.h.b16 %v4793
        %v5507 = vunpack.c.l.b16 %v4794
        %v5508 = vunpack.c.h.b16 %v4794
        %v5509 = vunpack.c.l.b16 %v4795
        %v5510 = vunpack.c.h.b16 %v4795
        %v5511 = vunpack.c.l.b16 %v4796
        %v5512 = vunpack.c.h.b16 %v4796
        %v5513 = vunpack.c.l.b16 %v4797
        %v5514 = vunpack.c.h.b16 %v4797
        %v5515 = vunpack.c.l.b16 %v4798
        %v5516 = vunpack.c.h.b16 %v4798
        %v5517 = vunpack.c.l.b16 %v4799
        %v5518 = vunpack.c.h.b16 %v4799
        %v5519 = vunpack.c.l.b16 %v4800
        %v5520 = vunpack.c.h.b16 %v4800
        %v5521 = vunpack.c.l.b16 %v4801
        %v5522 = vunpack.c.h.b16 %v4801
        %v5523 = vunpack.c.l.b16 %v4802
        %v5524 = vunpack.c.h.b16 %v4802
        %v5525 = vunpack.c.l.b16 %v4803
        %v5526 = vunpack.c.h.b16 %v4803
        %v5527 = vunpack.c.l.b16 %v4804
        %v5528 = vunpack.c.h.b16 %v4804
        %v5529 = vunpack.c.l.b16 %v4805
        %v5530 = vunpack.c.h.b16 %v4805
        %v5531 = vunpack.c.l.b16 %v4806
        %v5532 = vunpack.c.h.b16 %v4806
        %v5533 = vunpack.c.l.b16 %v4807
        %v5534 = vunpack.c.h.b16 %v4807
        %v5535 = vunpack.c.l.b16 %v4808
        %v5536 = vunpack.c.h.b16 %v4808
        %v5537 = vunpack.c.l.b16 %v4809
        %v5538 = vunpack.c.h.b16 %v4809
        %v5539 = vunpack.c.l.b16 %v4810
        %v5540 = vunpack.c.h.b16 %v4810
        %v5541 = vunpack.c.l.b16 %v4811
        %v5542 = vunpack.c.h.b16 %v4811
        %v5543 = vpack.c.b16 %v5419, %v5415
        %v5544 = vpack.c.b16 %v5420, %v5416
        %v5545 = vpack.c.b16 %v5421, %v5417
        %v5546 = vpack.c.b16 %v5422, %v5418
        %v5547 = vpack.c.b16 %v5427, %v5423
        %v5548 = vpack.c.b16 %v5428, %v5424
        %v5549 = vpack.c.b16 %v5429, %v5425
        %v5550 = vpack.c.b16 %v5430, %v5426
        %v5551 = vpack.c.b16 %v5435, %v5431
        %v5552 = vpack.c.b16 %v5436, %v5432
        %v5553 = vpack.c.b16 %v5437, %v5433
        %v5554 = vpack.c.b16 %v5438, %v5434
        %v5555 = vpack.c.b16 %v5443, %v5439
        %v5556 = vpack.c.b16 %v5444, %v5440
        %v5557 = vpack.c.b16 %v5445, %v5441
        %v5558 = vpack.c.b16 %v5446, %v5442
        %v5559 = vpack.c.b16 %v5451, %v5447
        %v5560 = vpack.c.b16 %v5452, %v5448
        %v5561 = vpack.c.b16 %v5453, %v5449
        %v5562 = vpack.c.b16 %v5454, %v5450
        %v5563 = vpack.c.b16 %v5459, %v5455
        %v5564 = vpack.c.b16 %v5460, %v5456
        %v5565 = vpack.c.b16 %v5461, %v5457
        %v5566 = vpack.c.b16 %v5462, %v5458
        %v5567 = vpack.c.b16 %v5467, %v5463
        %v5568 = vpack.c.b16 %v5468, %v5464
        %v5569 = vpack.c.b16 %v5469, %v5465
        %v5570 = vpack.c.b16 %v5470, %v5466
        %v5571 = vpack.c.b16 %v5475, %v5471
        %v5572 = vpack.c.b16 %v5476, %v5472
        %v5573 = vpack.c.b16 %v5477, %v5473
        %v5574 = vpack.c.b16 %v5478, %v5474
        %v5575 = vpack.c.b16 %v5483, %v5479
        %v5576 = vpack.c.b16 %v5484, %v5480
        %v5577 = vpack.c.b16 %v5485, %v5481
        %v5578 = vpack.c.b16 %v5486, %v5482
        %v5579 = vpack.c.b16 %v5491, %v5487
        %v5580 = vpack.c.b16 %v5492, %v5488
        %v5581 = vpack.c.b16 %v5493, %v5489
        %v5582 = vpack.c.b16 %v5494, %v5490
        %v5583 = vpack.c.b16 %v5499, %v5495
        %v5584 = vpack.c.b16 %v5500, %v5496
        %v5585 = vpack.c.b16 %v5501, %v5497
        %v5586 = vpack.c.b16 %v5502, %v5498
        %v5587 = vpack.c.b16 %v5507, %v5503
        %v5588 = vpack.c.b16 %v5508, %v5504
        %v5589 = vpack.c.b16 %v5509, %v5505
        %v5590 = vpack.c.b16 %v5510, %v5506
        %v5591 = vpack.c.b16 %v5515, %v5511
        %v5592 = vpack.c.b16 %v5516, %v5512
        %v5593 = vpack.c.b16 %v5517, %v5513
        %v5594 = vpack.c.b16 %v5518, %v5514
        %v5595 = vpack.c.b16 %v5523, %v5519
        %v5596 = vpack.c.b16 %v5524, %v5520
        %v5597 = vpack.c.b16 %v5525, %v5521
        %v5598 = vpack.c.b16 %v5526, %v5522
        %v5599 = vpack.c.b16 %v5531, %v5527
        %v5600 = vpack.c.b16 %v5532, %v5528
        %v5601 = vpack.c.b16 %v5533, %v5529
        %v5602 = vpack.c.b16 %v5534, %v5530
        %v5603 = vpack.c.b16 %v5539, %v5535
        %v5604 = vpack.c.b16 %v5540, %v5536
        %v5605 = vpack.c.b16 %v5541, %v5537
        %v5606 = vpack.c.b16 %v5542, %v5538
        %5671 = vmatpush.bf16.msra.mxu0 %v5571
        %5672 = vmatpush.bf16.msra.mxu0 %v5567
        %5673 = vmatpush.bf16.msra.mxu0 %v5563
        %5674 = vmatpush.bf16.msra.mxu0 %v5559
        %5675 = vmatpush.bf16.msra.mxu0 %v5555
        %5676 = vmatpush.bf16.msra.mxu0 %v5551
        %5677 = vmatpush.bf16.msra.mxu0 %v5547
        %5678 = vmatpush.bf16.msra.mxu0 %v5543
        %5679 = vmatmul.bf16.gmra.mxu0 %v5347
        %v5680 = vpop.f32.mrf.mxu0
        %v5681 = vadd.f32 %v5254, %v5680
        %v5682 = vpop.f32.mrf.mxu0
        %5683 = vdwg.mxu0
        %5684 = vmatpush.bf16.msra.mxu0 %v5603
        %5685 = vmatpush.bf16.msra.mxu0 %v5599
        %5686 = vmatpush.bf16.msra.mxu0 %v5595
        %5687 = vmatpush.bf16.msra.mxu0 %v5591
        %5688 = vmatpush.bf16.msra.mxu0 %v5587
        %5689 = vmatpush.bf16.msra.mxu0 %v5583
        %5690 = vmatpush.bf16.msra.mxu0 %v5579
        %5691 = vmatpush.bf16.msra.mxu0 %v5575
        %5692 = vmatmul.bf16.gmra.mxu0 %v5348
        %v5693 = vpop.f32.mrf.mxu0
        %v5694 = vadd.f32 %v5681, %v5693
        %v5695 = vpop.f32.mrf.mxu0
        %5696 = vdwg.mxu0
        %5697 = vmatpush.bf16.msra.mxu0 %v5572
        %5698 = vmatpush.bf16.msra.mxu0 %v5568
        %5699 = vmatpush.bf16.msra.mxu0 %v5564
        %5700 = vmatpush.bf16.msra.mxu0 %v5560
        %5701 = vmatpush.bf16.msra.mxu0 %v5556
        %5702 = vmatpush.bf16.msra.mxu0 %v5552
        %5703 = vmatpush.bf16.msra.mxu0 %v5548
        %5704 = vmatpush.bf16.msra.mxu0 %v5544
        %5705 = vmatmul.bf16.gmra.mxu0 %v5347
        %v5706 = vpop.f32.mrf.mxu0
        %v5707 = vadd.f32 %v5280, %v5706
        %v5708 = vpop.f32.mrf.mxu0
        %5709 = vdwg.mxu0
        %5710 = vmatpush.bf16.msra.mxu0 %v5604
        %5711 = vmatpush.bf16.msra.mxu0 %v5600
        %5712 = vmatpush.bf16.msra.mxu0 %v5596
        %5713 = vmatpush.bf16.msra.mxu0 %v5592
        %5714 = vmatpush.bf16.msra.mxu0 %v5588
        %5715 = vmatpush.bf16.msra.mxu0 %v5584
        %5716 = vmatpush.bf16.msra.mxu0 %v5580
        %5717 = vmatpush.bf16.msra.mxu0 %v5576
        %5718 = vmatmul.bf16.gmra.mxu0 %v5348
        %v5719 = vpop.f32.mrf.mxu0
        %v5720 = vadd.f32 %v5707, %v5719
        %v5721 = vpop.f32.mrf.mxu0
        %5722 = vdwg.mxu0
        %5723 = vmatpush.bf16.msra.mxu0 %v5573
        %5724 = vmatpush.bf16.msra.mxu0 %v5569
        %5725 = vmatpush.bf16.msra.mxu0 %v5565
        %5726 = vmatpush.bf16.msra.mxu0 %v5561
        %5727 = vmatpush.bf16.msra.mxu0 %v5557
        %5728 = vmatpush.bf16.msra.mxu0 %v5553
        %5729 = vmatpush.bf16.msra.mxu0 %v5549
        %5730 = vmatpush.bf16.msra.mxu0 %v5545
        %5731 = vmatmul.bf16.gmra.mxu0 %v5347
        %v5732 = vpop.f32.mrf.mxu0
        %v5733 = vadd.f32 %v5306, %v5732
        %v5734 = vpop.f32.mrf.mxu0
        %5735 = vdwg.mxu0
        %5736 = vmatpush.bf16.msra.mxu0 %v5605
        %5737 = vmatpush.bf16.msra.mxu0 %v5601
        %5738 = vmatpush.bf16.msra.mxu0 %v5597
        %5739 = vmatpush.bf16.msra.mxu0 %v5593
        %5740 = vmatpush.bf16.msra.mxu0 %v5589
        %5741 = vmatpush.bf16.msra.mxu0 %v5585
        %5742 = vmatpush.bf16.msra.mxu0 %v5581
        %5743 = vmatpush.bf16.msra.mxu0 %v5577
        %5744 = vmatmul.bf16.gmra.mxu0 %v5348
        %v5745 = vpop.f32.mrf.mxu0
        %v5746 = vadd.f32 %v5733, %v5745
        %v5747 = vpop.f32.mrf.mxu0
        %5748 = vdwg.mxu0
        %5749 = vmatpush.bf16.msra.mxu0 %v5574
        %5750 = vmatpush.bf16.msra.mxu0 %v5570
        %5751 = vmatpush.bf16.msra.mxu0 %v5566
        %5752 = vmatpush.bf16.msra.mxu0 %v5562
        %5753 = vmatpush.bf16.msra.mxu0 %v5558
        %5754 = vmatpush.bf16.msra.mxu0 %v5554
        %5755 = vmatpush.bf16.msra.mxu0 %v5550
        %5756 = vmatpush.bf16.msra.mxu0 %v5546
        %5757 = vmatmul.bf16.gmra.mxu0 %v5347
        %v5758 = vpop.f32.mrf.mxu0
        %v5759 = vadd.f32 %v5332, %v5758
        %v5760 = vpop.f32.mrf.mxu0
        %5761 = vdwg.mxu0
        %5762 = vmatpush.bf16.msra.mxu0 %v5606
        %5763 = vmatpush.bf16.msra.mxu0 %v5602
        %5764 = vmatpush.bf16.msra.mxu0 %v5598
        %5765 = vmatpush.bf16.msra.mxu0 %v5594
        %5766 = vmatpush.bf16.msra.mxu0 %v5590
        %5767 = vmatpush.bf16.msra.mxu0 %v5586
        %5768 = vmatpush.bf16.msra.mxu0 %v5582
        %5769 = vmatpush.bf16.msra.mxu0 %v5578
        %5770 = vmatmul.bf16.gmra.mxu0 %v5348
        %v5771 = vpop.f32.mrf.mxu0
        %v5772 = vadd.f32 %v5759, %v5771
        %v5773 = vpop.f32.mrf.mxu0
        %5774 = vdwg.mxu0
        %s5775 = scalar_lea.vmem [#allocation2], 2
        %v5776 = vld [vmem:[%s5775] ss:$4 sm:$0x3]
        %s5777 = scalar_lea.vmem [#allocation2], 10
        %v5778 = vld [vmem:[%s5777] ss:$4 sm:$0x3]
        %v5781 = vperm.slane %v5776, 0
        %v5782 = vperm.slane %v5776, 1
        %v5783 = vperm.slane %v5778, 0
        %v5784 = vperm.slane %v5778, 1
        %v5789 = vpack.c.bf16 %v5781, %v5781
        %v5790 = vpack.c.bf16 %v5782, %v5782
        %v5791 = vpack.c.bf16 %v5783, %v5783
        %v5792 = vpack.c.bf16 %v5784, %v5784
        %v5793 = vld [vmem:[%s462 + $0x400] sm:$0xff]
        %v5794 = vld [vmem:[%s462 + $0x408] sm:$0xff]
        %v5795 = vld [vmem:[%s462 + $0x410] sm:$0xff]
        %v5796 = vld [vmem:[%s462 + $0x418] sm:$0xff]
        %v5797 = vld [vmem:[%s462 + $0x420] sm:$0xff]
        %v5798 = vld [vmem:[%s462 + $0x428] sm:$0xff]
        %v5799 = vld [vmem:[%s462 + $0x430] sm:$0xff]
        %v5800 = vld [vmem:[%s462 + $0x438] sm:$0xff]
        %v5801 = vld [vmem:[%s462 + $0x440] sm:$0xff]
        %v5802 = vld [vmem:[%s462 + $0x448] sm:$0xff]
        %v5803 = vld [vmem:[%s462 + $0x450] sm:$0xff]
        %v5804 = vld [vmem:[%s462 + $0x458] sm:$0xff]
        %v5805 = vld [vmem:[%s462 + $0x460] sm:$0xff]
        %v5806 = vld [vmem:[%s462 + $0x468] sm:$0xff]
        %v5807 = vld [vmem:[%s462 + $0x470] sm:$0xff]
        %v5808 = vld [vmem:[%s462 + $0x478] sm:$0xff]
        %v5809 = vld [vmem:[%s462 + $0x480] sm:$0xff]
        %v5810 = vld [vmem:[%s462 + $0x488] sm:$0xff]
        %v5811 = vld [vmem:[%s462 + $0x490] sm:$0xff]
        %v5812 = vld [vmem:[%s462 + $0x498] sm:$0xff]
        %v5813 = vld [vmem:[%s462 + $0x4a0] sm:$0xff]
        %v5814 = vld [vmem:[%s462 + $0x4a8] sm:$0xff]
        %v5815 = vld [vmem:[%s462 + $0x4b0] sm:$0xff]
        %v5816 = vld [vmem:[%s462 + $0x4b8] sm:$0xff]
        %v5817 = vld [vmem:[%s462 + $0x4c0] sm:$0xff]
        %v5818 = vld [vmem:[%s462 + $0x4c8] sm:$0xff]
        %v5819 = vld [vmem:[%s462 + $0x4d0] sm:$0xff]
        %v5820 = vld [vmem:[%s462 + $0x4d8] sm:$0xff]
        %v5821 = vld [vmem:[%s462 + $0x4e0] sm:$0xff]
        %v5822 = vld [vmem:[%s462 + $0x4e8] sm:$0xff]
        %v5823 = vld [vmem:[%s462 + $0x4f0] sm:$0xff]
        %v5824 = vld [vmem:[%s462 + $0x4f8] sm:$0xff]
        %v5825 = vld [vmem:[%s462 + $0x500] sm:$0xff]
        %v5826 = vld [vmem:[%s462 + $0x508] sm:$0xff]
        %v5827 = vld [vmem:[%s462 + $0x510] sm:$0xff]
        %v5828 = vld [vmem:[%s462 + $0x518] sm:$0xff]
        %v5829 = vld [vmem:[%s462 + $0x520] sm:$0xff]
        %v5830 = vld [vmem:[%s462 + $0x528] sm:$0xff]
        %v5831 = vld [vmem:[%s462 + $0x530] sm:$0xff]
        %v5832 = vld [vmem:[%s462 + $0x538] sm:$0xff]
        %v5833 = vld [vmem:[%s462 + $0x540] sm:$0xff]
        %v5834 = vld [vmem:[%s462 + $0x548] sm:$0xff]
        %v5835 = vld [vmem:[%s462 + $0x550] sm:$0xff]
        %v5836 = vld [vmem:[%s462 + $0x558] sm:$0xff]
        %v5837 = vld [vmem:[%s462 + $0x560] sm:$0xff]
        %v5838 = vld [vmem:[%s462 + $0x568] sm:$0xff]
        %v5839 = vld [vmem:[%s462 + $0x570] sm:$0xff]
        %v5840 = vld [vmem:[%s462 + $0x578] sm:$0xff]
        %v5841 = vld [vmem:[%s462 + $0x580] sm:$0xff]
        %v5842 = vld [vmem:[%s462 + $0x588] sm:$0xff]
        %v5843 = vld [vmem:[%s462 + $0x590] sm:$0xff]
        %v5844 = vld [vmem:[%s462 + $0x598] sm:$0xff]
        %v5845 = vld [vmem:[%s462 + $0x5a0] sm:$0xff]
        %v5846 = vld [vmem:[%s462 + $0x5a8] sm:$0xff]
        %v5847 = vld [vmem:[%s462 + $0x5b0] sm:$0xff]
        %v5848 = vld [vmem:[%s462 + $0x5b8] sm:$0xff]
        %v5849 = vld [vmem:[%s462 + $0x5c0] sm:$0xff]
        %v5850 = vld [vmem:[%s462 + $0x5c8] sm:$0xff]
        %v5851 = vld [vmem:[%s462 + $0x5d0] sm:$0xff]
        %v5852 = vld [vmem:[%s462 + $0x5d8] sm:$0xff]
        %v5853 = vld [vmem:[%s462 + $0x5e0] sm:$0xff]
        %v5854 = vld [vmem:[%s462 + $0x5e8] sm:$0xff]
        %v5855 = vld [vmem:[%s462 + $0x5f0] sm:$0xff]
        %v5856 = vld [vmem:[%s462 + $0x5f8] sm:$0xff]
        %v5861 = vunpack.c.l.b16 %v5789
        %v5862 = vunpack.c.l.b16 %v5790
        %v5863 = vunpack.c.l.b16 %v5791
        %v5864 = vunpack.c.l.b16 %v5792
        %v5865 = vrot.slane %v5863, 7
        %v5866 = vsel %vm4903, %v5865, %v5861
        %v5867 = vrot.slane %v5864, 7
        %v5868 = vsel %vm4903, %v5867, %v5862
        %v5869 = vpack.c.b16 %v5866, %v5866
        %v5870 = vpack.c.b16 %v5868, %v5868
        %v5937 = vunpack.c.l.b16 %v5793
        %v5938 = vunpack.c.h.b16 %v5793
        %v5939 = vunpack.c.l.b16 %v5794
        %v5940 = vunpack.c.h.b16 %v5794
        %v5941 = vunpack.c.l.b16 %v5795
        %v5942 = vunpack.c.h.b16 %v5795
        %v5943 = vunpack.c.l.b16 %v5796
        %v5944 = vunpack.c.h.b16 %v5796
        %v5945 = vunpack.c.l.b16 %v5797
        %v5946 = vunpack.c.h.b16 %v5797
        %v5947 = vunpack.c.l.b16 %v5798
        %v5948 = vunpack.c.h.b16 %v5798
        %v5949 = vunpack.c.l.b16 %v5799
        %v5950 = vunpack.c.h.b16 %v5799
        %v5951 = vunpack.c.l.b16 %v5800
        %v5952 = vunpack.c.h.b16 %v5800
        %v5953 = vunpack.c.l.b16 %v5801
        %v5954 = vunpack.c.h.b16 %v5801
        %v5955 = vunpack.c.l.b16 %v5802
        %v5956 = vunpack.c.h.b16 %v5802
        %v5957 = vunpack.c.l.b16 %v5803
        %v5958 = vunpack.c.h.b16 %v5803
        %v5959 = vunpack.c.l.b16 %v5804
        %v5960 = vunpack.c.h.b16 %v5804
        %v5961 = vunpack.c.l.b16 %v5805
        %v5962 = vunpack.c.h.b16 %v5805
        %v5963 = vunpack.c.l.b16 %v5806
        %v5964 = vunpack.c.h.b16 %v5806
        %v5965 = vunpack.c.l.b16 %v5807
        %v5966 = vunpack.c.h.b16 %v5807
        %v5967 = vunpack.c.l.b16 %v5808
        %v5968 = vunpack.c.h.b16 %v5808
        %v5969 = vunpack.c.l.b16 %v5809
        %v5970 = vunpack.c.h.b16 %v5809
        %v5971 = vunpack.c.l.b16 %v5810
        %v5972 = vunpack.c.h.b16 %v5810
        %v5973 = vunpack.c.l.b16 %v5811
        %v5974 = vunpack.c.h.b16 %v5811
        %v5975 = vunpack.c.l.b16 %v5812
        %v5976 = vunpack.c.h.b16 %v5812
        %v5977 = vunpack.c.l.b16 %v5813
        %v5978 = vunpack.c.h.b16 %v5813
        %v5979 = vunpack.c.l.b16 %v5814
        %v5980 = vunpack.c.h.b16 %v5814
        %v5981 = vunpack.c.l.b16 %v5815
        %v5982 = vunpack.c.h.b16 %v5815
        %v5983 = vunpack.c.l.b16 %v5816
        %v5984 = vunpack.c.h.b16 %v5816
        %v5985 = vunpack.c.l.b16 %v5817
        %v5986 = vunpack.c.h.b16 %v5817
        %v5987 = vunpack.c.l.b16 %v5818
        %v5988 = vunpack.c.h.b16 %v5818
        %v5989 = vunpack.c.l.b16 %v5819
        %v5990 = vunpack.c.h.b16 %v5819
        %v5991 = vunpack.c.l.b16 %v5820
        %v5992 = vunpack.c.h.b16 %v5820
        %v5993 = vunpack.c.l.b16 %v5821
        %v5994 = vunpack.c.h.b16 %v5821
        %v5995 = vunpack.c.l.b16 %v5822
        %v5996 = vunpack.c.h.b16 %v5822
        %v5997 = vunpack.c.l.b16 %v5823
        %v5998 = vunpack.c.h.b16 %v5823
        %v5999 = vunpack.c.l.b16 %v5824
        %v6000 = vunpack.c.h.b16 %v5824
        %v6001 = vunpack.c.l.b16 %v5825
        %v6002 = vunpack.c.h.b16 %v5825
        %v6003 = vunpack.c.l.b16 %v5826
        %v6004 = vunpack.c.h.b16 %v5826
        %v6005 = vunpack.c.l.b16 %v5827
        %v6006 = vunpack.c.h.b16 %v5827
        %v6007 = vunpack.c.l.b16 %v5828
        %v6008 = vunpack.c.h.b16 %v5828
        %v6009 = vunpack.c.l.b16 %v5829
        %v6010 = vunpack.c.h.b16 %v5829
        %v6011 = vunpack.c.l.b16 %v5830
        %v6012 = vunpack.c.h.b16 %v5830
        %v6013 = vunpack.c.l.b16 %v5831
        %v6014 = vunpack.c.h.b16 %v5831
        %v6015 = vunpack.c.l.b16 %v5832
        %v6016 = vunpack.c.h.b16 %v5832
        %v6017 = vunpack.c.l.b16 %v5833
        %v6018 = vunpack.c.h.b16 %v5833
        %v6019 = vunpack.c.l.b16 %v5834
        %v6020 = vunpack.c.h.b16 %v5834
        %v6021 = vunpack.c.l.b16 %v5835
        %v6022 = vunpack.c.h.b16 %v5835
        %v6023 = vunpack.c.l.b16 %v5836
        %v6024 = vunpack.c.h.b16 %v5836
        %v6025 = vunpack.c.l.b16 %v5837
        %v6026 = vunpack.c.h.b16 %v5837
        %v6027 = vunpack.c.l.b16 %v5838
        %v6028 = vunpack.c.h.b16 %v5838
        %v6029 = vunpack.c.l.b16 %v5839
        %v6030 = vunpack.c.h.b16 %v5839
        %v6031 = vunpack.c.l.b16 %v5840
        %v6032 = vunpack.c.h.b16 %v5840
        %v6033 = vunpack.c.l.b16 %v5841
        %v6034 = vunpack.c.h.b16 %v5841
        %v6035 = vunpack.c.l.b16 %v5842
        %v6036 = vunpack.c.h.b16 %v5842
        %v6037 = vunpack.c.l.b16 %v5843
        %v6038 = vunpack.c.h.b16 %v5843
        %v6039 = vunpack.c.l.b16 %v5844
        %v6040 = vunpack.c.h.b16 %v5844
        %v6041 = vunpack.c.l.b16 %v5845
        %v6042 = vunpack.c.h.b16 %v5845
        %v6043 = vunpack.c.l.b16 %v5846
        %v6044 = vunpack.c.h.b16 %v5846
        %v6045 = vunpack.c.l.b16 %v5847
        %v6046 = vunpack.c.h.b16 %v5847
        %v6047 = vunpack.c.l.b16 %v5848
        %v6048 = vunpack.c.h.b16 %v5848
        %v6049 = vunpack.c.l.b16 %v5849
        %v6050 = vunpack.c.h.b16 %v5849
        %v6051 = vunpack.c.l.b16 %v5850
        %v6052 = vunpack.c.h.b16 %v5850
        %v6053 = vunpack.c.l.b16 %v5851
        %v6054 = vunpack.c.h.b16 %v5851
        %v6055 = vunpack.c.l.b16 %v5852
        %v6056 = vunpack.c.h.b16 %v5852
        %v6057 = vunpack.c.l.b16 %v5853
        %v6058 = vunpack.c.h.b16 %v5853
        %v6059 = vunpack.c.l.b16 %v5854
        %v6060 = vunpack.c.h.b16 %v5854
        %v6061 = vunpack.c.l.b16 %v5855
        %v6062 = vunpack.c.h.b16 %v5855
        %v6063 = vunpack.c.l.b16 %v5856
        %v6064 = vunpack.c.h.b16 %v5856
        %v6065 = vpack.c.b16 %v5941, %v5937
        %v6066 = vpack.c.b16 %v5942, %v5938
        %v6067 = vpack.c.b16 %v5943, %v5939
        %v6068 = vpack.c.b16 %v5944, %v5940
        %v6069 = vpack.c.b16 %v5949, %v5945
        %v6070 = vpack.c.b16 %v5950, %v5946
        %v6071 = vpack.c.b16 %v5951, %v5947
        %v6072 = vpack.c.b16 %v5952, %v5948
        %v6073 = vpack.c.b16 %v5957, %v5953
        %v6074 = vpack.c.b16 %v5958, %v5954
        %v6075 = vpack.c.b16 %v5959, %v5955
        %v6076 = vpack.c.b16 %v5960, %v5956
        %v6077 = vpack.c.b16 %v5965, %v5961
        %v6078 = vpack.c.b16 %v5966, %v5962
        %v6079 = vpack.c.b16 %v5967, %v5963
        %v6080 = vpack.c.b16 %v5968, %v5964
        %v6081 = vpack.c.b16 %v5973, %v5969
        %v6082 = vpack.c.b16 %v5974, %v5970
        %v6083 = vpack.c.b16 %v5975, %v5971
        %v6084 = vpack.c.b16 %v5976, %v5972
        %v6085 = vpack.c.b16 %v5981, %v5977
        %v6086 = vpack.c.b16 %v5982, %v5978
        %v6087 = vpack.c.b16 %v5983, %v5979
        %v6088 = vpack.c.b16 %v5984, %v5980
        %v6089 = vpack.c.b16 %v5989, %v5985
        %v6090 = vpack.c.b16 %v5990, %v5986
        %v6091 = vpack.c.b16 %v5991, %v5987
        %v6092 = vpack.c.b16 %v5992, %v5988
        %v6093 = vpack.c.b16 %v5997, %v5993
        %v6094 = vpack.c.b16 %v5998, %v5994
        %v6095 = vpack.c.b16 %v5999, %v5995
        %v6096 = vpack.c.b16 %v6000, %v5996
        %v6097 = vpack.c.b16 %v6005, %v6001
        %v6098 = vpack.c.b16 %v6006, %v6002
        %v6099 = vpack.c.b16 %v6007, %v6003
        %v6100 = vpack.c.b16 %v6008, %v6004
        %v6101 = vpack.c.b16 %v6013, %v6009
        %v6102 = vpack.c.b16 %v6014, %v6010
        %v6103 = vpack.c.b16 %v6015, %v6011
        %v6104 = vpack.c.b16 %v6016, %v6012
        %v6105 = vpack.c.b16 %v6021, %v6017
        %v6106 = vpack.c.b16 %v6022, %v6018
        %v6107 = vpack.c.b16 %v6023, %v6019
        %v6108 = vpack.c.b16 %v6024, %v6020
        %v6109 = vpack.c.b16 %v6029, %v6025
        %v6110 = vpack.c.b16 %v6030, %v6026
        %v6111 = vpack.c.b16 %v6031, %v6027
        %v6112 = vpack.c.b16 %v6032, %v6028
        %v6113 = vpack.c.b16 %v6037, %v6033
        %v6114 = vpack.c.b16 %v6038, %v6034
        %v6115 = vpack.c.b16 %v6039, %v6035
        %v6116 = vpack.c.b16 %v6040, %v6036
        %v6117 = vpack.c.b16 %v6045, %v6041
        %v6118 = vpack.c.b16 %v6046, %v6042
        %v6119 = vpack.c.b16 %v6047, %v6043
        %v6120 = vpack.c.b16 %v6048, %v6044
        %v6121 = vpack.c.b16 %v6053, %v6049
        %v6122 = vpack.c.b16 %v6054, %v6050
        %v6123 = vpack.c.b16 %v6055, %v6051
        %v6124 = vpack.c.b16 %v6056, %v6052
        %v6125 = vpack.c.b16 %v6061, %v6057
        %v6126 = vpack.c.b16 %v6062, %v6058
        %v6127 = vpack.c.b16 %v6063, %v6059
        %v6128 = vpack.c.b16 %v6064, %v6060
        %6193 = vmatpush.bf16.msra.mxu0 %v6093
        %6194 = vmatpush.bf16.msra.mxu0 %v6089
        %6195 = vmatpush.bf16.msra.mxu0 %v6085
        %6196 = vmatpush.bf16.msra.mxu0 %v6081
        %6197 = vmatpush.bf16.msra.mxu0 %v6077
        %6198 = vmatpush.bf16.msra.mxu0 %v6073
        %6199 = vmatpush.bf16.msra.mxu0 %v6069
        %6200 = vmatpush.bf16.msra.mxu0 %v6065
        %6201 = vmatmul.bf16.gmra.mxu0 %v5869
        %v6202 = vpop.f32.mrf.mxu0
        %v6203 = vadd.f32 0.0, %v6202
        %v6204 = vpop.f32.mrf.mxu0
        %6205 = vdwg.mxu0
        %6206 = vmatpush.bf16.msra.mxu0 %v6125
        %6207 = vmatpush.bf16.msra.mxu0 %v6121
        %6208 = vmatpush.bf16.msra.mxu0 %v6117
        %6209 = vmatpush.bf16.msra.mxu0 %v6113
        %6210 = vmatpush.bf16.msra.mxu0 %v6109
        %6211 = vmatpush.bf16.msra.mxu0 %v6105
        %6212 = vmatpush.bf16.msra.mxu0 %v6101
        %6213 = vmatpush.bf16.msra.mxu0 %v6097
        %6214 = vmatmul.bf16.gmra.mxu0 %v5870
        %v6215 = vpop.f32.mrf.mxu0
        %v6216 = vadd.f32 %v6203, %v6215
        %v6217 = vpop.f32.mrf.mxu0
        %6218 = vdwg.mxu0
        %6219 = vmatpush.bf16.msra.mxu0 %v6094
        %6220 = vmatpush.bf16.msra.mxu0 %v6090
        %6221 = vmatpush.bf16.msra.mxu0 %v6086
        %6222 = vmatpush.bf16.msra.mxu0 %v6082
        %6223 = vmatpush.bf16.msra.mxu0 %v6078
        %6224 = vmatpush.bf16.msra.mxu0 %v6074
        %6225 = vmatpush.bf16.msra.mxu0 %v6070
        %6226 = vmatpush.bf16.msra.mxu0 %v6066
        %6227 = vmatmul.bf16.gmra.mxu0 %v5869
        %v6228 = vpop.f32.mrf.mxu0
        %v6229 = vadd.f32 0.0, %v6228
        %v6230 = vpop.f32.mrf.mxu0
        %6231 = vdwg.mxu0
        %6232 = vmatpush.bf16.msra.mxu0 %v6126
        %6233 = vmatpush.bf16.msra.mxu0 %v6122
        %6234 = vmatpush.bf16.msra.mxu0 %v6118
        %6235 = vmatpush.bf16.msra.mxu0 %v6114
        %6236 = vmatpush.bf16.msra.mxu0 %v6110
        %6237 = vmatpush.bf16.msra.mxu0 %v6106
        %6238 = vmatpush.bf16.msra.mxu0 %v6102
        %6239 = vmatpush.bf16.msra.mxu0 %v6098
        %6240 = vmatmul.bf16.gmra.mxu0 %v5870
        %v6241 = vpop.f32.mrf.mxu0
        %v6242 = vadd.f32 %v6229, %v6241
        %v6243 = vpop.f32.mrf.mxu0
        %6244 = vdwg.mxu0
        %6245 = vmatpush.bf16.msra.mxu0 %v6095
        %6246 = vmatpush.bf16.msra.mxu0 %v6091
        %6247 = vmatpush.bf16.msra.mxu0 %v6087
        %6248 = vmatpush.bf16.msra.mxu0 %v6083
        %6249 = vmatpush.bf16.msra.mxu0 %v6079
        %6250 = vmatpush.bf16.msra.mxu0 %v6075
        %6251 = vmatpush.bf16.msra.mxu0 %v6071
        %6252 = vmatpush.bf16.msra.mxu0 %v6067
        %6253 = vmatmul.bf16.gmra.mxu0 %v5869
        %v6254 = vpop.f32.mrf.mxu0
        %v6255 = vadd.f32 0.0, %v6254
        %v6256 = vpop.f32.mrf.mxu0
        %6257 = vdwg.mxu0
        %6258 = vmatpush.bf16.msra.mxu0 %v6127
        %6259 = vmatpush.bf16.msra.mxu0 %v6123
        %6260 = vmatpush.bf16.msra.mxu0 %v6119
        %6261 = vmatpush.bf16.msra.mxu0 %v6115
        %6262 = vmatpush.bf16.msra.mxu0 %v6111
        %6263 = vmatpush.bf16.msra.mxu0 %v6107
        %6264 = vmatpush.bf16.msra.mxu0 %v6103
        %6265 = vmatpush.bf16.msra.mxu0 %v6099
        %6266 = vmatmul.bf16.gmra.mxu0 %v5870
        %v6267 = vpop.f32.mrf.mxu0
        %v6268 = vadd.f32 %v6255, %v6267
        %v6269 = vpop.f32.mrf.mxu0
        %6270 = vdwg.mxu0
        %6271 = vmatpush.bf16.msra.mxu0 %v6096
        %6272 = vmatpush.bf16.msra.mxu0 %v6092
        %6273 = vmatpush.bf16.msra.mxu0 %v6088
        %6274 = vmatpush.bf16.msra.mxu0 %v6084
        %6275 = vmatpush.bf16.msra.mxu0 %v6080
        %6276 = vmatpush.bf16.msra.mxu0 %v6076
        %6277 = vmatpush.bf16.msra.mxu0 %v6072
        %6278 = vmatpush.bf16.msra.mxu0 %v6068
        %6279 = vmatmul.bf16.gmra.mxu0 %v5869
        %v6280 = vpop.f32.mrf.mxu0
        %v6281 = vadd.f32 0.0, %v6280
        %v6282 = vpop.f32.mrf.mxu0
        %6283 = vdwg.mxu0
        %6284 = vmatpush.bf16.msra.mxu0 %v6128
        %6285 = vmatpush.bf16.msra.mxu0 %v6124
        %6286 = vmatpush.bf16.msra.mxu0 %v6120
        %6287 = vmatpush.bf16.msra.mxu0 %v6116
        %6288 = vmatpush.bf16.msra.mxu0 %v6112
        %6289 = vmatpush.bf16.msra.mxu0 %v6108
        %6290 = vmatpush.bf16.msra.mxu0 %v6104
        %6291 = vmatpush.bf16.msra.mxu0 %v6100
        %6292 = vmatmul.bf16.gmra.mxu0 %v5870
        %v6293 = vpop.f32.mrf.mxu0
        %v6294 = vadd.f32 %v6281, %v6293
        %v6295 = vpop.f32.mrf.mxu0
        %6296 = vdwg.mxu0
        %v6297 = vadd.f32 %v5694, %v6216
        %v6298 = vadd.f32 %v5720, %v6242
        %v6299 = vadd.f32 %v5746, %v6268
        %v6300 = vadd.f32 %v5772, %v6294
        %s6301 = scalar_lea.vmem [#allocation2], 3
        %v6302 = vld [vmem:[%s6301] ss:$4 sm:$0x3]
        %s6303 = scalar_lea.vmem [#allocation2], 11
        %v6304 = vld [vmem:[%s6303] ss:$4 sm:$0x3]
        %v6307 = vperm.slane %v6302, 0
        %v6308 = vperm.slane %v6302, 1
        %v6309 = vperm.slane %v6304, 0
        %v6310 = vperm.slane %v6304, 1
        %v6315 = vpack.c.bf16 %v6307, %v6307
        %v6316 = vpack.c.bf16 %v6308, %v6308
        %v6317 = vpack.c.bf16 %v6309, %v6309
        %v6318 = vpack.c.bf16 %v6310, %v6310
        %v6319 = vld [vmem:[%s462 + $0x600] sm:$0xff]
        %v6320 = vld [vmem:[%s462 + $0x608] sm:$0xff]
        %v6321 = vld [vmem:[%s462 + $0x610] sm:$0xff]
        %v6322 = vld [vmem:[%s462 + $0x618] sm:$0xff]
        %v6323 = vld [vmem:[%s462 + $0x620] sm:$0xff]
        %v6324 = vld [vmem:[%s462 + $0x628] sm:$0xff]
        %v6325 = vld [vmem:[%s462 + $0x630] sm:$0xff]
        %v6326 = vld [vmem:[%s462 + $0x638] sm:$0xff]
        %v6327 = vld [vmem:[%s462 + $0x640] sm:$0xff]
        %v6328 = vld [vmem:[%s462 + $0x648] sm:$0xff]
        %v6329 = vld [vmem:[%s462 + $0x650] sm:$0xff]
        %v6330 = vld [vmem:[%s462 + $0x658] sm:$0xff]
        %v6331 = vld [vmem:[%s462 + $0x660] sm:$0xff]
        %v6332 = vld [vmem:[%s462 + $0x668] sm:$0xff]
        %v6333 = vld [vmem:[%s462 + $0x670] sm:$0xff]
        %v6334 = vld [vmem:[%s462 + $0x678] sm:$0xff]
        %v6335 = vld [vmem:[%s462 + $0x680] sm:$0xff]
        %v6336 = vld [vmem:[%s462 + $0x688] sm:$0xff]
        %v6337 = vld [vmem:[%s462 + $0x690] sm:$0xff]
        %v6338 = vld [vmem:[%s462 + $0x698] sm:$0xff]
        %v6339 = vld [vmem:[%s462 + $0x6a0] sm:$0xff]
        %v6340 = vld [vmem:[%s462 + $0x6a8] sm:$0xff]
        %v6341 = vld [vmem:[%s462 + $0x6b0] sm:$0xff]
        %v6342 = vld [vmem:[%s462 + $0x6b8] sm:$0xff]
        %v6343 = vld [vmem:[%s462 + $0x6c0] sm:$0xff]
        %v6344 = vld [vmem:[%s462 + $0x6c8] sm:$0xff]
        %v6345 = vld [vmem:[%s462 + $0x6d0] sm:$0xff]
        %v6346 = vld [vmem:[%s462 + $0x6d8] sm:$0xff]
        %v6347 = vld [vmem:[%s462 + $0x6e0] sm:$0xff]
        %v6348 = vld [vmem:[%s462 + $0x6e8] sm:$0xff]
        %v6349 = vld [vmem:[%s462 + $0x6f0] sm:$0xff]
        %v6350 = vld [vmem:[%s462 + $0x6f8] sm:$0xff]
        %v6351 = vld [vmem:[%s462 + $0x700] sm:$0xff]
        %v6352 = vld [vmem:[%s462 + $0x708] sm:$0xff]
        %v6353 = vld [vmem:[%s462 + $0x710] sm:$0xff]
        %v6354 = vld [vmem:[%s462 + $0x718] sm:$0xff]
        %v6355 = vld [vmem:[%s462 + $0x720] sm:$0xff]
        %v6356 = vld [vmem:[%s462 + $0x728] sm:$0xff]
        %v6357 = vld [vmem:[%s462 + $0x730] sm:$0xff]
        %v6358 = vld [vmem:[%s462 + $0x738] sm:$0xff]
        %v6359 = vld [vmem:[%s462 + $0x740] sm:$0xff]
        %v6360 = vld [vmem:[%s462 + $0x748] sm:$0xff]
        %v6361 = vld [vmem:[%s462 + $0x750] sm:$0xff]
        %v6362 = vld [vmem:[%s462 + $0x758] sm:$0xff]
        %v6363 = vld [vmem:[%s462 + $0x760] sm:$0xff]
        %v6364 = vld [vmem:[%s462 + $0x768] sm:$0xff]
        %v6365 = vld [vmem:[%s462 + $0x770] sm:$0xff]
        %v6366 = vld [vmem:[%s462 + $0x778] sm:$0xff]
        %v6367 = vld [vmem:[%s462 + $0x780] sm:$0xff]
        %v6368 = vld [vmem:[%s462 + $0x788] sm:$0xff]
        %v6369 = vld [vmem:[%s462 + $0x790] sm:$0xff]
        %v6370 = vld [vmem:[%s462 + $0x798] sm:$0xff]
        %v6371 = vld [vmem:[%s462 + $0x7a0] sm:$0xff]
        %v6372 = vld [vmem:[%s462 + $0x7a8] sm:$0xff]
        %v6373 = vld [vmem:[%s462 + $0x7b0] sm:$0xff]
        %v6374 = vld [vmem:[%s462 + $0x7b8] sm:$0xff]
        %v6375 = vld [vmem:[%s462 + $0x7c0] sm:$0xff]
        %v6376 = vld [vmem:[%s462 + $0x7c8] sm:$0xff]
        %v6377 = vld [vmem:[%s462 + $0x7d0] sm:$0xff]
        %v6378 = vld [vmem:[%s462 + $0x7d8] sm:$0xff]
        %v6379 = vld [vmem:[%s462 + $0x7e0] sm:$0xff]
        %v6380 = vld [vmem:[%s462 + $0x7e8] sm:$0xff]
        %v6381 = vld [vmem:[%s462 + $0x7f0] sm:$0xff]
        %v6382 = vld [vmem:[%s462 + $0x7f8] sm:$0xff]
        %v6387 = vunpack.c.l.b16 %v6315
        %v6388 = vunpack.c.l.b16 %v6316
        %v6389 = vunpack.c.l.b16 %v6317
        %v6390 = vunpack.c.l.b16 %v6318
        %v6391 = vrot.slane %v6389, 7
        %v6392 = vsel %vm4903, %v6391, %v6387
        %v6393 = vrot.slane %v6390, 7
        %v6394 = vsel %vm4903, %v6393, %v6388
        %v6395 = vpack.c.b16 %v6392, %v6392
        %v6396 = vpack.c.b16 %v6394, %v6394
        %v6463 = vunpack.c.l.b16 %v6319
        %v6464 = vunpack.c.h.b16 %v6319
        %v6465 = vunpack.c.l.b16 %v6320
        %v6466 = vunpack.c.h.b16 %v6320
        %v6467 = vunpack.c.l.b16 %v6321
        %v6468 = vunpack.c.h.b16 %v6321
        %v6469 = vunpack.c.l.b16 %v6322
        %v6470 = vunpack.c.h.b16 %v6322
        %v6471 = vunpack.c.l.b16 %v6323
        %v6472 = vunpack.c.h.b16 %v6323
        %v6473 = vunpack.c.l.b16 %v6324
        %v6474 = vunpack.c.h.b16 %v6324
        %v6475 = vunpack.c.l.b16 %v6325
        %v6476 = vunpack.c.h.b16 %v6325
        %v6477 = vunpack.c.l.b16 %v6326
        %v6478 = vunpack.c.h.b16 %v6326
        %v6479 = vunpack.c.l.b16 %v6327
        %v6480 = vunpack.c.h.b16 %v6327
        %v6481 = vunpack.c.l.b16 %v6328
        %v6482 = vunpack.c.h.b16 %v6328
        %v6483 = vunpack.c.l.b16 %v6329
        %v6484 = vunpack.c.h.b16 %v6329
        %v6485 = vunpack.c.l.b16 %v6330
        %v6486 = vunpack.c.h.b16 %v6330
        %v6487 = vunpack.c.l.b16 %v6331
        %v6488 = vunpack.c.h.b16 %v6331
        %v6489 = vunpack.c.l.b16 %v6332
        %v6490 = vunpack.c.h.b16 %v6332
        %v6491 = vunpack.c.l.b16 %v6333
        %v6492 = vunpack.c.h.b16 %v6333
        %v6493 = vunpack.c.l.b16 %v6334
        %v6494 = vunpack.c.h.b16 %v6334
        %v6495 = vunpack.c.l.b16 %v6335
        %v6496 = vunpack.c.h.b16 %v6335
        %v6497 = vunpack.c.l.b16 %v6336
        %v6498 = vunpack.c.h.b16 %v6336
        %v6499 = vunpack.c.l.b16 %v6337
        %v6500 = vunpack.c.h.b16 %v6337
        %v6501 = vunpack.c.l.b16 %v6338
        %v6502 = vunpack.c.h.b16 %v6338
        %v6503 = vunpack.c.l.b16 %v6339
        %v6504 = vunpack.c.h.b16 %v6339
        %v6505 = vunpack.c.l.b16 %v6340
        %v6506 = vunpack.c.h.b16 %v6340
        %v6507 = vunpack.c.l.b16 %v6341
        %v6508 = vunpack.c.h.b16 %v6341
        %v6509 = vunpack.c.l.b16 %v6342
        %v6510 = vunpack.c.h.b16 %v6342
        %v6511 = vunpack.c.l.b16 %v6343
        %v6512 = vunpack.c.h.b16 %v6343
        %v6513 = vunpack.c.l.b16 %v6344
        %v6514 = vunpack.c.h.b16 %v6344
        %v6515 = vunpack.c.l.b16 %v6345
        %v6516 = vunpack.c.h.b16 %v6345
        %v6517 = vunpack.c.l.b16 %v6346
        %v6518 = vunpack.c.h.b16 %v6346
        %v6519 = vunpack.c.l.b16 %v6347
        %v6520 = vunpack.c.h.b16 %v6347
        %v6521 = vunpack.c.l.b16 %v6348
        %v6522 = vunpack.c.h.b16 %v6348
        %v6523 = vunpack.c.l.b16 %v6349
        %v6524 = vunpack.c.h.b16 %v6349
        %v6525 = vunpack.c.l.b16 %v6350
        %v6526 = vunpack.c.h.b16 %v6350
        %v6527 = vunpack.c.l.b16 %v6351
        %v6528 = vunpack.c.h.b16 %v6351
        %v6529 = vunpack.c.l.b16 %v6352
        %v6530 = vunpack.c.h.b16 %v6352
        %v6531 = vunpack.c.l.b16 %v6353
        %v6532 = vunpack.c.h.b16 %v6353
        %v6533 = vunpack.c.l.b16 %v6354
        %v6534 = vunpack.c.h.b16 %v6354
        %v6535 = vunpack.c.l.b16 %v6355
        %v6536 = vunpack.c.h.b16 %v6355
        %v6537 = vunpack.c.l.b16 %v6356
        %v6538 = vunpack.c.h.b16 %v6356
        %v6539 = vunpack.c.l.b16 %v6357
        %v6540 = vunpack.c.h.b16 %v6357
        %v6541 = vunpack.c.l.b16 %v6358
        %v6542 = vunpack.c.h.b16 %v6358
        %v6543 = vunpack.c.l.b16 %v6359
        %v6544 = vunpack.c.h.b16 %v6359
        %v6545 = vunpack.c.l.b16 %v6360
        %v6546 = vunpack.c.h.b16 %v6360
        %v6547 = vunpack.c.l.b16 %v6361
        %v6548 = vunpack.c.h.b16 %v6361
        %v6549 = vunpack.c.l.b16 %v6362
        %v6550 = vunpack.c.h.b16 %v6362
        %v6551 = vunpack.c.l.b16 %v6363
        %v6552 = vunpack.c.h.b16 %v6363
        %v6553 = vunpack.c.l.b16 %v6364
        %v6554 = vunpack.c.h.b16 %v6364
        %v6555 = vunpack.c.l.b16 %v6365
        %v6556 = vunpack.c.h.b16 %v6365
        %v6557 = vunpack.c.l.b16 %v6366
        %v6558 = vunpack.c.h.b16 %v6366
        %v6559 = vunpack.c.l.b16 %v6367
        %v6560 = vunpack.c.h.b16 %v6367
        %v6561 = vunpack.c.l.b16 %v6368
        %v6562 = vunpack.c.h.b16 %v6368
        %v6563 = vunpack.c.l.b16 %v6369
        %v6564 = vunpack.c.h.b16 %v6369
        %v6565 = vunpack.c.l.b16 %v6370
        %v6566 = vunpack.c.h.b16 %v6370
        %v6567 = vunpack.c.l.b16 %v6371
        %v6568 = vunpack.c.h.b16 %v6371
        %v6569 = vunpack.c.l.b16 %v6372
        %v6570 = vunpack.c.h.b16 %v6372
        %v6571 = vunpack.c.l.b16 %v6373
        %v6572 = vunpack.c.h.b16 %v6373
        %v6573 = vunpack.c.l.b16 %v6374
        %v6574 = vunpack.c.h.b16 %v6374
        %v6575 = vunpack.c.l.b16 %v6375
        %v6576 = vunpack.c.h.b16 %v6375
        %v6577 = vunpack.c.l.b16 %v6376
        %v6578 = vunpack.c.h.b16 %v6376
        %v6579 = vunpack.c.l.b16 %v6377
        %v6580 = vunpack.c.h.b16 %v6377
        %v6581 = vunpack.c.l.b16 %v6378
        %v6582 = vunpack.c.h.b16 %v6378
        %v6583 = vunpack.c.l.b16 %v6379
        %v6584 = vunpack.c.h.b16 %v6379
        %v6585 = vunpack.c.l.b16 %v6380
        %v6586 = vunpack.c.h.b16 %v6380
        %v6587 = vunpack.c.l.b16 %v6381
        %v6588 = vunpack.c.h.b16 %v6381
        %v6589 = vunpack.c.l.b16 %v6382
        %v6590 = vunpack.c.h.b16 %v6382
        %v6591 = vpack.c.b16 %v6467, %v6463
        %v6592 = vpack.c.b16 %v6468, %v6464
        %v6593 = vpack.c.b16 %v6469, %v6465
        %v6594 = vpack.c.b16 %v6470, %v6466
        %v6595 = vpack.c.b16 %v6475, %v6471
        %v6596 = vpack.c.b16 %v6476, %v6472
        %v6597 = vpack.c.b16 %v6477, %v6473
        %v6598 = vpack.c.b16 %v6478, %v6474
        %v6599 = vpack.c.b16 %v6483, %v6479
        %v6600 = vpack.c.b16 %v6484, %v6480
        %v6601 = vpack.c.b16 %v6485, %v6481
        %v6602 = vpack.c.b16 %v6486, %v6482
        %v6603 = vpack.c.b16 %v6491, %v6487
        %v6604 = vpack.c.b16 %v6492, %v6488
        %v6605 = vpack.c.b16 %v6493, %v6489
        %v6606 = vpack.c.b16 %v6494, %v6490
        %v6607 = vpack.c.b16 %v6499, %v6495
        %v6608 = vpack.c.b16 %v6500, %v6496
        %v6609 = vpack.c.b16 %v6501, %v6497
        %v6610 = vpack.c.b16 %v6502, %v6498
        %v6611 = vpack.c.b16 %v6507, %v6503
        %v6612 = vpack.c.b16 %v6508, %v6504
        %v6613 = vpack.c.b16 %v6509, %v6505
        %v6614 = vpack.c.b16 %v6510, %v6506
        %v6615 = vpack.c.b16 %v6515, %v6511
        %v6616 = vpack.c.b16 %v6516, %v6512
        %v6617 = vpack.c.b16 %v6517, %v6513
        %v6618 = vpack.c.b16 %v6518, %v6514
        %v6619 = vpack.c.b16 %v6523, %v6519
        %v6620 = vpack.c.b16 %v6524, %v6520
        %v6621 = vpack.c.b16 %v6525, %v6521
        %v6622 = vpack.c.b16 %v6526, %v6522
        %v6623 = vpack.c.b16 %v6531, %v6527
        %v6624 = vpack.c.b16 %v6532, %v6528
        %v6625 = vpack.c.b16 %v6533, %v6529
        %v6626 = vpack.c.b16 %v6534, %v6530
        %v6627 = vpack.c.b16 %v6539, %v6535
        %v6628 = vpack.c.b16 %v6540, %v6536
        %v6629 = vpack.c.b16 %v6541, %v6537
        %v6630 = vpack.c.b16 %v6542, %v6538
        %v6631 = vpack.c.b16 %v6547, %v6543
        %v6632 = vpack.c.b16 %v6548, %v6544
        %v6633 = vpack.c.b16 %v6549, %v6545
        %v6634 = vpack.c.b16 %v6550, %v6546
        %v6635 = vpack.c.b16 %v6555, %v6551
        %v6636 = vpack.c.b16 %v6556, %v6552
        %v6637 = vpack.c.b16 %v6557, %v6553
        %v6638 = vpack.c.b16 %v6558, %v6554
        %v6639 = vpack.c.b16 %v6563, %v6559
        %v6640 = vpack.c.b16 %v6564, %v6560
        %v6641 = vpack.c.b16 %v6565, %v6561
        %v6642 = vpack.c.b16 %v6566, %v6562
        %v6643 = vpack.c.b16 %v6571, %v6567
        %v6644 = vpack.c.b16 %v6572, %v6568
        %v6645 = vpack.c.b16 %v6573, %v6569
        %v6646 = vpack.c.b16 %v6574, %v6570
        %v6647 = vpack.c.b16 %v6579, %v6575
        %v6648 = vpack.c.b16 %v6580, %v6576
        %v6649 = vpack.c.b16 %v6581, %v6577
        %v6650 = vpack.c.b16 %v6582, %v6578
        %v6651 = vpack.c.b16 %v6587, %v6583
        %v6652 = vpack.c.b16 %v6588, %v6584
        %v6653 = vpack.c.b16 %v6589, %v6585
        %v6654 = vpack.c.b16 %v6590, %v6586
        %6719 = vmatpush.bf16.msra.mxu0 %v6619
        %6720 = vmatpush.bf16.msra.mxu0 %v6615
        %6721 = vmatpush.bf16.msra.mxu0 %v6611
        %6722 = vmatpush.bf16.msra.mxu0 %v6607
        %6723 = vmatpush.bf16.msra.mxu0 %v6603
        %6724 = vmatpush.bf16.msra.mxu0 %v6599
        %6725 = vmatpush.bf16.msra.mxu0 %v6595
        %6726 = vmatpush.bf16.msra.mxu0 %v6591
        %6727 = vmatmul.bf16.gmra.mxu0 %v6395
        %v6728 = vpop.f32.mrf.mxu0
        %v6729 = vadd.f32 0.0, %v6728
        %v6730 = vpop.f32.mrf.mxu0
        %6731 = vdwg.mxu0
        %6732 = vmatpush.bf16.msra.mxu0 %v6651
        %6733 = vmatpush.bf16.msra.mxu0 %v6647
        %6734 = vmatpush.bf16.msra.mxu0 %v6643
        %6735 = vmatpush.bf16.msra.mxu0 %v6639
        %6736 = vmatpush.bf16.msra.mxu0 %v6635
        %6737 = vmatpush.bf16.msra.mxu0 %v6631
        %6738 = vmatpush.bf16.msra.mxu0 %v6627
        %6739 = vmatpush.bf16.msra.mxu0 %v6623
        %6740 = vmatmul.bf16.gmra.mxu0 %v6396
        %v6741 = vpop.f32.mrf.mxu0
        %v6742 = vadd.f32 %v6729, %v6741
        %v6743 = vpop.f32.mrf.mxu0
        %6744 = vdwg.mxu0
        %6745 = vmatpush.bf16.msra.mxu0 %v6620
        %6746 = vmatpush.bf16.msra.mxu0 %v6616
        %6747 = vmatpush.bf16.msra.mxu0 %v6612
        %6748 = vmatpush.bf16.msra.mxu0 %v6608
        %6749 = vmatpush.bf16.msra.mxu0 %v6604
        %6750 = vmatpush.bf16.msra.mxu0 %v6600
        %6751 = vmatpush.bf16.msra.mxu0 %v6596
        %6752 = vmatpush.bf16.msra.mxu0 %v6592
        %6753 = vmatmul.bf16.gmra.mxu0 %v6395
        %v6754 = vpop.f32.mrf.mxu0
        %v6755 = vadd.f32 0.0, %v6754
        %v6756 = vpop.f32.mrf.mxu0
        %6757 = vdwg.mxu0
        %6758 = vmatpush.bf16.msra.mxu0 %v6652
        %6759 = vmatpush.bf16.msra.mxu0 %v6648
        %6760 = vmatpush.bf16.msra.mxu0 %v6644
        %6761 = vmatpush.bf16.msra.mxu0 %v6640
        %6762 = vmatpush.bf16.msra.mxu0 %v6636
        %6763 = vmatpush.bf16.msra.mxu0 %v6632
        %6764 = vmatpush.bf16.msra.mxu0 %v6628
        %6765 = vmatpush.bf16.msra.mxu0 %v6624
        %6766 = vmatmul.bf16.gmra.mxu0 %v6396
        %v6767 = vpop.f32.mrf.mxu0
        %v6768 = vadd.f32 %v6755, %v6767
        %v6769 = vpop.f32.mrf.mxu0
        %6770 = vdwg.mxu0
        %6771 = vmatpush.bf16.msra.mxu0 %v6621
        %6772 = vmatpush.bf16.msra.mxu0 %v6617
        %6773 = vmatpush.bf16.msra.mxu0 %v6613
        %6774 = vmatpush.bf16.msra.mxu0 %v6609
        %6775 = vmatpush.bf16.msra.mxu0 %v6605
        %6776 = vmatpush.bf16.msra.mxu0 %v6601
        %6777 = vmatpush.bf16.msra.mxu0 %v6597
        %6778 = vmatpush.bf16.msra.mxu0 %v6593
        %6779 = vmatmul.bf16.gmra.mxu0 %v6395
        %v6780 = vpop.f32.mrf.mxu0
        %v6781 = vadd.f32 0.0, %v6780
        %v6782 = vpop.f32.mrf.mxu0
        %6783 = vdwg.mxu0
        %6784 = vmatpush.bf16.msra.mxu0 %v6653
        %6785 = vmatpush.bf16.msra.mxu0 %v6649
        %6786 = vmatpush.bf16.msra.mxu0 %v6645
        %6787 = vmatpush.bf16.msra.mxu0 %v6641
        %6788 = vmatpush.bf16.msra.mxu0 %v6637
        %6789 = vmatpush.bf16.msra.mxu0 %v6633
        %6790 = vmatpush.bf16.msra.mxu0 %v6629
        %6791 = vmatpush.bf16.msra.mxu0 %v6625
        %6792 = vmatmul.bf16.gmra.mxu0 %v6396
        %v6793 = vpop.f32.mrf.mxu0
        %v6794 = vadd.f32 %v6781, %v6793
        %v6795 = vpop.f32.mrf.mxu0
        %6796 = vdwg.mxu0
        %6797 = vmatpush.bf16.msra.mxu0 %v6622
        %6798 = vmatpush.bf16.msra.mxu0 %v6618
        %6799 = vmatpush.bf16.msra.mxu0 %v6614
        %6800 = vmatpush.bf16.msra.mxu0 %v6610
        %6801 = vmatpush.bf16.msra.mxu0 %v6606
        %6802 = vmatpush.bf16.msra.mxu0 %v6602
        %6803 = vmatpush.bf16.msra.mxu0 %v6598
        %6804 = vmatpush.bf16.msra.mxu0 %v6594
        %6805 = vmatmul.bf16.gmra.mxu0 %v6395
        %v6806 = vpop.f32.mrf.mxu0
        %v6807 = vadd.f32 0.0, %v6806
        %v6808 = vpop.f32.mrf.mxu0
        %6809 = vdwg.mxu0
        %6810 = vmatpush.bf16.msra.mxu0 %v6654
        %6811 = vmatpush.bf16.msra.mxu0 %v6650
        %6812 = vmatpush.bf16.msra.mxu0 %v6646
        %6813 = vmatpush.bf16.msra.mxu0 %v6642
        %6814 = vmatpush.bf16.msra.mxu0 %v6638
        %6815 = vmatpush.bf16.msra.mxu0 %v6634
        %6816 = vmatpush.bf16.msra.mxu0 %v6630
        %6817 = vmatpush.bf16.msra.mxu0 %v6626
        %6818 = vmatmul.bf16.gmra.mxu0 %v6396
        %v6819 = vpop.f32.mrf.mxu0
        %v6820 = vadd.f32 %v6807, %v6819
        %v6821 = vpop.f32.mrf.mxu0
        %6822 = vdwg.mxu0
        %v6823 = vadd.f32 %v6297, %v6742
        %v6824 = vadd.f32 %v6298, %v6768
        %v6825 = vadd.f32 %v6299, %v6794
        %v6826 = vadd.f32 %v6300, %v6820
        %v6831 = vrot.slane %v6824, 6
        %v6832 = vrot.slane %v6825, 4
        %v6833 = vrot.slane %v6826, 2
        %vm6834 = vcmask 1041408
        %v6835 = vsel %vm6834, %v6823, %v6831
        %vm6836 = vcmask 1045508
        %v6837 = vsel %vm6836, %v6832, %v6833
        %vm6838 = vcmask 1043456
        %v6839 = vsel %vm6838, %v6835, %v6837
        %6841 = vst [vmem:[%s511] sm:$0xff] %v6839
        %s6842 = smul.u32 4, %s29
        %p6843 = scmp.lt.s32.totalorder %s6842, 7
        %s6844 = scalar_select %p6843, %s6842, 7
        %s6845 = smul.addr %s6844, 2
        %s6846 = scalar_lea.vmem %s13, %s6845
        // Predicated region
        $region93: #{ls_unet_forward.1} parent=71 // pred_check
          %p6847 = pneg %p325
        $region94: #{ls_unet_forward.1} parent=71 // pred_check_branch
          %6849 = sbr.rel (%p6847) target = $region96
        $region95: #{ls_unet_forward.1} parent=71 // pred_region
          %s6850 = smul.u32 4, %s29
        $region96: #{ls_unet_forward.1} parent=71 // pred_fallthru
          _
      $region72: #{ls_unet_forward.1} parent=5 // pred_fallthru
        _
      %p6851 = scmp.le.s32.totalorder 2, %s24
      // Predicated region
      $region97: #{ls_unet_forward.1} parent=5 // pred_check
        %p6852 = pneg %p6851
      $region98: #{ls_unet_forward.1} parent=5 // pred_check_branch
        %6854 = sbr.rel (%p6852) target = $region100
      $region99: #{ls_unet_forward.1} parent=5 // pred_region
        %s6855 = ssub.s32 %s24, 2
        // Predicated region
        $region101: #{ls_unet_forward.1} parent=99 // pred_check
          %p6856 = pneg %p331
        $region102: #{ls_unet_forward.1} parent=99 // pred_check_branch
          %6858 = sbr.rel (%p6856) target = $region104
        $region103: #{ls_unet_forward.1} parent=99 // pred_region
          %s6859 = smul.u32 4, %s30
          %p6860 = scmp.lt.s32.totalorder %s6859, 7
          %s6861 = scalar_select %p6860, %s6859, 7
          %s6862 = smul.addr %s6861, 2
          %s6863 = scalar_lea.vmem %s13, %s6862
        $region104: #{ls_unet_forward.1} parent=99 // pred_fallthru
          _
      $region100: #{ls_unet_forward.1} parent=5 // pred_fallthru
        _
    $region6: #{ls_unet_forward.1} parent=1 // loop_footer
      %s28 = sadd.s32 1, %s24
    $region7: #{ls_unet_forward.1} parent=1 // loop_footer_branch
      %23 = sbr.rel target = $region3
    $region8: #{ls_unet_forward.1} parent=1 // loop_exit
      _
    %6864 = vsyncpa [#allocation4], 1
    %s6865 = scalar_lea.sflag [#allocation4], 1
    %6866 = vsyncpa %s6865, 1
    %6867 = vsyncpa [#allocation6], 1
    %6868 = vsyncpa [#allocation9], 1
    %s6869 = scalar_lea.sflag [#allocation9], 1
    %6870 = vsyncpa %s6869, 1

</llo_original>
